<compile_context>
chip_gen: v6e
topology: v6e:2x2x1
jax: 0.10.0
libtpu: 0.0.40
codegen_flags: <defaults>
</compile_context>

<pallas_src>
import functools

import jax
import jax.numpy as jnp
from jax import lax
from jax.experimental import pallas as pl
from jax.experimental.pallas import tpu as pltpu

BN_EPS = 1e-5
SINKHORN_ITER = 20


# ----------------------------- Pallas kernels -----------------------------

def _matmul_bias_act_kernel(*refs, relu, has_residual):
    """out = relu( W @ A + bias [+ residual] )  — lane-dense conv/fc epilogue."""
    if has_residual:
        w_ref, a_ref, b_ref, r_ref, o_ref = refs
    else:
        w_ref, a_ref, b_ref, o_ref = refs
        r_ref = None
    acc = jnp.dot(w_ref[...], a_ref[...], preferred_element_type=jnp.float32)
    out = acc + b_ref[...]
    if r_ref is not None:
        out = out + r_ref[...]
    if relu:
        out = jnp.maximum(out, 0.0)
    o_ref[...] = out.astype(o_ref.dtype)


def _cdist_kernel(x_ref, o_ref):
    """Pairwise Euclidean distance between rows, batched over the leading axis."""
    x = x_ref[...]                                          # (B, N, N)
    gram = jnp.einsum('bij,bkj->bik', x, x,
                      preferred_element_type=jnp.float32)
    sq_row = jnp.sum(x * x, axis=2, keepdims=True)          # ||x_i||^2 (B, N, 1)
    ri = lax.broadcasted_iota(jnp.int32, gram.shape, 1)
    ci = lax.broadcasted_iota(jnp.int32, gram.shape, 2)
    diag = jnp.where(ri == ci, gram, 0.0)
    sq_col = jnp.sum(diag, axis=1, keepdims=True)           # ||x_j||^2 (B, 1, N)
    d2 = sq_row + sq_col - 2.0 * gram
    o_ref[...] = jnp.sqrt(jnp.maximum(d2, 0.0))


def _bmm_selfT_kernel(y_ref, o_ref):
    """Batched Y @ Y^T over a (G, N, N) block of spatial matrices."""
    y = y_ref[...]
    o_ref[...] = jnp.einsum('gij,gkj->gik', y, y,
                            preferred_element_type=jnp.float32)


def _sinkhorn_yxy_kernel(z_ref, x_ref, out_ref, ysink_ref, *, iters):
    """Log-domain Sinkhorn (torch dims 1 then 2) + exp, fused with Y @ X @ Y^T."""
    z0 = z_ref[0]

    def body(_, z):
        m0 = jnp.max(z, axis=0, keepdims=True)
        z = z - (jnp.log(jnp.sum(jnp.exp(z - m0), axis=0, keepdims=True)) + m0)
        m1 = jnp.max(z, axis=1, keepdims=True)
        z = z - (jnp.log(jnp.sum(jnp.exp(z - m1), axis=1, keepdims=True)) + m1)
        return z

    zf = lax.fori_loop(0, iters, body, z0)
    y = jnp.exp(zf)
    ysink_ref[0] = y
    t = jnp.dot(y, x_ref[0], preferred_element_type=jnp.float32)
    out_ref[0] = jnp.einsum('ik,jk->ij', t, y,               # t @ y^T
                            preferred_element_type=jnp.float32)


# ----------------------------- pallas_call wrappers -----------------------------

def _pick_lane_tile(m):
    """Lane-axis tile: a multiple of 128 when possible; prefer >=2 grid steps
    so the parallel axis can be sharded across v7x's two TensorCores."""
    for t in (256, 512, 384, 128):
        if m % t == 0:
            return t
    return m


def _pick_group(g, cap=32):
    """Largest divisor of g that is <= cap (matrices per grid step)."""
    for cand in range(min(cap, g), 0, -1):
        if g % cand == 0:
            return cand
    return g


def matmul_bias_act(w, a, bias, residual=None, relu=True):
    """(Cout, K) @ (K, M) + bias [+ residual] [+ ReLU]; output last dim M lane-dense."""
    cout, k = w.shape
    _, m = a.shape
    tl = _pick_lane_tile(m)
    grid = (m // tl,)
    in_specs = [
        pl.BlockSpec((cout, k), lambda i: (0, 0)),     # weights stay resident
        pl.BlockSpec((k, tl), lambda i: (0, i)),
        pl.BlockSpec((cout, 1), lambda i: (0, 0)),
    ]
    args = [w, a, bias]
    if residual is not None:
        in_specs.append(pl.BlockSpec((cout, tl), lambda i: (0, i)))
        args.append(residual)
    kernel = functools.partial(_matmul_bias_act_kernel, relu=relu,
                               has_residual=residual is not None)
    return pl.pallas_call(
        kernel,
        out_shape=jax.ShapeDtypeStruct((cout, m), jnp.float32),
        grid=grid,
        in_specs=in_specs,
        out_specs=pl.BlockSpec((cout, tl), lambda i: (0, i)),
        compiler_params=pltpu.CompilerParams(dimension_semantics=("parallel",)),
    )(*args)


def cdist_batched(x):
    """torch.cdist(x, x) per batch; x: (B, N, N)."""
    b, n, _ = x.shape
    return pl.pallas_call(
        _cdist_kernel,
        out_shape=jax.ShapeDtypeStruct((b, n, n), jnp.float32),
        grid=(1,),
        in_specs=[pl.BlockSpec((b, n, n), lambda i: (0, 0, 0))],
        out_specs=pl.BlockSpec((b, n, n), lambda i: (0, 0, 0)),
        compiler_params=pltpu.CompilerParams(dimension_semantics=("arbitrary",)),
    )(x)


def bmm_self_t(y):
    """Batched Y @ Y^T; y: (G, N, N), grouped G matrices per grid step."""
    g, n, _ = y.shape
    gt = _pick_group(g)
    return pl.pallas_call(
        _bmm_selfT_kernel,
        out_shape=jax.ShapeDtypeStruct((g, n, n), jnp.float32),
        grid=(g // gt,),
        in_specs=[pl.BlockSpec((gt, n, n), lambda i: (i, 0, 0))],
        out_specs=pl.BlockSpec((gt, n, n), lambda i: (i, 0, 0)),
        compiler_params=pltpu.CompilerParams(dimension_semantics=("parallel",)),
    )(y)


def sinkhorn_yxy(logits, x0, iters=SINKHORN_ITER):
    """y = sinkhorn(logits); out = y @ x0 @ y^T — fused per-batch kernel."""
    b, n, _ = logits.shape
    kernel = functools.partial(_sinkhorn_yxy_kernel, iters=iters)
    out, y = pl.pallas_call(
        kernel,
        out_shape=(jax.ShapeDtypeStruct((b, n, n), jnp.float32),
                   jax.ShapeDtypeStruct((b, n, n), jnp.float32)),
        grid=(b,),
        in_specs=[pl.BlockSpec((1, n, n), lambda i: (i, 0, 0)),
                  pl.BlockSpec((1, n, n), lambda i: (i, 0, 0))],
        out_specs=(pl.BlockSpec((1, n, n), lambda i: (i, 0, 0)),
                   pl.BlockSpec((1, n, n), lambda i: (i, 0, 0))),
        compiler_params=pltpu.CompilerParams(dimension_semantics=("parallel",)),
    )(logits, x0)
    return out, y


# ----------------------------- model glue (plain JAX) -----------------------------

def _im2col_T(x, k, pad):
    """Channel-first im2col for stride-1 conv.

    x: (Cin, B, H, W) -> (k*k*Cin, B*H*W); rows ordered (kh, kw, cin)."""
    c, b, h, w = x.shape
    xp = jnp.pad(x, ((0, 0), (0, 0), (pad, pad), (pad, pad)))
    cols = []
    for di in range(k):
        for dj in range(k):
            cols.append(xp[:, :, di:di + h, dj:dj + w].reshape(c, b * h * w))
    return jnp.concatenate(cols, axis=0)


def conv_bn_t(x, w, bn_params, k, pad, relu=True, residual=None):
    """k x k stride-1 conv + eval-mode BN [+ residual] [+ ReLU] via one Pallas matmul.

    x: (Cin, B, H, W) channel-first; returns (Cout, B, H, W)."""
    cin, b, h, wd = x.shape
    cout = w.shape[0]
    a_t = _im2col_T(x, k, pad)                               # (k*k*Cin, B*H*W)
    w_mat = jnp.transpose(w, (0, 2, 3, 1)).reshape(cout, k * k * cin)
    scale, bias = bn_params
    w_mat = w_mat * scale[:, None]                           # fold BN scale into weights
    r = None if residual is None else residual.reshape(cout, b * h * wd)
    out = matmul_bias_act(w_mat, a_t, bias[:, None], residual=r, relu=relu)
    return out.reshape(cout, b, h, wd)


def basic_block(x, p):
    out = conv_bn_t(x, p['conv1_w'], p['bn1'], 3, 1, relu=True)
    # second conv: BN, add identity, then ReLU (all fused in the kernel epilogue)
    out = conv_bn_t(out, p['conv2_w'], p['bn2'], 3, 1, relu=True, residual=x)
    return out


def init_params(key, model_dim):
    keys = iter(jax.random.split(key, 64))

    def kaiming(shape):  # (cout, cin, kh, kw), fan_out mode, relu gain
        cout, _, kh, kw = shape
        fan_out = cout * kh * kw
        std = (2.0 / fan_out) ** 0.5
        return std * jax.random.normal(next(keys), shape, dtype=jnp.float32)

    def bn(c):
        gamma = jnp.ones((c,), jnp.float32)
        beta = jnp.zeros((c,), jnp.float32)
        mean = jnp.zeros((c,), jnp.float32)
        var = jnp.ones((c,), jnp.float32)
        scale = gamma / jnp.sqrt(var + BN_EPS)
        bias = beta - mean * scale
        return scale, bias

    d = model_dim
    bound = 1.0 / (d ** 0.5)
    params = {
        'conv1_w': kaiming((d, 2, 7, 7)),
        'bn1': bn(d),
        'fc_w': jax.random.uniform(next(keys), (1, d), jnp.float32, -bound, bound),
        'fc_b': jax.random.uniform(next(keys), (1,), jnp.float32, -bound, bound),
    }
    for li in range(1, 5):
        blocks = []
        for _ in range(2):  # two BasicBlocks per layer, no downsample (stride 1, D->D)
            blocks.append({
                'conv1_w': kaiming((d, d, 3, 3)),
                'bn1': bn(d),
                'conv2_w': kaiming((d, d, 3, 3)),
                'bn2': bn(d),
            })
        params[f'layer{li}'] = blocks
    return params


def forward(params, x):
    """x: (B, 1, N, N) float32, NCHW like the PyTorch module. Returns (out, y)."""
    b, _, n, _ = x.shape
    d = params['conv1_w'].shape[0]

    x0 = x[:, 0]                                      # (B, N, N)
    dist = cdist_batched(x0)                          # torch.cdist(x, x)
    y = jnp.stack([x0, dist], axis=0)                 # channel-first (2, B, N, N)

    y = conv_bn_t(y, params['conv1_w'], params['bn1'], 7, 3, relu=True)
    for blk in params['layer1']:
        y = basic_block(y, blk)
    for blk in params['layer2']:
        y = basic_block(y, blk)

    # y <- y @ y^T over the spatial (N, N) matrix, per (channel, batch)
    ymat = bmm_self_t(y.reshape(d * b, n, n))
    y = ymat.reshape(d, b, n, n)

    for blk in params['layer3']:
        y = basic_block(y, blk)
    for blk in params['layer4']:
        y = basic_block(y, blk)

    # fc: Linear(D, 1) over the channel dim -> lane-dense (1, B*N*N) matmul
    logits = matmul_bias_act(
        params['fc_w'], y.reshape(d, b * n * n),
        params['fc_b'][:, None], residual=None, relu=False,
    ).reshape(b, n, n)

    # sinkhorn + y @ x.squeeze(1) @ y^T, fused in one kernel
    out, y_sink = sinkhorn_yxy(logits, x0)
    return out, y_sink


if __name__ == "__main__":
    B, N, MODEL_DIM = 2, 16, 32
    key = jax.random.PRNGKey(0)
    pkey, xkey = jax.random.split(key)
    params = init_params(pkey, MODEL_DIM)
    x = jax.random.normal(xkey, (B, 1, N, N), dtype=jnp.float32)

    out, y = jax.jit(forward)(params, x)
    jax.block_until_ready((out, y))
    assert out.shape == (B, N, N) and y.shape == (B, N, N)
    print("KERNEL_OK")
</pallas_src>

<mosaic_0001>
module attributes {stable_mosaic.version = 11 : i64} {
  func.func @_cdist_kernel(%arg0: i32, %arg1: memref<2x16x16xf32, #tpu.memory_space<vmem>>, %arg2: memref<2x16x16xf32, #tpu.memory_space<vmem>>) attributes {dimension_semantics = [#tpu.dimension_semantics<arbitrary>], iteration_bounds = array<i64: 1>, scalar_prefetch = 0 : i64, scratch_operands = 0 : i64, tpu.core_type = #tpu.core_type<tc>, window_params = [{pipeline_mode = #tpu.pipeline_mode<synchronous>, transform_indices = @transform_0, window_bounds = array<i64: 2, 16, 16>}, {pipeline_mode = #tpu.pipeline_mode<synchronous>, transform_indices = @transform_1, window_bounds = array<i64: 2, 16, 16>}]} {
    %c0 = arith.constant 0 : index
    %c0_0 = arith.constant 0 : index
    %c0_1 = arith.constant 0 : index
    %0 = vector.load %arg1[%c0, %c0_0, %c0_1] : memref<2x16x16xf32, #tpu.memory_space<vmem>>, vector<2x16x16xf32>
    "tpu.trace_start"() <{level = 10 : i32, message = "bij,bkj->bik"}> : () -> ()
    %cst = arith.constant dense<0.000000e+00> : vector<2x16x16xf32>
    %1 = tpu.matmul %0, %0, %cst {dimension_numbers = #tpu.dot_dimension_numbers<[2], [2], [1], [1], [0, 0, 0, 1, 1, 1], [0], [0]>} : vector<2x16x16xf32>, vector<2x16x16xf32>, vector<2x16x16xf32> -> vector<2x16x16xf32>
    "tpu.trace_stop"() : () -> ()
    %2 = arith.mulf %0, %0 : vector<2x16x16xf32>
    %cst_2 = arith.constant dense<0.000000e+00> : vector<2x16xf32>
    %3 = vector.multi_reduction <add>, %2, %cst_2 [2] : vector<2x16x16xf32> to vector<2x16xf32>
    %4 = vector.shape_cast %3 : vector<2x16xf32> to vector<2x16x1xf32>
    %5 = tpu.iota {dimensions = array<i32: 1>} : vector<2x16x16xi32>
    %6 = tpu.iota {dimensions = array<i32: 2>} : vector<2x16x16xi32>
    %7 = arith.cmpi eq, %5, %6 : vector<2x16x16xi32>
    %cst_3 = arith.constant 0.000000e+00 : f32
    %8 = vector.broadcast %cst_3 : f32 to vector<2x16x16xf32>
    %9 = arith.select %7, %1, %8 : vector<2x16x16xi1>, vector<2x16x16xf32>
    %cst_4 = arith.constant dense<0.000000e+00> : vector<2x16xf32>
    %10 = vector.multi_reduction <add>, %9, %cst_4 [1] : vector<2x16x16xf32> to vector<2x16xf32>
    %11 = vector.shape_cast %10 : vector<2x16xf32> to vector<2x1x16xf32>
    %12 = vector.broadcast %4 : vector<2x16x1xf32> to vector<2x16x16xf32>
    %13 = vector.broadcast %11 : vector<2x1x16xf32> to vector<2x16x16xf32>
    %14 = arith.addf %12, %13 : vector<2x16x16xf32>
    %cst_5 = arith.constant 2.000000e+00 : f32
    %15 = vector.broadcast %cst_5 : f32 to vector<2x16x16xf32>
    %16 = arith.mulf %15, %1 : vector<2x16x16xf32>
    %17 = arith.subf %14, %16 : vector<2x16x16xf32>
    %cst_6 = arith.constant 0.000000e+00 : f32
    %18 = vector.broadcast %cst_6 : f32 to vector<2x16x16xf32>
    %19 = arith.maximumf %17, %18 : vector<2x16x16xf32>
    %20 = math.sqrt %19 : vector<2x16x16xf32>
    %c0_7 = arith.constant 0 : index
    %c0_8 = arith.constant 0 : index
    %c0_9 = arith.constant 0 : index
    %21 = vector.load %arg2[%c0_7, %c0_8, %c0_9] : memref<2x16x16xf32, #tpu.memory_space<vmem>>, vector<2x16x16xf32>
    tpu.vector_store %arg2[%c0_7, %c0_8, %c0_9], %20 {strides = array<i32>} : memref<2x16x16xf32, #tpu.memory_space<vmem>>, vector<2x16x16xf32>,
    return
  }
  func.func @transform_0(%arg0: i32) -> (i32, i32, i32) {
    %c0_i32 = arith.constant 0 : i32
    %c0_i32_0 = arith.constant 0 : i32
    %c0_i32_1 = arith.constant 0 : i32
    %c0_i32_2 = arith.constant 0 : i32
    return %c0_i32, %c0_i32_0, %c0_i32_1 : i32, i32, i32
  }
  func.func @transform_1(%arg0: i32) -> (i32, i32, i32) {
    %c0_i32 = arith.constant 0 : i32
    %c0_i32_0 = arith.constant 0 : i32
    %c0_i32_1 = arith.constant 0 : i32
    %c0_i32_2 = arith.constant 0 : i32
    return %c0_i32, %c0_i32_0, %c0_i32_1 : i32, i32, i32
  }
}

module attributes {stable_mosaic.version = 11 : i64} {
  func.func @_matmul_bias_act_kernel(%arg0: i32, %arg1: memref<32x98xf32, #tpu.memory_space<vmem>>, %arg2: memref<98x256xf32, #tpu.memory_space<vmem>>, %arg3: memref<32x1xf32, #tpu.memory_space<vmem>>, %arg4: memref<32x256xf32, #tpu.memory_space<vmem>>) attributes {dimension_semantics = [#tpu.dimension_semantics<parallel>], iteration_bounds = array<i64: 2>, scalar_prefetch = 0 : i64, scratch_operands = 0 : i64, tpu.core_type = #tpu.core_type<tc>, window_params = [{pipeline_mode = #tpu.pipeline_mode<synchronous>, transform_indices = @transform_0, window_bounds = array<i64: 32, 98>}, {transform_indices = @transform_1, window_bounds = array<i64: 98, 256>}, {pipeline_mode = #tpu.pipeline_mode<synchronous>, transform_indices = @transform_2, window_bounds = array<i64: 32, 1>}, {transform_indices = @transform_3, window_bounds = array<i64: 32, 256>}]} {
    %c0 = arith.constant 0 : index
    %c0_0 = arith.constant 0 : index
    %0 = vector.load %arg1[%c0, %c0_0] : memref<32x98xf32, #tpu.memory_space<vmem>>, vector<32x98xf32>
    %c0_1 = arith.constant 0 : index
    %c0_2 = arith.constant 0 : index
    %1 = vector.load %arg2[%c0_1, %c0_2] : memref<98x256xf32, #tpu.memory_space<vmem>>, vector<98x256xf32>
    %cst = arith.constant dense<0.000000e+00> : vector<32x256xf32>
    %2 = tpu.matmul %0, %1, %cst {dimension_numbers = #tpu.dot_dimension_numbers<[1], [0], [0], [1], [0, 0, 1, 1], [], []>} : vector<32x98xf32>, vector<98x256xf32>, vector<32x256xf32> -> vector<32x256xf32>
    %c0_3 = arith.constant 0 : index
    %c0_4 = arith.constant 0 : index
    %3 = vector.load %arg3[%c0_3, %c0_4] : memref<32x1xf32, #tpu.memory_space<vmem>>, vector<32x1xf32>
    %4 = vector.broadcast %3 : vector<32x1xf32> to vector<32x256xf32>
    %5 = arith.addf %2, %4 : vector<32x256xf32>
    %cst_5 = arith.constant 0.000000e+00 : f32
    %6 = vector.broadcast %cst_5 : f32 to vector<32x256xf32>
    %7 = arith.maximumf %5, %6 : vector<32x256xf32>
    %c0_6 = arith.constant 0 : index
    %c0_7 = arith.constant 0 : index
    %8 = vector.load %arg4[%c0_6, %c0_7] : memref<32x256xf32, #tpu.memory_space<vmem>>, vector<32x256xf32>
    tpu.vector_store %arg4[%c0_6, %c0_7], %7 {strides = array<i32>} : memref<32x256xf32, #tpu.memory_space<vmem>>, vector<32x256xf32>,
    return
  }
  func.func @transform_0(%arg0: i32) -> (i32, i32) {
    %c0_i32 = arith.constant 0 : i32
    %c0_i32_0 = arith.constant 0 : i32
    %c0_i32_1 = arith.constant 0 : i32
    return %c0_i32, %c0_i32_0 : i32, i32
  }
  func.func @transform_1(%arg0: i32) -> (i32, i32) {
    %c0_i32 = arith.constant 0 : i32
    %c0_i32_0 = arith.constant 0 : i32
    return %c0_i32, %arg0 : i32, i32
  }
  func.func @transform_2(%arg0: i32) -> (i32, i32) {
    %c0_i32 = arith.constant 0 : i32
    %c0_i32_0 = arith.constant 0 : i32
    %c0_i32_1 = arith.constant 0 : i32
    return %c0_i32, %c0_i32_0 : i32, i32
  }
  func.func @transform_3(%arg0: i32) -> (i32, i32) {
    %c0_i32 = arith.constant 0 : i32
    %c0_i32_0 = arith.constant 0 : i32
    return %c0_i32, %arg0 : i32, i32
  }
}

module attributes {stable_mosaic.version = 11 : i64} {
  func.func @_matmul_bias_act_kernel(%arg0: i32, %arg1: memref<32x288xf32, #tpu.memory_space<vmem>>, %arg2: memref<288x256xf32, #tpu.memory_space<vmem>>, %arg3: memref<32x1xf32, #tpu.memory_space<vmem>>, %arg4: memref<32x256xf32, #tpu.memory_space<vmem>>) attributes {dimension_semantics = [#tpu.dimension_semantics<parallel>], iteration_bounds = array<i64: 2>, scalar_prefetch = 0 : i64, scratch_operands = 0 : i64, tpu.core_type = #tpu.core_type<tc>, window_params = [{pipeline_mode = #tpu.pipeline_mode<synchronous>, transform_indices = @transform_0, window_bounds = array<i64: 32, 288>}, {transform_indices = @transform_1, window_bounds = array<i64: 288, 256>}, {pipeline_mode = #tpu.pipeline_mode<synchronous>, transform_indices = @transform_2, window_bounds = array<i64: 32, 1>}, {transform_indices = @transform_3, window_bounds = array<i64: 32, 256>}]} {
    %c0 = arith.constant 0 : index
    %c0_0 = arith.constant 0 : index
    %0 = vector.load %arg1[%c0, %c0_0] : memref<32x288xf32, #tpu.memory_space<vmem>>, vector<32x288xf32>
    %c0_1 = arith.constant 0 : index
    %c0_2 = arith.constant 0 : index
    %1 = vector.load %arg2[%c0_1, %c0_2] : memref<288x256xf32, #tpu.memory_space<vmem>>, vector<288x256xf32>
    %cst = arith.constant dense<0.000000e+00> : vector<32x256xf32>
    %2 = tpu.matmul %0, %1, %cst {dimension_numbers = #tpu.dot_dimension_numbers<[1], [0], [0], [1], [0, 0, 1, 1], [], []>} : vector<32x288xf32>, vector<288x256xf32>, vector<32x256xf32> -> vector<32x256xf32>
    %c0_3 = arith.constant 0 : index
    %c0_4 = arith.constant 0 : index
    %3 = vector.load %arg3[%c0_3, %c0_4] : memref<32x1xf32, #tpu.memory_space<vmem>>, vector<32x1xf32>
    %4 = vector.broadcast %3 : vector<32x1xf32> to vector<32x256xf32>
    %5 = arith.addf %2, %4 : vector<32x256xf32>
    %cst_5 = arith.constant 0.000000e+00 : f32
    %6 = vector.broadcast %cst_5 : f32 to vector<32x256xf32>
    %7 = arith.maximumf %5, %6 : vector<32x256xf32>
    %c0_6 = arith.constant 0 : index
    %c0_7 = arith.constant 0 : index
    %8 = vector.load %arg4[%c0_6, %c0_7] : memref<32x256xf32, #tpu.memory_space<vmem>>, vector<32x256xf32>
    tpu.vector_store %arg4[%c0_6, %c0_7], %7 {strides = array<i32>} : memref<32x256xf32, #tpu.memory_space<vmem>>, vector<32x256xf32>,
    return
  }
  func.func @transform_0(%arg0: i32) -> (i32, i32) {
    %c0_i32 = arith.constant 0 : i32
    %c0_i32_0 = arith.constant 0 : i32
    %c0_i32_1 = arith.constant 0 : i32
    return %c0_i32, %c0_i32_0 : i32, i32
  }
  func.func @transform_1(%arg0: i32) -> (i32, i32) {
    %c0_i32 = arith.constant 0 : i32
    %c0_i32_0 = arith.constant 0 : i32
    return %c0_i32, %arg0 : i32, i32
  }
  func.func @transform_2(%arg0: i32) -> (i32, i32) {
    %c0_i32 = arith.constant 0 : i32
    %c0_i32_0 = arith.constant 0 : i32
    %c0_i32_1 = arith.constant 0 : i32
    return %c0_i32, %c0_i32_0 : i32, i32
  }
  func.func @transform_3(%arg0: i32) -> (i32, i32) {
    %c0_i32 = arith.constant 0 : i32
    %c0_i32_0 = arith.constant 0 : i32
    return %c0_i32, %arg0 : i32, i32
  }
}

module attributes {stable_mosaic.version = 11 : i64} {
  func.func @_matmul_bias_act_kernel(%arg0: i32, %arg1: memref<32x288xf32, #tpu.memory_space<vmem>>, %arg2: memref<288x256xf32, #tpu.memory_space<vmem>>, %arg3: memref<32x1xf32, #tpu.memory_space<vmem>>, %arg4: memref<32x256xf32, #tpu.memory_space<vmem>>, %arg5: memref<32x256xf32, #tpu.memory_space<vmem>>) attributes {dimension_semantics = [#tpu.dimension_semantics<parallel>], iteration_bounds = array<i64: 2>, scalar_prefetch = 0 : i64, scratch_operands = 0 : i64, tpu.core_type = #tpu.core_type<tc>, window_params = [{pipeline_mode = #tpu.pipeline_mode<synchronous>, transform_indices = @transform_0, window_bounds = array<i64: 32, 288>}, {transform_indices = @transform_1, window_bounds = array<i64: 288, 256>}, {pipeline_mode = #tpu.pipeline_mode<synchronous>, transform_indices = @transform_2, window_bounds = array<i64: 32, 1>}, {transform_indices = @transform_3, window_bounds = array<i64: 32, 256>}, {transform_indices = @transform_4, window_bounds = array<i64: 32, 256>}]} {
    %c0 = arith.constant 0 : index
    %c0_0 = arith.constant 0 : index
    %0 = vector.load %arg1[%c0, %c0_0] : memref<32x288xf32, #tpu.memory_space<vmem>>, vector<32x288xf32>
    %c0_1 = arith.constant 0 : index
    %c0_2 = arith.constant 0 : index
    %1 = vector.load %arg2[%c0_1, %c0_2] : memref<288x256xf32, #tpu.memory_space<vmem>>, vector<288x256xf32>
    %cst = arith.constant dense<0.000000e+00> : vector<32x256xf32>
    %2 = tpu.matmul %0, %1, %cst {dimension_numbers = #tpu.dot_dimension_numbers<[1], [0], [0], [1], [0, 0, 1, 1], [], []>} : vector<32x288xf32>, vector<288x256xf32>, vector<32x256xf32> -> vector<32x256xf32>
    %c0_3 = arith.constant 0 : index
    %c0_4 = arith.constant 0 : index
    %3 = vector.load %arg3[%c0_3, %c0_4] : memref<32x1xf32, #tpu.memory_space<vmem>>, vector<32x1xf32>
    %4 = vector.broadcast %3 : vector<32x1xf32> to vector<32x256xf32>
    %5 = arith.addf %2, %4 : vector<32x256xf32>
    %c0_5 = arith.constant 0 : index
    %c0_6 = arith.constant 0 : index
    %6 = vector.load %arg4[%c0_5, %c0_6] : memref<32x256xf32, #tpu.memory_space<vmem>>, vector<32x256xf32>
    %7 = arith.addf %5, %6 : vector<32x256xf32>
    %cst_7 = arith.constant 0.000000e+00 : f32
    %8 = vector.broadcast %cst_7 : f32 to vector<32x256xf32>
    %9 = arith.maximumf %7, %8 : vector<32x256xf32>
    %c0_8 = arith.constant 0 : index
    %c0_9 = arith.constant 0 : index
    %10 = vector.load %arg5[%c0_8, %c0_9] : memref<32x256xf32, #tpu.memory_space<vmem>>, vector<32x256xf32>
    tpu.vector_store %arg5[%c0_8, %c0_9], %9 {strides = array<i32>} : memref<32x256xf32, #tpu.memory_space<vmem>>, vector<32x256xf32>,
    return
  }
  func.func @transform_0(%arg0: i32) -> (i32, i32) {
    %c0_i32 = arith.constant 0 : i32
    %c0_i32_0 = arith.constant 0 : i32
    %c0_i32_1 = arith.constant 0 : i32
    return %c0_i32, %c0_i32_0 : i32, i32
  }
  func.func @transform_1(%arg0: i32) -> (i32, i32) {
    %c0_i32 = arith.constant 0 : i32
    %c0_i32_0 = arith.constant 0 : i32
    return %c0_i32, %arg0 : i32, i32
  }
  func.func @transform_2(%arg0: i32) -> (i32, i32) {
    %c0_i32 = arith.constant 0 : i32
    %c0_i32_0 = arith.constant 0 : i32
    %c0_i32_1 = arith.constant 0 : i32
    return %c0_i32, %c0_i32_0 : i32, i32
  }
  func.func @transform_3(%arg0: i32) -> (i32, i32) {
    %c0_i32 = arith.constant 0 : i32
    %c0_i32_0 = arith.constant 0 : i32
    return %c0_i32, %arg0 : i32, i32
  }
  func.func @transform_4(%arg0: i32) -> (i32, i32) {
    %c0_i32 = arith.constant 0 : i32
    %c0_i32_0 = arith.constant 0 : i32
    return %c0_i32, %arg0 : i32, i32
  }
}

module attributes {stable_mosaic.version = 11 : i64} {
  func.func @_bmm_selfT_kernel(%arg0: i32, %arg1: memref<32x16x16xf32, #tpu.memory_space<vmem>>, %arg2: memref<32x16x16xf32, #tpu.memory_space<vmem>>) attributes {dimension_semantics = [#tpu.dimension_semantics<parallel>], iteration_bounds = array<i64: 2>, scalar_prefetch = 0 : i64, scratch_operands = 0 : i64, tpu.core_type = #tpu.core_type<tc>, window_params = [{transform_indices = @transform_0, window_bounds = array<i64: 32, 16, 16>}, {transform_indices = @transform_1, window_bounds = array<i64: 32, 16, 16>}]} {
    %c0 = arith.constant 0 : index
    %c0_0 = arith.constant 0 : index
    %c0_1 = arith.constant 0 : index
    %0 = vector.load %arg1[%c0, %c0_0, %c0_1] : memref<32x16x16xf32, #tpu.memory_space<vmem>>, vector<32x16x16xf32>
    "tpu.trace_start"() <{level = 10 : i32, message = "gij,gkj->gik"}> : () -> ()
    %cst = arith.constant dense<0.000000e+00> : vector<32x16x16xf32>
    %1 = tpu.matmul %0, %0, %cst {dimension_numbers = #tpu.dot_dimension_numbers<[2], [2], [1], [1], [0, 0, 0, 1, 1, 1], [0], [0]>} : vector<32x16x16xf32>, vector<32x16x16xf32>, vector<32x16x16xf32> -> vector<32x16x16xf32>
    "tpu.trace_stop"() : () -> ()
    %c0_2 = arith.constant 0 : index
    %c0_3 = arith.constant 0 : index
    %c0_4 = arith.constant 0 : index
    %2 = vector.load %arg2[%c0_2, %c0_3, %c0_4] : memref<32x16x16xf32, #tpu.memory_space<vmem>>, vector<32x16x16xf32>
    tpu.vector_store %arg2[%c0_2, %c0_3, %c0_4], %1 {strides = array<i32>} : memref<32x16x16xf32, #tpu.memory_space<vmem>>, vector<32x16x16xf32>,
    return
  }
  func.func @transform_0(%arg0: i32) -> (i32, i32, i32) {
    %c0_i32 = arith.constant 0 : i32
    %c0_i32_0 = arith.constant 0 : i32
    %c0_i32_1 = arith.constant 0 : i32
    return %arg0, %c0_i32, %c0_i32_0 : i32, i32, i32
  }
  func.func @transform_1(%arg0: i32) -> (i32, i32, i32) {
    %c0_i32 = arith.constant 0 : i32
    %c0_i32_0 = arith.constant 0 : i32
    %c0_i32_1 = arith.constant 0 : i32
    return %arg0, %c0_i32, %c0_i32_0 : i32, i32, i32
  }
}

module attributes {stable_mosaic.version = 11 : i64} {
  func.func @_matmul_bias_act_kernel(%arg0: i32, %arg1: memref<1x32xf32, #tpu.memory_space<vmem>>, %arg2: memref<32x256xf32, #tpu.memory_space<vmem>>, %arg3: memref<1x1xf32, #tpu.memory_space<vmem>>, %arg4: memref<1x256xf32, #tpu.memory_space<vmem>>) attributes {dimension_semantics = [#tpu.dimension_semantics<parallel>], iteration_bounds = array<i64: 2>, scalar_prefetch = 0 : i64, scratch_operands = 0 : i64, tpu.core_type = #tpu.core_type<tc>, window_params = [{pipeline_mode = #tpu.pipeline_mode<synchronous>, transform_indices = @transform_0, window_bounds = array<i64: 1, 32>}, {transform_indices = @transform_1, window_bounds = array<i64: 32, 256>}, {pipeline_mode = #tpu.pipeline_mode<synchronous>, transform_indices = @transform_2, window_bounds = array<i64: 1, 1>}, {transform_indices = @transform_3, window_bounds = array<i64: 1, 256>}]} {
    %c0 = arith.constant 0 : index
    %c0_0 = arith.constant 0 : index
    %0 = vector.load %arg1[%c0, %c0_0] : memref<1x32xf32, #tpu.memory_space<vmem>>, vector<1x32xf32>
    %c0_1 = arith.constant 0 : index
    %c0_2 = arith.constant 0 : index
    %1 = vector.load %arg2[%c0_1, %c0_2] : memref<32x256xf32, #tpu.memory_space<vmem>>, vector<32x256xf32>
    %cst = arith.constant dense<0.000000e+00> : vector<1x256xf32>
    %2 = tpu.matmul %0, %1, %cst {dimension_numbers = #tpu.dot_dimension_numbers<[1], [0], [0], [1], [0, 0, 1, 1], [], []>} : vector<1x32xf32>, vector<32x256xf32>, vector<1x256xf32> -> vector<1x256xf32>
    %c0_3 = arith.constant 0 : index
    %c0_4 = arith.constant 0 : index
    %3 = vector.load %arg3[%c0_3, %c0_4] : memref<1x1xf32, #tpu.memory_space<vmem>>, vector<1x1xf32>
    %4 = vector.broadcast %3 : vector<1x1xf32> to vector<1x256xf32>
    %5 = arith.addf %2, %4 : vector<1x256xf32>
    %c0_5 = arith.constant 0 : index
    %c0_6 = arith.constant 0 : index
    %6 = vector.load %arg4[%c0_5, %c0_6] : memref<1x256xf32, #tpu.memory_space<vmem>>, vector<1x256xf32>
    tpu.vector_store %arg4[%c0_5, %c0_6], %5 {strides = array<i32>} : memref<1x256xf32, #tpu.memory_space<vmem>>, vector<1x256xf32>,
    return
  }
  func.func @transform_0(%arg0: i32) -> (i32, i32) {
    %c0_i32 = arith.constant 0 : i32
    %c0_i32_0 = arith.constant 0 : i32
    %c0_i32_1 = arith.constant 0 : i32
    return %c0_i32, %c0_i32_0 : i32, i32
  }
  func.func @transform_1(%arg0: i32) -> (i32, i32) {
    %c0_i32 = arith.constant 0 : i32
    %c0_i32_0 = arith.constant 0 : i32
    return %c0_i32, %arg0 : i32, i32
  }
  func.func @transform_2(%arg0: i32) -> (i32, i32) {
    %c0_i32 = arith.constant 0 : i32
    %c0_i32_0 = arith.constant 0 : i32
    %c0_i32_1 = arith.constant 0 : i32
    return %c0_i32, %c0_i32_0 : i32, i32
  }
  func.func @transform_3(%arg0: i32) -> (i32, i32) {
    %c0_i32 = arith.constant 0 : i32
    %c0_i32_0 = arith.constant 0 : i32
    return %c0_i32, %arg0 : i32, i32
  }
}

module attributes {stable_mosaic.version = 11 : i64} {
  func.func @_sinkhorn_yxy_kernel(%arg0: i32, %arg1: memref<1x16x16xf32, #tpu.memory_space<vmem>>, %arg2: memref<1x16x16xf32, #tpu.memory_space<vmem>>, %arg3: memref<1x16x16xf32, #tpu.memory_space<vmem>>, %arg4: memref<1x16x16xf32, #tpu.memory_space<vmem>>) attributes {dimension_semantics = [#tpu.dimension_semantics<parallel>], iteration_bounds = array<i64: 2>, scalar_prefetch = 0 : i64, scratch_operands = 0 : i64, tpu.core_type = #tpu.core_type<tc>, window_params = [{transform_indices = @transform_0, window_bounds = array<i64: 1, 16, 16>}, {transform_indices = @transform_1, window_bounds = array<i64: 1, 16, 16>}, {transform_indices = @transform_2, window_bounds = array<i64: 1, 16, 16>}, {transform_indices = @transform_3, window_bounds = array<i64: 1, 16, 16>}]} {
    %c0 = arith.constant 0 : index
    %c0_0 = arith.constant 0 : index
    %c0_1 = arith.constant 0 : index
    %0 = vector.load %arg1[%c0, %c0_0, %c0_1] : memref<1x16x16xf32, #tpu.memory_space<vmem>>, vector<1x16x16xf32>
    %1 = vector.shape_cast %0 : vector<1x16x16xf32> to vector<16x16xf32>
    %c0_i32 = arith.constant 0 : i32
    %c20_i32 = arith.constant 20 : i32
    %2 = arith.addi %c0_i32, %c20_i32 : i32
    %c1_i32 = arith.constant 1 : i32
    %3 = scf.for %arg5 = %c0_i32 to %2 step %c1_i32 iter_args(%arg6 = %1) -> (vector<16x16xf32>)  : i32 {
      %cst_12 = arith.constant dense<0xFF800000> : vector<16xf32>
      %15 = vector.multi_reduction <maximumf>, %arg6, %cst_12 [0] : vector<16x16xf32> to vector<16xf32>
      %16 = vector.shape_cast %15 : vector<16xf32> to vector<1x16xf32>
      %17 = vector.broadcast %16 : vector<1x16xf32> to vector<16x16xf32>
      %18 = arith.subf %arg6, %17 : vector<16x16xf32>
      %19 = math.exp %18 : vector<16x16xf32>
      %cst_13 = arith.constant dense<0.000000e+00> : vector<16xf32>
      %20 = vector.multi_reduction <add>, %19, %cst_13 [0] : vector<16x16xf32> to vector<16xf32>
      %21 = vector.shape_cast %20 : vector<16xf32> to vector<1x16xf32>
      %22 = math.log %21 : vector<1x16xf32>
      %23 = arith.addf %22, %16 : vector<1x16xf32>
      %24 = vector.broadcast %23 : vector<1x16xf32> to vector<16x16xf32>
      %25 = arith.subf %arg6, %24 : vector<16x16xf32>
      %cst_14 = arith.constant dense<0xFF800000> : vector<16xf32>
      %26 = vector.multi_reduction <maximumf>, %25, %cst_14 [1] : vector<16x16xf32> to vector<16xf32>
      %27 = vector.shape_cast %26 : vector<16xf32> to vector<16x1xf32>
      %28 = vector.broadcast %27 : vector<16x1xf32> to vector<16x16xf32>
      %29 = arith.subf %25, %28 : vector<16x16xf32>
      %30 = math.exp %29 : vector<16x16xf32>
      %cst_15 = arith.constant dense<0.000000e+00> : vector<16xf32>
      %31 = vector.multi_reduction <add>, %30, %cst_15 [1] : vector<16x16xf32> to vector<16xf32>
      %32 = vector.shape_cast %31 : vector<16xf32> to vector<16x1xf32>
      %33 = math.log %32 : vector<16x1xf32>
      %34 = arith.addf %33, %27 : vector<16x1xf32>
      %35 = vector.broadcast %34 : vector<16x1xf32> to vector<16x16xf32>
      %36 = arith.subf %25, %35 : vector<16x16xf32>
      scf.yield %36 : vector<16x16xf32>
    }
    %4 = math.exp %3 : vector<16x16xf32>
    %c0_2 = arith.constant 0 : index
    %c0_3 = arith.constant 0 : index
    %c0_4 = arith.constant 0 : index
    %5 = vector.load %arg4[%c0_2, %c0_3, %c0_4] : memref<1x16x16xf32, #tpu.memory_space<vmem>>, vector<1x16x16xf32>
    %6 = vector.shape_cast %5 : vector<1x16x16xf32> to vector<16x16xf32>
    %7 = vector.shape_cast %4 : vector<16x16xf32> to vector<1x16x16xf32>
    tpu.vector_store %arg4[%c0_2, %c0_3, %c0_4], %7 {strides = array<i32>} : memref<1x16x16xf32, #tpu.memory_space<vmem>>, vector<1x16x16xf32>,
    %c0_5 = arith.constant 0 : index
    %c0_6 = arith.constant 0 : index
    %c0_7 = arith.constant 0 : index
    %8 = vector.load %arg2[%c0_5, %c0_6, %c0_7] : memref<1x16x16xf32, #tpu.memory_space<vmem>>, vector<1x16x16xf32>
    %9 = vector.shape_cast %8 : vector<1x16x16xf32> to vector<16x16xf32>
    %cst = arith.constant dense<0.000000e+00> : vector<16x16xf32>
    %10 = tpu.matmul %4, %9, %cst {dimension_numbers = #tpu.dot_dimension_numbers<[1], [0], [0], [1], [0, 0, 1, 1], [], []>} : vector<16x16xf32>, vector<16x16xf32>, vector<16x16xf32> -> vector<16x16xf32>
    "tpu.trace_start"() <{level = 10 : i32, message = "ik,jk->ij"}> : () -> ()
    %cst_8 = arith.constant dense<0.000000e+00> : vector<16x16xf32>
    %11 = tpu.matmul %10, %4, %cst_8 {dimension_numbers = #tpu.dot_dimension_numbers<[1], [1], [0], [0], [0, 0, 1, 0], [], []>} : vector<16x16xf32>, vector<16x16xf32>, vector<16x16xf32> -> vector<16x16xf32>
    "tpu.trace_stop"() : () -> ()
    %c0_9 = arith.constant 0 : index
    %c0_10 = arith.constant 0 : index
    %c0_11 = arith.constant 0 : index
    %12 = vector.load %arg3[%c0_9, %c0_10, %c0_11] : memref<1x16x16xf32, #tpu.memory_space<vmem>>, vector<1x16x16xf32>
    %13 = vector.shape_cast %12 : vector<1x16x16xf32> to vector<16x16xf32>
    %14 = vector.shape_cast %11 : vector<16x16xf32> to vector<1x16x16xf32>
    tpu.vector_store %arg3[%c0_9, %c0_10, %c0_11], %14 {strides = array<i32>} : memref<1x16x16xf32, #tpu.memory_space<vmem>>, vector<1x16x16xf32>,
    return
  }
  func.func @transform_0(%arg0: i32) -> (i32, i32, i32) {
    %c0_i32 = arith.constant 0 : i32
    %c0_i32_0 = arith.constant 0 : i32
    %c0_i32_1 = arith.constant 0 : i32
    return %arg0, %c0_i32, %c0_i32_0 : i32, i32, i32
  }
  func.func @transform_1(%arg0: i32) -> (i32, i32, i32) {
    %c0_i32 = arith.constant 0 : i32
    %c0_i32_0 = arith.constant 0 : i32
    %c0_i32_1 = arith.constant 0 : i32
    return %arg0, %c0_i32, %c0_i32_0 : i32, i32, i32
  }
  func.func @transform_2(%arg0: i32) -> (i32, i32, i32) {
    %c0_i32 = arith.constant 0 : i32
    %c0_i32_0 = arith.constant 0 : i32
    %c0_i32_1 = arith.constant 0 : i32
    return %arg0, %c0_i32, %c0_i32_0 : i32, i32, i32
  }
  func.func @transform_3(%arg0: i32) -> (i32, i32, i32) {
    %c0_i32 = arith.constant 0 : i32
    %c0_i32_0 = arith.constant 0 : i32
    %c0_i32_1 = arith.constant 0 : i32
    return %arg0, %c0_i32, %c0_i32_0 : i32, i32, i32
  }
}

</mosaic_0001>

<llo_original>
// kernel: forward.21
$region0: #{forward.21}
  #allocation0 [shape = 'u32[]', space=smem, size = 0x4, offset = 0x4, fixed_abs, tag = 'smem constant byte address 0x4 - core index']
  #allocation1 [shape = 'u32[144,128]{1,0:T(1,128)}', space=vmem, size = 0x12000, scoped, tag = 'internal scratch']
  %s0 = inlined_call_operand.vmem [shape: f32[2,16,16], index: 0, kind: input, shape index: {}]
  %s1 = inlined_call_operand.vmem [shape: f32[2,16,16], index: 1, kind: output, shape index: {}]
  %s2 = sld [smem:[#allocation0]]
  $region14: #{forward.21} parent=0
    _
  %s4 = ssub.s32 1, %s2
  %s5 = scalar_select 0, %s4, %s2
  // Predicated region
  $region2: #{forward.21} parent=0 // pred_check
    _
  $region3: #{forward.21} parent=0 // pred_check_branch
    %7 = sbr.rel (0) target = $region5
  $region4: #{forward.21} parent=0 // pred_region
    _
  $region5: #{forward.21} parent=0 // pred_fallthru
    _
  %v8 = vld [vmem:[%s0] sm:$0xff]
  %v9 = vld [vmem:[%s0 + $0x8] sm:$0xff]
  %v10 = vld [vmem:[%s0 + $0x10] sm:$0xff]
  %v11 = vld [vmem:[%s0 + $0x18] sm:$0xff]
  %vm12 = vcmask 130048
  %v14 = vsel %vm12, %v8, 0
  %v17 = vsel %vm12, %v9, 0
  %19 = vmatprep.subr.mxu0 0.0
  %20 = vmatpush1.xpose.msra.mxu0 0.0
  %21 = vmatprep.subr.mxu0 0.0
  %22 = vmatpush1.xpose.msra.mxu0 0.0
  %23 = vmatprep.subr.mxu0 0.0
  %24 = vmatpush1.xpose.msra.mxu0 0.0
  %25 = vmatprep.subr.mxu0 0.0
  %26 = vmatpush1.xpose.msra.mxu0 0.0
  %27 = vmatprep.subr.mxu0 0.0
  %28 = vmatpush1.xpose.msra.mxu0 0.0
  %29 = vmatprep.subr.mxu0 0.0
  %30 = vmatpush1.xpose.msra.mxu0 0.0
  %31 = vmatprep.subr.mxu0 0.0
  %32 = vmatpush1.xpose.msra.mxu0 0.0
  %33 = vmatprep.subr.mxu0 0.0
  %34 = vmatpush1.xpose.msra.mxu0 0.0
  %35 = vmatprep.subr.mxu0 0.0
  %36 = vmatpush1.xpose.msra.mxu0 0.0
  %37 = vmatprep.subr.mxu0 0.0
  %38 = vmatpush1.xpose.msra.mxu0 0.0
  %39 = vmatprep.subr.mxu0 0.0
  %40 = vmatpush1.xpose.msra.mxu0 0.0
  %41 = vmatprep.subr.mxu0 0.0
  %42 = vmatpush1.xpose.msra.mxu0 0.0
  %43 = vmatprep.subr.mxu0 0.0
  %44 = vmatpush1.xpose.msra.mxu0 0.0
  %45 = vmatprep.subr.mxu0 0.0
  %46 = vmatpush1.xpose.msra.mxu0 0.0
  %47 = vmatprep.subr.mxu0 0.0
  %48 = vmatpush1.xpose.msra.mxu0 %v17
  %49 = vmatprep.subr.mxu0 0.0
  %50 = vmatpush1.xpose.msra.mxu0 %v14
  %51 = vmatprep.subr.mxu0 0.0
  %52 = vmatpush2.xpose.msra.mxu0 0.0
  %53 = vmatprep.subr.mxu0 0.0
  %54 = vmatpush2.xpose.msra.mxu0 0.0
  %55 = vmatprep.subr.mxu0 0.0
  %56 = vmatpush2.xpose.msra.mxu0 0.0
  %57 = vmatprep.subr.mxu0 0.0
  %58 = vmatpush2.xpose.msra.mxu0 0.0
  %59 = vmatprep.subr.mxu0 0.0
  %60 = vmatpush2.xpose.msra.mxu0 0.0
  %61 = vmatprep.subr.mxu0 0.0
  %62 = vmatpush2.xpose.msra.mxu0 0.0
  %63 = vmatprep.subr.mxu0 0.0
  %64 = vmatpush2.xpose.msra.mxu0 0.0
  %65 = vmatprep.subr.mxu0 0.0
  %66 = vmatpush2.xpose.msra.mxu0 0.0
  %67 = vmatprep.subr.mxu0 0.0
  %68 = vmatpush2.xpose.msra.mxu0 0.0
  %69 = vmatprep.subr.mxu0 0.0
  %70 = vmatpush2.xpose.msra.mxu0 0.0
  %71 = vmatprep.subr.mxu0 0.0
  %72 = vmatpush2.xpose.msra.mxu0 0.0
  %73 = vmatprep.subr.mxu0 0.0
  %74 = vmatpush2.xpose.msra.mxu0 0.0
  %75 = vmatprep.subr.mxu0 0.0
  %76 = vmatpush2.xpose.msra.mxu0 0.0
  %77 = vmatprep.subr.mxu0 0.0
  %78 = vmatpush2.xpose.msra.mxu0 0.0
  %79 = vmatprep.subr.mxu0 0.0
  %80 = vmatpush2.xpose.msra.mxu0 0.0
  %81 = vmatprep.subr.mxu0 0.0
  %82 = vmatpush2.xpose.msra.mxu0 0.0
  %83 = vmatprep.mubr.f32.mxu0 0.0
  %84 = vmatmul.mubr.f32.gmra.mxu0 %v14
  %v85 = vpop.f32.mrf.mxu0
  %v86 = vadd.f32 0.0, %v85
  %v87 = vpop.f32.mrf.mxu0
  %88 = vmatprep.mubr.f32.mxu0 0.0
  %89 = vmatmul.mubr.f32.gmra.mxu0 %v17
  %v90 = vpop.f32.mrf.mxu0
  %v91 = vadd.f32 0.0, %v90
  %v92 = vpop.f32.mrf.mxu0
  %93 = vdwg.mxu0
  %v95 = vsel %vm12, %v10, 0
  %v98 = vsel %vm12, %v11, 0
  %100 = vmatprep.subr.mxu0 0.0
  %101 = vmatpush1.xpose.msra.mxu0 0.0
  %102 = vmatprep.subr.mxu0 0.0
  %103 = vmatpush1.xpose.msra.mxu0 0.0
  %104 = vmatprep.subr.mxu0 0.0
  %105 = vmatpush1.xpose.msra.mxu0 0.0
  %106 = vmatprep.subr.mxu0 0.0
  %107 = vmatpush1.xpose.msra.mxu0 0.0
  %108 = vmatprep.subr.mxu0 0.0
  %109 = vmatpush1.xpose.msra.mxu0 0.0
  %110 = vmatprep.subr.mxu0 0.0
  %111 = vmatpush1.xpose.msra.mxu0 0.0
  %112 = vmatprep.subr.mxu0 0.0
  %113 = vmatpush1.xpose.msra.mxu0 0.0
  %114 = vmatprep.subr.mxu0 0.0
  %115 = vmatpush1.xpose.msra.mxu0 0.0
  %116 = vmatprep.subr.mxu0 0.0
  %117 = vmatpush1.xpose.msra.mxu0 0.0
  %118 = vmatprep.subr.mxu0 0.0
  %119 = vmatpush1.xpose.msra.mxu0 0.0
  %120 = vmatprep.subr.mxu0 0.0
  %121 = vmatpush1.xpose.msra.mxu0 0.0
  %122 = vmatprep.subr.mxu0 0.0
  %123 = vmatpush1.xpose.msra.mxu0 0.0
  %124 = vmatprep.subr.mxu0 0.0
  %125 = vmatpush1.xpose.msra.mxu0 0.0
  %126 = vmatprep.subr.mxu0 0.0
  %127 = vmatpush1.xpose.msra.mxu0 0.0
  %128 = vmatprep.subr.mxu0 0.0
  %129 = vmatpush1.xpose.msra.mxu0 %v98
  %130 = vmatprep.subr.mxu0 0.0
  %131 = vmatpush1.xpose.msra.mxu0 %v95
  %132 = vmatprep.subr.mxu0 0.0
  %133 = vmatpush2.xpose.msra.mxu0 0.0
  %134 = vmatprep.subr.mxu0 0.0
  %135 = vmatpush2.xpose.msra.mxu0 0.0
  %136 = vmatprep.subr.mxu0 0.0
  %137 = vmatpush2.xpose.msra.mxu0 0.0
  %138 = vmatprep.subr.mxu0 0.0
  %139 = vmatpush2.xpose.msra.mxu0 0.0
  %140 = vmatprep.subr.mxu0 0.0
  %141 = vmatpush2.xpose.msra.mxu0 0.0
  %142 = vmatprep.subr.mxu0 0.0
  %143 = vmatpush2.xpose.msra.mxu0 0.0
  %144 = vmatprep.subr.mxu0 0.0
  %145 = vmatpush2.xpose.msra.mxu0 0.0
  %146 = vmatprep.subr.mxu0 0.0
  %147 = vmatpush2.xpose.msra.mxu0 0.0
  %148 = vmatprep.subr.mxu0 0.0
  %149 = vmatpush2.xpose.msra.mxu0 0.0
  %150 = vmatprep.subr.mxu0 0.0
  %151 = vmatpush2.xpose.msra.mxu0 0.0
  %152 = vmatprep.subr.mxu0 0.0
  %153 = vmatpush2.xpose.msra.mxu0 0.0
  %154 = vmatprep.subr.mxu0 0.0
  %155 = vmatpush2.xpose.msra.mxu0 0.0
  %156 = vmatprep.subr.mxu0 0.0
  %157 = vmatpush2.xpose.msra.mxu0 0.0
  %158 = vmatprep.subr.mxu0 0.0
  %159 = vmatpush2.xpose.msra.mxu0 0.0
  %160 = vmatprep.subr.mxu0 0.0
  %161 = vmatpush2.xpose.msra.mxu0 0.0
  %162 = vmatprep.subr.mxu0 0.0
  %163 = vmatpush2.xpose.msra.mxu0 0.0
  %164 = vmatprep.mubr.f32.mxu0 0.0
  %165 = vmatmul.mubr.f32.gmra.mxu0 %v95
  %v166 = vpop.f32.mrf.mxu0
  %v167 = vadd.f32 0.0, %v166
  %v168 = vpop.f32.mrf.mxu0
  %169 = vmatprep.mubr.f32.mxu0 0.0
  %170 = vmatmul.mubr.f32.gmra.mxu0 %v98
  %v171 = vpop.f32.mrf.mxu0
  %v172 = vadd.f32 0.0, %v171
  %v173 = vpop.f32.mrf.mxu0
  %174 = vdwg.mxu0
  %v175 = vmul.f32 %v8, %v8
  %v176 = vmul.f32 %v9, %v9
  %v177 = vmul.f32 %v10, %v10
  %v178 = vmul.f32 %v11, %v11
  %v179 = vsel %vm12, %v175, 0.0
  %180 = vadd.xlane.f32.xlu0 %v179
  %v181 = vpop.xlane.xlu0 %180
  %v182 = vsel %vm12, %v176, 0.0
  %183 = vadd.xlane.f32.xlu0 %v182
  %v184 = vpop.xlane.xlu0 %183
  %v185 = vsel %vm12, %v177, 0.0
  %186 = vadd.xlane.f32.xlu0 %v185
  %v187 = vpop.xlane.xlu0 %186
  %v188 = vsel %vm12, %v178, 0.0
  %189 = vadd.xlane.f32.xlu0 %v188
  %v190 = vpop.xlane.xlu0 %189
  %v191 = vlaneseq
  %v192 = vshrl.u32 %v191, 7
  %v193 = vadd.s32 %v192, 8
  %v194 = vlaneseq
  %v195 = vand.u32 %v194, 127
  %vm196 = vcmp.eq.s32.totalorder %v192, %v195
  %vm197 = vcmp.eq.s32.totalorder %v193, %v195
  %v198 = vsel %vm196, %v86, 0.0
  %v199 = vsel %vm197, %v91, 0.0
  %v200 = vsel %vm196, %v167, 0.0
  %v201 = vsel %vm197, %v172, 0.0
  %v202 = vsel %vm12, %v198, 0.0
  %v203 = vsel %vm12, %v199, 0.0
  %v204 = vadd.f32 %v202, %v203
  %v205 = vrot.slane %v204, 4
  %v206 = vadd.f32 %v204, %v205
  %v207 = vrot.slane %v206, 2
  %v208 = vadd.f32 %v206, %v207
  %v209 = vrot.slane %v208, 1
  %v210 = vadd.f32 %v208, %v209
  %v211 = vsel %vm12, %v200, 0.0
  %v212 = vsel %vm12, %v201, 0.0
  %v213 = vadd.f32 %v211, %v212
  %v214 = vrot.slane %v213, 4
  %v215 = vadd.f32 %v213, %v214
  %v216 = vrot.slane %v215, 2
  %v217 = vadd.f32 %v215, %v216
  %v218 = vrot.slane %v217, 1
  %v219 = vadd.f32 %v217, %v218
  %v220 = vadd.f32 %v181, %v210
  %v221 = vadd.f32 %v184, %v210
  %v222 = vadd.f32 %v187, %v219
  %v223 = vadd.f32 %v190, %v219
  %v224 = vmul.f32 %v86, 2.0
  %v225 = vmul.f32 %v91, 2.0
  %v226 = vmul.f32 %v167, 2.0
  %v227 = vmul.f32 %v172, 2.0
  %v228 = vsub.f32 %v220, %v224
  %v229 = vsub.f32 %v221, %v225
  %v230 = vsub.f32 %v222, %v226
  %v231 = vsub.f32 %v223, %v227
  %v232 = vmax.f32 %v228, 0.0
  %v233 = vmax.f32 %v229, 0.0
  %v234 = vmax.f32 %v230, 0.0
  %v235 = vmax.f32 %v231, 0.0
  %v236 = vrsqrt.pop %v232
  %v237 = vmul.f32 %v232, %v236
  %vm238 = vcmp.eq.f32.partialorder %v232, inf
  %v239 = vsel %vm238, %v232, %v237
  %vm240 = vcmp.eq.f32.partialorder %v232, 0.0
  %v241 = vand.u32 %v232, 2147483648
  %v242 = vsel %vm240, %v241, %v239
  %v243 = vrsqrt.pop %v233
  %v244 = vmul.f32 %v233, %v243
  %vm245 = vcmp.eq.f32.partialorder %v233, inf
  %v246 = vsel %vm245, %v233, %v244
  %vm247 = vcmp.eq.f32.partialorder %v233, 0.0
  %v248 = vand.u32 %v233, 2147483648
  %v249 = vsel %vm247, %v248, %v246
  %v250 = vrsqrt.pop %v234
  %v251 = vmul.f32 %v234, %v250
  %vm252 = vcmp.eq.f32.partialorder %v234, inf
  %v253 = vsel %vm252, %v234, %v251
  %vm254 = vcmp.eq.f32.partialorder %v234, 0.0
  %v255 = vand.u32 %v234, 2147483648
  %v256 = vsel %vm254, %v255, %v253
  %v257 = vrsqrt.pop %v235
  %v258 = vmul.f32 %v235, %v257
  %vm259 = vcmp.eq.f32.partialorder %v235, inf
  %v260 = vsel %vm259, %v235, %v258
  %vm261 = vcmp.eq.f32.partialorder %v235, 0.0
  %v262 = vand.u32 %v235, 2147483648
  %v263 = vsel %vm261, %v262, %v260
  %264 = vst.msk [vmem:[%s1] sm:$0xff] %vm12, %v242
  %265 = vst.msk [vmem:[%s1 + $0x8] sm:$0xff] %vm12, %v249
  %266 = vst.msk [vmem:[%s1 + $0x10] sm:$0xff] %vm12, %v256
  %267 = vst.msk [vmem:[%s1 + $0x18] sm:$0xff] %vm12, %v263
  // Predicated region
  $region6: #{forward.21} parent=0 // pred_check
    _
  $region7: #{forward.21} parent=0 // pred_check_branch
    %269 = sbr.rel (0) target = $region9
  $region8: #{forward.21} parent=0 // pred_region
    _
  $region9: #{forward.21} parent=0 // pred_fallthru
    _
  // Predicated region
  $region10: #{forward.21} parent=0 // pred_check
    _
  $region11: #{forward.21} parent=0 // pred_check_branch
    %271 = sbr.rel (0) target = $region13
  $region12: #{forward.21} parent=0 // pred_region
    _
  $region13: #{forward.21} parent=0 // pred_fallthru
    _

// kernel: forward.22
$region0: #{forward.22}
  #allocation0 [shape = 'u32[]', space=smem, size = 0x4, offset = 0x4, fixed_abs, tag = 'smem constant byte address 0x4 - core index']
  #allocation1 [shape = 'u32[144,128]{1,0:T(1,128)}', space=vmem, size = 0x12000, scoped, tag = 'internal scratch']
  %s0 = inlined_call_operand.vmem [shape: f32[32,98], index: 0, kind: input, shape index: {}]
  %s1 = inlined_call_operand.vmem [shape: f32[98,512], index: 1, kind: input, shape index: {}]
  %s2 = inlined_call_operand.vmem [shape: f32[32,1], index: 2, kind: input, shape index: {}]
  %s3 = inlined_call_operand.vmem [shape: f32[32,512], index: 3, kind: output, shape index: {}]
  %s4 = sld [smem:[#allocation0]]
  $region87: #{forward.22} parent=0
    _
  %s6 = ssub.s32 1, %s4
  %s7 = scalar_select 0, %s6, %s4
  $region1: #{forward.22} parent=0
    #allocation2 [shape = 'u8[212992]{0}', space=vmem, size = 0x34000, scoped, tag = 'input window, operand 1']
    #allocation3 [shape = 'u8[65536]{0}', space=vmem, size = 0x10000, scoped, tag = 'output window, operand 0']
    loop: start=0, step=1, limit=4
    $region2: #{forward.22} parent=1 // loop_pre_header
      _
    $region3: #{forward.22} parent=1 // loop_header
      %s9 = sphi 0, %s13
      %p10 = scmp.ge.s32.totalorder %s9, 4
      %s17 = sphi 0, %s17
      %s19 = sphi 0, %s17
      %s20 = sphi 0, %s19
      %s34 = sphi 0, %s20
      %s40 = sphi 0, %s42
      %s43 = sphi 0, %s40
      %s44 = sphi 0, %s43
      %s60 = sphi 0, %s44
      %s64 = sphi 0, %s64
      %s66 = sphi 0, %s64
      %s67 = sphi 0, %s66
      %s81 = sphi 0, %s67
      %s87 = sphi 0, %s89
      %s90 = sphi 0, %s87
      %s91 = sphi 0, %s90
      %s107 = sphi 0, %s91
    $region4: #{forward.22} parent=1 // loop_header_branch
      %12 = sbr.rel (%p10) target = $region8
    $region5: #{forward.22} parent=1 // loop_body
      %s14 = ssub.s32 %s9, 1
      %s15 = ssub.s32 %s9, 2
      %s16 = sadd.s32 %s9, 1
      %s18 = sadd.s32 %s17, 1
      %p21 = scmp.eq.s32.totalorder %s9, 1
      %p22 = scmp.ne.s32.totalorder %s17, %s19
      %p23 = scmp.eq.s32.totalorder %s9, 0
      %p24 = por %p22, %p23
      %p25 = scmp.ne.s32.totalorder %s17, %s19
      %p26 = scmp.eq.s32.totalorder %s14, 1
      %p27 = por %p25, %p26
      %p28 = scmp.ne.s32.totalorder %s19, %s20
      %p29 = scmp.eq.s32.totalorder %s14, 0
      %p30 = por %p28, %p29
      %p31 = scmp.ne.s32.totalorder %s19, %s20
      %p32 = scmp.eq.s32.totalorder %s15, 1
      %p33 = por %p31, %p32
      %p35 = scmp.ne.s32.totalorder %s20, %s34
      %p36 = scmp.eq.s32.totalorder %s15, 0
      %p37 = por %p35, %p36
      %s38 = ssub.s32 %s9, %s16
      %p39 = scmp.eq.s32.totalorder %s38, 0
      %s41 = sadd.s32 %s40, 1
      %s42 = scalar_select %p39, %s40, %s41
      %p45 = pneg %p39
      %p46 = scmp.eq.s32.totalorder %s9, 1
      %p47 = por %p45, %p46
      %p48 = scmp.ne.s32.totalorder %s40, %s43
      %p49 = scmp.eq.s32.totalorder %s9, 0
      %p50 = por %p48, %p49
      %p51 = scmp.ne.s32.totalorder %s40, %s43
      %p52 = scmp.eq.s32.totalorder %s14, 1
      %p53 = por %p51, %p52
      %p54 = scmp.ne.s32.totalorder %s43, %s44
      %p55 = scmp.eq.s32.totalorder %s14, 0
      %p56 = por %p54, %p55
      %p57 = scmp.ne.s32.totalorder %s43, %s44
      %p58 = scmp.eq.s32.totalorder %s15, 1
      %p59 = por %p57, %p58
      %p61 = scmp.ne.s32.totalorder %s44, %s60
      %p62 = scmp.eq.s32.totalorder %s15, 0
      %p63 = por %p61, %p62
      %s65 = sadd.s32 %s64, 1
      %p68 = scmp.eq.s32.totalorder %s9, 1
      %p69 = scmp.ne.s32.totalorder %s64, %s66
      %p70 = scmp.eq.s32.totalorder %s9, 0
      %p71 = por %p69, %p70
      %p72 = scmp.ne.s32.totalorder %s64, %s66
      %p73 = scmp.eq.s32.totalorder %s14, 1
      %p74 = por %p72, %p73
      %p75 = scmp.ne.s32.totalorder %s66, %s67
      %p76 = scmp.eq.s32.totalorder %s14, 0
      %p77 = por %p75, %p76
      %p78 = scmp.ne.s32.totalorder %s66, %s67
      %p79 = scmp.eq.s32.totalorder %s15, 1
      %p80 = por %p78, %p79
      %p82 = scmp.ne.s32.totalorder %s67, %s81
      %p83 = scmp.eq.s32.totalorder %s15, 0
      %p84 = por %p82, %p83
      %s85 = ssub.s32 %s9, %s16
      %p86 = scmp.eq.s32.totalorder %s85, 0
      %s88 = sadd.s32 %s87, 1
      %s89 = scalar_select %p86, %s87, %s88
      %p92 = pneg %p86
      %p93 = scmp.eq.s32.totalorder %s9, 1
      %p94 = por %p92, %p93
      %p95 = scmp.ne.s32.totalorder %s87, %s90
      %p96 = scmp.eq.s32.totalorder %s9, 0
      %p97 = por %p95, %p96
      %p98 = scmp.ne.s32.totalorder %s87, %s90
      %p99 = scmp.eq.s32.totalorder %s14, 1
      %p100 = por %p98, %p99
      %p101 = scmp.ne.s32.totalorder %s90, %s91
      %p102 = scmp.eq.s32.totalorder %s14, 0
      %p103 = por %p101, %p102
      %p104 = scmp.ne.s32.totalorder %s90, %s91
      %p105 = scmp.eq.s32.totalorder %s15, 1
      %p106 = por %p104, %p105
      %p108 = scmp.ne.s32.totalorder %s91, %s107
      %p109 = scmp.eq.s32.totalorder %s15, 0
      %p110 = por %p108, %p109
      %p111 = scmp.le.s32.totalorder 1, %s9
      %p112 = scmp.lt.s32.totalorder %s9, 3
      %p113 = pnand %p111, %p112
      %p114 = pneg %p113
      // Predicated region
      $region9: #{forward.22} parent=5 // pred_check
        _
      $region10: #{forward.22} parent=5 // pred_check_branch
        %116 = sbr.rel (%p113) target = $region12
      $region11: #{forward.22} parent=5 // pred_region
        %s117 = ssub.s32 %s9, 1
        // Predicated region
        $region13: #{forward.22} parent=11 // pred_check
          %p118 = pneg %p30
        $region14: #{forward.22} parent=11 // pred_check_branch
          %120 = sbr.rel (%p118) target = $region16
        $region15: #{forward.22} parent=11 // pred_region
          _
        $region16: #{forward.22} parent=11 // pred_fallthru
          _
        // Predicated region
        $region17: #{forward.22} parent=11 // pred_check
          %p121 = pneg %p77
        $region18: #{forward.22} parent=11 // pred_check_branch
          %123 = sbr.rel (%p121) target = $region20
        $region19: #{forward.22} parent=11 // pred_region
          _
        $region20: #{forward.22} parent=11 // pred_fallthru
          _
      $region12: #{forward.22} parent=5 // pred_fallthru
        _
      %p124 = scmp.lt.s32.totalorder %s9, 2
      // Predicated region
      $region21: #{forward.22} parent=5 // pred_check
        %p125 = pneg %p124
      $region22: #{forward.22} parent=5 // pred_check_branch
        %127 = sbr.rel (%p125) target = $region24
      $region23: #{forward.22} parent=5 // pred_region
        // Predicated region
        $region25: #{forward.22} parent=23 // pred_check
          %p128 = pneg %p50
        $region26: #{forward.22} parent=23 // pred_check_branch
          %130 = sbr.rel (%p128) target = $region28
        $region27: #{forward.22} parent=23 // pred_region
          %s131 = sand.u32 %s40, 1
          %s132 = sand.u32 %s40, 1
          %s133 = smul.addr %s132, 208
          %s134 = scalar_lea.vmem [#allocation2], %s133
          %s135 = smul.u32 2, %s9
          %s136 = smul.addr %s135, 8
          %s137 = scalar_lea.vmem %s1, %s136
          // Predicated region
          $region29: #{forward.22} parent=27 // pred_check
            _
          $region30: #{forward.22} parent=27 // pred_check_branch
            %139 = sbr.rel (0) target = $region32
          $region31: #{forward.22} parent=27 // pred_region
            // Predicated region
            $region33: #{forward.22} parent=31 // pred_check
              _
            $region34: #{forward.22} parent=31 // pred_check_branch
              %141 = sbr.rel (0) target = $region36
            $region35: #{forward.22} parent=31 // pred_region
              loop: start=0, step=1, limit=1
              $region37: #{forward.22} parent=35 // loop_pre_header
                _
              $region38: #{forward.22} parent=35 // loop_header
                %s143 = sphi 0, %s147
                %p144 = scmp.ge.s32.totalorder %s143, 1
                %s148 = sphi %s137, %s137
                %s149 = sphi %s134, %s134
              $region39: #{forward.22} parent=35 // loop_header_branch
                %146 = sbr.rel (%p144) target = $region43
              $region40: #{forward.22} parent=35 // loop_body
                %v150 = vld [vmem:[%s148] sm:$0xff]
                %151 = vst [vmem:[%s149] sm:$0xff] %v150
                %v152 = vld [vmem:[%s148 + $0x8] sm:$0xff]
                %153 = vst [vmem:[%s149 + $0x8] sm:$0xff] %v152
                %v154 = vld [vmem:[%s148 + $0x20] sm:$0xff]
                %155 = vst [vmem:[%s149 + $0x10] sm:$0xff] %v154
                %v156 = vld [vmem:[%s148 + $0x28] sm:$0xff]
                %157 = vst [vmem:[%s149 + $0x18] sm:$0xff] %v156
                %v158 = vld [vmem:[%s148 + $0x40] sm:$0xff]
                %159 = vst [vmem:[%s149 + $0x20] sm:$0xff] %v158
                %v160 = vld [vmem:[%s148 + $0x48] sm:$0xff]
                %161 = vst [vmem:[%s149 + $0x28] sm:$0xff] %v160
                %v162 = vld [vmem:[%s148 + $0x60] sm:$0xff]
                %163 = vst [vmem:[%s149 + $0x30] sm:$0xff] %v162
                %v164 = vld [vmem:[%s148 + $0x68] sm:$0xff]
                %165 = vst [vmem:[%s149 + $0x38] sm:$0xff] %v164
                %v166 = vld [vmem:[%s148 + $0x80] sm:$0xff]
                %167 = vst [vmem:[%s149 + $0x40] sm:$0xff] %v166
                %v168 = vld [vmem:[%s148 + $0x88] sm:$0xff]
                %169 = vst [vmem:[%s149 + $0x48] sm:$0xff] %v168
                %v170 = vld [vmem:[%s148 + $0xa0] sm:$0xff]
                %171 = vst [vmem:[%s149 + $0x50] sm:$0xff] %v170
                %v172 = vld [vmem:[%s148 + $0xa8] sm:$0xff]
                %173 = vst [vmem:[%s149 + $0x58] sm:$0xff] %v172
                %v174 = vld [vmem:[%s148 + $0xc0] sm:$0xff]
                %175 = vst [vmem:[%s149 + $0x60] sm:$0xff] %v174
                %v176 = vld [vmem:[%s148 + $0xc8] sm:$0xff]
                %177 = vst [vmem:[%s149 + $0x68] sm:$0xff] %v176
                %v178 = vld [vmem:[%s148 + $0xe0] sm:$0xff]
                %179 = vst [vmem:[%s149 + $0x70] sm:$0xff] %v178
                %v180 = vld [vmem:[%s148 + $0xe8] sm:$0xff]
                %181 = vst [vmem:[%s149 + $0x78] sm:$0xff] %v180
                %v182 = vld [vmem:[%s148 + $0x100] sm:$0xff]
                %183 = vst [vmem:[%s149 + $0x80] sm:$0xff] %v182
                %v184 = vld [vmem:[%s148 + $0x108] sm:$0xff]
                %185 = vst [vmem:[%s149 + $0x88] sm:$0xff] %v184
                %v186 = vld [vmem:[%s148 + $0x120] sm:$0xff]
                %187 = vst [vmem:[%s149 + $0x90] sm:$0xff] %v186
                %v188 = vld [vmem:[%s148 + $0x128] sm:$0xff]
                %189 = vst [vmem:[%s149 + $0x98] sm:$0xff] %v188
                %v190 = vld [vmem:[%s148 + $0x140] sm:$0xff]
                %191 = vst [vmem:[%s149 + $0xa0] sm:$0xff] %v190
                %v192 = vld [vmem:[%s148 + $0x148] sm:$0xff]
                %193 = vst [vmem:[%s149 + $0xa8] sm:$0xff] %v192
                %v194 = vld [vmem:[%s148 + $0x160] sm:$0xff]
                %195 = vst [vmem:[%s149 + $0xb0] sm:$0xff] %v194
                %v196 = vld [vmem:[%s148 + $0x168] sm:$0xff]
                %197 = vst [vmem:[%s149 + $0xb8] sm:$0xff] %v196
                %v198 = vld [vmem:[%s148 + $0x180] sm:$0xff]
                %199 = vst [vmem:[%s149 + $0xc0] sm:$0xff] %v198
                %v200 = vld [vmem:[%s148 + $0x188] sm:$0xff]
                %201 = vst [vmem:[%s149 + $0xc8] sm:$0xff] %v200
              $region41: #{forward.22} parent=35 // loop_footer
                %s147 = sadd.s32 1, %s143
              $region42: #{forward.22} parent=35 // loop_footer_branch
                %142 = sbr.rel target = $region38
              $region43: #{forward.22} parent=35 // loop_exit
                _
            $region36: #{forward.22} parent=31 // pred_fallthru
              _
            // Predicated region
            $region44: #{forward.22} parent=31 // pred_check
              _
            $region45: #{forward.22} parent=31 // pred_check_branch
              %203 = sbr.rel target = $region47
            $region46: #{forward.22} parent=31 // pred_region
              _
            $region47: #{forward.22} parent=31 // pred_fallthru
              _
          $region32: #{forward.22} parent=27 // pred_fallthru
            _
          %204 = vnop
        $region28: #{forward.22} parent=23 // pred_fallthru
          _
      $region24: #{forward.22} parent=5 // pred_fallthru
        _
      %p205 = scmp.le.s32.totalorder 1, %s9
      %p206 = scmp.lt.s32.totalorder %s9, 3
      %p207 = pnand %p205, %p206
      %p208 = pneg %p207
      // Predicated region
      $region48: #{forward.22} parent=5 // pred_check
        _
      $region49: #{forward.22} parent=5 // pred_check_branch
        %210 = sbr.rel (%p207) target = $region51
      $region50: #{forward.22} parent=5 // pred_region
        %s211 = ssub.s32 %s9, 1
        %s212 = sand.u32 %s43, 1
        %s213 = sand.u32 %s43, 1
        %s214 = smul.addr %s213, 208
        %s215 = scalar_lea.vmem [#allocation2], %s214
        // Predicated region
        $region52: #{forward.22} parent=50 // pred_check
          %p216 = pneg %p56
        $region53: #{forward.22} parent=50 // pred_check_branch
          %218 = sbr.rel (%p216) target = $region55
        $region54: #{forward.22} parent=50 // pred_region
          _
        $region55: #{forward.22} parent=50 // pred_fallthru
          _
        %p219 = pneg %p30
        %p220 = pneg %p27
        %s221 = sand.u32 %s43, 1
        %s222 = sand.u32 %s43, 1
        %s223 = smul.addr %s222, 208
        %s224 = scalar_lea.vmem [#allocation2], %s223
        %p225 = pneg %p56
        %p226 = pneg %p53
        %p227 = pneg %p77
        %p228 = pneg %p74
        %p229 = pneg %p103
        %p230 = pneg %p100
        %s231 = sand.u32 %s90, 1
        %s232 = sand.u32 %s90, 1
        %s233 = smul.addr %s232, 64
        %s234 = scalar_lea.vmem [#allocation3], %s233
        %s235 = smul.u32 2, %s14
        %s236 = smul.u32 2, %s14
        %v237 = vld [vmem:[%s0] sm:$0xff]
        %v238 = vld [vmem:[%s0 + $0x8] sm:$0xff]
        %v239 = vld [vmem:[%s0 + $0x10] sm:$0xff]
        %v240 = vld [vmem:[%s0 + $0x18] sm:$0xff]
        %v241 = vld [vmem:[%s215] sm:$0xff]
        %v242 = vld [vmem:[%s215 + $0x8] sm:$0xff]
        %v243 = vld [vmem:[%s215 + $0x10] sm:$0xff]
        %v244 = vld [vmem:[%s215 + $0x18] sm:$0xff]
        %v245 = vld [vmem:[%s215 + $0x20] sm:$0xff]
        %v246 = vld [vmem:[%s215 + $0x28] sm:$0xff]
        %v247 = vld [vmem:[%s215 + $0x30] sm:$0xff]
        %v248 = vld [vmem:[%s215 + $0x38] sm:$0xff]
        %v249 = vld [vmem:[%s215 + $0x40] sm:$0xff]
        %v250 = vld [vmem:[%s215 + $0x48] sm:$0xff]
        %v251 = vld [vmem:[%s215 + $0x50] sm:$0xff]
        %v252 = vld [vmem:[%s215 + $0x58] sm:$0xff]
        %v253 = vld [vmem:[%s215 + $0x60] sm:$0xff]
        %v254 = vld [vmem:[%s215 + $0x68] sm:$0xff]
        %v255 = vld [vmem:[%s215 + $0x70] sm:$0xff]
        %v256 = vld [vmem:[%s215 + $0x78] sm:$0xff]
        %v257 = vld [vmem:[%s215 + $0x80] sm:$0xff]
        %v258 = vld [vmem:[%s215 + $0x88] sm:$0xff]
        %v259 = vld [vmem:[%s215 + $0x90] sm:$0xff]
        %v260 = vld [vmem:[%s215 + $0x98] sm:$0xff]
        %v261 = vld [vmem:[%s215 + $0xa0] sm:$0xff]
        %v262 = vld [vmem:[%s215 + $0xa8] sm:$0xff]
        %v263 = vld [vmem:[%s215 + $0xb0] sm:$0xff]
        %v264 = vld [vmem:[%s215 + $0xb8] sm:$0xff]
        %v265 = vld [vmem:[%s215 + $0xc0] sm:$0x3]
        %v266 = vld [vmem:[%s215 + $0xc8] sm:$0x3]
        %v267 = vld [vmem:[%s2] sm:$0xff]
        %v268 = vld [vmem:[%s2 + $0x8] sm:$0xff]
        %v269 = vld [vmem:[%s2 + $0x10] sm:$0xff]
        %v270 = vld [vmem:[%s2 + $0x18] sm:$0xff]
        %272 = vset.pattern.permute.xlu0 0
        %273 = vperm.xlu0 %272, %v267
        %v274 = vpop.permute.xlu0 %273
        %277 = vset.pattern.permute.xlu0 0
        %278 = vperm.xlu0 %277, %v268
        %v279 = vpop.permute.xlu0 %278
        %282 = vset.pattern.permute.xlu0 0
        %283 = vperm.xlu0 %282, %v269
        %v284 = vpop.permute.xlu0 %283
        %287 = vset.pattern.permute.xlu0 0
        %288 = vperm.xlu0 %287, %v270
        %v289 = vpop.permute.xlu0 %288
        %vm291 = vcmask 801792
        %v293 = vsel %vm291, %v237, 0
        %v296 = vsel %vm291, %v238, 0
        %v299 = vsel %vm291, %v239, 0
        %v302 = vsel %vm291, %v240, 0
        %vm304 = vcmask 1041408
        %v306 = vsel %vm304, %v265, 0
        %v309 = vsel %vm304, %v266, 0
        %311 = vmatprep.subr.mxu0 0.0
        %312 = vmatpush1.msra.mxu0 0.0
        %313 = vmatprep.subr.mxu0 0.0
        %314 = vmatpush1.msra.mxu0 0.0
        %315 = vmatprep.subr.mxu0 0.0
        %316 = vmatpush1.msra.mxu0 0.0
        %317 = vmatprep.subr.mxu0 %v309
        %318 = vmatpush1.msra.mxu0 %v306
        %319 = vmatprep.subr.mxu0 %v264
        %320 = vmatpush1.msra.mxu0 %v263
        %321 = vmatprep.subr.mxu0 %v262
        %322 = vmatpush1.msra.mxu0 %v261
        %323 = vmatprep.subr.mxu0 %v260
        %324 = vmatpush1.msra.mxu0 %v259
        %325 = vmatprep.subr.mxu0 %v258
        %326 = vmatpush1.msra.mxu0 %v257
        %327 = vmatprep.subr.mxu0 %v256
        %328 = vmatpush1.msra.mxu0 %v255
        %329 = vmatprep.subr.mxu0 %v254
        %330 = vmatpush1.msra.mxu0 %v253
        %331 = vmatprep.subr.mxu0 %v252
        %332 = vmatpush1.msra.mxu0 %v251
        %333 = vmatprep.subr.mxu0 %v250
        %334 = vmatpush1.msra.mxu0 %v249
        %335 = vmatprep.subr.mxu0 %v248
        %336 = vmatpush1.msra.mxu0 %v247
        %337 = vmatprep.subr.mxu0 %v246
        %338 = vmatpush1.msra.mxu0 %v245
        %339 = vmatprep.subr.mxu0 %v244
        %340 = vmatpush1.msra.mxu0 %v243
        %341 = vmatprep.subr.mxu0 %v242
        %342 = vmatpush1.msra.mxu0 %v241
        %343 = vmatprep.subr.mxu0 0.0
        %344 = vmatpush2.msra.mxu0 0.0
        %345 = vmatprep.subr.mxu0 0.0
        %346 = vmatpush2.msra.mxu0 0.0
        %347 = vmatprep.subr.mxu0 0.0
        %348 = vmatpush2.msra.mxu0 0.0
        %349 = vmatprep.subr.mxu0 0.0
        %350 = vmatpush2.msra.mxu0 0.0
        %351 = vmatprep.subr.mxu0 0.0
        %352 = vmatpush2.msra.mxu0 0.0
        %353 = vmatprep.subr.mxu0 0.0
        %354 = vmatpush2.msra.mxu0 0.0
        %355 = vmatprep.subr.mxu0 0.0
        %356 = vmatpush2.msra.mxu0 0.0
        %357 = vmatprep.subr.mxu0 0.0
        %358 = vmatpush2.msra.mxu0 0.0
        %359 = vmatprep.subr.mxu0 0.0
        %360 = vmatpush2.msra.mxu0 0.0
        %361 = vmatprep.subr.mxu0 0.0
        %362 = vmatpush2.msra.mxu0 0.0
        %363 = vmatprep.subr.mxu0 0.0
        %364 = vmatpush2.msra.mxu0 0.0
        %365 = vmatprep.subr.mxu0 0.0
        %366 = vmatpush2.msra.mxu0 0.0
        %367 = vmatprep.subr.mxu0 0.0
        %368 = vmatpush2.msra.mxu0 0.0
        %369 = vmatprep.subr.mxu0 0.0
        %370 = vmatpush2.msra.mxu0 0.0
        %371 = vmatprep.subr.mxu0 0.0
        %372 = vmatpush2.msra.mxu0 0.0
        %373 = vmatprep.subr.mxu0 0.0
        %374 = vmatpush2.msra.mxu0 0.0
        %375 = vmatprep.mubr.f32.mxu0 0.0
        %376 = vmatmul.mubr.f32.gmra.mxu0 %v293
        %v377 = vpop.f32.mrf.mxu0
        %v378 = vadd.f32 %v274, %v377
        %v379 = vpop.f32.mrf.mxu0
        %v380 = vadd.f32 %v274, %v379
        %381 = vmatprep.mubr.f32.mxu0 0.0
        %382 = vmatmul.mubr.f32.gmra.mxu0 %v296
        %v383 = vpop.f32.mrf.mxu0
        %v384 = vadd.f32 %v279, %v383
        %v385 = vpop.f32.mrf.mxu0
        %v386 = vadd.f32 %v279, %v385
        %387 = vmatprep.mubr.f32.mxu0 0.0
        %388 = vmatmul.mubr.f32.gmra.mxu0 %v299
        %v389 = vpop.f32.mrf.mxu0
        %v390 = vadd.f32 %v284, %v389
        %v391 = vpop.f32.mrf.mxu0
        %v392 = vadd.f32 %v284, %v391
        %393 = vmatprep.mubr.f32.mxu0 0.0
        %394 = vmatmul.mubr.f32.gmra.mxu0 %v302
        %v395 = vpop.f32.mrf.mxu0
        %v396 = vadd.f32 %v289, %v395
        %v397 = vpop.f32.mrf.mxu0
        %v398 = vadd.f32 %v289, %v397
        %399 = vdwg.mxu0
        %v400 = vmax.f32 %v378, 0.0
        %v401 = vmax.f32 %v380, 0.0
        %v402 = vmax.f32 %v384, 0.0
        %v403 = vmax.f32 %v386, 0.0
        %v404 = vmax.f32 %v390, 0.0
        %v405 = vmax.f32 %v392, 0.0
        %v406 = vmax.f32 %v396, 0.0
        %v407 = vmax.f32 %v398, 0.0
        %408 = vst [vmem:[%s234] sm:$0xff] %v400
        %409 = vst [vmem:[%s234 + $0x8] sm:$0xff] %v401
        %410 = vst [vmem:[%s234 + $0x10] sm:$0xff] %v402
        %411 = vst [vmem:[%s234 + $0x18] sm:$0xff] %v403
        %412 = vst [vmem:[%s234 + $0x20] sm:$0xff] %v404
        %413 = vst [vmem:[%s234 + $0x28] sm:$0xff] %v405
        %414 = vst [vmem:[%s234 + $0x30] sm:$0xff] %v406
        %415 = vst [vmem:[%s234 + $0x38] sm:$0xff] %v407
        %s416 = sand.u32 %s90, 1
        %s417 = sand.u32 %s90, 1
        %s418 = smul.addr %s417, 64
        %s419 = scalar_lea.vmem [#allocation3], %s418
        // Predicated region
        $region56: #{forward.22} parent=50 // pred_check
          %p420 = pneg %p100
        $region57: #{forward.22} parent=50 // pred_check_branch
          %422 = sbr.rel (%p420) target = $region59
        $region58: #{forward.22} parent=50 // pred_region
          %s423 = smul.u32 2, %s14
          %s424 = smul.addr %s423, 8
          %s425 = scalar_lea.vmem %s3, %s424
          // Predicated region
          $region60: #{forward.22} parent=58 // pred_check
            _
          $region61: #{forward.22} parent=58 // pred_check_branch
            %427 = sbr.rel (0) target = $region63
          $region62: #{forward.22} parent=58 // pred_region
            // Predicated region
            $region64: #{forward.22} parent=62 // pred_check
              _
            $region65: #{forward.22} parent=62 // pred_check_branch
              %429 = sbr.rel (0) target = $region67
            $region66: #{forward.22} parent=62 // pred_region
              loop: start=0, step=1, limit=1
              $region68: #{forward.22} parent=66 // loop_pre_header
                _
              $region69: #{forward.22} parent=66 // loop_header
                %s431 = sphi 0, %s435
                %p432 = scmp.ge.s32.totalorder %s431, 1
                %s436 = sphi %s419, %s419
                %s437 = sphi %s425, %s425
              $region70: #{forward.22} parent=66 // loop_header_branch
                %434 = sbr.rel (%p432) target = $region74
              $region71: #{forward.22} parent=66 // loop_body
                %v438 = vld [vmem:[%s436] sm:$0xff]
                %439 = vst [vmem:[%s437] sm:$0xff] %v438
                %v440 = vld [vmem:[%s436 + $0x8] sm:$0xff]
                %441 = vst [vmem:[%s437 + $0x8] sm:$0xff] %v440
                %v442 = vld [vmem:[%s436 + $0x10] sm:$0xff]
                %443 = vst [vmem:[%s437 + $0x20] sm:$0xff] %v442
                %v444 = vld [vmem:[%s436 + $0x18] sm:$0xff]
                %445 = vst [vmem:[%s437 + $0x28] sm:$0xff] %v444
                %v446 = vld [vmem:[%s436 + $0x20] sm:$0xff]
                %447 = vst [vmem:[%s437 + $0x40] sm:$0xff] %v446
                %v448 = vld [vmem:[%s436 + $0x28] sm:$0xff]
                %449 = vst [vmem:[%s437 + $0x48] sm:$0xff] %v448
                %v450 = vld [vmem:[%s436 + $0x30] sm:$0xff]
                %451 = vst [vmem:[%s437 + $0x60] sm:$0xff] %v450
                %v452 = vld [vmem:[%s436 + $0x38] sm:$0xff]
                %453 = vst [vmem:[%s437 + $0x68] sm:$0xff] %v452
              $region72: #{forward.22} parent=66 // loop_footer
                %s435 = sadd.s32 1, %s431
              $region73: #{forward.22} parent=66 // loop_footer_branch
                %430 = sbr.rel target = $region69
              $region74: #{forward.22} parent=66 // loop_exit
                _
            $region67: #{forward.22} parent=62 // pred_fallthru
              _
            // Predicated region
            $region75: #{forward.22} parent=62 // pred_check
              _
            $region76: #{forward.22} parent=62 // pred_check_branch
              %455 = sbr.rel target = $region78
            $region77: #{forward.22} parent=62 // pred_region
              _
            $region78: #{forward.22} parent=62 // pred_fallthru
              _
          $region63: #{forward.22} parent=58 // pred_fallthru
            _
          %456 = vnop
        $region59: #{forward.22} parent=50 // pred_fallthru
          _
      $region51: #{forward.22} parent=5 // pred_fallthru
        _
      %p457 = scmp.le.s32.totalorder 2, %s9
      // Predicated region
      $region79: #{forward.22} parent=5 // pred_check
        %p458 = pneg %p457
      $region80: #{forward.22} parent=5 // pred_check_branch
        %460 = sbr.rel (%p458) target = $region82
      $region81: #{forward.22} parent=5 // pred_region
        %s461 = ssub.s32 %s9, 2
        // Predicated region
        $region83: #{forward.22} parent=81 // pred_check
          %p462 = pneg %p106
        $region84: #{forward.22} parent=81 // pred_check_branch
          %464 = sbr.rel (%p462) target = $region86
        $region85: #{forward.22} parent=81 // pred_region
          %s465 = sand.u32 %s91, 1
          %s466 = sand.u32 %s91, 1
          %s467 = smul.addr %s466, 64
          %s468 = scalar_lea.vmem [#allocation3], %s467
        $region86: #{forward.22} parent=81 // pred_fallthru
          _
      $region82: #{forward.22} parent=5 // pred_fallthru
        _
    $region6: #{forward.22} parent=1 // loop_footer
      %s13 = sadd.s32 1, %s9
    $region7: #{forward.22} parent=1 // loop_footer_branch
      %8 = sbr.rel target = $region3
    $region8: #{forward.22} parent=1 // loop_exit
      _

// kernel: forward.23
$region0: #{forward.23}
  #allocation0 [shape = 'u32[]', space=smem, size = 0x4, offset = 0x4, fixed_abs, tag = 'smem constant byte address 0x4 - core index']
  #allocation1 [shape = 'u32[144,128]{1,0:T(1,128)}', space=vmem, size = 0x12000, scoped, tag = 'internal scratch']
  %s0 = inlined_call_operand.vmem [shape: f32[32,288], index: 0, kind: input, shape index: {}]
  %s1 = inlined_call_operand.vmem [shape: f32[288,512], index: 1, kind: input, shape index: {}]
  %s2 = inlined_call_operand.vmem [shape: f32[32,1], index: 2, kind: input, shape index: {}]
  %s3 = inlined_call_operand.vmem [shape: f32[32,512], index: 3, kind: output, shape index: {}]
  %s4 = sld [smem:[#allocation0]]
  $region87: #{forward.23} parent=0
    _
  %s6 = ssub.s32 1, %s4
  %s7 = scalar_select 0, %s6, %s4
  $region1: #{forward.23} parent=0
    #allocation2 [shape = 'u8[589824]{0}', space=vmem, size = 0x90000, scoped, tag = 'input window, operand 1']
    #allocation3 [shape = 'u8[65536]{0}', space=vmem, size = 0x10000, scoped, tag = 'output window, operand 0']
    loop: start=0, step=1, limit=4
    $region2: #{forward.23} parent=1 // loop_pre_header
      _
    $region3: #{forward.23} parent=1 // loop_header
      %s9 = sphi 0, %s13
      %p10 = scmp.ge.s32.totalorder %s9, 4
      %s17 = sphi 0, %s17
      %s19 = sphi 0, %s17
      %s20 = sphi 0, %s19
      %s34 = sphi 0, %s20
      %s40 = sphi 0, %s42
      %s43 = sphi 0, %s40
      %s44 = sphi 0, %s43
      %s60 = sphi 0, %s44
      %s64 = sphi 0, %s64
      %s66 = sphi 0, %s64
      %s67 = sphi 0, %s66
      %s81 = sphi 0, %s67
      %s87 = sphi 0, %s89
      %s90 = sphi 0, %s87
      %s91 = sphi 0, %s90
      %s107 = sphi 0, %s91
    $region4: #{forward.23} parent=1 // loop_header_branch
      %12 = sbr.rel (%p10) target = $region8
    $region5: #{forward.23} parent=1 // loop_body
      %s14 = ssub.s32 %s9, 1
      %s15 = ssub.s32 %s9, 2
      %s16 = sadd.s32 %s9, 1
      %s18 = sadd.s32 %s17, 1
      %p21 = scmp.eq.s32.totalorder %s9, 1
      %p22 = scmp.ne.s32.totalorder %s17, %s19
      %p23 = scmp.eq.s32.totalorder %s9, 0
      %p24 = por %p22, %p23
      %p25 = scmp.ne.s32.totalorder %s17, %s19
      %p26 = scmp.eq.s32.totalorder %s14, 1
      %p27 = por %p25, %p26
      %p28 = scmp.ne.s32.totalorder %s19, %s20
      %p29 = scmp.eq.s32.totalorder %s14, 0
      %p30 = por %p28, %p29
      %p31 = scmp.ne.s32.totalorder %s19, %s20
      %p32 = scmp.eq.s32.totalorder %s15, 1
      %p33 = por %p31, %p32
      %p35 = scmp.ne.s32.totalorder %s20, %s34
      %p36 = scmp.eq.s32.totalorder %s15, 0
      %p37 = por %p35, %p36
      %s38 = ssub.s32 %s9, %s16
      %p39 = scmp.eq.s32.totalorder %s38, 0
      %s41 = sadd.s32 %s40, 1
      %s42 = scalar_select %p39, %s40, %s41
      %p45 = pneg %p39
      %p46 = scmp.eq.s32.totalorder %s9, 1
      %p47 = por %p45, %p46
      %p48 = scmp.ne.s32.totalorder %s40, %s43
      %p49 = scmp.eq.s32.totalorder %s9, 0
      %p50 = por %p48, %p49
      %p51 = scmp.ne.s32.totalorder %s40, %s43
      %p52 = scmp.eq.s32.totalorder %s14, 1
      %p53 = por %p51, %p52
      %p54 = scmp.ne.s32.totalorder %s43, %s44
      %p55 = scmp.eq.s32.totalorder %s14, 0
      %p56 = por %p54, %p55
      %p57 = scmp.ne.s32.totalorder %s43, %s44
      %p58 = scmp.eq.s32.totalorder %s15, 1
      %p59 = por %p57, %p58
      %p61 = scmp.ne.s32.totalorder %s44, %s60
      %p62 = scmp.eq.s32.totalorder %s15, 0
      %p63 = por %p61, %p62
      %s65 = sadd.s32 %s64, 1
      %p68 = scmp.eq.s32.totalorder %s9, 1
      %p69 = scmp.ne.s32.totalorder %s64, %s66
      %p70 = scmp.eq.s32.totalorder %s9, 0
      %p71 = por %p69, %p70
      %p72 = scmp.ne.s32.totalorder %s64, %s66
      %p73 = scmp.eq.s32.totalorder %s14, 1
      %p74 = por %p72, %p73
      %p75 = scmp.ne.s32.totalorder %s66, %s67
      %p76 = scmp.eq.s32.totalorder %s14, 0
      %p77 = por %p75, %p76
      %p78 = scmp.ne.s32.totalorder %s66, %s67
      %p79 = scmp.eq.s32.totalorder %s15, 1
      %p80 = por %p78, %p79
      %p82 = scmp.ne.s32.totalorder %s67, %s81
      %p83 = scmp.eq.s32.totalorder %s15, 0
      %p84 = por %p82, %p83
      %s85 = ssub.s32 %s9, %s16
      %p86 = scmp.eq.s32.totalorder %s85, 0
      %s88 = sadd.s32 %s87, 1
      %s89 = scalar_select %p86, %s87, %s88
      %p92 = pneg %p86
      %p93 = scmp.eq.s32.totalorder %s9, 1
      %p94 = por %p92, %p93
      %p95 = scmp.ne.s32.totalorder %s87, %s90
      %p96 = scmp.eq.s32.totalorder %s9, 0
      %p97 = por %p95, %p96
      %p98 = scmp.ne.s32.totalorder %s87, %s90
      %p99 = scmp.eq.s32.totalorder %s14, 1
      %p100 = por %p98, %p99
      %p101 = scmp.ne.s32.totalorder %s90, %s91
      %p102 = scmp.eq.s32.totalorder %s14, 0
      %p103 = por %p101, %p102
      %p104 = scmp.ne.s32.totalorder %s90, %s91
      %p105 = scmp.eq.s32.totalorder %s15, 1
      %p106 = por %p104, %p105
      %p108 = scmp.ne.s32.totalorder %s91, %s107
      %p109 = scmp.eq.s32.totalorder %s15, 0
      %p110 = por %p108, %p109
      %p111 = scmp.le.s32.totalorder 1, %s9
      %p112 = scmp.lt.s32.totalorder %s9, 3
      %p113 = pnand %p111, %p112
      %p114 = pneg %p113
      // Predicated region
      $region9: #{forward.23} parent=5 // pred_check
        _
      $region10: #{forward.23} parent=5 // pred_check_branch
        %116 = sbr.rel (%p113) target = $region12
      $region11: #{forward.23} parent=5 // pred_region
        %s117 = ssub.s32 %s9, 1
        // Predicated region
        $region13: #{forward.23} parent=11 // pred_check
          %p118 = pneg %p30
        $region14: #{forward.23} parent=11 // pred_check_branch
          %120 = sbr.rel (%p118) target = $region16
        $region15: #{forward.23} parent=11 // pred_region
          _
        $region16: #{forward.23} parent=11 // pred_fallthru
          _
        // Predicated region
        $region17: #{forward.23} parent=11 // pred_check
          %p121 = pneg %p77
        $region18: #{forward.23} parent=11 // pred_check_branch
          %123 = sbr.rel (%p121) target = $region20
        $region19: #{forward.23} parent=11 // pred_region
          _
        $region20: #{forward.23} parent=11 // pred_fallthru
          _
      $region12: #{forward.23} parent=5 // pred_fallthru
        _
      %p124 = scmp.lt.s32.totalorder %s9, 2
      // Predicated region
      $region21: #{forward.23} parent=5 // pred_check
        %p125 = pneg %p124
      $region22: #{forward.23} parent=5 // pred_check_branch
        %127 = sbr.rel (%p125) target = $region24
      $region23: #{forward.23} parent=5 // pred_region
        // Predicated region
        $region25: #{forward.23} parent=23 // pred_check
          %p128 = pneg %p50
        $region26: #{forward.23} parent=23 // pred_check_branch
          %130 = sbr.rel (%p128) target = $region28
        $region27: #{forward.23} parent=23 // pred_region
          %s131 = sand.u32 %s40, 1
          %s132 = sand.u32 %s40, 1
          %s133 = smul.addr %s132, 576
          %s134 = scalar_lea.vmem [#allocation2], %s133
          %s135 = smul.u32 2, %s9
          %s136 = smul.addr %s135, 8
          %s137 = scalar_lea.vmem %s1, %s136
          // Predicated region
          $region29: #{forward.23} parent=27 // pred_check
            _
          $region30: #{forward.23} parent=27 // pred_check_branch
            %139 = sbr.rel (0) target = $region32
          $region31: #{forward.23} parent=27 // pred_region
            // Predicated region
            $region33: #{forward.23} parent=31 // pred_check
              _
            $region34: #{forward.23} parent=31 // pred_check_branch
              %141 = sbr.rel (0) target = $region36
            $region35: #{forward.23} parent=31 // pred_region
              loop: start=0, step=1, limit=1
              $region37: #{forward.23} parent=35 // loop_pre_header
                _
              $region38: #{forward.23} parent=35 // loop_header
                %s143 = sphi 0, %s147
                %p144 = scmp.ge.s32.totalorder %s143, 1
                %s148 = sphi %s137, %s137
                %s149 = sphi %s134, %s134
              $region39: #{forward.23} parent=35 // loop_header_branch
                %146 = sbr.rel (%p144) target = $region43
              $region40: #{forward.23} parent=35 // loop_body
                %v150 = vld [vmem:[%s148] sm:$0xff]
                %151 = vst [vmem:[%s149] sm:$0xff] %v150
                %v152 = vld [vmem:[%s148 + $0x8] sm:$0xff]
                %153 = vst [vmem:[%s149 + $0x8] sm:$0xff] %v152
                %v154 = vld [vmem:[%s148 + $0x20] sm:$0xff]
                %155 = vst [vmem:[%s149 + $0x10] sm:$0xff] %v154
                %v156 = vld [vmem:[%s148 + $0x28] sm:$0xff]
                %157 = vst [vmem:[%s149 + $0x18] sm:$0xff] %v156
                %v158 = vld [vmem:[%s148 + $0x40] sm:$0xff]
                %159 = vst [vmem:[%s149 + $0x20] sm:$0xff] %v158
                %v160 = vld [vmem:[%s148 + $0x48] sm:$0xff]
                %161 = vst [vmem:[%s149 + $0x28] sm:$0xff] %v160
                %v162 = vld [vmem:[%s148 + $0x60] sm:$0xff]
                %163 = vst [vmem:[%s149 + $0x30] sm:$0xff] %v162
                %v164 = vld [vmem:[%s148 + $0x68] sm:$0xff]
                %165 = vst [vmem:[%s149 + $0x38] sm:$0xff] %v164
                %v166 = vld [vmem:[%s148 + $0x80] sm:$0xff]
                %167 = vst [vmem:[%s149 + $0x40] sm:$0xff] %v166
                %v168 = vld [vmem:[%s148 + $0x88] sm:$0xff]
                %169 = vst [vmem:[%s149 + $0x48] sm:$0xff] %v168
                %v170 = vld [vmem:[%s148 + $0xa0] sm:$0xff]
                %171 = vst [vmem:[%s149 + $0x50] sm:$0xff] %v170
                %v172 = vld [vmem:[%s148 + $0xa8] sm:$0xff]
                %173 = vst [vmem:[%s149 + $0x58] sm:$0xff] %v172
                %v174 = vld [vmem:[%s148 + $0xc0] sm:$0xff]
                %175 = vst [vmem:[%s149 + $0x60] sm:$0xff] %v174
                %v176 = vld [vmem:[%s148 + $0xc8] sm:$0xff]
                %177 = vst [vmem:[%s149 + $0x68] sm:$0xff] %v176
                %v178 = vld [vmem:[%s148 + $0xe0] sm:$0xff]
                %179 = vst [vmem:[%s149 + $0x70] sm:$0xff] %v178
                %v180 = vld [vmem:[%s148 + $0xe8] sm:$0xff]
                %181 = vst [vmem:[%s149 + $0x78] sm:$0xff] %v180
                %v182 = vld [vmem:[%s148 + $0x100] sm:$0xff]
                %183 = vst [vmem:[%s149 + $0x80] sm:$0xff] %v182
                %v184 = vld [vmem:[%s148 + $0x108] sm:$0xff]
                %185 = vst [vmem:[%s149 + $0x88] sm:$0xff] %v184
                %v186 = vld [vmem:[%s148 + $0x120] sm:$0xff]
                %187 = vst [vmem:[%s149 + $0x90] sm:$0xff] %v186
                %v188 = vld [vmem:[%s148 + $0x128] sm:$0xff]
                %189 = vst [vmem:[%s149 + $0x98] sm:$0xff] %v188
                %v190 = vld [vmem:[%s148 + $0x140] sm:$0xff]
                %191 = vst [vmem:[%s149 + $0xa0] sm:$0xff] %v190
                %v192 = vld [vmem:[%s148 + $0x148] sm:$0xff]
                %193 = vst [vmem:[%s149 + $0xa8] sm:$0xff] %v192
                %v194 = vld [vmem:[%s148 + $0x160] sm:$0xff]
                %195 = vst [vmem:[%s149 + $0xb0] sm:$0xff] %v194
                %v196 = vld [vmem:[%s148 + $0x168] sm:$0xff]
                %197 = vst [vmem:[%s149 + $0xb8] sm:$0xff] %v196
                %v198 = vld [vmem:[%s148 + $0x180] sm:$0xff]
                %199 = vst [vmem:[%s149 + $0xc0] sm:$0xff] %v198
                %v200 = vld [vmem:[%s148 + $0x188] sm:$0xff]
                %201 = vst [vmem:[%s149 + $0xc8] sm:$0xff] %v200
                %v202 = vld [vmem:[%s148 + $0x1a0] sm:$0xff]
                %203 = vst [vmem:[%s149 + $0xd0] sm:$0xff] %v202
                %v204 = vld [vmem:[%s148 + $0x1a8] sm:$0xff]
                %205 = vst [vmem:[%s149 + $0xd8] sm:$0xff] %v204
                %v206 = vld [vmem:[%s148 + $0x1c0] sm:$0xff]
                %207 = vst [vmem:[%s149 + $0xe0] sm:$0xff] %v206
                %v208 = vld [vmem:[%s148 + $0x1c8] sm:$0xff]
                %209 = vst [vmem:[%s149 + $0xe8] sm:$0xff] %v208
                %v210 = vld [vmem:[%s148 + $0x1e0] sm:$0xff]
                %211 = vst [vmem:[%s149 + $0xf0] sm:$0xff] %v210
                %v212 = vld [vmem:[%s148 + $0x1e8] sm:$0xff]
                %213 = vst [vmem:[%s149 + $0xf8] sm:$0xff] %v212
                %v214 = vld [vmem:[%s148 + $0x200] sm:$0xff]
                %215 = vst [vmem:[%s149 + $0x100] sm:$0xff] %v214
                %v216 = vld [vmem:[%s148 + $0x208] sm:$0xff]
                %217 = vst [vmem:[%s149 + $0x108] sm:$0xff] %v216
                %v218 = vld [vmem:[%s148 + $0x220] sm:$0xff]
                %219 = vst [vmem:[%s149 + $0x110] sm:$0xff] %v218
                %v220 = vld [vmem:[%s148 + $0x228] sm:$0xff]
                %221 = vst [vmem:[%s149 + $0x118] sm:$0xff] %v220
                %v222 = vld [vmem:[%s148 + $0x240] sm:$0xff]
                %223 = vst [vmem:[%s149 + $0x120] sm:$0xff] %v222
                %v224 = vld [vmem:[%s148 + $0x248] sm:$0xff]
                %225 = vst [vmem:[%s149 + $0x128] sm:$0xff] %v224
                %v226 = vld [vmem:[%s148 + $0x260] sm:$0xff]
                %227 = vst [vmem:[%s149 + $0x130] sm:$0xff] %v226
                %v228 = vld [vmem:[%s148 + $0x268] sm:$0xff]
                %229 = vst [vmem:[%s149 + $0x138] sm:$0xff] %v228
                %v230 = vld [vmem:[%s148 + $0x280] sm:$0xff]
                %231 = vst [vmem:[%s149 + $0x140] sm:$0xff] %v230
                %v232 = vld [vmem:[%s148 + $0x288] sm:$0xff]
                %233 = vst [vmem:[%s149 + $0x148] sm:$0xff] %v232
                %v234 = vld [vmem:[%s148 + $0x2a0] sm:$0xff]
                %235 = vst [vmem:[%s149 + $0x150] sm:$0xff] %v234
                %v236 = vld [vmem:[%s148 + $0x2a8] sm:$0xff]
                %237 = vst [vmem:[%s149 + $0x158] sm:$0xff] %v236
                %v238 = vld [vmem:[%s148 + $0x2c0] sm:$0xff]
                %239 = vst [vmem:[%s149 + $0x160] sm:$0xff] %v238
                %v240 = vld [vmem:[%s148 + $0x2c8] sm:$0xff]
                %241 = vst [vmem:[%s149 + $0x168] sm:$0xff] %v240
                %v242 = vld [vmem:[%s148 + $0x2e0] sm:$0xff]
                %243 = vst [vmem:[%s149 + $0x170] sm:$0xff] %v242
                %v244 = vld [vmem:[%s148 + $0x2e8] sm:$0xff]
                %245 = vst [vmem:[%s149 + $0x178] sm:$0xff] %v244
                %v246 = vld [vmem:[%s148 + $0x300] sm:$0xff]
                %247 = vst [vmem:[%s149 + $0x180] sm:$0xff] %v246
                %v248 = vld [vmem:[%s148 + $0x308] sm:$0xff]
                %249 = vst [vmem:[%s149 + $0x188] sm:$0xff] %v248
                %v250 = vld [vmem:[%s148 + $0x320] sm:$0xff]
                %251 = vst [vmem:[%s149 + $0x190] sm:$0xff] %v250
                %v252 = vld [vmem:[%s148 + $0x328] sm:$0xff]
                %253 = vst [vmem:[%s149 + $0x198] sm:$0xff] %v252
                %v254 = vld [vmem:[%s148 + $0x340] sm:$0xff]
                %255 = vst [vmem:[%s149 + $0x1a0] sm:$0xff] %v254
                %v256 = vld [vmem:[%s148 + $0x348] sm:$0xff]
                %257 = vst [vmem:[%s149 + $0x1a8] sm:$0xff] %v256
                %v258 = vld [vmem:[%s148 + $0x360] sm:$0xff]
                %259 = vst [vmem:[%s149 + $0x1b0] sm:$0xff] %v258
                %v260 = vld [vmem:[%s148 + $0x368] sm:$0xff]
                %261 = vst [vmem:[%s149 + $0x1b8] sm:$0xff] %v260
                %v262 = vld [vmem:[%s148 + $0x380] sm:$0xff]
                %263 = vst [vmem:[%s149 + $0x1c0] sm:$0xff] %v262
                %v264 = vld [vmem:[%s148 + $0x388] sm:$0xff]
                %265 = vst [vmem:[%s149 + $0x1c8] sm:$0xff] %v264
                %v266 = vld [vmem:[%s148 + $0x3a0] sm:$0xff]
                %267 = vst [vmem:[%s149 + $0x1d0] sm:$0xff] %v266
                %v268 = vld [vmem:[%s148 + $0x3a8] sm:$0xff]
                %269 = vst [vmem:[%s149 + $0x1d8] sm:$0xff] %v268
                %v270 = vld [vmem:[%s148 + $0x3c0] sm:$0xff]
                %271 = vst [vmem:[%s149 + $0x1e0] sm:$0xff] %v270
                %v272 = vld [vmem:[%s148 + $0x3c8] sm:$0xff]
                %273 = vst [vmem:[%s149 + $0x1e8] sm:$0xff] %v272
                %v274 = vld [vmem:[%s148 + $0x3e0] sm:$0xff]
                %275 = vst [vmem:[%s149 + $0x1f0] sm:$0xff] %v274
                %v276 = vld [vmem:[%s148 + $0x3e8] sm:$0xff]
                %277 = vst [vmem:[%s149 + $0x1f8] sm:$0xff] %v276
                %v278 = vld [vmem:[%s148 + $0x400] sm:$0xff]
                %279 = vst [vmem:[%s149 + $0x200] sm:$0xff] %v278
                %v280 = vld [vmem:[%s148 + $0x408] sm:$0xff]
                %281 = vst [vmem:[%s149 + $0x208] sm:$0xff] %v280
                %v282 = vld [vmem:[%s148 + $0x420] sm:$0xff]
                %283 = vst [vmem:[%s149 + $0x210] sm:$0xff] %v282
                %v284 = vld [vmem:[%s148 + $0x428] sm:$0xff]
                %285 = vst [vmem:[%s149 + $0x218] sm:$0xff] %v284
                %v286 = vld [vmem:[%s148 + $0x440] sm:$0xff]
                %287 = vst [vmem:[%s149 + $0x220] sm:$0xff] %v286
                %v288 = vld [vmem:[%s148 + $0x448] sm:$0xff]
                %289 = vst [vmem:[%s149 + $0x228] sm:$0xff] %v288
                %v290 = vld [vmem:[%s148 + $0x460] sm:$0xff]
                %291 = vst [vmem:[%s149 + $0x230] sm:$0xff] %v290
                %v292 = vld [vmem:[%s148 + $0x468] sm:$0xff]
                %293 = vst [vmem:[%s149 + $0x238] sm:$0xff] %v292
              $region41: #{forward.23} parent=35 // loop_footer
                %s147 = sadd.s32 1, %s143
              $region42: #{forward.23} parent=35 // loop_footer_branch
                %142 = sbr.rel target = $region38
              $region43: #{forward.23} parent=35 // loop_exit
                _
            $region36: #{forward.23} parent=31 // pred_fallthru
              _
            // Predicated region
            $region44: #{forward.23} parent=31 // pred_check
              _
            $region45: #{forward.23} parent=31 // pred_check_branch
              %295 = sbr.rel target = $region47
            $region46: #{forward.23} parent=31 // pred_region
              _
            $region47: #{forward.23} parent=31 // pred_fallthru
              _
          $region32: #{forward.23} parent=27 // pred_fallthru
            _
          %296 = vnop
        $region28: #{forward.23} parent=23 // pred_fallthru
          _
      $region24: #{forward.23} parent=5 // pred_fallthru
        _
      %p297 = scmp.le.s32.totalorder 1, %s9
      %p298 = scmp.lt.s32.totalorder %s9, 3
      %p299 = pnand %p297, %p298
      %p300 = pneg %p299
      // Predicated region
      $region48: #{forward.23} parent=5 // pred_check
        _
      $region49: #{forward.23} parent=5 // pred_check_branch
        %302 = sbr.rel (%p299) target = $region51
      $region50: #{forward.23} parent=5 // pred_region
        %s303 = ssub.s32 %s9, 1
        %s304 = sand.u32 %s43, 1
        %s305 = sand.u32 %s43, 1
        %s306 = smul.addr %s305, 576
        %s307 = scalar_lea.vmem [#allocation2], %s306
        // Predicated region
        $region52: #{forward.23} parent=50 // pred_check
          %p308 = pneg %p56
        $region53: #{forward.23} parent=50 // pred_check_branch
          %310 = sbr.rel (%p308) target = $region55
        $region54: #{forward.23} parent=50 // pred_region
          _
        $region55: #{forward.23} parent=50 // pred_fallthru
          _
        %p311 = pneg %p30
        %p312 = pneg %p27
        %s313 = sand.u32 %s43, 1
        %s314 = sand.u32 %s43, 1
        %s315 = smul.addr %s314, 576
        %s316 = scalar_lea.vmem [#allocation2], %s315
        %p317 = pneg %p56
        %p318 = pneg %p53
        %p319 = pneg %p77
        %p320 = pneg %p74
        %p321 = pneg %p103
        %p322 = pneg %p100
        %s323 = sand.u32 %s90, 1
        %s324 = sand.u32 %s90, 1
        %s325 = smul.addr %s324, 64
        %s326 = scalar_lea.vmem [#allocation3], %s325
        %s327 = smul.u32 2, %s14
        %s328 = smul.u32 2, %s14
        %v329 = vld [vmem:[%s0] sm:$0xff]
        %v330 = vld [vmem:[%s0 + $0x8] sm:$0xff]
        %v331 = vld [vmem:[%s0 + $0x10] sm:$0xff]
        %v332 = vld [vmem:[%s0 + $0x18] sm:$0xff]
        %v333 = vld [vmem:[%s0 + $0x20] sm:$0xff]
        %v334 = vld [vmem:[%s0 + $0x28] sm:$0xff]
        %v335 = vld [vmem:[%s0 + $0x30] sm:$0xff]
        %v336 = vld [vmem:[%s0 + $0x38] sm:$0xff]
        %v337 = vld [vmem:[%s0 + $0x40] sm:$0xff]
        %v338 = vld [vmem:[%s0 + $0x48] sm:$0xff]
        %v339 = vld [vmem:[%s0 + $0x50] sm:$0xff]
        %v340 = vld [vmem:[%s0 + $0x58] sm:$0xff]
        %v341 = vld [vmem:[%s307] sm:$0xff]
        %v342 = vld [vmem:[%s307 + $0x8] sm:$0xff]
        %v343 = vld [vmem:[%s307 + $0x10] sm:$0xff]
        %v344 = vld [vmem:[%s307 + $0x18] sm:$0xff]
        %v345 = vld [vmem:[%s307 + $0x20] sm:$0xff]
        %v346 = vld [vmem:[%s307 + $0x28] sm:$0xff]
        %v347 = vld [vmem:[%s307 + $0x30] sm:$0xff]
        %v348 = vld [vmem:[%s307 + $0x38] sm:$0xff]
        %v349 = vld [vmem:[%s307 + $0x40] sm:$0xff]
        %v350 = vld [vmem:[%s307 + $0x48] sm:$0xff]
        %v351 = vld [vmem:[%s307 + $0x50] sm:$0xff]
        %v352 = vld [vmem:[%s307 + $0x58] sm:$0xff]
        %v353 = vld [vmem:[%s307 + $0x60] sm:$0xff]
        %v354 = vld [vmem:[%s307 + $0x68] sm:$0xff]
        %v355 = vld [vmem:[%s307 + $0x70] sm:$0xff]
        %v356 = vld [vmem:[%s307 + $0x78] sm:$0xff]
        %v357 = vld [vmem:[%s307 + $0x80] sm:$0xff]
        %v358 = vld [vmem:[%s307 + $0x88] sm:$0xff]
        %v359 = vld [vmem:[%s307 + $0x90] sm:$0xff]
        %v360 = vld [vmem:[%s307 + $0x98] sm:$0xff]
        %v361 = vld [vmem:[%s307 + $0xa0] sm:$0xff]
        %v362 = vld [vmem:[%s307 + $0xa8] sm:$0xff]
        %v363 = vld [vmem:[%s307 + $0xb0] sm:$0xff]
        %v364 = vld [vmem:[%s307 + $0xb8] sm:$0xff]
        %v365 = vld [vmem:[%s307 + $0xc0] sm:$0xff]
        %v366 = vld [vmem:[%s307 + $0xc8] sm:$0xff]
        %v367 = vld [vmem:[%s307 + $0xd0] sm:$0xff]
        %v368 = vld [vmem:[%s307 + $0xd8] sm:$0xff]
        %v369 = vld [vmem:[%s307 + $0xe0] sm:$0xff]
        %v370 = vld [vmem:[%s307 + $0xe8] sm:$0xff]
        %v371 = vld [vmem:[%s307 + $0xf0] sm:$0xff]
        %v372 = vld [vmem:[%s307 + $0xf8] sm:$0xff]
        %v373 = vld [vmem:[%s307 + $0x100] sm:$0xff]
        %v374 = vld [vmem:[%s307 + $0x108] sm:$0xff]
        %v375 = vld [vmem:[%s307 + $0x110] sm:$0xff]
        %v376 = vld [vmem:[%s307 + $0x118] sm:$0xff]
        %v377 = vld [vmem:[%s307 + $0x120] sm:$0xff]
        %v378 = vld [vmem:[%s307 + $0x128] sm:$0xff]
        %v379 = vld [vmem:[%s307 + $0x130] sm:$0xff]
        %v380 = vld [vmem:[%s307 + $0x138] sm:$0xff]
        %v381 = vld [vmem:[%s307 + $0x140] sm:$0xff]
        %v382 = vld [vmem:[%s307 + $0x148] sm:$0xff]
        %v383 = vld [vmem:[%s307 + $0x150] sm:$0xff]
        %v384 = vld [vmem:[%s307 + $0x158] sm:$0xff]
        %v385 = vld [vmem:[%s307 + $0x160] sm:$0xff]
        %v386 = vld [vmem:[%s307 + $0x168] sm:$0xff]
        %v387 = vld [vmem:[%s307 + $0x170] sm:$0xff]
        %v388 = vld [vmem:[%s307 + $0x178] sm:$0xff]
        %v389 = vld [vmem:[%s307 + $0x180] sm:$0xff]
        %v390 = vld [vmem:[%s307 + $0x188] sm:$0xff]
        %v391 = vld [vmem:[%s307 + $0x190] sm:$0xff]
        %v392 = vld [vmem:[%s307 + $0x198] sm:$0xff]
        %v393 = vld [vmem:[%s307 + $0x1a0] sm:$0xff]
        %v394 = vld [vmem:[%s307 + $0x1a8] sm:$0xff]
        %v395 = vld [vmem:[%s307 + $0x1b0] sm:$0xff]
        %v396 = vld [vmem:[%s307 + $0x1b8] sm:$0xff]
        %v397 = vld [vmem:[%s307 + $0x1c0] sm:$0xff]
        %v398 = vld [vmem:[%s307 + $0x1c8] sm:$0xff]
        %v399 = vld [vmem:[%s307 + $0x1d0] sm:$0xff]
        %v400 = vld [vmem:[%s307 + $0x1d8] sm:$0xff]
        %v401 = vld [vmem:[%s307 + $0x1e0] sm:$0xff]
        %v402 = vld [vmem:[%s307 + $0x1e8] sm:$0xff]
        %v403 = vld [vmem:[%s307 + $0x1f0] sm:$0xff]
        %v404 = vld [vmem:[%s307 + $0x1f8] sm:$0xff]
        %v405 = vld [vmem:[%s307 + $0x200] sm:$0xff]
        %v406 = vld [vmem:[%s307 + $0x208] sm:$0xff]
        %v407 = vld [vmem:[%s307 + $0x210] sm:$0xff]
        %v408 = vld [vmem:[%s307 + $0x218] sm:$0xff]
        %v409 = vld [vmem:[%s307 + $0x220] sm:$0xff]
        %v410 = vld [vmem:[%s307 + $0x228] sm:$0xff]
        %v411 = vld [vmem:[%s307 + $0x230] sm:$0xff]
        %v412 = vld [vmem:[%s307 + $0x238] sm:$0xff]
        %v413 = vld [vmem:[%s2] sm:$0xff]
        %v414 = vld [vmem:[%s2 + $0x8] sm:$0xff]
        %v415 = vld [vmem:[%s2 + $0x10] sm:$0xff]
        %v416 = vld [vmem:[%s2 + $0x18] sm:$0xff]
        %418 = vset.pattern.permute.xlu0 0
        %419 = vperm.xlu0 %418, %v413
        %v420 = vpop.permute.xlu0 %419
        %423 = vset.pattern.permute.xlu0 0
        %424 = vperm.xlu0 %423, %v414
        %v425 = vpop.permute.xlu0 %424
        %428 = vset.pattern.permute.xlu0 0
        %429 = vperm.xlu0 %428, %v415
        %v430 = vpop.permute.xlu0 %429
        %433 = vset.pattern.permute.xlu0 0
        %434 = vperm.xlu0 %433, %v416
        %v435 = vpop.permute.xlu0 %434
        %vm437 = vcmask 261120
        %v439 = vsel %vm437, %v331, 0
        %v442 = vsel %vm437, %v334, 0
        %v445 = vsel %vm437, %v337, 0
        %v448 = vsel %vm437, %v340, 0
        %450 = vmatprep.subr.mxu0 %v372
        %451 = vmatpush1.msra.mxu0 %v371
        %452 = vmatprep.subr.mxu0 %v370
        %453 = vmatpush1.msra.mxu0 %v369
        %454 = vmatprep.subr.mxu0 %v368
        %455 = vmatpush1.msra.mxu0 %v367
        %456 = vmatprep.subr.mxu0 %v366
        %457 = vmatpush1.msra.mxu0 %v365
        %458 = vmatprep.subr.mxu0 %v364
        %459 = vmatpush1.msra.mxu0 %v363
        %460 = vmatprep.subr.mxu0 %v362
        %461 = vmatpush1.msra.mxu0 %v361
        %462 = vmatprep.subr.mxu0 %v360
        %463 = vmatpush1.msra.mxu0 %v359
        %464 = vmatprep.subr.mxu0 %v358
        %465 = vmatpush1.msra.mxu0 %v357
        %466 = vmatprep.subr.mxu0 %v356
        %467 = vmatpush1.msra.mxu0 %v355
        %468 = vmatprep.subr.mxu0 %v354
        %469 = vmatpush1.msra.mxu0 %v353
        %470 = vmatprep.subr.mxu0 %v352
        %471 = vmatpush1.msra.mxu0 %v351
        %472 = vmatprep.subr.mxu0 %v350
        %473 = vmatpush1.msra.mxu0 %v349
        %474 = vmatprep.subr.mxu0 %v348
        %475 = vmatpush1.msra.mxu0 %v347
        %476 = vmatprep.subr.mxu0 %v346
        %477 = vmatpush1.msra.mxu0 %v345
        %478 = vmatprep.subr.mxu0 %v344
        %479 = vmatpush1.msra.mxu0 %v343
        %480 = vmatprep.subr.mxu0 %v342
        %481 = vmatpush1.msra.mxu0 %v341
        %482 = vmatprep.subr.mxu0 %v404
        %483 = vmatpush2.msra.mxu0 %v403
        %484 = vmatprep.subr.mxu0 %v402
        %485 = vmatpush2.msra.mxu0 %v401
        %486 = vmatprep.subr.mxu0 %v400
        %487 = vmatpush2.msra.mxu0 %v399
        %488 = vmatprep.subr.mxu0 %v398
        %489 = vmatpush2.msra.mxu0 %v397
        %490 = vmatprep.subr.mxu0 %v396
        %491 = vmatpush2.msra.mxu0 %v395
        %492 = vmatprep.subr.mxu0 %v394
        %493 = vmatpush2.msra.mxu0 %v393
        %494 = vmatprep.subr.mxu0 %v392
        %495 = vmatpush2.msra.mxu0 %v391
        %496 = vmatprep.subr.mxu0 %v390
        %497 = vmatpush2.msra.mxu0 %v389
        %498 = vmatprep.subr.mxu0 %v388
        %499 = vmatpush2.msra.mxu0 %v387
        %500 = vmatprep.subr.mxu0 %v386
        %501 = vmatpush2.msra.mxu0 %v385
        %502 = vmatprep.subr.mxu0 %v384
        %503 = vmatpush2.msra.mxu0 %v383
        %504 = vmatprep.subr.mxu0 %v382
        %505 = vmatpush2.msra.mxu0 %v381
        %506 = vmatprep.subr.mxu0 %v380
        %507 = vmatpush2.msra.mxu0 %v379
        %508 = vmatprep.subr.mxu0 %v378
        %509 = vmatpush2.msra.mxu0 %v377
        %510 = vmatprep.subr.mxu0 %v376
        %511 = vmatpush2.msra.mxu0 %v375
        %512 = vmatprep.subr.mxu0 %v374
        %513 = vmatpush2.msra.mxu0 %v373
        %514 = vmatprep.mubr.f32.mxu0 %v330
        %515 = vmatmul.mubr.f32.gmra.mxu0 %v329
        %v516 = vpop.f32.mrf.mxu0
        %v517 = vadd.f32 %v420, %v516
        %v518 = vpop.f32.mrf.mxu0
        %v519 = vadd.f32 %v420, %v518
        %520 = vmatprep.mubr.f32.mxu0 %v333
        %521 = vmatmul.mubr.f32.gmra.mxu0 %v332
        %v522 = vpop.f32.mrf.mxu0
        %v523 = vadd.f32 %v425, %v522
        %v524 = vpop.f32.mrf.mxu0
        %v525 = vadd.f32 %v425, %v524
        %526 = vmatprep.mubr.f32.mxu0 %v336
        %527 = vmatmul.mubr.f32.gmra.mxu0 %v335
        %v528 = vpop.f32.mrf.mxu0
        %v529 = vadd.f32 %v430, %v528
        %v530 = vpop.f32.mrf.mxu0
        %v531 = vadd.f32 %v430, %v530
        %532 = vmatprep.mubr.f32.mxu0 %v339
        %533 = vmatmul.mubr.f32.gmra.mxu0 %v338
        %v534 = vpop.f32.mrf.mxu0
        %v535 = vadd.f32 %v435, %v534
        %v536 = vpop.f32.mrf.mxu0
        %v537 = vadd.f32 %v435, %v536
        %538 = vdwg.mxu0
        %539 = vmatprep.subr.mxu0 0.0
        %540 = vmatpush1.msra.mxu0 0.0
        %541 = vmatprep.subr.mxu0 0.0
        %542 = vmatpush1.msra.mxu0 0.0
        %543 = vmatprep.subr.mxu0 0.0
        %544 = vmatpush1.msra.mxu0 0.0
        %545 = vmatprep.subr.mxu0 0.0
        %546 = vmatpush1.msra.mxu0 0.0
        %547 = vmatprep.subr.mxu0 0.0
        %548 = vmatpush1.msra.mxu0 0.0
        %549 = vmatprep.subr.mxu0 0.0
        %550 = vmatpush1.msra.mxu0 0.0
        %551 = vmatprep.subr.mxu0 0.0
        %552 = vmatpush1.msra.mxu0 0.0
        %553 = vmatprep.subr.mxu0 0.0
        %554 = vmatpush1.msra.mxu0 0.0
        %555 = vmatprep.subr.mxu0 0.0
        %556 = vmatpush1.msra.mxu0 0.0
        %557 = vmatprep.subr.mxu0 0.0
        %558 = vmatpush1.msra.mxu0 0.0
        %559 = vmatprep.subr.mxu0 0.0
        %560 = vmatpush1.msra.mxu0 0.0
        %561 = vmatprep.subr.mxu0 0.0
        %562 = vmatpush1.msra.mxu0 0.0
        %563 = vmatprep.subr.mxu0 %v412
        %564 = vmatpush1.msra.mxu0 %v411
        %565 = vmatprep.subr.mxu0 %v410
        %566 = vmatpush1.msra.mxu0 %v409
        %567 = vmatprep.subr.mxu0 %v408
        %568 = vmatpush1.msra.mxu0 %v407
        %569 = vmatprep.subr.mxu0 %v406
        %570 = vmatpush1.msra.mxu0 %v405
        %571 = vmatprep.subr.mxu0 0.0
        %572 = vmatpush2.msra.mxu0 0.0
        %573 = vmatprep.subr.mxu0 0.0
        %574 = vmatpush2.msra.mxu0 0.0
        %575 = vmatprep.subr.mxu0 0.0
        %576 = vmatpush2.msra.mxu0 0.0
        %577 = vmatprep.subr.mxu0 0.0
        %578 = vmatpush2.msra.mxu0 0.0
        %579 = vmatprep.subr.mxu0 0.0
        %580 = vmatpush2.msra.mxu0 0.0
        %581 = vmatprep.subr.mxu0 0.0
        %582 = vmatpush2.msra.mxu0 0.0
        %583 = vmatprep.subr.mxu0 0.0
        %584 = vmatpush2.msra.mxu0 0.0
        %585 = vmatprep.subr.mxu0 0.0
        %586 = vmatpush2.msra.mxu0 0.0
        %587 = vmatprep.subr.mxu0 0.0
        %588 = vmatpush2.msra.mxu0 0.0
        %589 = vmatprep.subr.mxu0 0.0
        %590 = vmatpush2.msra.mxu0 0.0
        %591 = vmatprep.subr.mxu0 0.0
        %592 = vmatpush2.msra.mxu0 0.0
        %593 = vmatprep.subr.mxu0 0.0
        %594 = vmatpush2.msra.mxu0 0.0
        %595 = vmatprep.subr.mxu0 0.0
        %596 = vmatpush2.msra.mxu0 0.0
        %597 = vmatprep.subr.mxu0 0.0
        %598 = vmatpush2.msra.mxu0 0.0
        %599 = vmatprep.subr.mxu0 0.0
        %600 = vmatpush2.msra.mxu0 0.0
        %601 = vmatprep.subr.mxu0 0.0
        %602 = vmatpush2.msra.mxu0 0.0
        %603 = vmatprep.mubr.f32.mxu0 0.0
        %604 = vmatmul.mubr.f32.gmra.mxu0 %v439
        %v605 = vpop.f32.mrf.mxu0
        %v606 = vadd.f32 %v517, %v605
        %v607 = vpop.f32.mrf.mxu0
        %v608 = vadd.f32 %v519, %v607
        %609 = vmatprep.mubr.f32.mxu0 0.0
        %610 = vmatmul.mubr.f32.gmra.mxu0 %v442
        %v611 = vpop.f32.mrf.mxu0
        %v612 = vadd.f32 %v523, %v611
        %v613 = vpop.f32.mrf.mxu0
        %v614 = vadd.f32 %v525, %v613
        %615 = vmatprep.mubr.f32.mxu0 0.0
        %616 = vmatmul.mubr.f32.gmra.mxu0 %v445
        %v617 = vpop.f32.mrf.mxu0
        %v618 = vadd.f32 %v529, %v617
        %v619 = vpop.f32.mrf.mxu0
        %v620 = vadd.f32 %v531, %v619
        %621 = vmatprep.mubr.f32.mxu0 0.0
        %622 = vmatmul.mubr.f32.gmra.mxu0 %v448
        %v623 = vpop.f32.mrf.mxu0
        %v624 = vadd.f32 %v535, %v623
        %v625 = vpop.f32.mrf.mxu0
        %v626 = vadd.f32 %v537, %v625
        %627 = vdwg.mxu0
        %v628 = vmax.f32 %v606, 0.0
        %v629 = vmax.f32 %v608, 0.0
        %v630 = vmax.f32 %v612, 0.0
        %v631 = vmax.f32 %v614, 0.0
        %v632 = vmax.f32 %v618, 0.0
        %v633 = vmax.f32 %v620, 0.0
        %v634 = vmax.f32 %v624, 0.0
        %v635 = vmax.f32 %v626, 0.0
        %636 = vst [vmem:[%s326] sm:$0xff] %v628
        %637 = vst [vmem:[%s326 + $0x8] sm:$0xff] %v629
        %638 = vst [vmem:[%s326 + $0x10] sm:$0xff] %v630
        %639 = vst [vmem:[%s326 + $0x18] sm:$0xff] %v631
        %640 = vst [vmem:[%s326 + $0x20] sm:$0xff] %v632
        %641 = vst [vmem:[%s326 + $0x28] sm:$0xff] %v633
        %642 = vst [vmem:[%s326 + $0x30] sm:$0xff] %v634
        %643 = vst [vmem:[%s326 + $0x38] sm:$0xff] %v635
        %s644 = sand.u32 %s90, 1
        %s645 = sand.u32 %s90, 1
        %s646 = smul.addr %s645, 64
        %s647 = scalar_lea.vmem [#allocation3], %s646
        // Predicated region
        $region56: #{forward.23} parent=50 // pred_check
          %p648 = pneg %p100
        $region57: #{forward.23} parent=50 // pred_check_branch
          %650 = sbr.rel (%p648) target = $region59
        $region58: #{forward.23} parent=50 // pred_region
          %s651 = smul.u32 2, %s14
          %s652 = smul.addr %s651, 8
          %s653 = scalar_lea.vmem %s3, %s652
          // Predicated region
          $region60: #{forward.23} parent=58 // pred_check
            _
          $region61: #{forward.23} parent=58 // pred_check_branch
            %655 = sbr.rel (0) target = $region63
          $region62: #{forward.23} parent=58 // pred_region
            // Predicated region
            $region64: #{forward.23} parent=62 // pred_check
              _
            $region65: #{forward.23} parent=62 // pred_check_branch
              %657 = sbr.rel (0) target = $region67
            $region66: #{forward.23} parent=62 // pred_region
              loop: start=0, step=1, limit=1
              $region68: #{forward.23} parent=66 // loop_pre_header
                _
              $region69: #{forward.23} parent=66 // loop_header
                %s659 = sphi 0, %s663
                %p660 = scmp.ge.s32.totalorder %s659, 1
                %s664 = sphi %s647, %s647
                %s665 = sphi %s653, %s653
              $region70: #{forward.23} parent=66 // loop_header_branch
                %662 = sbr.rel (%p660) target = $region74
              $region71: #{forward.23} parent=66 // loop_body
                %v666 = vld [vmem:[%s664] sm:$0xff]
                %667 = vst [vmem:[%s665] sm:$0xff] %v666
                %v668 = vld [vmem:[%s664 + $0x8] sm:$0xff]
                %669 = vst [vmem:[%s665 + $0x8] sm:$0xff] %v668
                %v670 = vld [vmem:[%s664 + $0x10] sm:$0xff]
                %671 = vst [vmem:[%s665 + $0x20] sm:$0xff] %v670
                %v672 = vld [vmem:[%s664 + $0x18] sm:$0xff]
                %673 = vst [vmem:[%s665 + $0x28] sm:$0xff] %v672
                %v674 = vld [vmem:[%s664 + $0x20] sm:$0xff]
                %675 = vst [vmem:[%s665 + $0x40] sm:$0xff] %v674
                %v676 = vld [vmem:[%s664 + $0x28] sm:$0xff]
                %677 = vst [vmem:[%s665 + $0x48] sm:$0xff] %v676
                %v678 = vld [vmem:[%s664 + $0x30] sm:$0xff]
                %679 = vst [vmem:[%s665 + $0x60] sm:$0xff] %v678
                %v680 = vld [vmem:[%s664 + $0x38] sm:$0xff]
                %681 = vst [vmem:[%s665 + $0x68] sm:$0xff] %v680
              $region72: #{forward.23} parent=66 // loop_footer
                %s663 = sadd.s32 1, %s659
              $region73: #{forward.23} parent=66 // loop_footer_branch
                %658 = sbr.rel target = $region69
              $region74: #{forward.23} parent=66 // loop_exit
                _
            $region67: #{forward.23} parent=62 // pred_fallthru
              _
            // Predicated region
            $region75: #{forward.23} parent=62 // pred_check
              _
            $region76: #{forward.23} parent=62 // pred_check_branch
              %683 = sbr.rel target = $region78
            $region77: #{forward.23} parent=62 // pred_region
              _
            $region78: #{forward.23} parent=62 // pred_fallthru
              _
          $region63: #{forward.23} parent=58 // pred_fallthru
            _
          %684 = vnop
        $region59: #{forward.23} parent=50 // pred_fallthru
          _
      $region51: #{forward.23} parent=5 // pred_fallthru
        _
      %p685 = scmp.le.s32.totalorder 2, %s9
      // Predicated region
      $region79: #{forward.23} parent=5 // pred_check
        %p686 = pneg %p685
      $region80: #{forward.23} parent=5 // pred_check_branch
        %688 = sbr.rel (%p686) target = $region82
      $region81: #{forward.23} parent=5 // pred_region
        %s689 = ssub.s32 %s9, 2
        // Predicated region
        $region83: #{forward.23} parent=81 // pred_check
          %p690 = pneg %p106
        $region84: #{forward.23} parent=81 // pred_check_branch
          %692 = sbr.rel (%p690) target = $region86
        $region85: #{forward.23} parent=81 // pred_region
          %s693 = sand.u32 %s91, 1
          %s694 = sand.u32 %s91, 1
          %s695 = smul.addr %s694, 64
          %s696 = scalar_lea.vmem [#allocation3], %s695
        $region86: #{forward.23} parent=81 // pred_fallthru
          _
      $region82: #{forward.23} parent=5 // pred_fallthru
        _
    $region6: #{forward.23} parent=1 // loop_footer
      %s13 = sadd.s32 1, %s9
    $region7: #{forward.23} parent=1 // loop_footer_branch
      %8 = sbr.rel target = $region3
    $region8: #{forward.23} parent=1 // loop_exit
      _

// kernel: forward.24
$region0: #{forward.24}
  #allocation0 [shape = 'u32[]', space=smem, size = 0x4, offset = 0x4, fixed_abs, tag = 'smem constant byte address 0x4 - core index']
  #allocation1 [shape = 'u32[144,128]{1,0:T(1,128)}', space=vmem, size = 0x12000, scoped, tag = 'internal scratch']
  %s0 = inlined_call_operand.vmem [shape: f32[32,288], index: 0, kind: input, shape index: {}]
  %s1 = inlined_call_operand.vmem [shape: f32[288,512], index: 1, kind: input, shape index: {}]
  %s2 = inlined_call_operand.vmem [shape: f32[32,1], index: 2, kind: input, shape index: {}]
  %s3 = inlined_call_operand.vmem [shape: f32[32,512], index: 3, kind: input, shape index: {}]
  %s4 = inlined_call_operand.vmem [shape: f32[32,512], index: 4, kind: output, shape index: {}]
  %s5 = sld [smem:[#allocation0]]
  $region114: #{forward.24} parent=0
    _
  %s7 = ssub.s32 1, %s5
  %s8 = scalar_select 0, %s7, %s5
  $region1: #{forward.24} parent=0
    #allocation2 [shape = 'u8[589824]{0}', space=vmem, size = 0x90000, scoped, tag = 'input window, operand 1']
    #allocation3 [shape = 'u8[65536]{0}', space=vmem, size = 0x10000, scoped, tag = 'input window, operand 3']
    #allocation4 [shape = 'u8[65536]{0}', space=vmem, size = 0x10000, scoped, tag = 'output window, operand 0']
    loop: start=0, step=1, limit=4
    $region2: #{forward.24} parent=1 // loop_pre_header
      _
    $region3: #{forward.24} parent=1 // loop_header
      %s10 = sphi 0, %s14
      %p11 = scmp.ge.s32.totalorder %s10, 4
      %s18 = sphi 0, %s18
      %s20 = sphi 0, %s18
      %s21 = sphi 0, %s20
      %s35 = sphi 0, %s21
      %s41 = sphi 0, %s43
      %s44 = sphi 0, %s41
      %s45 = sphi 0, %s44
      %s61 = sphi 0, %s45
      %s65 = sphi 0, %s65
      %s67 = sphi 0, %s65
      %s68 = sphi 0, %s67
      %s82 = sphi 0, %s68
      %s88 = sphi 0, %s90
      %s91 = sphi 0, %s88
      %s92 = sphi 0, %s91
      %s108 = sphi 0, %s92
      %s114 = sphi 0, %s116
      %s117 = sphi 0, %s114
      %s118 = sphi 0, %s117
      %s134 = sphi 0, %s118
    $region4: #{forward.24} parent=1 // loop_header_branch
      %13 = sbr.rel (%p11) target = $region8
    $region5: #{forward.24} parent=1 // loop_body
      %s15 = ssub.s32 %s10, 1
      %s16 = ssub.s32 %s10, 2
      %s17 = sadd.s32 %s10, 1
      %s19 = sadd.s32 %s18, 1
      %p22 = scmp.eq.s32.totalorder %s10, 1
      %p23 = scmp.ne.s32.totalorder %s18, %s20
      %p24 = scmp.eq.s32.totalorder %s10, 0
      %p25 = por %p23, %p24
      %p26 = scmp.ne.s32.totalorder %s18, %s20
      %p27 = scmp.eq.s32.totalorder %s15, 1
      %p28 = por %p26, %p27
      %p29 = scmp.ne.s32.totalorder %s20, %s21
      %p30 = scmp.eq.s32.totalorder %s15, 0
      %p31 = por %p29, %p30
      %p32 = scmp.ne.s32.totalorder %s20, %s21
      %p33 = scmp.eq.s32.totalorder %s16, 1
      %p34 = por %p32, %p33
      %p36 = scmp.ne.s32.totalorder %s21, %s35
      %p37 = scmp.eq.s32.totalorder %s16, 0
      %p38 = por %p36, %p37
      %s39 = ssub.s32 %s10, %s17
      %p40 = scmp.eq.s32.totalorder %s39, 0
      %s42 = sadd.s32 %s41, 1
      %s43 = scalar_select %p40, %s41, %s42
      %p46 = pneg %p40
      %p47 = scmp.eq.s32.totalorder %s10, 1
      %p48 = por %p46, %p47
      %p49 = scmp.ne.s32.totalorder %s41, %s44
      %p50 = scmp.eq.s32.totalorder %s10, 0
      %p51 = por %p49, %p50
      %p52 = scmp.ne.s32.totalorder %s41, %s44
      %p53 = scmp.eq.s32.totalorder %s15, 1
      %p54 = por %p52, %p53
      %p55 = scmp.ne.s32.totalorder %s44, %s45
      %p56 = scmp.eq.s32.totalorder %s15, 0
      %p57 = por %p55, %p56
      %p58 = scmp.ne.s32.totalorder %s44, %s45
      %p59 = scmp.eq.s32.totalorder %s16, 1
      %p60 = por %p58, %p59
      %p62 = scmp.ne.s32.totalorder %s45, %s61
      %p63 = scmp.eq.s32.totalorder %s16, 0
      %p64 = por %p62, %p63
      %s66 = sadd.s32 %s65, 1
      %p69 = scmp.eq.s32.totalorder %s10, 1
      %p70 = scmp.ne.s32.totalorder %s65, %s67
      %p71 = scmp.eq.s32.totalorder %s10, 0
      %p72 = por %p70, %p71
      %p73 = scmp.ne.s32.totalorder %s65, %s67
      %p74 = scmp.eq.s32.totalorder %s15, 1
      %p75 = por %p73, %p74
      %p76 = scmp.ne.s32.totalorder %s67, %s68
      %p77 = scmp.eq.s32.totalorder %s15, 0
      %p78 = por %p76, %p77
      %p79 = scmp.ne.s32.totalorder %s67, %s68
      %p80 = scmp.eq.s32.totalorder %s16, 1
      %p81 = por %p79, %p80
      %p83 = scmp.ne.s32.totalorder %s68, %s82
      %p84 = scmp.eq.s32.totalorder %s16, 0
      %p85 = por %p83, %p84
      %s86 = ssub.s32 %s10, %s17
      %p87 = scmp.eq.s32.totalorder %s86, 0
      %s89 = sadd.s32 %s88, 1
      %s90 = scalar_select %p87, %s88, %s89
      %p93 = pneg %p87
      %p94 = scmp.eq.s32.totalorder %s10, 1
      %p95 = por %p93, %p94
      %p96 = scmp.ne.s32.totalorder %s88, %s91
      %p97 = scmp.eq.s32.totalorder %s10, 0
      %p98 = por %p96, %p97
      %p99 = scmp.ne.s32.totalorder %s88, %s91
      %p100 = scmp.eq.s32.totalorder %s15, 1
      %p101 = por %p99, %p100
      %p102 = scmp.ne.s32.totalorder %s91, %s92
      %p103 = scmp.eq.s32.totalorder %s15, 0
      %p104 = por %p102, %p103
      %p105 = scmp.ne.s32.totalorder %s91, %s92
      %p106 = scmp.eq.s32.totalorder %s16, 1
      %p107 = por %p105, %p106
      %p109 = scmp.ne.s32.totalorder %s92, %s108
      %p110 = scmp.eq.s32.totalorder %s16, 0
      %p111 = por %p109, %p110
      %s112 = ssub.s32 %s10, %s17
      %p113 = scmp.eq.s32.totalorder %s112, 0
      %s115 = sadd.s32 %s114, 1
      %s116 = scalar_select %p113, %s114, %s115
      %p119 = pneg %p113
      %p120 = scmp.eq.s32.totalorder %s10, 1
      %p121 = por %p119, %p120
      %p122 = scmp.ne.s32.totalorder %s114, %s117
      %p123 = scmp.eq.s32.totalorder %s10, 0
      %p124 = por %p122, %p123
      %p125 = scmp.ne.s32.totalorder %s114, %s117
      %p126 = scmp.eq.s32.totalorder %s15, 1
      %p127 = por %p125, %p126
      %p128 = scmp.ne.s32.totalorder %s117, %s118
      %p129 = scmp.eq.s32.totalorder %s15, 0
      %p130 = por %p128, %p129
      %p131 = scmp.ne.s32.totalorder %s117, %s118
      %p132 = scmp.eq.s32.totalorder %s16, 1
      %p133 = por %p131, %p132
      %p135 = scmp.ne.s32.totalorder %s118, %s134
      %p136 = scmp.eq.s32.totalorder %s16, 0
      %p137 = por %p135, %p136
      %p138 = scmp.le.s32.totalorder 1, %s10
      %p139 = scmp.lt.s32.totalorder %s10, 3
      %p140 = pnand %p138, %p139
      %p141 = pneg %p140
      // Predicated region
      $region9: #{forward.24} parent=5 // pred_check
        _
      $region10: #{forward.24} parent=5 // pred_check_branch
        %143 = sbr.rel (%p140) target = $region12
      $region11: #{forward.24} parent=5 // pred_region
        %s144 = ssub.s32 %s10, 1
        // Predicated region
        $region13: #{forward.24} parent=11 // pred_check
          %p145 = pneg %p31
        $region14: #{forward.24} parent=11 // pred_check_branch
          %147 = sbr.rel (%p145) target = $region16
        $region15: #{forward.24} parent=11 // pred_region
          _
        $region16: #{forward.24} parent=11 // pred_fallthru
          _
        // Predicated region
        $region17: #{forward.24} parent=11 // pred_check
          %p148 = pneg %p78
        $region18: #{forward.24} parent=11 // pred_check_branch
          %150 = sbr.rel (%p148) target = $region20
        $region19: #{forward.24} parent=11 // pred_region
          _
        $region20: #{forward.24} parent=11 // pred_fallthru
          _
      $region12: #{forward.24} parent=5 // pred_fallthru
        _
      %p151 = scmp.lt.s32.totalorder %s10, 2
      // Predicated region
      $region21: #{forward.24} parent=5 // pred_check
        %p152 = pneg %p151
      $region22: #{forward.24} parent=5 // pred_check_branch
        %154 = sbr.rel (%p152) target = $region24
      $region23: #{forward.24} parent=5 // pred_region
        // Predicated region
        $region25: #{forward.24} parent=23 // pred_check
          %p155 = pneg %p51
        $region26: #{forward.24} parent=23 // pred_check_branch
          %157 = sbr.rel (%p155) target = $region28
        $region27: #{forward.24} parent=23 // pred_region
          %s158 = sand.u32 %s41, 1
          %s159 = sand.u32 %s41, 1
          %s160 = smul.addr %s159, 576
          %s161 = scalar_lea.vmem [#allocation2], %s160
          %s162 = smul.u32 2, %s10
          %s163 = smul.addr %s162, 8
          %s164 = scalar_lea.vmem %s1, %s163
          // Predicated region
          $region29: #{forward.24} parent=27 // pred_check
            _
          $region30: #{forward.24} parent=27 // pred_check_branch
            %166 = sbr.rel (0) target = $region32
          $region31: #{forward.24} parent=27 // pred_region
            // Predicated region
            $region33: #{forward.24} parent=31 // pred_check
              _
            $region34: #{forward.24} parent=31 // pred_check_branch
              %168 = sbr.rel (0) target = $region36
            $region35: #{forward.24} parent=31 // pred_region
              loop: start=0, step=1, limit=1
              $region37: #{forward.24} parent=35 // loop_pre_header
                _
              $region38: #{forward.24} parent=35 // loop_header
                %s170 = sphi 0, %s174
                %p171 = scmp.ge.s32.totalorder %s170, 1
                %s175 = sphi %s164, %s164
                %s176 = sphi %s161, %s161
              $region39: #{forward.24} parent=35 // loop_header_branch
                %173 = sbr.rel (%p171) target = $region43
              $region40: #{forward.24} parent=35 // loop_body
                %v177 = vld [vmem:[%s175] sm:$0xff]
                %178 = vst [vmem:[%s176] sm:$0xff] %v177
                %v179 = vld [vmem:[%s175 + $0x8] sm:$0xff]
                %180 = vst [vmem:[%s176 + $0x8] sm:$0xff] %v179
                %v181 = vld [vmem:[%s175 + $0x20] sm:$0xff]
                %182 = vst [vmem:[%s176 + $0x10] sm:$0xff] %v181
                %v183 = vld [vmem:[%s175 + $0x28] sm:$0xff]
                %184 = vst [vmem:[%s176 + $0x18] sm:$0xff] %v183
                %v185 = vld [vmem:[%s175 + $0x40] sm:$0xff]
                %186 = vst [vmem:[%s176 + $0x20] sm:$0xff] %v185
                %v187 = vld [vmem:[%s175 + $0x48] sm:$0xff]
                %188 = vst [vmem:[%s176 + $0x28] sm:$0xff] %v187
                %v189 = vld [vmem:[%s175 + $0x60] sm:$0xff]
                %190 = vst [vmem:[%s176 + $0x30] sm:$0xff] %v189
                %v191 = vld [vmem:[%s175 + $0x68] sm:$0xff]
                %192 = vst [vmem:[%s176 + $0x38] sm:$0xff] %v191
                %v193 = vld [vmem:[%s175 + $0x80] sm:$0xff]
                %194 = vst [vmem:[%s176 + $0x40] sm:$0xff] %v193
                %v195 = vld [vmem:[%s175 + $0x88] sm:$0xff]
                %196 = vst [vmem:[%s176 + $0x48] sm:$0xff] %v195
                %v197 = vld [vmem:[%s175 + $0xa0] sm:$0xff]
                %198 = vst [vmem:[%s176 + $0x50] sm:$0xff] %v197
                %v199 = vld [vmem:[%s175 + $0xa8] sm:$0xff]
                %200 = vst [vmem:[%s176 + $0x58] sm:$0xff] %v199
                %v201 = vld [vmem:[%s175 + $0xc0] sm:$0xff]
                %202 = vst [vmem:[%s176 + $0x60] sm:$0xff] %v201
                %v203 = vld [vmem:[%s175 + $0xc8] sm:$0xff]
                %204 = vst [vmem:[%s176 + $0x68] sm:$0xff] %v203
                %v205 = vld [vmem:[%s175 + $0xe0] sm:$0xff]
                %206 = vst [vmem:[%s176 + $0x70] sm:$0xff] %v205
                %v207 = vld [vmem:[%s175 + $0xe8] sm:$0xff]
                %208 = vst [vmem:[%s176 + $0x78] sm:$0xff] %v207
                %v209 = vld [vmem:[%s175 + $0x100] sm:$0xff]
                %210 = vst [vmem:[%s176 + $0x80] sm:$0xff] %v209
                %v211 = vld [vmem:[%s175 + $0x108] sm:$0xff]
                %212 = vst [vmem:[%s176 + $0x88] sm:$0xff] %v211
                %v213 = vld [vmem:[%s175 + $0x120] sm:$0xff]
                %214 = vst [vmem:[%s176 + $0x90] sm:$0xff] %v213
                %v215 = vld [vmem:[%s175 + $0x128] sm:$0xff]
                %216 = vst [vmem:[%s176 + $0x98] sm:$0xff] %v215
                %v217 = vld [vmem:[%s175 + $0x140] sm:$0xff]
                %218 = vst [vmem:[%s176 + $0xa0] sm:$0xff] %v217
                %v219 = vld [vmem:[%s175 + $0x148] sm:$0xff]
                %220 = vst [vmem:[%s176 + $0xa8] sm:$0xff] %v219
                %v221 = vld [vmem:[%s175 + $0x160] sm:$0xff]
                %222 = vst [vmem:[%s176 + $0xb0] sm:$0xff] %v221
                %v223 = vld [vmem:[%s175 + $0x168] sm:$0xff]
                %224 = vst [vmem:[%s176 + $0xb8] sm:$0xff] %v223
                %v225 = vld [vmem:[%s175 + $0x180] sm:$0xff]
                %226 = vst [vmem:[%s176 + $0xc0] sm:$0xff] %v225
                %v227 = vld [vmem:[%s175 + $0x188] sm:$0xff]
                %228 = vst [vmem:[%s176 + $0xc8] sm:$0xff] %v227
                %v229 = vld [vmem:[%s175 + $0x1a0] sm:$0xff]
                %230 = vst [vmem:[%s176 + $0xd0] sm:$0xff] %v229
                %v231 = vld [vmem:[%s175 + $0x1a8] sm:$0xff]
                %232 = vst [vmem:[%s176 + $0xd8] sm:$0xff] %v231
                %v233 = vld [vmem:[%s175 + $0x1c0] sm:$0xff]
                %234 = vst [vmem:[%s176 + $0xe0] sm:$0xff] %v233
                %v235 = vld [vmem:[%s175 + $0x1c8] sm:$0xff]
                %236 = vst [vmem:[%s176 + $0xe8] sm:$0xff] %v235
                %v237 = vld [vmem:[%s175 + $0x1e0] sm:$0xff]
                %238 = vst [vmem:[%s176 + $0xf0] sm:$0xff] %v237
                %v239 = vld [vmem:[%s175 + $0x1e8] sm:$0xff]
                %240 = vst [vmem:[%s176 + $0xf8] sm:$0xff] %v239
                %v241 = vld [vmem:[%s175 + $0x200] sm:$0xff]
                %242 = vst [vmem:[%s176 + $0x100] sm:$0xff] %v241
                %v243 = vld [vmem:[%s175 + $0x208] sm:$0xff]
                %244 = vst [vmem:[%s176 + $0x108] sm:$0xff] %v243
                %v245 = vld [vmem:[%s175 + $0x220] sm:$0xff]
                %246 = vst [vmem:[%s176 + $0x110] sm:$0xff] %v245
                %v247 = vld [vmem:[%s175 + $0x228] sm:$0xff]
                %248 = vst [vmem:[%s176 + $0x118] sm:$0xff] %v247
                %v249 = vld [vmem:[%s175 + $0x240] sm:$0xff]
                %250 = vst [vmem:[%s176 + $0x120] sm:$0xff] %v249
                %v251 = vld [vmem:[%s175 + $0x248] sm:$0xff]
                %252 = vst [vmem:[%s176 + $0x128] sm:$0xff] %v251
                %v253 = vld [vmem:[%s175 + $0x260] sm:$0xff]
                %254 = vst [vmem:[%s176 + $0x130] sm:$0xff] %v253
                %v255 = vld [vmem:[%s175 + $0x268] sm:$0xff]
                %256 = vst [vmem:[%s176 + $0x138] sm:$0xff] %v255
                %v257 = vld [vmem:[%s175 + $0x280] sm:$0xff]
                %258 = vst [vmem:[%s176 + $0x140] sm:$0xff] %v257
                %v259 = vld [vmem:[%s175 + $0x288] sm:$0xff]
                %260 = vst [vmem:[%s176 + $0x148] sm:$0xff] %v259
                %v261 = vld [vmem:[%s175 + $0x2a0] sm:$0xff]
                %262 = vst [vmem:[%s176 + $0x150] sm:$0xff] %v261
                %v263 = vld [vmem:[%s175 + $0x2a8] sm:$0xff]
                %264 = vst [vmem:[%s176 + $0x158] sm:$0xff] %v263
                %v265 = vld [vmem:[%s175 + $0x2c0] sm:$0xff]
                %266 = vst [vmem:[%s176 + $0x160] sm:$0xff] %v265
                %v267 = vld [vmem:[%s175 + $0x2c8] sm:$0xff]
                %268 = vst [vmem:[%s176 + $0x168] sm:$0xff] %v267
                %v269 = vld [vmem:[%s175 + $0x2e0] sm:$0xff]
                %270 = vst [vmem:[%s176 + $0x170] sm:$0xff] %v269
                %v271 = vld [vmem:[%s175 + $0x2e8] sm:$0xff]
                %272 = vst [vmem:[%s176 + $0x178] sm:$0xff] %v271
                %v273 = vld [vmem:[%s175 + $0x300] sm:$0xff]
                %274 = vst [vmem:[%s176 + $0x180] sm:$0xff] %v273
                %v275 = vld [vmem:[%s175 + $0x308] sm:$0xff]
                %276 = vst [vmem:[%s176 + $0x188] sm:$0xff] %v275
                %v277 = vld [vmem:[%s175 + $0x320] sm:$0xff]
                %278 = vst [vmem:[%s176 + $0x190] sm:$0xff] %v277
                %v279 = vld [vmem:[%s175 + $0x328] sm:$0xff]
                %280 = vst [vmem:[%s176 + $0x198] sm:$0xff] %v279
                %v281 = vld [vmem:[%s175 + $0x340] sm:$0xff]
                %282 = vst [vmem:[%s176 + $0x1a0] sm:$0xff] %v281
                %v283 = vld [vmem:[%s175 + $0x348] sm:$0xff]
                %284 = vst [vmem:[%s176 + $0x1a8] sm:$0xff] %v283
                %v285 = vld [vmem:[%s175 + $0x360] sm:$0xff]
                %286 = vst [vmem:[%s176 + $0x1b0] sm:$0xff] %v285
                %v287 = vld [vmem:[%s175 + $0x368] sm:$0xff]
                %288 = vst [vmem:[%s176 + $0x1b8] sm:$0xff] %v287
                %v289 = vld [vmem:[%s175 + $0x380] sm:$0xff]
                %290 = vst [vmem:[%s176 + $0x1c0] sm:$0xff] %v289
                %v291 = vld [vmem:[%s175 + $0x388] sm:$0xff]
                %292 = vst [vmem:[%s176 + $0x1c8] sm:$0xff] %v291
                %v293 = vld [vmem:[%s175 + $0x3a0] sm:$0xff]
                %294 = vst [vmem:[%s176 + $0x1d0] sm:$0xff] %v293
                %v295 = vld [vmem:[%s175 + $0x3a8] sm:$0xff]
                %296 = vst [vmem:[%s176 + $0x1d8] sm:$0xff] %v295
                %v297 = vld [vmem:[%s175 + $0x3c0] sm:$0xff]
                %298 = vst [vmem:[%s176 + $0x1e0] sm:$0xff] %v297
                %v299 = vld [vmem:[%s175 + $0x3c8] sm:$0xff]
                %300 = vst [vmem:[%s176 + $0x1e8] sm:$0xff] %v299
                %v301 = vld [vmem:[%s175 + $0x3e0] sm:$0xff]
                %302 = vst [vmem:[%s176 + $0x1f0] sm:$0xff] %v301
                %v303 = vld [vmem:[%s175 + $0x3e8] sm:$0xff]
                %304 = vst [vmem:[%s176 + $0x1f8] sm:$0xff] %v303
                %v305 = vld [vmem:[%s175 + $0x400] sm:$0xff]
                %306 = vst [vmem:[%s176 + $0x200] sm:$0xff] %v305
                %v307 = vld [vmem:[%s175 + $0x408] sm:$0xff]
                %308 = vst [vmem:[%s176 + $0x208] sm:$0xff] %v307
                %v309 = vld [vmem:[%s175 + $0x420] sm:$0xff]
                %310 = vst [vmem:[%s176 + $0x210] sm:$0xff] %v309
                %v311 = vld [vmem:[%s175 + $0x428] sm:$0xff]
                %312 = vst [vmem:[%s176 + $0x218] sm:$0xff] %v311
                %v313 = vld [vmem:[%s175 + $0x440] sm:$0xff]
                %314 = vst [vmem:[%s176 + $0x220] sm:$0xff] %v313
                %v315 = vld [vmem:[%s175 + $0x448] sm:$0xff]
                %316 = vst [vmem:[%s176 + $0x228] sm:$0xff] %v315
                %v317 = vld [vmem:[%s175 + $0x460] sm:$0xff]
                %318 = vst [vmem:[%s176 + $0x230] sm:$0xff] %v317
                %v319 = vld [vmem:[%s175 + $0x468] sm:$0xff]
                %320 = vst [vmem:[%s176 + $0x238] sm:$0xff] %v319
              $region41: #{forward.24} parent=35 // loop_footer
                %s174 = sadd.s32 1, %s170
              $region42: #{forward.24} parent=35 // loop_footer_branch
                %169 = sbr.rel target = $region38
              $region43: #{forward.24} parent=35 // loop_exit
                _
            $region36: #{forward.24} parent=31 // pred_fallthru
              _
            // Predicated region
            $region44: #{forward.24} parent=31 // pred_check
              _
            $region45: #{forward.24} parent=31 // pred_check_branch
              %322 = sbr.rel target = $region47
            $region46: #{forward.24} parent=31 // pred_region
              _
            $region47: #{forward.24} parent=31 // pred_fallthru
              _
          $region32: #{forward.24} parent=27 // pred_fallthru
            _
          %323 = vnop
        $region28: #{forward.24} parent=23 // pred_fallthru
          _
        // Predicated region
        $region48: #{forward.24} parent=23 // pred_check
          %p324 = pneg %p98
        $region49: #{forward.24} parent=23 // pred_check_branch
          %326 = sbr.rel (%p324) target = $region51
        $region50: #{forward.24} parent=23 // pred_region
          %s327 = sand.u32 %s88, 1
          %s328 = sand.u32 %s88, 1
          %s329 = smul.addr %s328, 64
          %s330 = scalar_lea.vmem [#allocation3], %s329
          %s331 = smul.u32 2, %s10
          %s332 = smul.addr %s331, 8
          %s333 = scalar_lea.vmem %s3, %s332
          // Predicated region
          $region52: #{forward.24} parent=50 // pred_check
            _
          $region53: #{forward.24} parent=50 // pred_check_branch
            %335 = sbr.rel (0) target = $region55
          $region54: #{forward.24} parent=50 // pred_region
            // Predicated region
            $region56: #{forward.24} parent=54 // pred_check
              _
            $region57: #{forward.24} parent=54 // pred_check_branch
              %337 = sbr.rel (0) target = $region59
            $region58: #{forward.24} parent=54 // pred_region
              loop: start=0, step=1, limit=1
              $region60: #{forward.24} parent=58 // loop_pre_header
                _
              $region61: #{forward.24} parent=58 // loop_header
                %s339 = sphi 0, %s343
                %p340 = scmp.ge.s32.totalorder %s339, 1
                %s344 = sphi %s333, %s333
                %s345 = sphi %s330, %s330
              $region62: #{forward.24} parent=58 // loop_header_branch
                %342 = sbr.rel (%p340) target = $region66
              $region63: #{forward.24} parent=58 // loop_body
                %v346 = vld [vmem:[%s344] sm:$0xff]
                %347 = vst [vmem:[%s345] sm:$0xff] %v346
                %v348 = vld [vmem:[%s344 + $0x8] sm:$0xff]
                %349 = vst [vmem:[%s345 + $0x8] sm:$0xff] %v348
                %v350 = vld [vmem:[%s344 + $0x20] sm:$0xff]
                %351 = vst [vmem:[%s345 + $0x10] sm:$0xff] %v350
                %v352 = vld [vmem:[%s344 + $0x28] sm:$0xff]
                %353 = vst [vmem:[%s345 + $0x18] sm:$0xff] %v352
                %v354 = vld [vmem:[%s344 + $0x40] sm:$0xff]
                %355 = vst [vmem:[%s345 + $0x20] sm:$0xff] %v354
                %v356 = vld [vmem:[%s344 + $0x48] sm:$0xff]
                %357 = vst [vmem:[%s345 + $0x28] sm:$0xff] %v356
                %v358 = vld [vmem:[%s344 + $0x60] sm:$0xff]
                %359 = vst [vmem:[%s345 + $0x30] sm:$0xff] %v358
                %v360 = vld [vmem:[%s344 + $0x68] sm:$0xff]
                %361 = vst [vmem:[%s345 + $0x38] sm:$0xff] %v360
              $region64: #{forward.24} parent=58 // loop_footer
                %s343 = sadd.s32 1, %s339
              $region65: #{forward.24} parent=58 // loop_footer_branch
                %338 = sbr.rel target = $region61
              $region66: #{forward.24} parent=58 // loop_exit
                _
            $region59: #{forward.24} parent=54 // pred_fallthru
              _
            // Predicated region
            $region67: #{forward.24} parent=54 // pred_check
              _
            $region68: #{forward.24} parent=54 // pred_check_branch
              %363 = sbr.rel target = $region70
            $region69: #{forward.24} parent=54 // pred_region
              _
            $region70: #{forward.24} parent=54 // pred_fallthru
              _
          $region55: #{forward.24} parent=50 // pred_fallthru
            _
          %364 = vnop
        $region51: #{forward.24} parent=23 // pred_fallthru
          _
      $region24: #{forward.24} parent=5 // pred_fallthru
        _
      %p365 = scmp.le.s32.totalorder 1, %s10
      %p366 = scmp.lt.s32.totalorder %s10, 3
      %p367 = pnand %p365, %p366
      %p368 = pneg %p367
      // Predicated region
      $region71: #{forward.24} parent=5 // pred_check
        _
      $region72: #{forward.24} parent=5 // pred_check_branch
        %370 = sbr.rel (%p367) target = $region74
      $region73: #{forward.24} parent=5 // pred_region
        %s371 = ssub.s32 %s10, 1
        %s372 = sand.u32 %s44, 1
        %s373 = sand.u32 %s44, 1
        %s374 = smul.addr %s373, 576
        %s375 = scalar_lea.vmem [#allocation2], %s374
        // Predicated region
        $region75: #{forward.24} parent=73 // pred_check
          %p376 = pneg %p57
        $region76: #{forward.24} parent=73 // pred_check_branch
          %378 = sbr.rel (%p376) target = $region78
        $region77: #{forward.24} parent=73 // pred_region
          _
        $region78: #{forward.24} parent=73 // pred_fallthru
          _
        %s379 = sand.u32 %s91, 1
        %s380 = sand.u32 %s91, 1
        %s381 = smul.addr %s380, 64
        %s382 = scalar_lea.vmem [#allocation3], %s381
        // Predicated region
        $region79: #{forward.24} parent=73 // pred_check
          %p383 = pneg %p104
        $region80: #{forward.24} parent=73 // pred_check_branch
          %385 = sbr.rel (%p383) target = $region82
        $region81: #{forward.24} parent=73 // pred_region
          _
        $region82: #{forward.24} parent=73 // pred_fallthru
          _
        %p386 = pneg %p31
        %p387 = pneg %p28
        %s388 = sand.u32 %s44, 1
        %s389 = sand.u32 %s44, 1
        %s390 = smul.addr %s389, 576
        %s391 = scalar_lea.vmem [#allocation2], %s390
        %p392 = pneg %p57
        %p393 = pneg %p54
        %p394 = pneg %p78
        %p395 = pneg %p75
        %s396 = sand.u32 %s91, 1
        %s397 = sand.u32 %s91, 1
        %s398 = smul.addr %s397, 64
        %s399 = scalar_lea.vmem [#allocation3], %s398
        %p400 = pneg %p104
        %p401 = pneg %p101
        %p402 = pneg %p130
        %p403 = pneg %p127
        %s404 = sand.u32 %s117, 1
        %s405 = sand.u32 %s117, 1
        %s406 = smul.addr %s405, 64
        %s407 = scalar_lea.vmem [#allocation4], %s406
        %s408 = smul.u32 2, %s15
        %s409 = smul.u32 2, %s15
        %s410 = smul.u32 2, %s15
        %v411 = vld [vmem:[%s0] sm:$0xff]
        %v412 = vld [vmem:[%s0 + $0x8] sm:$0xff]
        %v413 = vld [vmem:[%s0 + $0x10] sm:$0xff]
        %v414 = vld [vmem:[%s0 + $0x18] sm:$0xff]
        %v415 = vld [vmem:[%s0 + $0x20] sm:$0xff]
        %v416 = vld [vmem:[%s0 + $0x28] sm:$0xff]
        %v417 = vld [vmem:[%s0 + $0x30] sm:$0xff]
        %v418 = vld [vmem:[%s0 + $0x38] sm:$0xff]
        %v419 = vld [vmem:[%s0 + $0x40] sm:$0xff]
        %v420 = vld [vmem:[%s0 + $0x48] sm:$0xff]
        %v421 = vld [vmem:[%s0 + $0x50] sm:$0xff]
        %v422 = vld [vmem:[%s0 + $0x58] sm:$0xff]
        %v423 = vld [vmem:[%s375] sm:$0xff]
        %v424 = vld [vmem:[%s375 + $0x8] sm:$0xff]
        %v425 = vld [vmem:[%s375 + $0x10] sm:$0xff]
        %v426 = vld [vmem:[%s375 + $0x18] sm:$0xff]
        %v427 = vld [vmem:[%s375 + $0x20] sm:$0xff]
        %v428 = vld [vmem:[%s375 + $0x28] sm:$0xff]
        %v429 = vld [vmem:[%s375 + $0x30] sm:$0xff]
        %v430 = vld [vmem:[%s375 + $0x38] sm:$0xff]
        %v431 = vld [vmem:[%s375 + $0x40] sm:$0xff]
        %v432 = vld [vmem:[%s375 + $0x48] sm:$0xff]
        %v433 = vld [vmem:[%s375 + $0x50] sm:$0xff]
        %v434 = vld [vmem:[%s375 + $0x58] sm:$0xff]
        %v435 = vld [vmem:[%s375 + $0x60] sm:$0xff]
        %v436 = vld [vmem:[%s375 + $0x68] sm:$0xff]
        %v437 = vld [vmem:[%s375 + $0x70] sm:$0xff]
        %v438 = vld [vmem:[%s375 + $0x78] sm:$0xff]
        %v439 = vld [vmem:[%s375 + $0x80] sm:$0xff]
        %v440 = vld [vmem:[%s375 + $0x88] sm:$0xff]
        %v441 = vld [vmem:[%s375 + $0x90] sm:$0xff]
        %v442 = vld [vmem:[%s375 + $0x98] sm:$0xff]
        %v443 = vld [vmem:[%s375 + $0xa0] sm:$0xff]
        %v444 = vld [vmem:[%s375 + $0xa8] sm:$0xff]
        %v445 = vld [vmem:[%s375 + $0xb0] sm:$0xff]
        %v446 = vld [vmem:[%s375 + $0xb8] sm:$0xff]
        %v447 = vld [vmem:[%s375 + $0xc0] sm:$0xff]
        %v448 = vld [vmem:[%s375 + $0xc8] sm:$0xff]
        %v449 = vld [vmem:[%s375 + $0xd0] sm:$0xff]
        %v450 = vld [vmem:[%s375 + $0xd8] sm:$0xff]
        %v451 = vld [vmem:[%s375 + $0xe0] sm:$0xff]
        %v452 = vld [vmem:[%s375 + $0xe8] sm:$0xff]
        %v453 = vld [vmem:[%s375 + $0xf0] sm:$0xff]
        %v454 = vld [vmem:[%s375 + $0xf8] sm:$0xff]
        %v455 = vld [vmem:[%s375 + $0x100] sm:$0xff]
        %v456 = vld [vmem:[%s375 + $0x108] sm:$0xff]
        %v457 = vld [vmem:[%s375 + $0x110] sm:$0xff]
        %v458 = vld [vmem:[%s375 + $0x118] sm:$0xff]
        %v459 = vld [vmem:[%s375 + $0x120] sm:$0xff]
        %v460 = vld [vmem:[%s375 + $0x128] sm:$0xff]
        %v461 = vld [vmem:[%s375 + $0x130] sm:$0xff]
        %v462 = vld [vmem:[%s375 + $0x138] sm:$0xff]
        %v463 = vld [vmem:[%s375 + $0x140] sm:$0xff]
        %v464 = vld [vmem:[%s375 + $0x148] sm:$0xff]
        %v465 = vld [vmem:[%s375 + $0x150] sm:$0xff]
        %v466 = vld [vmem:[%s375 + $0x158] sm:$0xff]
        %v467 = vld [vmem:[%s375 + $0x160] sm:$0xff]
        %v468 = vld [vmem:[%s375 + $0x168] sm:$0xff]
        %v469 = vld [vmem:[%s375 + $0x170] sm:$0xff]
        %v470 = vld [vmem:[%s375 + $0x178] sm:$0xff]
        %v471 = vld [vmem:[%s375 + $0x180] sm:$0xff]
        %v472 = vld [vmem:[%s375 + $0x188] sm:$0xff]
        %v473 = vld [vmem:[%s375 + $0x190] sm:$0xff]
        %v474 = vld [vmem:[%s375 + $0x198] sm:$0xff]
        %v475 = vld [vmem:[%s375 + $0x1a0] sm:$0xff]
        %v476 = vld [vmem:[%s375 + $0x1a8] sm:$0xff]
        %v477 = vld [vmem:[%s375 + $0x1b0] sm:$0xff]
        %v478 = vld [vmem:[%s375 + $0x1b8] sm:$0xff]
        %v479 = vld [vmem:[%s375 + $0x1c0] sm:$0xff]
        %v480 = vld [vmem:[%s375 + $0x1c8] sm:$0xff]
        %v481 = vld [vmem:[%s375 + $0x1d0] sm:$0xff]
        %v482 = vld [vmem:[%s375 + $0x1d8] sm:$0xff]
        %v483 = vld [vmem:[%s375 + $0x1e0] sm:$0xff]
        %v484 = vld [vmem:[%s375 + $0x1e8] sm:$0xff]
        %v485 = vld [vmem:[%s375 + $0x1f0] sm:$0xff]
        %v486 = vld [vmem:[%s375 + $0x1f8] sm:$0xff]
        %v487 = vld [vmem:[%s375 + $0x200] sm:$0xff]
        %v488 = vld [vmem:[%s375 + $0x208] sm:$0xff]
        %v489 = vld [vmem:[%s375 + $0x210] sm:$0xff]
        %v490 = vld [vmem:[%s375 + $0x218] sm:$0xff]
        %v491 = vld [vmem:[%s375 + $0x220] sm:$0xff]
        %v492 = vld [vmem:[%s375 + $0x228] sm:$0xff]
        %v493 = vld [vmem:[%s375 + $0x230] sm:$0xff]
        %v494 = vld [vmem:[%s375 + $0x238] sm:$0xff]
        %v495 = vld [vmem:[%s2] sm:$0xff]
        %v496 = vld [vmem:[%s2 + $0x8] sm:$0xff]
        %v497 = vld [vmem:[%s2 + $0x10] sm:$0xff]
        %v498 = vld [vmem:[%s2 + $0x18] sm:$0xff]
        %500 = vset.pattern.permute.xlu0 0
        %501 = vperm.xlu0 %500, %v495
        %v502 = vpop.permute.xlu0 %501
        %505 = vset.pattern.permute.xlu0 0
        %506 = vperm.xlu0 %505, %v496
        %v507 = vpop.permute.xlu0 %506
        %510 = vset.pattern.permute.xlu0 0
        %511 = vperm.xlu0 %510, %v497
        %v512 = vpop.permute.xlu0 %511
        %515 = vset.pattern.permute.xlu0 0
        %516 = vperm.xlu0 %515, %v498
        %v517 = vpop.permute.xlu0 %516
        %vm519 = vcmask 261120
        %v521 = vsel %vm519, %v413, 0
        %v524 = vsel %vm519, %v416, 0
        %v527 = vsel %vm519, %v419, 0
        %v530 = vsel %vm519, %v422, 0
        %532 = vmatprep.subr.mxu0 %v454
        %533 = vmatpush1.msra.mxu0 %v453
        %534 = vmatprep.subr.mxu0 %v452
        %535 = vmatpush1.msra.mxu0 %v451
        %536 = vmatprep.subr.mxu0 %v450
        %537 = vmatpush1.msra.mxu0 %v449
        %538 = vmatprep.subr.mxu0 %v448
        %539 = vmatpush1.msra.mxu0 %v447
        %540 = vmatprep.subr.mxu0 %v446
        %541 = vmatpush1.msra.mxu0 %v445
        %542 = vmatprep.subr.mxu0 %v444
        %543 = vmatpush1.msra.mxu0 %v443
        %544 = vmatprep.subr.mxu0 %v442
        %545 = vmatpush1.msra.mxu0 %v441
        %546 = vmatprep.subr.mxu0 %v440
        %547 = vmatpush1.msra.mxu0 %v439
        %548 = vmatprep.subr.mxu0 %v438
        %549 = vmatpush1.msra.mxu0 %v437
        %550 = vmatprep.subr.mxu0 %v436
        %551 = vmatpush1.msra.mxu0 %v435
        %552 = vmatprep.subr.mxu0 %v434
        %553 = vmatpush1.msra.mxu0 %v433
        %554 = vmatprep.subr.mxu0 %v432
        %555 = vmatpush1.msra.mxu0 %v431
        %556 = vmatprep.subr.mxu0 %v430
        %557 = vmatpush1.msra.mxu0 %v429
        %558 = vmatprep.subr.mxu0 %v428
        %559 = vmatpush1.msra.mxu0 %v427
        %560 = vmatprep.subr.mxu0 %v426
        %561 = vmatpush1.msra.mxu0 %v425
        %562 = vmatprep.subr.mxu0 %v424
        %563 = vmatpush1.msra.mxu0 %v423
        %564 = vmatprep.subr.mxu0 %v486
        %565 = vmatpush2.msra.mxu0 %v485
        %566 = vmatprep.subr.mxu0 %v484
        %567 = vmatpush2.msra.mxu0 %v483
        %568 = vmatprep.subr.mxu0 %v482
        %569 = vmatpush2.msra.mxu0 %v481
        %570 = vmatprep.subr.mxu0 %v480
        %571 = vmatpush2.msra.mxu0 %v479
        %572 = vmatprep.subr.mxu0 %v478
        %573 = vmatpush2.msra.mxu0 %v477
        %574 = vmatprep.subr.mxu0 %v476
        %575 = vmatpush2.msra.mxu0 %v475
        %576 = vmatprep.subr.mxu0 %v474
        %577 = vmatpush2.msra.mxu0 %v473
        %578 = vmatprep.subr.mxu0 %v472
        %579 = vmatpush2.msra.mxu0 %v471
        %580 = vmatprep.subr.mxu0 %v470
        %581 = vmatpush2.msra.mxu0 %v469
        %582 = vmatprep.subr.mxu0 %v468
        %583 = vmatpush2.msra.mxu0 %v467
        %584 = vmatprep.subr.mxu0 %v466
        %585 = vmatpush2.msra.mxu0 %v465
        %586 = vmatprep.subr.mxu0 %v464
        %587 = vmatpush2.msra.mxu0 %v463
        %588 = vmatprep.subr.mxu0 %v462
        %589 = vmatpush2.msra.mxu0 %v461
        %590 = vmatprep.subr.mxu0 %v460
        %591 = vmatpush2.msra.mxu0 %v459
        %592 = vmatprep.subr.mxu0 %v458
        %593 = vmatpush2.msra.mxu0 %v457
        %594 = vmatprep.subr.mxu0 %v456
        %595 = vmatpush2.msra.mxu0 %v455
        %596 = vmatprep.mubr.f32.mxu0 %v412
        %597 = vmatmul.mubr.f32.gmra.mxu0 %v411
        %v598 = vpop.f32.mrf.mxu0
        %v599 = vadd.f32 %v502, %v598
        %v600 = vpop.f32.mrf.mxu0
        %v601 = vadd.f32 %v502, %v600
        %602 = vmatprep.mubr.f32.mxu0 %v415
        %603 = vmatmul.mubr.f32.gmra.mxu0 %v414
        %v604 = vpop.f32.mrf.mxu0
        %v605 = vadd.f32 %v507, %v604
        %v606 = vpop.f32.mrf.mxu0
        %v607 = vadd.f32 %v507, %v606
        %608 = vmatprep.mubr.f32.mxu0 %v418
        %609 = vmatmul.mubr.f32.gmra.mxu0 %v417
        %v610 = vpop.f32.mrf.mxu0
        %v611 = vadd.f32 %v512, %v610
        %v612 = vpop.f32.mrf.mxu0
        %v613 = vadd.f32 %v512, %v612
        %614 = vmatprep.mubr.f32.mxu0 %v421
        %615 = vmatmul.mubr.f32.gmra.mxu0 %v420
        %v616 = vpop.f32.mrf.mxu0
        %v617 = vadd.f32 %v517, %v616
        %v618 = vpop.f32.mrf.mxu0
        %v619 = vadd.f32 %v517, %v618
        %620 = vdwg.mxu0
        %621 = vmatprep.subr.mxu0 0.0
        %622 = vmatpush1.msra.mxu0 0.0
        %623 = vmatprep.subr.mxu0 0.0
        %624 = vmatpush1.msra.mxu0 0.0
        %625 = vmatprep.subr.mxu0 0.0
        %626 = vmatpush1.msra.mxu0 0.0
        %627 = vmatprep.subr.mxu0 0.0
        %628 = vmatpush1.msra.mxu0 0.0
        %629 = vmatprep.subr.mxu0 0.0
        %630 = vmatpush1.msra.mxu0 0.0
        %631 = vmatprep.subr.mxu0 0.0
        %632 = vmatpush1.msra.mxu0 0.0
        %633 = vmatprep.subr.mxu0 0.0
        %634 = vmatpush1.msra.mxu0 0.0
        %635 = vmatprep.subr.mxu0 0.0
        %636 = vmatpush1.msra.mxu0 0.0
        %637 = vmatprep.subr.mxu0 0.0
        %638 = vmatpush1.msra.mxu0 0.0
        %639 = vmatprep.subr.mxu0 0.0
        %640 = vmatpush1.msra.mxu0 0.0
        %641 = vmatprep.subr.mxu0 0.0
        %642 = vmatpush1.msra.mxu0 0.0
        %643 = vmatprep.subr.mxu0 0.0
        %644 = vmatpush1.msra.mxu0 0.0
        %645 = vmatprep.subr.mxu0 %v494
        %646 = vmatpush1.msra.mxu0 %v493
        %647 = vmatprep.subr.mxu0 %v492
        %648 = vmatpush1.msra.mxu0 %v491
        %649 = vmatprep.subr.mxu0 %v490
        %650 = vmatpush1.msra.mxu0 %v489
        %651 = vmatprep.subr.mxu0 %v488
        %652 = vmatpush1.msra.mxu0 %v487
        %653 = vmatprep.subr.mxu0 0.0
        %654 = vmatpush2.msra.mxu0 0.0
        %655 = vmatprep.subr.mxu0 0.0
        %656 = vmatpush2.msra.mxu0 0.0
        %657 = vmatprep.subr.mxu0 0.0
        %658 = vmatpush2.msra.mxu0 0.0
        %659 = vmatprep.subr.mxu0 0.0
        %660 = vmatpush2.msra.mxu0 0.0
        %661 = vmatprep.subr.mxu0 0.0
        %662 = vmatpush2.msra.mxu0 0.0
        %663 = vmatprep.subr.mxu0 0.0
        %664 = vmatpush2.msra.mxu0 0.0
        %665 = vmatprep.subr.mxu0 0.0
        %666 = vmatpush2.msra.mxu0 0.0
        %667 = vmatprep.subr.mxu0 0.0
        %668 = vmatpush2.msra.mxu0 0.0
        %669 = vmatprep.subr.mxu0 0.0
        %670 = vmatpush2.msra.mxu0 0.0
        %671 = vmatprep.subr.mxu0 0.0
        %672 = vmatpush2.msra.mxu0 0.0
        %673 = vmatprep.subr.mxu0 0.0
        %674 = vmatpush2.msra.mxu0 0.0
        %675 = vmatprep.subr.mxu0 0.0
        %676 = vmatpush2.msra.mxu0 0.0
        %677 = vmatprep.subr.mxu0 0.0
        %678 = vmatpush2.msra.mxu0 0.0
        %679 = vmatprep.subr.mxu0 0.0
        %680 = vmatpush2.msra.mxu0 0.0
        %681 = vmatprep.subr.mxu0 0.0
        %682 = vmatpush2.msra.mxu0 0.0
        %683 = vmatprep.subr.mxu0 0.0
        %684 = vmatpush2.msra.mxu0 0.0
        %685 = vmatprep.mubr.f32.mxu0 0.0
        %686 = vmatmul.mubr.f32.gmra.mxu0 %v521
        %v687 = vpop.f32.mrf.mxu0
        %v688 = vadd.f32 %v599, %v687
        %v689 = vpop.f32.mrf.mxu0
        %v690 = vadd.f32 %v601, %v689
        %691 = vmatprep.mubr.f32.mxu0 0.0
        %692 = vmatmul.mubr.f32.gmra.mxu0 %v524
        %v693 = vpop.f32.mrf.mxu0
        %v694 = vadd.f32 %v605, %v693
        %v695 = vpop.f32.mrf.mxu0
        %v696 = vadd.f32 %v607, %v695
        %697 = vmatprep.mubr.f32.mxu0 0.0
        %698 = vmatmul.mubr.f32.gmra.mxu0 %v527
        %v699 = vpop.f32.mrf.mxu0
        %v700 = vadd.f32 %v611, %v699
        %v701 = vpop.f32.mrf.mxu0
        %v702 = vadd.f32 %v613, %v701
        %703 = vmatprep.mubr.f32.mxu0 0.0
        %704 = vmatmul.mubr.f32.gmra.mxu0 %v530
        %v705 = vpop.f32.mrf.mxu0
        %v706 = vadd.f32 %v617, %v705
        %v707 = vpop.f32.mrf.mxu0
        %v708 = vadd.f32 %v619, %v707
        %709 = vdwg.mxu0
        %v710 = vld [vmem:[%s382] sm:$0xff]
        %v711 = vld [vmem:[%s382 + $0x8] sm:$0xff]
        %v712 = vld [vmem:[%s382 + $0x10] sm:$0xff]
        %v713 = vld [vmem:[%s382 + $0x18] sm:$0xff]
        %v714 = vld [vmem:[%s382 + $0x20] sm:$0xff]
        %v715 = vld [vmem:[%s382 + $0x28] sm:$0xff]
        %v716 = vld [vmem:[%s382 + $0x30] sm:$0xff]
        %v717 = vld [vmem:[%s382 + $0x38] sm:$0xff]
        %v718 = vadd.f32 %v688, %v710
        %v719 = vadd.f32 %v690, %v711
        %v720 = vadd.f32 %v694, %v712
        %v721 = vadd.f32 %v696, %v713
        %v722 = vadd.f32 %v700, %v714
        %v723 = vadd.f32 %v702, %v715
        %v724 = vadd.f32 %v706, %v716
        %v725 = vadd.f32 %v708, %v717
        %v726 = vmax.f32 %v718, 0.0
        %v727 = vmax.f32 %v719, 0.0
        %v728 = vmax.f32 %v720, 0.0
        %v729 = vmax.f32 %v721, 0.0
        %v730 = vmax.f32 %v722, 0.0
        %v731 = vmax.f32 %v723, 0.0
        %v732 = vmax.f32 %v724, 0.0
        %v733 = vmax.f32 %v725, 0.0
        %734 = vst [vmem:[%s407] sm:$0xff] %v726
        %735 = vst [vmem:[%s407 + $0x8] sm:$0xff] %v727
        %736 = vst [vmem:[%s407 + $0x10] sm:$0xff] %v728
        %737 = vst [vmem:[%s407 + $0x18] sm:$0xff] %v729
        %738 = vst [vmem:[%s407 + $0x20] sm:$0xff] %v730
        %739 = vst [vmem:[%s407 + $0x28] sm:$0xff] %v731
        %740 = vst [vmem:[%s407 + $0x30] sm:$0xff] %v732
        %741 = vst [vmem:[%s407 + $0x38] sm:$0xff] %v733
        %s742 = sand.u32 %s117, 1
        %s743 = sand.u32 %s117, 1
        %s744 = smul.addr %s743, 64
        %s745 = scalar_lea.vmem [#allocation4], %s744
        // Predicated region
        $region83: #{forward.24} parent=73 // pred_check
          %p746 = pneg %p127
        $region84: #{forward.24} parent=73 // pred_check_branch
          %748 = sbr.rel (%p746) target = $region86
        $region85: #{forward.24} parent=73 // pred_region
          %s749 = smul.u32 2, %s15
          %s750 = smul.addr %s749, 8
          %s751 = scalar_lea.vmem %s4, %s750
          // Predicated region
          $region87: #{forward.24} parent=85 // pred_check
            _
          $region88: #{forward.24} parent=85 // pred_check_branch
            %753 = sbr.rel (0) target = $region90
          $region89: #{forward.24} parent=85 // pred_region
            // Predicated region
            $region91: #{forward.24} parent=89 // pred_check
              _
            $region92: #{forward.24} parent=89 // pred_check_branch
              %755 = sbr.rel (0) target = $region94
            $region93: #{forward.24} parent=89 // pred_region
              loop: start=0, step=1, limit=1
              $region95: #{forward.24} parent=93 // loop_pre_header
                _
              $region96: #{forward.24} parent=93 // loop_header
                %s757 = sphi 0, %s761
                %p758 = scmp.ge.s32.totalorder %s757, 1
                %s762 = sphi %s745, %s745
                %s763 = sphi %s751, %s751
              $region97: #{forward.24} parent=93 // loop_header_branch
                %760 = sbr.rel (%p758) target = $region101
              $region98: #{forward.24} parent=93 // loop_body
                %v764 = vld [vmem:[%s762] sm:$0xff]
                %765 = vst [vmem:[%s763] sm:$0xff] %v764
                %v766 = vld [vmem:[%s762 + $0x8] sm:$0xff]
                %767 = vst [vmem:[%s763 + $0x8] sm:$0xff] %v766
                %v768 = vld [vmem:[%s762 + $0x10] sm:$0xff]
                %769 = vst [vmem:[%s763 + $0x20] sm:$0xff] %v768
                %v770 = vld [vmem:[%s762 + $0x18] sm:$0xff]
                %771 = vst [vmem:[%s763 + $0x28] sm:$0xff] %v770
                %v772 = vld [vmem:[%s762 + $0x20] sm:$0xff]
                %773 = vst [vmem:[%s763 + $0x40] sm:$0xff] %v772
                %v774 = vld [vmem:[%s762 + $0x28] sm:$0xff]
                %775 = vst [vmem:[%s763 + $0x48] sm:$0xff] %v774
                %v776 = vld [vmem:[%s762 + $0x30] sm:$0xff]
                %777 = vst [vmem:[%s763 + $0x60] sm:$0xff] %v776
                %v778 = vld [vmem:[%s762 + $0x38] sm:$0xff]
                %779 = vst [vmem:[%s763 + $0x68] sm:$0xff] %v778
              $region99: #{forward.24} parent=93 // loop_footer
                %s761 = sadd.s32 1, %s757
              $region100: #{forward.24} parent=93 // loop_footer_branch
                %756 = sbr.rel target = $region96
              $region101: #{forward.24} parent=93 // loop_exit
                _
            $region94: #{forward.24} parent=89 // pred_fallthru
              _
            // Predicated region
            $region102: #{forward.24} parent=89 // pred_check
              _
            $region103: #{forward.24} parent=89 // pred_check_branch
              %781 = sbr.rel target = $region105
            $region104: #{forward.24} parent=89 // pred_region
              _
            $region105: #{forward.24} parent=89 // pred_fallthru
              _
          $region90: #{forward.24} parent=85 // pred_fallthru
            _
          %782 = vnop
        $region86: #{forward.24} parent=73 // pred_fallthru
          _
      $region74: #{forward.24} parent=5 // pred_fallthru
        _
      %p783 = scmp.le.s32.totalorder 2, %s10
      // Predicated region
      $region106: #{forward.24} parent=5 // pred_check
        %p784 = pneg %p783
      $region107: #{forward.24} parent=5 // pred_check_branch
        %786 = sbr.rel (%p784) target = $region109
      $region108: #{forward.24} parent=5 // pred_region
        %s787 = ssub.s32 %s10, 2
        // Predicated region
        $region110: #{forward.24} parent=108 // pred_check
          %p788 = pneg %p133
        $region111: #{forward.24} parent=108 // pred_check_branch
          %790 = sbr.rel (%p788) target = $region113
        $region112: #{forward.24} parent=108 // pred_region
          %s791 = sand.u32 %s118, 1
          %s792 = sand.u32 %s118, 1
          %s793 = smul.addr %s792, 64
          %s794 = scalar_lea.vmem [#allocation4], %s793
        $region113: #{forward.24} parent=108 // pred_fallthru
          _
      $region109: #{forward.24} parent=5 // pred_fallthru
        _
    $region6: #{forward.24} parent=1 // loop_footer
      %s14 = sadd.s32 1, %s10
    $region7: #{forward.24} parent=1 // loop_footer_branch
      %9 = sbr.rel target = $region3
    $region8: #{forward.24} parent=1 // loop_exit
      _

// kernel: forward.31
$region0: #{forward.31}
  #allocation0 [shape = 'u32[]', space=smem, size = 0x4, offset = 0x4, fixed_abs, tag = 'smem constant byte address 0x4 - core index']
  #allocation1 [shape = 'u32[144,128]{1,0:T(1,128)}', space=vmem, size = 0x12000, scoped, tag = 'internal scratch']
  %s0 = inlined_call_operand.vmem [shape: f32[64,16,16], index: 0, kind: input, shape index: {}]
  %s1 = inlined_call_operand.vmem [shape: f32[64,16,16], index: 1, kind: output, shape index: {}]
  %s2 = sld [smem:[#allocation0]]
  $region37: #{forward.31} parent=0
    _
  %s4 = ssub.s32 1, %s2
  %s5 = scalar_select 0, %s4, %s2
  loop: start=0, step=1, limit=4
  $region2: #{forward.31} parent=0 // loop_pre_header
    _
  $region3: #{forward.31} parent=0 // loop_header
    %s7 = sphi 0, %s11
    %p8 = scmp.ge.s32.totalorder %s7, 4
    %s17 = sphi 0, %s19
    %s20 = sphi 0, %s17
    %s21 = sphi 0, %s20
    %s37 = sphi 0, %s21
    %s43 = sphi 0, %s45
    %s46 = sphi 0, %s43
    %s47 = sphi 0, %s46
    %s63 = sphi 0, %s47
  $region4: #{forward.31} parent=0 // loop_header_branch
    %10 = sbr.rel (%p8) target = $region8
  $region5: #{forward.31} parent=0 // loop_body
    %s12 = ssub.s32 %s7, 1
    %s13 = ssub.s32 %s7, 2
    %s14 = sadd.s32 %s7, 1
    %s15 = ssub.s32 %s7, %s14
    %p16 = scmp.eq.s32.totalorder %s15, 0
    %s18 = sadd.s32 %s17, 1
    %s19 = scalar_select %p16, %s17, %s18
    %p22 = pneg %p16
    %p23 = scmp.eq.s32.totalorder %s7, 1
    %p24 = por %p22, %p23
    %p25 = scmp.ne.s32.totalorder %s17, %s20
    %p26 = scmp.eq.s32.totalorder %s7, 0
    %p27 = por %p25, %p26
    %p28 = scmp.ne.s32.totalorder %s17, %s20
    %p29 = scmp.eq.s32.totalorder %s12, 1
    %p30 = por %p28, %p29
    %p31 = scmp.ne.s32.totalorder %s20, %s21
    %p32 = scmp.eq.s32.totalorder %s12, 0
    %p33 = por %p31, %p32
    %p34 = scmp.ne.s32.totalorder %s20, %s21
    %p35 = scmp.eq.s32.totalorder %s13, 1
    %p36 = por %p34, %p35
    %p38 = scmp.ne.s32.totalorder %s21, %s37
    %p39 = scmp.eq.s32.totalorder %s13, 0
    %p40 = por %p38, %p39
    %s41 = ssub.s32 %s7, %s14
    %p42 = scmp.eq.s32.totalorder %s41, 0
    %s44 = sadd.s32 %s43, 1
    %s45 = scalar_select %p42, %s43, %s44
    %p48 = pneg %p42
    %p49 = scmp.eq.s32.totalorder %s7, 1
    %p50 = por %p48, %p49
    %p51 = scmp.ne.s32.totalorder %s43, %s46
    %p52 = scmp.eq.s32.totalorder %s7, 0
    %p53 = por %p51, %p52
    %p54 = scmp.ne.s32.totalorder %s43, %s46
    %p55 = scmp.eq.s32.totalorder %s12, 1
    %p56 = por %p54, %p55
    %p57 = scmp.ne.s32.totalorder %s46, %s47
    %p58 = scmp.eq.s32.totalorder %s12, 0
    %p59 = por %p57, %p58
    %p60 = scmp.ne.s32.totalorder %s46, %s47
    %p61 = scmp.eq.s32.totalorder %s13, 1
    %p62 = por %p60, %p61
    %p64 = scmp.ne.s32.totalorder %s47, %s63
    %p65 = scmp.eq.s32.totalorder %s13, 0
    %p66 = por %p64, %p65
    %p67 = scmp.le.s32.totalorder 1, %s7
    %p68 = scmp.lt.s32.totalorder %s7, 3
    %p69 = pnand %p67, %p68
    %p70 = pneg %p69
    // Predicated region
    $region9: #{forward.31} parent=5 // pred_check
      _
    $region10: #{forward.31} parent=5 // pred_check_branch
      %72 = sbr.rel (%p69) target = $region12
    $region11: #{forward.31} parent=5 // pred_region
      %s73 = ssub.s32 %s7, 1
    $region12: #{forward.31} parent=5 // pred_fallthru
      _
    %p74 = scmp.lt.s32.totalorder %s7, 2
    // Predicated region
    $region13: #{forward.31} parent=5 // pred_check
      %p75 = pneg %p74
    $region14: #{forward.31} parent=5 // pred_check_branch
      %77 = sbr.rel (%p75) target = $region16
    $region15: #{forward.31} parent=5 // pred_region
      // Predicated region
      $region17: #{forward.31} parent=15 // pred_check
        %p78 = pneg %p27
      $region18: #{forward.31} parent=15 // pred_check_branch
        %80 = sbr.rel (%p78) target = $region20
      $region19: #{forward.31} parent=15 // pred_region
        %s81 = smul.u32 32, %s7
        %p82 = scmp.lt.s32.totalorder %s81, 63
        %s83 = scalar_select %p82, %s81, 63
        %s84 = smul.addr %s83, 2
        %s85 = smul.addr %s84, 8
        %s86 = scalar_lea.vmem %s0, %s85
        %s87 = smul.u32 32, %s7
      $region20: #{forward.31} parent=15 // pred_fallthru
        _
    $region16: #{forward.31} parent=5 // pred_fallthru
      _
    %p88 = scmp.le.s32.totalorder 1, %s7
    %p89 = scmp.lt.s32.totalorder %s7, 3
    %p90 = pnand %p88, %p89
    %p91 = pneg %p90
    // Predicated region
    $region21: #{forward.31} parent=5 // pred_check
      _
    $region22: #{forward.31} parent=5 // pred_check_branch
      %93 = sbr.rel (%p90) target = $region24
    $region23: #{forward.31} parent=5 // pred_region
      %s94 = ssub.s32 %s7, 1
      %s95 = smul.u32 32, %s12
      %p96 = scmp.lt.s32.totalorder %s95, 63
      %s97 = scalar_select %p96, %s95, 63
      %s98 = smul.addr %s97, 2
      %s99 = smul.addr %s98, 8
      %s100 = scalar_lea.vmem %s0, %s99
      %p101 = pneg %p33
      %p102 = pneg %p30
      %p103 = pneg %p59
      %p104 = pneg %p56
      %s105 = smul.u32 32, %s12
      %p106 = scmp.lt.s32.totalorder %s105, 63
      %s107 = scalar_select %p106, %s105, 63
      %s108 = smul.addr %s107, 2
      %s109 = smul.addr %s108, 8
      %s110 = scalar_lea.vmem %s1, %s109
      %s111 = smul.u32 32, %s12
      %p112 = scmp.lt.s32.totalorder %s111, 63
      %s113 = scalar_select %p112, %s111, 63
      %s114 = smul.addr %s113, 2
      %s115 = smul.addr %s114, 8
      %s116 = scalar_lea.vmem %s0, %s115
      %s117 = smul.u32 32, %s12
      %s118 = smul.u32 32, %s12
      %p119 = scmp.lt.s32.totalorder %s118, 63
      %s120 = scalar_select %p119, %s118, 63
      %s121 = smul.addr %s120, 2
      %s122 = smul.addr %s121, 8
      %s123 = scalar_lea.vmem %s1, %s122
      %s124 = smul.u32 32, %s12
      %v125 = vld [vmem:[%s116] sm:$0xff]
      %v126 = vld [vmem:[%s116 + $0x8] sm:$0xff]
      %v127 = vld [vmem:[%s116 + $0x10] sm:$0xff]
      %v128 = vld [vmem:[%s116 + $0x18] sm:$0xff]
      %v129 = vld [vmem:[%s116 + $0x20] sm:$0xff]
      %v130 = vld [vmem:[%s116 + $0x28] sm:$0xff]
      %v131 = vld [vmem:[%s116 + $0x30] sm:$0xff]
      %v132 = vld [vmem:[%s116 + $0x38] sm:$0xff]
      %v133 = vld [vmem:[%s116 + $0x40] sm:$0xff]
      %v134 = vld [vmem:[%s116 + $0x48] sm:$0xff]
      %v135 = vld [vmem:[%s116 + $0x50] sm:$0xff]
      %v136 = vld [vmem:[%s116 + $0x58] sm:$0xff]
      %v137 = vld [vmem:[%s116 + $0x60] sm:$0xff]
      %v138 = vld [vmem:[%s116 + $0x68] sm:$0xff]
      %v139 = vld [vmem:[%s116 + $0x70] sm:$0xff]
      %v140 = vld [vmem:[%s116 + $0x78] sm:$0xff]
      %v141 = vld [vmem:[%s116 + $0x80] sm:$0xff]
      %v142 = vld [vmem:[%s116 + $0x88] sm:$0xff]
      %v143 = vld [vmem:[%s116 + $0x90] sm:$0xff]
      %v144 = vld [vmem:[%s116 + $0x98] sm:$0xff]
      %v145 = vld [vmem:[%s116 + $0xa0] sm:$0xff]
      %v146 = vld [vmem:[%s116 + $0xa8] sm:$0xff]
      %v147 = vld [vmem:[%s116 + $0xb0] sm:$0xff]
      %v148 = vld [vmem:[%s116 + $0xb8] sm:$0xff]
      %v149 = vld [vmem:[%s116 + $0xc0] sm:$0xff]
      %v150 = vld [vmem:[%s116 + $0xc8] sm:$0xff]
      %v151 = vld [vmem:[%s116 + $0xd0] sm:$0xff]
      %v152 = vld [vmem:[%s116 + $0xd8] sm:$0xff]
      %v153 = vld [vmem:[%s116 + $0xe0] sm:$0xff]
      %v154 = vld [vmem:[%s116 + $0xe8] sm:$0xff]
      %v155 = vld [vmem:[%s116 + $0xf0] sm:$0xff]
      %v156 = vld [vmem:[%s116 + $0xf8] sm:$0xff]
      %v157 = vld [vmem:[%s116 + $0x100] sm:$0xff]
      %v158 = vld [vmem:[%s116 + $0x108] sm:$0xff]
      %v159 = vld [vmem:[%s116 + $0x110] sm:$0xff]
      %v160 = vld [vmem:[%s116 + $0x118] sm:$0xff]
      %v161 = vld [vmem:[%s116 + $0x120] sm:$0xff]
      %v162 = vld [vmem:[%s116 + $0x128] sm:$0xff]
      %v163 = vld [vmem:[%s116 + $0x130] sm:$0xff]
      %v164 = vld [vmem:[%s116 + $0x138] sm:$0xff]
      %v165 = vld [vmem:[%s116 + $0x140] sm:$0xff]
      %v166 = vld [vmem:[%s116 + $0x148] sm:$0xff]
      %v167 = vld [vmem:[%s116 + $0x150] sm:$0xff]
      %v168 = vld [vmem:[%s116 + $0x158] sm:$0xff]
      %v169 = vld [vmem:[%s116 + $0x160] sm:$0xff]
      %v170 = vld [vmem:[%s116 + $0x168] sm:$0xff]
      %v171 = vld [vmem:[%s116 + $0x170] sm:$0xff]
      %v172 = vld [vmem:[%s116 + $0x178] sm:$0xff]
      %v173 = vld [vmem:[%s116 + $0x180] sm:$0xff]
      %v174 = vld [vmem:[%s116 + $0x188] sm:$0xff]
      %v175 = vld [vmem:[%s116 + $0x190] sm:$0xff]
      %v176 = vld [vmem:[%s116 + $0x198] sm:$0xff]
      %v177 = vld [vmem:[%s116 + $0x1a0] sm:$0xff]
      %v178 = vld [vmem:[%s116 + $0x1a8] sm:$0xff]
      %v179 = vld [vmem:[%s116 + $0x1b0] sm:$0xff]
      %v180 = vld [vmem:[%s116 + $0x1b8] sm:$0xff]
      %v181 = vld [vmem:[%s116 + $0x1c0] sm:$0xff]
      %v182 = vld [vmem:[%s116 + $0x1c8] sm:$0xff]
      %v183 = vld [vmem:[%s116 + $0x1d0] sm:$0xff]
      %v184 = vld [vmem:[%s116 + $0x1d8] sm:$0xff]
      %v185 = vld [vmem:[%s116 + $0x1e0] sm:$0xff]
      %v186 = vld [vmem:[%s116 + $0x1e8] sm:$0xff]
      %v187 = vld [vmem:[%s116 + $0x1f0] sm:$0xff]
      %v188 = vld [vmem:[%s116 + $0x1f8] sm:$0xff]
      %vm189 = vcmask 130048
      %v191 = vsel %vm189, %v125, 0
      %v194 = vsel %vm189, %v126, 0
      %196 = vmatprep.subr.mxu0 0.0
      %197 = vmatpush1.xpose.msra.mxu0 0.0
      %198 = vmatprep.subr.mxu0 0.0
      %199 = vmatpush1.xpose.msra.mxu0 0.0
      %200 = vmatprep.subr.mxu0 0.0
      %201 = vmatpush1.xpose.msra.mxu0 0.0
      %202 = vmatprep.subr.mxu0 0.0
      %203 = vmatpush1.xpose.msra.mxu0 0.0
      %204 = vmatprep.subr.mxu0 0.0
      %205 = vmatpush1.xpose.msra.mxu0 0.0
      %206 = vmatprep.subr.mxu0 0.0
      %207 = vmatpush1.xpose.msra.mxu0 0.0
      %208 = vmatprep.subr.mxu0 0.0
      %209 = vmatpush1.xpose.msra.mxu0 0.0
      %210 = vmatprep.subr.mxu0 0.0
      %211 = vmatpush1.xpose.msra.mxu0 0.0
      %212 = vmatprep.subr.mxu0 0.0
      %213 = vmatpush1.xpose.msra.mxu0 0.0
      %214 = vmatprep.subr.mxu0 0.0
      %215 = vmatpush1.xpose.msra.mxu0 0.0
      %216 = vmatprep.subr.mxu0 0.0
      %217 = vmatpush1.xpose.msra.mxu0 0.0
      %218 = vmatprep.subr.mxu0 0.0
      %219 = vmatpush1.xpose.msra.mxu0 0.0
      %220 = vmatprep.subr.mxu0 0.0
      %221 = vmatpush1.xpose.msra.mxu0 0.0
      %222 = vmatprep.subr.mxu0 0.0
      %223 = vmatpush1.xpose.msra.mxu0 0.0
      %224 = vmatprep.subr.mxu0 0.0
      %225 = vmatpush1.xpose.msra.mxu0 %v194
      %226 = vmatprep.subr.mxu0 0.0
      %227 = vmatpush1.xpose.msra.mxu0 %v191
      %228 = vmatprep.subr.mxu0 0.0
      %229 = vmatpush2.xpose.msra.mxu0 0.0
      %230 = vmatprep.subr.mxu0 0.0
      %231 = vmatpush2.xpose.msra.mxu0 0.0
      %232 = vmatprep.subr.mxu0 0.0
      %233 = vmatpush2.xpose.msra.mxu0 0.0
      %234 = vmatprep.subr.mxu0 0.0
      %235 = vmatpush2.xpose.msra.mxu0 0.0
      %236 = vmatprep.subr.mxu0 0.0
      %237 = vmatpush2.xpose.msra.mxu0 0.0
      %238 = vmatprep.subr.mxu0 0.0
      %239 = vmatpush2.xpose.msra.mxu0 0.0
      %240 = vmatprep.subr.mxu0 0.0
      %241 = vmatpush2.xpose.msra.mxu0 0.0
      %242 = vmatprep.subr.mxu0 0.0
      %243 = vmatpush2.xpose.msra.mxu0 0.0
      %244 = vmatprep.subr.mxu0 0.0
      %245 = vmatpush2.xpose.msra.mxu0 0.0
      %246 = vmatprep.subr.mxu0 0.0
      %247 = vmatpush2.xpose.msra.mxu0 0.0
      %248 = vmatprep.subr.mxu0 0.0
      %249 = vmatpush2.xpose.msra.mxu0 0.0
      %250 = vmatprep.subr.mxu0 0.0
      %251 = vmatpush2.xpose.msra.mxu0 0.0
      %252 = vmatprep.subr.mxu0 0.0
      %253 = vmatpush2.xpose.msra.mxu0 0.0
      %254 = vmatprep.subr.mxu0 0.0
      %255 = vmatpush2.xpose.msra.mxu0 0.0
      %256 = vmatprep.subr.mxu0 0.0
      %257 = vmatpush2.xpose.msra.mxu0 0.0
      %258 = vmatprep.subr.mxu0 0.0
      %259 = vmatpush2.xpose.msra.mxu0 0.0
      %260 = vmatprep.mubr.f32.mxu0 0.0
      %261 = vmatmul.mubr.f32.gmra.mxu0 %v191
      %v262 = vpop.f32.mrf.mxu0
      %v263 = vadd.f32 0.0, %v262
      %v264 = vpop.f32.mrf.mxu0
      %265 = vmatprep.mubr.f32.mxu0 0.0
      %266 = vmatmul.mubr.f32.gmra.mxu0 %v194
      %v267 = vpop.f32.mrf.mxu0
      %v268 = vadd.f32 0.0, %v267
      %v269 = vpop.f32.mrf.mxu0
      %270 = vdwg.mxu0
      %v272 = vsel %vm189, %v127, 0
      %v275 = vsel %vm189, %v128, 0
      %277 = vmatprep.subr.mxu0 0.0
      %278 = vmatpush1.xpose.msra.mxu0 0.0
      %279 = vmatprep.subr.mxu0 0.0
      %280 = vmatpush1.xpose.msra.mxu0 0.0
      %281 = vmatprep.subr.mxu0 0.0
      %282 = vmatpush1.xpose.msra.mxu0 0.0
      %283 = vmatprep.subr.mxu0 0.0
      %284 = vmatpush1.xpose.msra.mxu0 0.0
      %285 = vmatprep.subr.mxu0 0.0
      %286 = vmatpush1.xpose.msra.mxu0 0.0
      %287 = vmatprep.subr.mxu0 0.0
      %288 = vmatpush1.xpose.msra.mxu0 0.0
      %289 = vmatprep.subr.mxu0 0.0
      %290 = vmatpush1.xpose.msra.mxu0 0.0
      %291 = vmatprep.subr.mxu0 0.0
      %292 = vmatpush1.xpose.msra.mxu0 0.0
      %293 = vmatprep.subr.mxu0 0.0
      %294 = vmatpush1.xpose.msra.mxu0 0.0
      %295 = vmatprep.subr.mxu0 0.0
      %296 = vmatpush1.xpose.msra.mxu0 0.0
      %297 = vmatprep.subr.mxu0 0.0
      %298 = vmatpush1.xpose.msra.mxu0 0.0
      %299 = vmatprep.subr.mxu0 0.0
      %300 = vmatpush1.xpose.msra.mxu0 0.0
      %301 = vmatprep.subr.mxu0 0.0
      %302 = vmatpush1.xpose.msra.mxu0 0.0
      %303 = vmatprep.subr.mxu0 0.0
      %304 = vmatpush1.xpose.msra.mxu0 0.0
      %305 = vmatprep.subr.mxu0 0.0
      %306 = vmatpush1.xpose.msra.mxu0 %v275
      %307 = vmatprep.subr.mxu0 0.0
      %308 = vmatpush1.xpose.msra.mxu0 %v272
      %309 = vmatprep.subr.mxu0 0.0
      %310 = vmatpush2.xpose.msra.mxu0 0.0
      %311 = vmatprep.subr.mxu0 0.0
      %312 = vmatpush2.xpose.msra.mxu0 0.0
      %313 = vmatprep.subr.mxu0 0.0
      %314 = vmatpush2.xpose.msra.mxu0 0.0
      %315 = vmatprep.subr.mxu0 0.0
      %316 = vmatpush2.xpose.msra.mxu0 0.0
      %317 = vmatprep.subr.mxu0 0.0
      %318 = vmatpush2.xpose.msra.mxu0 0.0
      %319 = vmatprep.subr.mxu0 0.0
      %320 = vmatpush2.xpose.msra.mxu0 0.0
      %321 = vmatprep.subr.mxu0 0.0
      %322 = vmatpush2.xpose.msra.mxu0 0.0
      %323 = vmatprep.subr.mxu0 0.0
      %324 = vmatpush2.xpose.msra.mxu0 0.0
      %325 = vmatprep.subr.mxu0 0.0
      %326 = vmatpush2.xpose.msra.mxu0 0.0
      %327 = vmatprep.subr.mxu0 0.0
      %328 = vmatpush2.xpose.msra.mxu0 0.0
      %329 = vmatprep.subr.mxu0 0.0
      %330 = vmatpush2.xpose.msra.mxu0 0.0
      %331 = vmatprep.subr.mxu0 0.0
      %332 = vmatpush2.xpose.msra.mxu0 0.0
      %333 = vmatprep.subr.mxu0 0.0
      %334 = vmatpush2.xpose.msra.mxu0 0.0
      %335 = vmatprep.subr.mxu0 0.0
      %336 = vmatpush2.xpose.msra.mxu0 0.0
      %337 = vmatprep.subr.mxu0 0.0
      %338 = vmatpush2.xpose.msra.mxu0 0.0
      %339 = vmatprep.subr.mxu0 0.0
      %340 = vmatpush2.xpose.msra.mxu0 0.0
      %341 = vmatprep.mubr.f32.mxu0 0.0
      %342 = vmatmul.mubr.f32.gmra.mxu0 %v272
      %v343 = vpop.f32.mrf.mxu0
      %v344 = vadd.f32 0.0, %v343
      %v345 = vpop.f32.mrf.mxu0
      %346 = vmatprep.mubr.f32.mxu0 0.0
      %347 = vmatmul.mubr.f32.gmra.mxu0 %v275
      %v348 = vpop.f32.mrf.mxu0
      %v349 = vadd.f32 0.0, %v348
      %v350 = vpop.f32.mrf.mxu0
      %351 = vdwg.mxu0
      %v353 = vsel %vm189, %v129, 0
      %v356 = vsel %vm189, %v130, 0
      %358 = vmatprep.subr.mxu0 0.0
      %359 = vmatpush1.xpose.msra.mxu0 0.0
      %360 = vmatprep.subr.mxu0 0.0
      %361 = vmatpush1.xpose.msra.mxu0 0.0
      %362 = vmatprep.subr.mxu0 0.0
      %363 = vmatpush1.xpose.msra.mxu0 0.0
      %364 = vmatprep.subr.mxu0 0.0
      %365 = vmatpush1.xpose.msra.mxu0 0.0
      %366 = vmatprep.subr.mxu0 0.0
      %367 = vmatpush1.xpose.msra.mxu0 0.0
      %368 = vmatprep.subr.mxu0 0.0
      %369 = vmatpush1.xpose.msra.mxu0 0.0
      %370 = vmatprep.subr.mxu0 0.0
      %371 = vmatpush1.xpose.msra.mxu0 0.0
      %372 = vmatprep.subr.mxu0 0.0
      %373 = vmatpush1.xpose.msra.mxu0 0.0
      %374 = vmatprep.subr.mxu0 0.0
      %375 = vmatpush1.xpose.msra.mxu0 0.0
      %376 = vmatprep.subr.mxu0 0.0
      %377 = vmatpush1.xpose.msra.mxu0 0.0
      %378 = vmatprep.subr.mxu0 0.0
      %379 = vmatpush1.xpose.msra.mxu0 0.0
      %380 = vmatprep.subr.mxu0 0.0
      %381 = vmatpush1.xpose.msra.mxu0 0.0
      %382 = vmatprep.subr.mxu0 0.0
      %383 = vmatpush1.xpose.msra.mxu0 0.0
      %384 = vmatprep.subr.mxu0 0.0
      %385 = vmatpush1.xpose.msra.mxu0 0.0
      %386 = vmatprep.subr.mxu0 0.0
      %387 = vmatpush1.xpose.msra.mxu0 %v356
      %388 = vmatprep.subr.mxu0 0.0
      %389 = vmatpush1.xpose.msra.mxu0 %v353
      %390 = vmatprep.subr.mxu0 0.0
      %391 = vmatpush2.xpose.msra.mxu0 0.0
      %392 = vmatprep.subr.mxu0 0.0
      %393 = vmatpush2.xpose.msra.mxu0 0.0
      %394 = vmatprep.subr.mxu0 0.0
      %395 = vmatpush2.xpose.msra.mxu0 0.0
      %396 = vmatprep.subr.mxu0 0.0
      %397 = vmatpush2.xpose.msra.mxu0 0.0
      %398 = vmatprep.subr.mxu0 0.0
      %399 = vmatpush2.xpose.msra.mxu0 0.0
      %400 = vmatprep.subr.mxu0 0.0
      %401 = vmatpush2.xpose.msra.mxu0 0.0
      %402 = vmatprep.subr.mxu0 0.0
      %403 = vmatpush2.xpose.msra.mxu0 0.0
      %404 = vmatprep.subr.mxu0 0.0
      %405 = vmatpush2.xpose.msra.mxu0 0.0
      %406 = vmatprep.subr.mxu0 0.0
      %407 = vmatpush2.xpose.msra.mxu0 0.0
      %408 = vmatprep.subr.mxu0 0.0
      %409 = vmatpush2.xpose.msra.mxu0 0.0
      %410 = vmatprep.subr.mxu0 0.0
      %411 = vmatpush2.xpose.msra.mxu0 0.0
      %412 = vmatprep.subr.mxu0 0.0
      %413 = vmatpush2.xpose.msra.mxu0 0.0
      %414 = vmatprep.subr.mxu0 0.0
      %415 = vmatpush2.xpose.msra.mxu0 0.0
      %416 = vmatprep.subr.mxu0 0.0
      %417 = vmatpush2.xpose.msra.mxu0 0.0
      %418 = vmatprep.subr.mxu0 0.0
      %419 = vmatpush2.xpose.msra.mxu0 0.0
      %420 = vmatprep.subr.mxu0 0.0
      %421 = vmatpush2.xpose.msra.mxu0 0.0
      %422 = vmatprep.mubr.f32.mxu0 0.0
      %423 = vmatmul.mubr.f32.gmra.mxu0 %v353
      %v424 = vpop.f32.mrf.mxu0
      %v425 = vadd.f32 0.0, %v424
      %v426 = vpop.f32.mrf.mxu0
      %427 = vmatprep.mubr.f32.mxu0 0.0
      %428 = vmatmul.mubr.f32.gmra.mxu0 %v356
      %v429 = vpop.f32.mrf.mxu0
      %v430 = vadd.f32 0.0, %v429
      %v431 = vpop.f32.mrf.mxu0
      %432 = vdwg.mxu0
      %v434 = vsel %vm189, %v131, 0
      %v437 = vsel %vm189, %v132, 0
      %439 = vmatprep.subr.mxu0 0.0
      %440 = vmatpush1.xpose.msra.mxu0 0.0
      %441 = vmatprep.subr.mxu0 0.0
      %442 = vmatpush1.xpose.msra.mxu0 0.0
      %443 = vmatprep.subr.mxu0 0.0
      %444 = vmatpush1.xpose.msra.mxu0 0.0
      %445 = vmatprep.subr.mxu0 0.0
      %446 = vmatpush1.xpose.msra.mxu0 0.0
      %447 = vmatprep.subr.mxu0 0.0
      %448 = vmatpush1.xpose.msra.mxu0 0.0
      %449 = vmatprep.subr.mxu0 0.0
      %450 = vmatpush1.xpose.msra.mxu0 0.0
      %451 = vmatprep.subr.mxu0 0.0
      %452 = vmatpush1.xpose.msra.mxu0 0.0
      %453 = vmatprep.subr.mxu0 0.0
      %454 = vmatpush1.xpose.msra.mxu0 0.0
      %455 = vmatprep.subr.mxu0 0.0
      %456 = vmatpush1.xpose.msra.mxu0 0.0
      %457 = vmatprep.subr.mxu0 0.0
      %458 = vmatpush1.xpose.msra.mxu0 0.0
      %459 = vmatprep.subr.mxu0 0.0
      %460 = vmatpush1.xpose.msra.mxu0 0.0
      %461 = vmatprep.subr.mxu0 0.0
      %462 = vmatpush1.xpose.msra.mxu0 0.0
      %463 = vmatprep.subr.mxu0 0.0
      %464 = vmatpush1.xpose.msra.mxu0 0.0
      %465 = vmatprep.subr.mxu0 0.0
      %466 = vmatpush1.xpose.msra.mxu0 0.0
      %467 = vmatprep.subr.mxu0 0.0
      %468 = vmatpush1.xpose.msra.mxu0 %v437
      %469 = vmatprep.subr.mxu0 0.0
      %470 = vmatpush1.xpose.msra.mxu0 %v434
      %471 = vmatprep.subr.mxu0 0.0
      %472 = vmatpush2.xpose.msra.mxu0 0.0
      %473 = vmatprep.subr.mxu0 0.0
      %474 = vmatpush2.xpose.msra.mxu0 0.0
      %475 = vmatprep.subr.mxu0 0.0
      %476 = vmatpush2.xpose.msra.mxu0 0.0
      %477 = vmatprep.subr.mxu0 0.0
      %478 = vmatpush2.xpose.msra.mxu0 0.0
      %479 = vmatprep.subr.mxu0 0.0
      %480 = vmatpush2.xpose.msra.mxu0 0.0
      %481 = vmatprep.subr.mxu0 0.0
      %482 = vmatpush2.xpose.msra.mxu0 0.0
      %483 = vmatprep.subr.mxu0 0.0
      %484 = vmatpush2.xpose.msra.mxu0 0.0
      %485 = vmatprep.subr.mxu0 0.0
      %486 = vmatpush2.xpose.msra.mxu0 0.0
      %487 = vmatprep.subr.mxu0 0.0
      %488 = vmatpush2.xpose.msra.mxu0 0.0
      %489 = vmatprep.subr.mxu0 0.0
      %490 = vmatpush2.xpose.msra.mxu0 0.0
      %491 = vmatprep.subr.mxu0 0.0
      %492 = vmatpush2.xpose.msra.mxu0 0.0
      %493 = vmatprep.subr.mxu0 0.0
      %494 = vmatpush2.xpose.msra.mxu0 0.0
      %495 = vmatprep.subr.mxu0 0.0
      %496 = vmatpush2.xpose.msra.mxu0 0.0
      %497 = vmatprep.subr.mxu0 0.0
      %498 = vmatpush2.xpose.msra.mxu0 0.0
      %499 = vmatprep.subr.mxu0 0.0
      %500 = vmatpush2.xpose.msra.mxu0 0.0
      %501 = vmatprep.subr.mxu0 0.0
      %502 = vmatpush2.xpose.msra.mxu0 0.0
      %503 = vmatprep.mubr.f32.mxu0 0.0
      %504 = vmatmul.mubr.f32.gmra.mxu0 %v434
      %v505 = vpop.f32.mrf.mxu0
      %v506 = vadd.f32 0.0, %v505
      %v507 = vpop.f32.mrf.mxu0
      %508 = vmatprep.mubr.f32.mxu0 0.0
      %509 = vmatmul.mubr.f32.gmra.mxu0 %v437
      %v510 = vpop.f32.mrf.mxu0
      %v511 = vadd.f32 0.0, %v510
      %v512 = vpop.f32.mrf.mxu0
      %513 = vdwg.mxu0
      %v515 = vsel %vm189, %v133, 0
      %v518 = vsel %vm189, %v134, 0
      %520 = vmatprep.subr.mxu0 0.0
      %521 = vmatpush1.xpose.msra.mxu0 0.0
      %522 = vmatprep.subr.mxu0 0.0
      %523 = vmatpush1.xpose.msra.mxu0 0.0
      %524 = vmatprep.subr.mxu0 0.0
      %525 = vmatpush1.xpose.msra.mxu0 0.0
      %526 = vmatprep.subr.mxu0 0.0
      %527 = vmatpush1.xpose.msra.mxu0 0.0
      %528 = vmatprep.subr.mxu0 0.0
      %529 = vmatpush1.xpose.msra.mxu0 0.0
      %530 = vmatprep.subr.mxu0 0.0
      %531 = vmatpush1.xpose.msra.mxu0 0.0
      %532 = vmatprep.subr.mxu0 0.0
      %533 = vmatpush1.xpose.msra.mxu0 0.0
      %534 = vmatprep.subr.mxu0 0.0
      %535 = vmatpush1.xpose.msra.mxu0 0.0
      %536 = vmatprep.subr.mxu0 0.0
      %537 = vmatpush1.xpose.msra.mxu0 0.0
      %538 = vmatprep.subr.mxu0 0.0
      %539 = vmatpush1.xpose.msra.mxu0 0.0
      %540 = vmatprep.subr.mxu0 0.0
      %541 = vmatpush1.xpose.msra.mxu0 0.0
      %542 = vmatprep.subr.mxu0 0.0
      %543 = vmatpush1.xpose.msra.mxu0 0.0
      %544 = vmatprep.subr.mxu0 0.0
      %545 = vmatpush1.xpose.msra.mxu0 0.0
      %546 = vmatprep.subr.mxu0 0.0
      %547 = vmatpush1.xpose.msra.mxu0 0.0
      %548 = vmatprep.subr.mxu0 0.0
      %549 = vmatpush1.xpose.msra.mxu0 %v518
      %550 = vmatprep.subr.mxu0 0.0
      %551 = vmatpush1.xpose.msra.mxu0 %v515
      %552 = vmatprep.subr.mxu0 0.0
      %553 = vmatpush2.xpose.msra.mxu0 0.0
      %554 = vmatprep.subr.mxu0 0.0
      %555 = vmatpush2.xpose.msra.mxu0 0.0
      %556 = vmatprep.subr.mxu0 0.0
      %557 = vmatpush2.xpose.msra.mxu0 0.0
      %558 = vmatprep.subr.mxu0 0.0
      %559 = vmatpush2.xpose.msra.mxu0 0.0
      %560 = vmatprep.subr.mxu0 0.0
      %561 = vmatpush2.xpose.msra.mxu0 0.0
      %562 = vmatprep.subr.mxu0 0.0
      %563 = vmatpush2.xpose.msra.mxu0 0.0
      %564 = vmatprep.subr.mxu0 0.0
      %565 = vmatpush2.xpose.msra.mxu0 0.0
      %566 = vmatprep.subr.mxu0 0.0
      %567 = vmatpush2.xpose.msra.mxu0 0.0
      %568 = vmatprep.subr.mxu0 0.0
      %569 = vmatpush2.xpose.msra.mxu0 0.0
      %570 = vmatprep.subr.mxu0 0.0
      %571 = vmatpush2.xpose.msra.mxu0 0.0
      %572 = vmatprep.subr.mxu0 0.0
      %573 = vmatpush2.xpose.msra.mxu0 0.0
      %574 = vmatprep.subr.mxu0 0.0
      %575 = vmatpush2.xpose.msra.mxu0 0.0
      %576 = vmatprep.subr.mxu0 0.0
      %577 = vmatpush2.xpose.msra.mxu0 0.0
      %578 = vmatprep.subr.mxu0 0.0
      %579 = vmatpush2.xpose.msra.mxu0 0.0
      %580 = vmatprep.subr.mxu0 0.0
      %581 = vmatpush2.xpose.msra.mxu0 0.0
      %582 = vmatprep.subr.mxu0 0.0
      %583 = vmatpush2.xpose.msra.mxu0 0.0
      %584 = vmatprep.mubr.f32.mxu0 0.0
      %585 = vmatmul.mubr.f32.gmra.mxu0 %v515
      %v586 = vpop.f32.mrf.mxu0
      %v587 = vadd.f32 0.0, %v586
      %v588 = vpop.f32.mrf.mxu0
      %589 = vmatprep.mubr.f32.mxu0 0.0
      %590 = vmatmul.mubr.f32.gmra.mxu0 %v518
      %v591 = vpop.f32.mrf.mxu0
      %v592 = vadd.f32 0.0, %v591
      %v593 = vpop.f32.mrf.mxu0
      %594 = vdwg.mxu0
      %v596 = vsel %vm189, %v135, 0
      %v599 = vsel %vm189, %v136, 0
      %601 = vmatprep.subr.mxu0 0.0
      %602 = vmatpush1.xpose.msra.mxu0 0.0
      %603 = vmatprep.subr.mxu0 0.0
      %604 = vmatpush1.xpose.msra.mxu0 0.0
      %605 = vmatprep.subr.mxu0 0.0
      %606 = vmatpush1.xpose.msra.mxu0 0.0
      %607 = vmatprep.subr.mxu0 0.0
      %608 = vmatpush1.xpose.msra.mxu0 0.0
      %609 = vmatprep.subr.mxu0 0.0
      %610 = vmatpush1.xpose.msra.mxu0 0.0
      %611 = vmatprep.subr.mxu0 0.0
      %612 = vmatpush1.xpose.msra.mxu0 0.0
      %613 = vmatprep.subr.mxu0 0.0
      %614 = vmatpush1.xpose.msra.mxu0 0.0
      %615 = vmatprep.subr.mxu0 0.0
      %616 = vmatpush1.xpose.msra.mxu0 0.0
      %617 = vmatprep.subr.mxu0 0.0
      %618 = vmatpush1.xpose.msra.mxu0 0.0
      %619 = vmatprep.subr.mxu0 0.0
      %620 = vmatpush1.xpose.msra.mxu0 0.0
      %621 = vmatprep.subr.mxu0 0.0
      %622 = vmatpush1.xpose.msra.mxu0 0.0
      %623 = vmatprep.subr.mxu0 0.0
      %624 = vmatpush1.xpose.msra.mxu0 0.0
      %625 = vmatprep.subr.mxu0 0.0
      %626 = vmatpush1.xpose.msra.mxu0 0.0
      %627 = vmatprep.subr.mxu0 0.0
      %628 = vmatpush1.xpose.msra.mxu0 0.0
      %629 = vmatprep.subr.mxu0 0.0
      %630 = vmatpush1.xpose.msra.mxu0 %v599
      %631 = vmatprep.subr.mxu0 0.0
      %632 = vmatpush1.xpose.msra.mxu0 %v596
      %633 = vmatprep.subr.mxu0 0.0
      %634 = vmatpush2.xpose.msra.mxu0 0.0
      %635 = vmatprep.subr.mxu0 0.0
      %636 = vmatpush2.xpose.msra.mxu0 0.0
      %637 = vmatprep.subr.mxu0 0.0
      %638 = vmatpush2.xpose.msra.mxu0 0.0
      %639 = vmatprep.subr.mxu0 0.0
      %640 = vmatpush2.xpose.msra.mxu0 0.0
      %641 = vmatprep.subr.mxu0 0.0
      %642 = vmatpush2.xpose.msra.mxu0 0.0
      %643 = vmatprep.subr.mxu0 0.0
      %644 = vmatpush2.xpose.msra.mxu0 0.0
      %645 = vmatprep.subr.mxu0 0.0
      %646 = vmatpush2.xpose.msra.mxu0 0.0
      %647 = vmatprep.subr.mxu0 0.0
      %648 = vmatpush2.xpose.msra.mxu0 0.0
      %649 = vmatprep.subr.mxu0 0.0
      %650 = vmatpush2.xpose.msra.mxu0 0.0
      %651 = vmatprep.subr.mxu0 0.0
      %652 = vmatpush2.xpose.msra.mxu0 0.0
      %653 = vmatprep.subr.mxu0 0.0
      %654 = vmatpush2.xpose.msra.mxu0 0.0
      %655 = vmatprep.subr.mxu0 0.0
      %656 = vmatpush2.xpose.msra.mxu0 0.0
      %657 = vmatprep.subr.mxu0 0.0
      %658 = vmatpush2.xpose.msra.mxu0 0.0
      %659 = vmatprep.subr.mxu0 0.0
      %660 = vmatpush2.xpose.msra.mxu0 0.0
      %661 = vmatprep.subr.mxu0 0.0
      %662 = vmatpush2.xpose.msra.mxu0 0.0
      %663 = vmatprep.subr.mxu0 0.0
      %664 = vmatpush2.xpose.msra.mxu0 0.0
      %665 = vmatprep.mubr.f32.mxu0 0.0
      %666 = vmatmul.mubr.f32.gmra.mxu0 %v596
      %v667 = vpop.f32.mrf.mxu0
      %v668 = vadd.f32 0.0, %v667
      %v669 = vpop.f32.mrf.mxu0
      %670 = vmatprep.mubr.f32.mxu0 0.0
      %671 = vmatmul.mubr.f32.gmra.mxu0 %v599
      %v672 = vpop.f32.mrf.mxu0
      %v673 = vadd.f32 0.0, %v672
      %v674 = vpop.f32.mrf.mxu0
      %675 = vdwg.mxu0
      %v677 = vsel %vm189, %v137, 0
      %v680 = vsel %vm189, %v138, 0
      %682 = vmatprep.subr.mxu0 0.0
      %683 = vmatpush1.xpose.msra.mxu0 0.0
      %684 = vmatprep.subr.mxu0 0.0
      %685 = vmatpush1.xpose.msra.mxu0 0.0
      %686 = vmatprep.subr.mxu0 0.0
      %687 = vmatpush1.xpose.msra.mxu0 0.0
      %688 = vmatprep.subr.mxu0 0.0
      %689 = vmatpush1.xpose.msra.mxu0 0.0
      %690 = vmatprep.subr.mxu0 0.0
      %691 = vmatpush1.xpose.msra.mxu0 0.0
      %692 = vmatprep.subr.mxu0 0.0
      %693 = vmatpush1.xpose.msra.mxu0 0.0
      %694 = vmatprep.subr.mxu0 0.0
      %695 = vmatpush1.xpose.msra.mxu0 0.0
      %696 = vmatprep.subr.mxu0 0.0
      %697 = vmatpush1.xpose.msra.mxu0 0.0
      %698 = vmatprep.subr.mxu0 0.0
      %699 = vmatpush1.xpose.msra.mxu0 0.0
      %700 = vmatprep.subr.mxu0 0.0
      %701 = vmatpush1.xpose.msra.mxu0 0.0
      %702 = vmatprep.subr.mxu0 0.0
      %703 = vmatpush1.xpose.msra.mxu0 0.0
      %704 = vmatprep.subr.mxu0 0.0
      %705 = vmatpush1.xpose.msra.mxu0 0.0
      %706 = vmatprep.subr.mxu0 0.0
      %707 = vmatpush1.xpose.msra.mxu0 0.0
      %708 = vmatprep.subr.mxu0 0.0
      %709 = vmatpush1.xpose.msra.mxu0 0.0
      %710 = vmatprep.subr.mxu0 0.0
      %711 = vmatpush1.xpose.msra.mxu0 %v680
      %712 = vmatprep.subr.mxu0 0.0
      %713 = vmatpush1.xpose.msra.mxu0 %v677
      %714 = vmatprep.subr.mxu0 0.0
      %715 = vmatpush2.xpose.msra.mxu0 0.0
      %716 = vmatprep.subr.mxu0 0.0
      %717 = vmatpush2.xpose.msra.mxu0 0.0
      %718 = vmatprep.subr.mxu0 0.0
      %719 = vmatpush2.xpose.msra.mxu0 0.0
      %720 = vmatprep.subr.mxu0 0.0
      %721 = vmatpush2.xpose.msra.mxu0 0.0
      %722 = vmatprep.subr.mxu0 0.0
      %723 = vmatpush2.xpose.msra.mxu0 0.0
      %724 = vmatprep.subr.mxu0 0.0
      %725 = vmatpush2.xpose.msra.mxu0 0.0
      %726 = vmatprep.subr.mxu0 0.0
      %727 = vmatpush2.xpose.msra.mxu0 0.0
      %728 = vmatprep.subr.mxu0 0.0
      %729 = vmatpush2.xpose.msra.mxu0 0.0
      %730 = vmatprep.subr.mxu0 0.0
      %731 = vmatpush2.xpose.msra.mxu0 0.0
      %732 = vmatprep.subr.mxu0 0.0
      %733 = vmatpush2.xpose.msra.mxu0 0.0
      %734 = vmatprep.subr.mxu0 0.0
      %735 = vmatpush2.xpose.msra.mxu0 0.0
      %736 = vmatprep.subr.mxu0 0.0
      %737 = vmatpush2.xpose.msra.mxu0 0.0
      %738 = vmatprep.subr.mxu0 0.0
      %739 = vmatpush2.xpose.msra.mxu0 0.0
      %740 = vmatprep.subr.mxu0 0.0
      %741 = vmatpush2.xpose.msra.mxu0 0.0
      %742 = vmatprep.subr.mxu0 0.0
      %743 = vmatpush2.xpose.msra.mxu0 0.0
      %744 = vmatprep.subr.mxu0 0.0
      %745 = vmatpush2.xpose.msra.mxu0 0.0
      %746 = vmatprep.mubr.f32.mxu0 0.0
      %747 = vmatmul.mubr.f32.gmra.mxu0 %v677
      %v748 = vpop.f32.mrf.mxu0
      %v749 = vadd.f32 0.0, %v748
      %v750 = vpop.f32.mrf.mxu0
      %751 = vmatprep.mubr.f32.mxu0 0.0
      %752 = vmatmul.mubr.f32.gmra.mxu0 %v680
      %v753 = vpop.f32.mrf.mxu0
      %v754 = vadd.f32 0.0, %v753
      %v755 = vpop.f32.mrf.mxu0
      %756 = vdwg.mxu0
      %v758 = vsel %vm189, %v139, 0
      %v761 = vsel %vm189, %v140, 0
      %763 = vmatprep.subr.mxu0 0.0
      %764 = vmatpush1.xpose.msra.mxu0 0.0
      %765 = vmatprep.subr.mxu0 0.0
      %766 = vmatpush1.xpose.msra.mxu0 0.0
      %767 = vmatprep.subr.mxu0 0.0
      %768 = vmatpush1.xpose.msra.mxu0 0.0
      %769 = vmatprep.subr.mxu0 0.0
      %770 = vmatpush1.xpose.msra.mxu0 0.0
      %771 = vmatprep.subr.mxu0 0.0
      %772 = vmatpush1.xpose.msra.mxu0 0.0
      %773 = vmatprep.subr.mxu0 0.0
      %774 = vmatpush1.xpose.msra.mxu0 0.0
      %775 = vmatprep.subr.mxu0 0.0
      %776 = vmatpush1.xpose.msra.mxu0 0.0
      %777 = vmatprep.subr.mxu0 0.0
      %778 = vmatpush1.xpose.msra.mxu0 0.0
      %779 = vmatprep.subr.mxu0 0.0
      %780 = vmatpush1.xpose.msra.mxu0 0.0
      %781 = vmatprep.subr.mxu0 0.0
      %782 = vmatpush1.xpose.msra.mxu0 0.0
      %783 = vmatprep.subr.mxu0 0.0
      %784 = vmatpush1.xpose.msra.mxu0 0.0
      %785 = vmatprep.subr.mxu0 0.0
      %786 = vmatpush1.xpose.msra.mxu0 0.0
      %787 = vmatprep.subr.mxu0 0.0
      %788 = vmatpush1.xpose.msra.mxu0 0.0
      %789 = vmatprep.subr.mxu0 0.0
      %790 = vmatpush1.xpose.msra.mxu0 0.0
      %791 = vmatprep.subr.mxu0 0.0
      %792 = vmatpush1.xpose.msra.mxu0 %v761
      %793 = vmatprep.subr.mxu0 0.0
      %794 = vmatpush1.xpose.msra.mxu0 %v758
      %795 = vmatprep.subr.mxu0 0.0
      %796 = vmatpush2.xpose.msra.mxu0 0.0
      %797 = vmatprep.subr.mxu0 0.0
      %798 = vmatpush2.xpose.msra.mxu0 0.0
      %799 = vmatprep.subr.mxu0 0.0
      %800 = vmatpush2.xpose.msra.mxu0 0.0
      %801 = vmatprep.subr.mxu0 0.0
      %802 = vmatpush2.xpose.msra.mxu0 0.0
      %803 = vmatprep.subr.mxu0 0.0
      %804 = vmatpush2.xpose.msra.mxu0 0.0
      %805 = vmatprep.subr.mxu0 0.0
      %806 = vmatpush2.xpose.msra.mxu0 0.0
      %807 = vmatprep.subr.mxu0 0.0
      %808 = vmatpush2.xpose.msra.mxu0 0.0
      %809 = vmatprep.subr.mxu0 0.0
      %810 = vmatpush2.xpose.msra.mxu0 0.0
      %811 = vmatprep.subr.mxu0 0.0
      %812 = vmatpush2.xpose.msra.mxu0 0.0
      %813 = vmatprep.subr.mxu0 0.0
      %814 = vmatpush2.xpose.msra.mxu0 0.0
      %815 = vmatprep.subr.mxu0 0.0
      %816 = vmatpush2.xpose.msra.mxu0 0.0
      %817 = vmatprep.subr.mxu0 0.0
      %818 = vmatpush2.xpose.msra.mxu0 0.0
      %819 = vmatprep.subr.mxu0 0.0
      %820 = vmatpush2.xpose.msra.mxu0 0.0
      %821 = vmatprep.subr.mxu0 0.0
      %822 = vmatpush2.xpose.msra.mxu0 0.0
      %823 = vmatprep.subr.mxu0 0.0
      %824 = vmatpush2.xpose.msra.mxu0 0.0
      %825 = vmatprep.subr.mxu0 0.0
      %826 = vmatpush2.xpose.msra.mxu0 0.0
      %827 = vmatprep.mubr.f32.mxu0 0.0
      %828 = vmatmul.mubr.f32.gmra.mxu0 %v758
      %v829 = vpop.f32.mrf.mxu0
      %v830 = vadd.f32 0.0, %v829
      %v831 = vpop.f32.mrf.mxu0
      %832 = vmatprep.mubr.f32.mxu0 0.0
      %833 = vmatmul.mubr.f32.gmra.mxu0 %v761
      %v834 = vpop.f32.mrf.mxu0
      %v835 = vadd.f32 0.0, %v834
      %v836 = vpop.f32.mrf.mxu0
      %837 = vdwg.mxu0
      %v839 = vsel %vm189, %v141, 0
      %v842 = vsel %vm189, %v142, 0
      %844 = vmatprep.subr.mxu0 0.0
      %845 = vmatpush1.xpose.msra.mxu0 0.0
      %846 = vmatprep.subr.mxu0 0.0
      %847 = vmatpush1.xpose.msra.mxu0 0.0
      %848 = vmatprep.subr.mxu0 0.0
      %849 = vmatpush1.xpose.msra.mxu0 0.0
      %850 = vmatprep.subr.mxu0 0.0
      %851 = vmatpush1.xpose.msra.mxu0 0.0
      %852 = vmatprep.subr.mxu0 0.0
      %853 = vmatpush1.xpose.msra.mxu0 0.0
      %854 = vmatprep.subr.mxu0 0.0
      %855 = vmatpush1.xpose.msra.mxu0 0.0
      %856 = vmatprep.subr.mxu0 0.0
      %857 = vmatpush1.xpose.msra.mxu0 0.0
      %858 = vmatprep.subr.mxu0 0.0
      %859 = vmatpush1.xpose.msra.mxu0 0.0
      %860 = vmatprep.subr.mxu0 0.0
      %861 = vmatpush1.xpose.msra.mxu0 0.0
      %862 = vmatprep.subr.mxu0 0.0
      %863 = vmatpush1.xpose.msra.mxu0 0.0
      %864 = vmatprep.subr.mxu0 0.0
      %865 = vmatpush1.xpose.msra.mxu0 0.0
      %866 = vmatprep.subr.mxu0 0.0
      %867 = vmatpush1.xpose.msra.mxu0 0.0
      %868 = vmatprep.subr.mxu0 0.0
      %869 = vmatpush1.xpose.msra.mxu0 0.0
      %870 = vmatprep.subr.mxu0 0.0
      %871 = vmatpush1.xpose.msra.mxu0 0.0
      %872 = vmatprep.subr.mxu0 0.0
      %873 = vmatpush1.xpose.msra.mxu0 %v842
      %874 = vmatprep.subr.mxu0 0.0
      %875 = vmatpush1.xpose.msra.mxu0 %v839
      %876 = vmatprep.subr.mxu0 0.0
      %877 = vmatpush2.xpose.msra.mxu0 0.0
      %878 = vmatprep.subr.mxu0 0.0
      %879 = vmatpush2.xpose.msra.mxu0 0.0
      %880 = vmatprep.subr.mxu0 0.0
      %881 = vmatpush2.xpose.msra.mxu0 0.0
      %882 = vmatprep.subr.mxu0 0.0
      %883 = vmatpush2.xpose.msra.mxu0 0.0
      %884 = vmatprep.subr.mxu0 0.0
      %885 = vmatpush2.xpose.msra.mxu0 0.0
      %886 = vmatprep.subr.mxu0 0.0
      %887 = vmatpush2.xpose.msra.mxu0 0.0
      %888 = vmatprep.subr.mxu0 0.0
      %889 = vmatpush2.xpose.msra.mxu0 0.0
      %890 = vmatprep.subr.mxu0 0.0
      %891 = vmatpush2.xpose.msra.mxu0 0.0
      %892 = vmatprep.subr.mxu0 0.0
      %893 = vmatpush2.xpose.msra.mxu0 0.0
      %894 = vmatprep.subr.mxu0 0.0
      %895 = vmatpush2.xpose.msra.mxu0 0.0
      %896 = vmatprep.subr.mxu0 0.0
      %897 = vmatpush2.xpose.msra.mxu0 0.0
      %898 = vmatprep.subr.mxu0 0.0
      %899 = vmatpush2.xpose.msra.mxu0 0.0
      %900 = vmatprep.subr.mxu0 0.0
      %901 = vmatpush2.xpose.msra.mxu0 0.0
      %902 = vmatprep.subr.mxu0 0.0
      %903 = vmatpush2.xpose.msra.mxu0 0.0
      %904 = vmatprep.subr.mxu0 0.0
      %905 = vmatpush2.xpose.msra.mxu0 0.0
      %906 = vmatprep.subr.mxu0 0.0
      %907 = vmatpush2.xpose.msra.mxu0 0.0
      %908 = vmatprep.mubr.f32.mxu0 0.0
      %909 = vmatmul.mubr.f32.gmra.mxu0 %v839
      %v910 = vpop.f32.mrf.mxu0
      %v911 = vadd.f32 0.0, %v910
      %v912 = vpop.f32.mrf.mxu0
      %913 = vmatprep.mubr.f32.mxu0 0.0
      %914 = vmatmul.mubr.f32.gmra.mxu0 %v842
      %v915 = vpop.f32.mrf.mxu0
      %v916 = vadd.f32 0.0, %v915
      %v917 = vpop.f32.mrf.mxu0
      %918 = vdwg.mxu0
      %v920 = vsel %vm189, %v143, 0
      %v923 = vsel %vm189, %v144, 0
      %925 = vmatprep.subr.mxu0 0.0
      %926 = vmatpush1.xpose.msra.mxu0 0.0
      %927 = vmatprep.subr.mxu0 0.0
      %928 = vmatpush1.xpose.msra.mxu0 0.0
      %929 = vmatprep.subr.mxu0 0.0
      %930 = vmatpush1.xpose.msra.mxu0 0.0
      %931 = vmatprep.subr.mxu0 0.0
      %932 = vmatpush1.xpose.msra.mxu0 0.0
      %933 = vmatprep.subr.mxu0 0.0
      %934 = vmatpush1.xpose.msra.mxu0 0.0
      %935 = vmatprep.subr.mxu0 0.0
      %936 = vmatpush1.xpose.msra.mxu0 0.0
      %937 = vmatprep.subr.mxu0 0.0
      %938 = vmatpush1.xpose.msra.mxu0 0.0
      %939 = vmatprep.subr.mxu0 0.0
      %940 = vmatpush1.xpose.msra.mxu0 0.0
      %941 = vmatprep.subr.mxu0 0.0
      %942 = vmatpush1.xpose.msra.mxu0 0.0
      %943 = vmatprep.subr.mxu0 0.0
      %944 = vmatpush1.xpose.msra.mxu0 0.0
      %945 = vmatprep.subr.mxu0 0.0
      %946 = vmatpush1.xpose.msra.mxu0 0.0
      %947 = vmatprep.subr.mxu0 0.0
      %948 = vmatpush1.xpose.msra.mxu0 0.0
      %949 = vmatprep.subr.mxu0 0.0
      %950 = vmatpush1.xpose.msra.mxu0 0.0
      %951 = vmatprep.subr.mxu0 0.0
      %952 = vmatpush1.xpose.msra.mxu0 0.0
      %953 = vmatprep.subr.mxu0 0.0
      %954 = vmatpush1.xpose.msra.mxu0 %v923
      %955 = vmatprep.subr.mxu0 0.0
      %956 = vmatpush1.xpose.msra.mxu0 %v920
      %957 = vmatprep.subr.mxu0 0.0
      %958 = vmatpush2.xpose.msra.mxu0 0.0
      %959 = vmatprep.subr.mxu0 0.0
      %960 = vmatpush2.xpose.msra.mxu0 0.0
      %961 = vmatprep.subr.mxu0 0.0
      %962 = vmatpush2.xpose.msra.mxu0 0.0
      %963 = vmatprep.subr.mxu0 0.0
      %964 = vmatpush2.xpose.msra.mxu0 0.0
      %965 = vmatprep.subr.mxu0 0.0
      %966 = vmatpush2.xpose.msra.mxu0 0.0
      %967 = vmatprep.subr.mxu0 0.0
      %968 = vmatpush2.xpose.msra.mxu0 0.0
      %969 = vmatprep.subr.mxu0 0.0
      %970 = vmatpush2.xpose.msra.mxu0 0.0
      %971 = vmatprep.subr.mxu0 0.0
      %972 = vmatpush2.xpose.msra.mxu0 0.0
      %973 = vmatprep.subr.mxu0 0.0
      %974 = vmatpush2.xpose.msra.mxu0 0.0
      %975 = vmatprep.subr.mxu0 0.0
      %976 = vmatpush2.xpose.msra.mxu0 0.0
      %977 = vmatprep.subr.mxu0 0.0
      %978 = vmatpush2.xpose.msra.mxu0 0.0
      %979 = vmatprep.subr.mxu0 0.0
      %980 = vmatpush2.xpose.msra.mxu0 0.0
      %981 = vmatprep.subr.mxu0 0.0
      %982 = vmatpush2.xpose.msra.mxu0 0.0
      %983 = vmatprep.subr.mxu0 0.0
      %984 = vmatpush2.xpose.msra.mxu0 0.0
      %985 = vmatprep.subr.mxu0 0.0
      %986 = vmatpush2.xpose.msra.mxu0 0.0
      %987 = vmatprep.subr.mxu0 0.0
      %988 = vmatpush2.xpose.msra.mxu0 0.0
      %989 = vmatprep.mubr.f32.mxu0 0.0
      %990 = vmatmul.mubr.f32.gmra.mxu0 %v920
      %v991 = vpop.f32.mrf.mxu0
      %v992 = vadd.f32 0.0, %v991
      %v993 = vpop.f32.mrf.mxu0
      %994 = vmatprep.mubr.f32.mxu0 0.0
      %995 = vmatmul.mubr.f32.gmra.mxu0 %v923
      %v996 = vpop.f32.mrf.mxu0
      %v997 = vadd.f32 0.0, %v996
      %v998 = vpop.f32.mrf.mxu0
      %999 = vdwg.mxu0
      %v1001 = vsel %vm189, %v145, 0
      %v1004 = vsel %vm189, %v146, 0
      %1006 = vmatprep.subr.mxu0 0.0
      %1007 = vmatpush1.xpose.msra.mxu0 0.0
      %1008 = vmatprep.subr.mxu0 0.0
      %1009 = vmatpush1.xpose.msra.mxu0 0.0
      %1010 = vmatprep.subr.mxu0 0.0
      %1011 = vmatpush1.xpose.msra.mxu0 0.0
      %1012 = vmatprep.subr.mxu0 0.0
      %1013 = vmatpush1.xpose.msra.mxu0 0.0
      %1014 = vmatprep.subr.mxu0 0.0
      %1015 = vmatpush1.xpose.msra.mxu0 0.0
      %1016 = vmatprep.subr.mxu0 0.0
      %1017 = vmatpush1.xpose.msra.mxu0 0.0
      %1018 = vmatprep.subr.mxu0 0.0
      %1019 = vmatpush1.xpose.msra.mxu0 0.0
      %1020 = vmatprep.subr.mxu0 0.0
      %1021 = vmatpush1.xpose.msra.mxu0 0.0
      %1022 = vmatprep.subr.mxu0 0.0
      %1023 = vmatpush1.xpose.msra.mxu0 0.0
      %1024 = vmatprep.subr.mxu0 0.0
      %1025 = vmatpush1.xpose.msra.mxu0 0.0
      %1026 = vmatprep.subr.mxu0 0.0
      %1027 = vmatpush1.xpose.msra.mxu0 0.0
      %1028 = vmatprep.subr.mxu0 0.0
      %1029 = vmatpush1.xpose.msra.mxu0 0.0
      %1030 = vmatprep.subr.mxu0 0.0
      %1031 = vmatpush1.xpose.msra.mxu0 0.0
      %1032 = vmatprep.subr.mxu0 0.0
      %1033 = vmatpush1.xpose.msra.mxu0 0.0
      %1034 = vmatprep.subr.mxu0 0.0
      %1035 = vmatpush1.xpose.msra.mxu0 %v1004
      %1036 = vmatprep.subr.mxu0 0.0
      %1037 = vmatpush1.xpose.msra.mxu0 %v1001
      %1038 = vmatprep.subr.mxu0 0.0
      %1039 = vmatpush2.xpose.msra.mxu0 0.0
      %1040 = vmatprep.subr.mxu0 0.0
      %1041 = vmatpush2.xpose.msra.mxu0 0.0
      %1042 = vmatprep.subr.mxu0 0.0
      %1043 = vmatpush2.xpose.msra.mxu0 0.0
      %1044 = vmatprep.subr.mxu0 0.0
      %1045 = vmatpush2.xpose.msra.mxu0 0.0
      %1046 = vmatprep.subr.mxu0 0.0
      %1047 = vmatpush2.xpose.msra.mxu0 0.0
      %1048 = vmatprep.subr.mxu0 0.0
      %1049 = vmatpush2.xpose.msra.mxu0 0.0
      %1050 = vmatprep.subr.mxu0 0.0
      %1051 = vmatpush2.xpose.msra.mxu0 0.0
      %1052 = vmatprep.subr.mxu0 0.0
      %1053 = vmatpush2.xpose.msra.mxu0 0.0
      %1054 = vmatprep.subr.mxu0 0.0
      %1055 = vmatpush2.xpose.msra.mxu0 0.0
      %1056 = vmatprep.subr.mxu0 0.0
      %1057 = vmatpush2.xpose.msra.mxu0 0.0
      %1058 = vmatprep.subr.mxu0 0.0
      %1059 = vmatpush2.xpose.msra.mxu0 0.0
      %1060 = vmatprep.subr.mxu0 0.0
      %1061 = vmatpush2.xpose.msra.mxu0 0.0
      %1062 = vmatprep.subr.mxu0 0.0
      %1063 = vmatpush2.xpose.msra.mxu0 0.0
      %1064 = vmatprep.subr.mxu0 0.0
      %1065 = vmatpush2.xpose.msra.mxu0 0.0
      %1066 = vmatprep.subr.mxu0 0.0
      %1067 = vmatpush2.xpose.msra.mxu0 0.0
      %1068 = vmatprep.subr.mxu0 0.0
      %1069 = vmatpush2.xpose.msra.mxu0 0.0
      %1070 = vmatprep.mubr.f32.mxu0 0.0
      %1071 = vmatmul.mubr.f32.gmra.mxu0 %v1001
      %v1072 = vpop.f32.mrf.mxu0
      %v1073 = vadd.f32 0.0, %v1072
      %v1074 = vpop.f32.mrf.mxu0
      %1075 = vmatprep.mubr.f32.mxu0 0.0
      %1076 = vmatmul.mubr.f32.gmra.mxu0 %v1004
      %v1077 = vpop.f32.mrf.mxu0
      %v1078 = vadd.f32 0.0, %v1077
      %v1079 = vpop.f32.mrf.mxu0
      %1080 = vdwg.mxu0
      %v1082 = vsel %vm189, %v147, 0
      %v1085 = vsel %vm189, %v148, 0
      %1087 = vmatprep.subr.mxu0 0.0
      %1088 = vmatpush1.xpose.msra.mxu0 0.0
      %1089 = vmatprep.subr.mxu0 0.0
      %1090 = vmatpush1.xpose.msra.mxu0 0.0
      %1091 = vmatprep.subr.mxu0 0.0
      %1092 = vmatpush1.xpose.msra.mxu0 0.0
      %1093 = vmatprep.subr.mxu0 0.0
      %1094 = vmatpush1.xpose.msra.mxu0 0.0
      %1095 = vmatprep.subr.mxu0 0.0
      %1096 = vmatpush1.xpose.msra.mxu0 0.0
      %1097 = vmatprep.subr.mxu0 0.0
      %1098 = vmatpush1.xpose.msra.mxu0 0.0
      %1099 = vmatprep.subr.mxu0 0.0
      %1100 = vmatpush1.xpose.msra.mxu0 0.0
      %1101 = vmatprep.subr.mxu0 0.0
      %1102 = vmatpush1.xpose.msra.mxu0 0.0
      %1103 = vmatprep.subr.mxu0 0.0
      %1104 = vmatpush1.xpose.msra.mxu0 0.0
      %1105 = vmatprep.subr.mxu0 0.0
      %1106 = vmatpush1.xpose.msra.mxu0 0.0
      %1107 = vmatprep.subr.mxu0 0.0
      %1108 = vmatpush1.xpose.msra.mxu0 0.0
      %1109 = vmatprep.subr.mxu0 0.0
      %1110 = vmatpush1.xpose.msra.mxu0 0.0
      %1111 = vmatprep.subr.mxu0 0.0
      %1112 = vmatpush1.xpose.msra.mxu0 0.0
      %1113 = vmatprep.subr.mxu0 0.0
      %1114 = vmatpush1.xpose.msra.mxu0 0.0
      %1115 = vmatprep.subr.mxu0 0.0
      %1116 = vmatpush1.xpose.msra.mxu0 %v1085
      %1117 = vmatprep.subr.mxu0 0.0
      %1118 = vmatpush1.xpose.msra.mxu0 %v1082
      %1119 = vmatprep.subr.mxu0 0.0
      %1120 = vmatpush2.xpose.msra.mxu0 0.0
      %1121 = vmatprep.subr.mxu0 0.0
      %1122 = vmatpush2.xpose.msra.mxu0 0.0
      %1123 = vmatprep.subr.mxu0 0.0
      %1124 = vmatpush2.xpose.msra.mxu0 0.0
      %1125 = vmatprep.subr.mxu0 0.0
      %1126 = vmatpush2.xpose.msra.mxu0 0.0
      %1127 = vmatprep.subr.mxu0 0.0
      %1128 = vmatpush2.xpose.msra.mxu0 0.0
      %1129 = vmatprep.subr.mxu0 0.0
      %1130 = vmatpush2.xpose.msra.mxu0 0.0
      %1131 = vmatprep.subr.mxu0 0.0
      %1132 = vmatpush2.xpose.msra.mxu0 0.0
      %1133 = vmatprep.subr.mxu0 0.0
      %1134 = vmatpush2.xpose.msra.mxu0 0.0
      %1135 = vmatprep.subr.mxu0 0.0
      %1136 = vmatpush2.xpose.msra.mxu0 0.0
      %1137 = vmatprep.subr.mxu0 0.0
      %1138 = vmatpush2.xpose.msra.mxu0 0.0
      %1139 = vmatprep.subr.mxu0 0.0
      %1140 = vmatpush2.xpose.msra.mxu0 0.0
      %1141 = vmatprep.subr.mxu0 0.0
      %1142 = vmatpush2.xpose.msra.mxu0 0.0
      %1143 = vmatprep.subr.mxu0 0.0
      %1144 = vmatpush2.xpose.msra.mxu0 0.0
      %1145 = vmatprep.subr.mxu0 0.0
      %1146 = vmatpush2.xpose.msra.mxu0 0.0
      %1147 = vmatprep.subr.mxu0 0.0
      %1148 = vmatpush2.xpose.msra.mxu0 0.0
      %1149 = vmatprep.subr.mxu0 0.0
      %1150 = vmatpush2.xpose.msra.mxu0 0.0
      %1151 = vmatprep.mubr.f32.mxu0 0.0
      %1152 = vmatmul.mubr.f32.gmra.mxu0 %v1082
      %v1153 = vpop.f32.mrf.mxu0
      %v1154 = vadd.f32 0.0, %v1153
      %v1155 = vpop.f32.mrf.mxu0
      %1156 = vmatprep.mubr.f32.mxu0 0.0
      %1157 = vmatmul.mubr.f32.gmra.mxu0 %v1085
      %v1158 = vpop.f32.mrf.mxu0
      %v1159 = vadd.f32 0.0, %v1158
      %v1160 = vpop.f32.mrf.mxu0
      %1161 = vdwg.mxu0
      %v1163 = vsel %vm189, %v149, 0
      %v1166 = vsel %vm189, %v150, 0
      %1168 = vmatprep.subr.mxu0 0.0
      %1169 = vmatpush1.xpose.msra.mxu0 0.0
      %1170 = vmatprep.subr.mxu0 0.0
      %1171 = vmatpush1.xpose.msra.mxu0 0.0
      %1172 = vmatprep.subr.mxu0 0.0
      %1173 = vmatpush1.xpose.msra.mxu0 0.0
      %1174 = vmatprep.subr.mxu0 0.0
      %1175 = vmatpush1.xpose.msra.mxu0 0.0
      %1176 = vmatprep.subr.mxu0 0.0
      %1177 = vmatpush1.xpose.msra.mxu0 0.0
      %1178 = vmatprep.subr.mxu0 0.0
      %1179 = vmatpush1.xpose.msra.mxu0 0.0
      %1180 = vmatprep.subr.mxu0 0.0
      %1181 = vmatpush1.xpose.msra.mxu0 0.0
      %1182 = vmatprep.subr.mxu0 0.0
      %1183 = vmatpush1.xpose.msra.mxu0 0.0
      %1184 = vmatprep.subr.mxu0 0.0
      %1185 = vmatpush1.xpose.msra.mxu0 0.0
      %1186 = vmatprep.subr.mxu0 0.0
      %1187 = vmatpush1.xpose.msra.mxu0 0.0
      %1188 = vmatprep.subr.mxu0 0.0
      %1189 = vmatpush1.xpose.msra.mxu0 0.0
      %1190 = vmatprep.subr.mxu0 0.0
      %1191 = vmatpush1.xpose.msra.mxu0 0.0
      %1192 = vmatprep.subr.mxu0 0.0
      %1193 = vmatpush1.xpose.msra.mxu0 0.0
      %1194 = vmatprep.subr.mxu0 0.0
      %1195 = vmatpush1.xpose.msra.mxu0 0.0
      %1196 = vmatprep.subr.mxu0 0.0
      %1197 = vmatpush1.xpose.msra.mxu0 %v1166
      %1198 = vmatprep.subr.mxu0 0.0
      %1199 = vmatpush1.xpose.msra.mxu0 %v1163
      %1200 = vmatprep.subr.mxu0 0.0
      %1201 = vmatpush2.xpose.msra.mxu0 0.0
      %1202 = vmatprep.subr.mxu0 0.0
      %1203 = vmatpush2.xpose.msra.mxu0 0.0
      %1204 = vmatprep.subr.mxu0 0.0
      %1205 = vmatpush2.xpose.msra.mxu0 0.0
      %1206 = vmatprep.subr.mxu0 0.0
      %1207 = vmatpush2.xpose.msra.mxu0 0.0
      %1208 = vmatprep.subr.mxu0 0.0
      %1209 = vmatpush2.xpose.msra.mxu0 0.0
      %1210 = vmatprep.subr.mxu0 0.0
      %1211 = vmatpush2.xpose.msra.mxu0 0.0
      %1212 = vmatprep.subr.mxu0 0.0
      %1213 = vmatpush2.xpose.msra.mxu0 0.0
      %1214 = vmatprep.subr.mxu0 0.0
      %1215 = vmatpush2.xpose.msra.mxu0 0.0
      %1216 = vmatprep.subr.mxu0 0.0
      %1217 = vmatpush2.xpose.msra.mxu0 0.0
      %1218 = vmatprep.subr.mxu0 0.0
      %1219 = vmatpush2.xpose.msra.mxu0 0.0
      %1220 = vmatprep.subr.mxu0 0.0
      %1221 = vmatpush2.xpose.msra.mxu0 0.0
      %1222 = vmatprep.subr.mxu0 0.0
      %1223 = vmatpush2.xpose.msra.mxu0 0.0
      %1224 = vmatprep.subr.mxu0 0.0
      %1225 = vmatpush2.xpose.msra.mxu0 0.0
      %1226 = vmatprep.subr.mxu0 0.0
      %1227 = vmatpush2.xpose.msra.mxu0 0.0
      %1228 = vmatprep.subr.mxu0 0.0
      %1229 = vmatpush2.xpose.msra.mxu0 0.0
      %1230 = vmatprep.subr.mxu0 0.0
      %1231 = vmatpush2.xpose.msra.mxu0 0.0
      %1232 = vmatprep.mubr.f32.mxu0 0.0
      %1233 = vmatmul.mubr.f32.gmra.mxu0 %v1163
      %v1234 = vpop.f32.mrf.mxu0
      %v1235 = vadd.f32 0.0, %v1234
      %v1236 = vpop.f32.mrf.mxu0
      %1237 = vmatprep.mubr.f32.mxu0 0.0
      %1238 = vmatmul.mubr.f32.gmra.mxu0 %v1166
      %v1239 = vpop.f32.mrf.mxu0
      %v1240 = vadd.f32 0.0, %v1239
      %v1241 = vpop.f32.mrf.mxu0
      %1242 = vdwg.mxu0
      %v1244 = vsel %vm189, %v151, 0
      %v1247 = vsel %vm189, %v152, 0
      %1249 = vmatprep.subr.mxu0 0.0
      %1250 = vmatpush1.xpose.msra.mxu0 0.0
      %1251 = vmatprep.subr.mxu0 0.0
      %1252 = vmatpush1.xpose.msra.mxu0 0.0
      %1253 = vmatprep.subr.mxu0 0.0
      %1254 = vmatpush1.xpose.msra.mxu0 0.0
      %1255 = vmatprep.subr.mxu0 0.0
      %1256 = vmatpush1.xpose.msra.mxu0 0.0
      %1257 = vmatprep.subr.mxu0 0.0
      %1258 = vmatpush1.xpose.msra.mxu0 0.0
      %1259 = vmatprep.subr.mxu0 0.0
      %1260 = vmatpush1.xpose.msra.mxu0 0.0
      %1261 = vmatprep.subr.mxu0 0.0
      %1262 = vmatpush1.xpose.msra.mxu0 0.0
      %1263 = vmatprep.subr.mxu0 0.0
      %1264 = vmatpush1.xpose.msra.mxu0 0.0
      %1265 = vmatprep.subr.mxu0 0.0
      %1266 = vmatpush1.xpose.msra.mxu0 0.0
      %1267 = vmatprep.subr.mxu0 0.0
      %1268 = vmatpush1.xpose.msra.mxu0 0.0
      %1269 = vmatprep.subr.mxu0 0.0
      %1270 = vmatpush1.xpose.msra.mxu0 0.0
      %1271 = vmatprep.subr.mxu0 0.0
      %1272 = vmatpush1.xpose.msra.mxu0 0.0
      %1273 = vmatprep.subr.mxu0 0.0
      %1274 = vmatpush1.xpose.msra.mxu0 0.0
      %1275 = vmatprep.subr.mxu0 0.0
      %1276 = vmatpush1.xpose.msra.mxu0 0.0
      %1277 = vmatprep.subr.mxu0 0.0
      %1278 = vmatpush1.xpose.msra.mxu0 %v1247
      %1279 = vmatprep.subr.mxu0 0.0
      %1280 = vmatpush1.xpose.msra.mxu0 %v1244
      %1281 = vmatprep.subr.mxu0 0.0
      %1282 = vmatpush2.xpose.msra.mxu0 0.0
      %1283 = vmatprep.subr.mxu0 0.0
      %1284 = vmatpush2.xpose.msra.mxu0 0.0
      %1285 = vmatprep.subr.mxu0 0.0
      %1286 = vmatpush2.xpose.msra.mxu0 0.0
      %1287 = vmatprep.subr.mxu0 0.0
      %1288 = vmatpush2.xpose.msra.mxu0 0.0
      %1289 = vmatprep.subr.mxu0 0.0
      %1290 = vmatpush2.xpose.msra.mxu0 0.0
      %1291 = vmatprep.subr.mxu0 0.0
      %1292 = vmatpush2.xpose.msra.mxu0 0.0
      %1293 = vmatprep.subr.mxu0 0.0
      %1294 = vmatpush2.xpose.msra.mxu0 0.0
      %1295 = vmatprep.subr.mxu0 0.0
      %1296 = vmatpush2.xpose.msra.mxu0 0.0
      %1297 = vmatprep.subr.mxu0 0.0
      %1298 = vmatpush2.xpose.msra.mxu0 0.0
      %1299 = vmatprep.subr.mxu0 0.0
      %1300 = vmatpush2.xpose.msra.mxu0 0.0
      %1301 = vmatprep.subr.mxu0 0.0
      %1302 = vmatpush2.xpose.msra.mxu0 0.0
      %1303 = vmatprep.subr.mxu0 0.0
      %1304 = vmatpush2.xpose.msra.mxu0 0.0
      %1305 = vmatprep.subr.mxu0 0.0
      %1306 = vmatpush2.xpose.msra.mxu0 0.0
      %1307 = vmatprep.subr.mxu0 0.0
      %1308 = vmatpush2.xpose.msra.mxu0 0.0
      %1309 = vmatprep.subr.mxu0 0.0
      %1310 = vmatpush2.xpose.msra.mxu0 0.0
      %1311 = vmatprep.subr.mxu0 0.0
      %1312 = vmatpush2.xpose.msra.mxu0 0.0
      %1313 = vmatprep.mubr.f32.mxu0 0.0
      %1314 = vmatmul.mubr.f32.gmra.mxu0 %v1244
      %v1315 = vpop.f32.mrf.mxu0
      %v1316 = vadd.f32 0.0, %v1315
      %v1317 = vpop.f32.mrf.mxu0
      %1318 = vmatprep.mubr.f32.mxu0 0.0
      %1319 = vmatmul.mubr.f32.gmra.mxu0 %v1247
      %v1320 = vpop.f32.mrf.mxu0
      %v1321 = vadd.f32 0.0, %v1320
      %v1322 = vpop.f32.mrf.mxu0
      %1323 = vdwg.mxu0
      %v1325 = vsel %vm189, %v153, 0
      %v1328 = vsel %vm189, %v154, 0
      %1330 = vmatprep.subr.mxu0 0.0
      %1331 = vmatpush1.xpose.msra.mxu0 0.0
      %1332 = vmatprep.subr.mxu0 0.0
      %1333 = vmatpush1.xpose.msra.mxu0 0.0
      %1334 = vmatprep.subr.mxu0 0.0
      %1335 = vmatpush1.xpose.msra.mxu0 0.0
      %1336 = vmatprep.subr.mxu0 0.0
      %1337 = vmatpush1.xpose.msra.mxu0 0.0
      %1338 = vmatprep.subr.mxu0 0.0
      %1339 = vmatpush1.xpose.msra.mxu0 0.0
      %1340 = vmatprep.subr.mxu0 0.0
      %1341 = vmatpush1.xpose.msra.mxu0 0.0
      %1342 = vmatprep.subr.mxu0 0.0
      %1343 = vmatpush1.xpose.msra.mxu0 0.0
      %1344 = vmatprep.subr.mxu0 0.0
      %1345 = vmatpush1.xpose.msra.mxu0 0.0
      %1346 = vmatprep.subr.mxu0 0.0
      %1347 = vmatpush1.xpose.msra.mxu0 0.0
      %1348 = vmatprep.subr.mxu0 0.0
      %1349 = vmatpush1.xpose.msra.mxu0 0.0
      %1350 = vmatprep.subr.mxu0 0.0
      %1351 = vmatpush1.xpose.msra.mxu0 0.0
      %1352 = vmatprep.subr.mxu0 0.0
      %1353 = vmatpush1.xpose.msra.mxu0 0.0
      %1354 = vmatprep.subr.mxu0 0.0
      %1355 = vmatpush1.xpose.msra.mxu0 0.0
      %1356 = vmatprep.subr.mxu0 0.0
      %1357 = vmatpush1.xpose.msra.mxu0 0.0
      %1358 = vmatprep.subr.mxu0 0.0
      %1359 = vmatpush1.xpose.msra.mxu0 %v1328
      %1360 = vmatprep.subr.mxu0 0.0
      %1361 = vmatpush1.xpose.msra.mxu0 %v1325
      %1362 = vmatprep.subr.mxu0 0.0
      %1363 = vmatpush2.xpose.msra.mxu0 0.0
      %1364 = vmatprep.subr.mxu0 0.0
      %1365 = vmatpush2.xpose.msra.mxu0 0.0
      %1366 = vmatprep.subr.mxu0 0.0
      %1367 = vmatpush2.xpose.msra.mxu0 0.0
      %1368 = vmatprep.subr.mxu0 0.0
      %1369 = vmatpush2.xpose.msra.mxu0 0.0
      %1370 = vmatprep.subr.mxu0 0.0
      %1371 = vmatpush2.xpose.msra.mxu0 0.0
      %1372 = vmatprep.subr.mxu0 0.0
      %1373 = vmatpush2.xpose.msra.mxu0 0.0
      %1374 = vmatprep.subr.mxu0 0.0
      %1375 = vmatpush2.xpose.msra.mxu0 0.0
      %1376 = vmatprep.subr.mxu0 0.0
      %1377 = vmatpush2.xpose.msra.mxu0 0.0
      %1378 = vmatprep.subr.mxu0 0.0
      %1379 = vmatpush2.xpose.msra.mxu0 0.0
      %1380 = vmatprep.subr.mxu0 0.0
      %1381 = vmatpush2.xpose.msra.mxu0 0.0
      %1382 = vmatprep.subr.mxu0 0.0
      %1383 = vmatpush2.xpose.msra.mxu0 0.0
      %1384 = vmatprep.subr.mxu0 0.0
      %1385 = vmatpush2.xpose.msra.mxu0 0.0
      %1386 = vmatprep.subr.mxu0 0.0
      %1387 = vmatpush2.xpose.msra.mxu0 0.0
      %1388 = vmatprep.subr.mxu0 0.0
      %1389 = vmatpush2.xpose.msra.mxu0 0.0
      %1390 = vmatprep.subr.mxu0 0.0
      %1391 = vmatpush2.xpose.msra.mxu0 0.0
      %1392 = vmatprep.subr.mxu0 0.0
      %1393 = vmatpush2.xpose.msra.mxu0 0.0
      %1394 = vmatprep.mubr.f32.mxu0 0.0
      %1395 = vmatmul.mubr.f32.gmra.mxu0 %v1325
      %v1396 = vpop.f32.mrf.mxu0
      %v1397 = vadd.f32 0.0, %v1396
      %v1398 = vpop.f32.mrf.mxu0
      %1399 = vmatprep.mubr.f32.mxu0 0.0
      %1400 = vmatmul.mubr.f32.gmra.mxu0 %v1328
      %v1401 = vpop.f32.mrf.mxu0
      %v1402 = vadd.f32 0.0, %v1401
      %v1403 = vpop.f32.mrf.mxu0
      %1404 = vdwg.mxu0
      %v1406 = vsel %vm189, %v155, 0
      %v1409 = vsel %vm189, %v156, 0
      %1411 = vmatprep.subr.mxu0 0.0
      %1412 = vmatpush1.xpose.msra.mxu0 0.0
      %1413 = vmatprep.subr.mxu0 0.0
      %1414 = vmatpush1.xpose.msra.mxu0 0.0
      %1415 = vmatprep.subr.mxu0 0.0
      %1416 = vmatpush1.xpose.msra.mxu0 0.0
      %1417 = vmatprep.subr.mxu0 0.0
      %1418 = vmatpush1.xpose.msra.mxu0 0.0
      %1419 = vmatprep.subr.mxu0 0.0
      %1420 = vmatpush1.xpose.msra.mxu0 0.0
      %1421 = vmatprep.subr.mxu0 0.0
      %1422 = vmatpush1.xpose.msra.mxu0 0.0
      %1423 = vmatprep.subr.mxu0 0.0
      %1424 = vmatpush1.xpose.msra.mxu0 0.0
      %1425 = vmatprep.subr.mxu0 0.0
      %1426 = vmatpush1.xpose.msra.mxu0 0.0
      %1427 = vmatprep.subr.mxu0 0.0
      %1428 = vmatpush1.xpose.msra.mxu0 0.0
      %1429 = vmatprep.subr.mxu0 0.0
      %1430 = vmatpush1.xpose.msra.mxu0 0.0
      %1431 = vmatprep.subr.mxu0 0.0
      %1432 = vmatpush1.xpose.msra.mxu0 0.0
      %1433 = vmatprep.subr.mxu0 0.0
      %1434 = vmatpush1.xpose.msra.mxu0 0.0
      %1435 = vmatprep.subr.mxu0 0.0
      %1436 = vmatpush1.xpose.msra.mxu0 0.0
      %1437 = vmatprep.subr.mxu0 0.0
      %1438 = vmatpush1.xpose.msra.mxu0 0.0
      %1439 = vmatprep.subr.mxu0 0.0
      %1440 = vmatpush1.xpose.msra.mxu0 %v1409
      %1441 = vmatprep.subr.mxu0 0.0
      %1442 = vmatpush1.xpose.msra.mxu0 %v1406
      %1443 = vmatprep.subr.mxu0 0.0
      %1444 = vmatpush2.xpose.msra.mxu0 0.0
      %1445 = vmatprep.subr.mxu0 0.0
      %1446 = vmatpush2.xpose.msra.mxu0 0.0
      %1447 = vmatprep.subr.mxu0 0.0
      %1448 = vmatpush2.xpose.msra.mxu0 0.0
      %1449 = vmatprep.subr.mxu0 0.0
      %1450 = vmatpush2.xpose.msra.mxu0 0.0
      %1451 = vmatprep.subr.mxu0 0.0
      %1452 = vmatpush2.xpose.msra.mxu0 0.0
      %1453 = vmatprep.subr.mxu0 0.0
      %1454 = vmatpush2.xpose.msra.mxu0 0.0
      %1455 = vmatprep.subr.mxu0 0.0
      %1456 = vmatpush2.xpose.msra.mxu0 0.0
      %1457 = vmatprep.subr.mxu0 0.0
      %1458 = vmatpush2.xpose.msra.mxu0 0.0
      %1459 = vmatprep.subr.mxu0 0.0
      %1460 = vmatpush2.xpose.msra.mxu0 0.0
      %1461 = vmatprep.subr.mxu0 0.0
      %1462 = vmatpush2.xpose.msra.mxu0 0.0
      %1463 = vmatprep.subr.mxu0 0.0
      %1464 = vmatpush2.xpose.msra.mxu0 0.0
      %1465 = vmatprep.subr.mxu0 0.0
      %1466 = vmatpush2.xpose.msra.mxu0 0.0
      %1467 = vmatprep.subr.mxu0 0.0
      %1468 = vmatpush2.xpose.msra.mxu0 0.0
      %1469 = vmatprep.subr.mxu0 0.0
      %1470 = vmatpush2.xpose.msra.mxu0 0.0
      %1471 = vmatprep.subr.mxu0 0.0
      %1472 = vmatpush2.xpose.msra.mxu0 0.0
      %1473 = vmatprep.subr.mxu0 0.0
      %1474 = vmatpush2.xpose.msra.mxu0 0.0
      %1475 = vmatprep.mubr.f32.mxu0 0.0
      %1476 = vmatmul.mubr.f32.gmra.mxu0 %v1406
      %v1477 = vpop.f32.mrf.mxu0
      %v1478 = vadd.f32 0.0, %v1477
      %v1479 = vpop.f32.mrf.mxu0
      %1480 = vmatprep.mubr.f32.mxu0 0.0
      %1481 = vmatmul.mubr.f32.gmra.mxu0 %v1409
      %v1482 = vpop.f32.mrf.mxu0
      %v1483 = vadd.f32 0.0, %v1482
      %v1484 = vpop.f32.mrf.mxu0
      %1485 = vdwg.mxu0
      %v1487 = vsel %vm189, %v157, 0
      %v1490 = vsel %vm189, %v158, 0
      %1492 = vmatprep.subr.mxu0 0.0
      %1493 = vmatpush1.xpose.msra.mxu0 0.0
      %1494 = vmatprep.subr.mxu0 0.0
      %1495 = vmatpush1.xpose.msra.mxu0 0.0
      %1496 = vmatprep.subr.mxu0 0.0
      %1497 = vmatpush1.xpose.msra.mxu0 0.0
      %1498 = vmatprep.subr.mxu0 0.0
      %1499 = vmatpush1.xpose.msra.mxu0 0.0
      %1500 = vmatprep.subr.mxu0 0.0
      %1501 = vmatpush1.xpose.msra.mxu0 0.0
      %1502 = vmatprep.subr.mxu0 0.0
      %1503 = vmatpush1.xpose.msra.mxu0 0.0
      %1504 = vmatprep.subr.mxu0 0.0
      %1505 = vmatpush1.xpose.msra.mxu0 0.0
      %1506 = vmatprep.subr.mxu0 0.0
      %1507 = vmatpush1.xpose.msra.mxu0 0.0
      %1508 = vmatprep.subr.mxu0 0.0
      %1509 = vmatpush1.xpose.msra.mxu0 0.0
      %1510 = vmatprep.subr.mxu0 0.0
      %1511 = vmatpush1.xpose.msra.mxu0 0.0
      %1512 = vmatprep.subr.mxu0 0.0
      %1513 = vmatpush1.xpose.msra.mxu0 0.0
      %1514 = vmatprep.subr.mxu0 0.0
      %1515 = vmatpush1.xpose.msra.mxu0 0.0
      %1516 = vmatprep.subr.mxu0 0.0
      %1517 = vmatpush1.xpose.msra.mxu0 0.0
      %1518 = vmatprep.subr.mxu0 0.0
      %1519 = vmatpush1.xpose.msra.mxu0 0.0
      %1520 = vmatprep.subr.mxu0 0.0
      %1521 = vmatpush1.xpose.msra.mxu0 %v1490
      %1522 = vmatprep.subr.mxu0 0.0
      %1523 = vmatpush1.xpose.msra.mxu0 %v1487
      %1524 = vmatprep.subr.mxu0 0.0
      %1525 = vmatpush2.xpose.msra.mxu0 0.0
      %1526 = vmatprep.subr.mxu0 0.0
      %1527 = vmatpush2.xpose.msra.mxu0 0.0
      %1528 = vmatprep.subr.mxu0 0.0
      %1529 = vmatpush2.xpose.msra.mxu0 0.0
      %1530 = vmatprep.subr.mxu0 0.0
      %1531 = vmatpush2.xpose.msra.mxu0 0.0
      %1532 = vmatprep.subr.mxu0 0.0
      %1533 = vmatpush2.xpose.msra.mxu0 0.0
      %1534 = vmatprep.subr.mxu0 0.0
      %1535 = vmatpush2.xpose.msra.mxu0 0.0
      %1536 = vmatprep.subr.mxu0 0.0
      %1537 = vmatpush2.xpose.msra.mxu0 0.0
      %1538 = vmatprep.subr.mxu0 0.0
      %1539 = vmatpush2.xpose.msra.mxu0 0.0
      %1540 = vmatprep.subr.mxu0 0.0
      %1541 = vmatpush2.xpose.msra.mxu0 0.0
      %1542 = vmatprep.subr.mxu0 0.0
      %1543 = vmatpush2.xpose.msra.mxu0 0.0
      %1544 = vmatprep.subr.mxu0 0.0
      %1545 = vmatpush2.xpose.msra.mxu0 0.0
      %1546 = vmatprep.subr.mxu0 0.0
      %1547 = vmatpush2.xpose.msra.mxu0 0.0
      %1548 = vmatprep.subr.mxu0 0.0
      %1549 = vmatpush2.xpose.msra.mxu0 0.0
      %1550 = vmatprep.subr.mxu0 0.0
      %1551 = vmatpush2.xpose.msra.mxu0 0.0
      %1552 = vmatprep.subr.mxu0 0.0
      %1553 = vmatpush2.xpose.msra.mxu0 0.0
      %1554 = vmatprep.subr.mxu0 0.0
      %1555 = vmatpush2.xpose.msra.mxu0 0.0
      %1556 = vmatprep.mubr.f32.mxu0 0.0
      %1557 = vmatmul.mubr.f32.gmra.mxu0 %v1487
      %v1558 = vpop.f32.mrf.mxu0
      %v1559 = vadd.f32 0.0, %v1558
      %v1560 = vpop.f32.mrf.mxu0
      %1561 = vmatprep.mubr.f32.mxu0 0.0
      %1562 = vmatmul.mubr.f32.gmra.mxu0 %v1490
      %v1563 = vpop.f32.mrf.mxu0
      %v1564 = vadd.f32 0.0, %v1563
      %v1565 = vpop.f32.mrf.mxu0
      %1566 = vdwg.mxu0
      %v1568 = vsel %vm189, %v159, 0
      %v1571 = vsel %vm189, %v160, 0
      %1573 = vmatprep.subr.mxu0 0.0
      %1574 = vmatpush1.xpose.msra.mxu0 0.0
      %1575 = vmatprep.subr.mxu0 0.0
      %1576 = vmatpush1.xpose.msra.mxu0 0.0
      %1577 = vmatprep.subr.mxu0 0.0
      %1578 = vmatpush1.xpose.msra.mxu0 0.0
      %1579 = vmatprep.subr.mxu0 0.0
      %1580 = vmatpush1.xpose.msra.mxu0 0.0
      %1581 = vmatprep.subr.mxu0 0.0
      %1582 = vmatpush1.xpose.msra.mxu0 0.0
      %1583 = vmatprep.subr.mxu0 0.0
      %1584 = vmatpush1.xpose.msra.mxu0 0.0
      %1585 = vmatprep.subr.mxu0 0.0
      %1586 = vmatpush1.xpose.msra.mxu0 0.0
      %1587 = vmatprep.subr.mxu0 0.0
      %1588 = vmatpush1.xpose.msra.mxu0 0.0
      %1589 = vmatprep.subr.mxu0 0.0
      %1590 = vmatpush1.xpose.msra.mxu0 0.0
      %1591 = vmatprep.subr.mxu0 0.0
      %1592 = vmatpush1.xpose.msra.mxu0 0.0
      %1593 = vmatprep.subr.mxu0 0.0
      %1594 = vmatpush1.xpose.msra.mxu0 0.0
      %1595 = vmatprep.subr.mxu0 0.0
      %1596 = vmatpush1.xpose.msra.mxu0 0.0
      %1597 = vmatprep.subr.mxu0 0.0
      %1598 = vmatpush1.xpose.msra.mxu0 0.0
      %1599 = vmatprep.subr.mxu0 0.0
      %1600 = vmatpush1.xpose.msra.mxu0 0.0
      %1601 = vmatprep.subr.mxu0 0.0
      %1602 = vmatpush1.xpose.msra.mxu0 %v1571
      %1603 = vmatprep.subr.mxu0 0.0
      %1604 = vmatpush1.xpose.msra.mxu0 %v1568
      %1605 = vmatprep.subr.mxu0 0.0
      %1606 = vmatpush2.xpose.msra.mxu0 0.0
      %1607 = vmatprep.subr.mxu0 0.0
      %1608 = vmatpush2.xpose.msra.mxu0 0.0
      %1609 = vmatprep.subr.mxu0 0.0
      %1610 = vmatpush2.xpose.msra.mxu0 0.0
      %1611 = vmatprep.subr.mxu0 0.0
      %1612 = vmatpush2.xpose.msra.mxu0 0.0
      %1613 = vmatprep.subr.mxu0 0.0
      %1614 = vmatpush2.xpose.msra.mxu0 0.0
      %1615 = vmatprep.subr.mxu0 0.0
      %1616 = vmatpush2.xpose.msra.mxu0 0.0
      %1617 = vmatprep.subr.mxu0 0.0
      %1618 = vmatpush2.xpose.msra.mxu0 0.0
      %1619 = vmatprep.subr.mxu0 0.0
      %1620 = vmatpush2.xpose.msra.mxu0 0.0
      %1621 = vmatprep.subr.mxu0 0.0
      %1622 = vmatpush2.xpose.msra.mxu0 0.0
      %1623 = vmatprep.subr.mxu0 0.0
      %1624 = vmatpush2.xpose.msra.mxu0 0.0
      %1625 = vmatprep.subr.mxu0 0.0
      %1626 = vmatpush2.xpose.msra.mxu0 0.0
      %1627 = vmatprep.subr.mxu0 0.0
      %1628 = vmatpush2.xpose.msra.mxu0 0.0
      %1629 = vmatprep.subr.mxu0 0.0
      %1630 = vmatpush2.xpose.msra.mxu0 0.0
      %1631 = vmatprep.subr.mxu0 0.0
      %1632 = vmatpush2.xpose.msra.mxu0 0.0
      %1633 = vmatprep.subr.mxu0 0.0
      %1634 = vmatpush2.xpose.msra.mxu0 0.0
      %1635 = vmatprep.subr.mxu0 0.0
      %1636 = vmatpush2.xpose.msra.mxu0 0.0
      %1637 = vmatprep.mubr.f32.mxu0 0.0
      %1638 = vmatmul.mubr.f32.gmra.mxu0 %v1568
      %v1639 = vpop.f32.mrf.mxu0
      %v1640 = vadd.f32 0.0, %v1639
      %v1641 = vpop.f32.mrf.mxu0
      %1642 = vmatprep.mubr.f32.mxu0 0.0
      %1643 = vmatmul.mubr.f32.gmra.mxu0 %v1571
      %v1644 = vpop.f32.mrf.mxu0
      %v1645 = vadd.f32 0.0, %v1644
      %v1646 = vpop.f32.mrf.mxu0
      %1647 = vdwg.mxu0
      %v1649 = vsel %vm189, %v161, 0
      %v1652 = vsel %vm189, %v162, 0
      %1654 = vmatprep.subr.mxu0 0.0
      %1655 = vmatpush1.xpose.msra.mxu0 0.0
      %1656 = vmatprep.subr.mxu0 0.0
      %1657 = vmatpush1.xpose.msra.mxu0 0.0
      %1658 = vmatprep.subr.mxu0 0.0
      %1659 = vmatpush1.xpose.msra.mxu0 0.0
      %1660 = vmatprep.subr.mxu0 0.0
      %1661 = vmatpush1.xpose.msra.mxu0 0.0
      %1662 = vmatprep.subr.mxu0 0.0
      %1663 = vmatpush1.xpose.msra.mxu0 0.0
      %1664 = vmatprep.subr.mxu0 0.0
      %1665 = vmatpush1.xpose.msra.mxu0 0.0
      %1666 = vmatprep.subr.mxu0 0.0
      %1667 = vmatpush1.xpose.msra.mxu0 0.0
      %1668 = vmatprep.subr.mxu0 0.0
      %1669 = vmatpush1.xpose.msra.mxu0 0.0
      %1670 = vmatprep.subr.mxu0 0.0
      %1671 = vmatpush1.xpose.msra.mxu0 0.0
      %1672 = vmatprep.subr.mxu0 0.0
      %1673 = vmatpush1.xpose.msra.mxu0 0.0
      %1674 = vmatprep.subr.mxu0 0.0
      %1675 = vmatpush1.xpose.msra.mxu0 0.0
      %1676 = vmatprep.subr.mxu0 0.0
      %1677 = vmatpush1.xpose.msra.mxu0 0.0
      %1678 = vmatprep.subr.mxu0 0.0
      %1679 = vmatpush1.xpose.msra.mxu0 0.0
      %1680 = vmatprep.subr.mxu0 0.0
      %1681 = vmatpush1.xpose.msra.mxu0 0.0
      %1682 = vmatprep.subr.mxu0 0.0
      %1683 = vmatpush1.xpose.msra.mxu0 %v1652
      %1684 = vmatprep.subr.mxu0 0.0
      %1685 = vmatpush1.xpose.msra.mxu0 %v1649
      %1686 = vmatprep.subr.mxu0 0.0
      %1687 = vmatpush2.xpose.msra.mxu0 0.0
      %1688 = vmatprep.subr.mxu0 0.0
      %1689 = vmatpush2.xpose.msra.mxu0 0.0
      %1690 = vmatprep.subr.mxu0 0.0
      %1691 = vmatpush2.xpose.msra.mxu0 0.0
      %1692 = vmatprep.subr.mxu0 0.0
      %1693 = vmatpush2.xpose.msra.mxu0 0.0
      %1694 = vmatprep.subr.mxu0 0.0
      %1695 = vmatpush2.xpose.msra.mxu0 0.0
      %1696 = vmatprep.subr.mxu0 0.0
      %1697 = vmatpush2.xpose.msra.mxu0 0.0
      %1698 = vmatprep.subr.mxu0 0.0
      %1699 = vmatpush2.xpose.msra.mxu0 0.0
      %1700 = vmatprep.subr.mxu0 0.0
      %1701 = vmatpush2.xpose.msra.mxu0 0.0
      %1702 = vmatprep.subr.mxu0 0.0
      %1703 = vmatpush2.xpose.msra.mxu0 0.0
      %1704 = vmatprep.subr.mxu0 0.0
      %1705 = vmatpush2.xpose.msra.mxu0 0.0
      %1706 = vmatprep.subr.mxu0 0.0
      %1707 = vmatpush2.xpose.msra.mxu0 0.0
      %1708 = vmatprep.subr.mxu0 0.0
      %1709 = vmatpush2.xpose.msra.mxu0 0.0
      %1710 = vmatprep.subr.mxu0 0.0
      %1711 = vmatpush2.xpose.msra.mxu0 0.0
      %1712 = vmatprep.subr.mxu0 0.0
      %1713 = vmatpush2.xpose.msra.mxu0 0.0
      %1714 = vmatprep.subr.mxu0 0.0
      %1715 = vmatpush2.xpose.msra.mxu0 0.0
      %1716 = vmatprep.subr.mxu0 0.0
      %1717 = vmatpush2.xpose.msra.mxu0 0.0
      %1718 = vmatprep.mubr.f32.mxu0 0.0
      %1719 = vmatmul.mubr.f32.gmra.mxu0 %v1649
      %v1720 = vpop.f32.mrf.mxu0
      %v1721 = vadd.f32 0.0, %v1720
      %v1722 = vpop.f32.mrf.mxu0
      %1723 = vmatprep.mubr.f32.mxu0 0.0
      %1724 = vmatmul.mubr.f32.gmra.mxu0 %v1652
      %v1725 = vpop.f32.mrf.mxu0
      %v1726 = vadd.f32 0.0, %v1725
      %v1727 = vpop.f32.mrf.mxu0
      %1728 = vdwg.mxu0
      %v1730 = vsel %vm189, %v163, 0
      %v1733 = vsel %vm189, %v164, 0
      %1735 = vmatprep.subr.mxu0 0.0
      %1736 = vmatpush1.xpose.msra.mxu0 0.0
      %1737 = vmatprep.subr.mxu0 0.0
      %1738 = vmatpush1.xpose.msra.mxu0 0.0
      %1739 = vmatprep.subr.mxu0 0.0
      %1740 = vmatpush1.xpose.msra.mxu0 0.0
      %1741 = vmatprep.subr.mxu0 0.0
      %1742 = vmatpush1.xpose.msra.mxu0 0.0
      %1743 = vmatprep.subr.mxu0 0.0
      %1744 = vmatpush1.xpose.msra.mxu0 0.0
      %1745 = vmatprep.subr.mxu0 0.0
      %1746 = vmatpush1.xpose.msra.mxu0 0.0
      %1747 = vmatprep.subr.mxu0 0.0
      %1748 = vmatpush1.xpose.msra.mxu0 0.0
      %1749 = vmatprep.subr.mxu0 0.0
      %1750 = vmatpush1.xpose.msra.mxu0 0.0
      %1751 = vmatprep.subr.mxu0 0.0
      %1752 = vmatpush1.xpose.msra.mxu0 0.0
      %1753 = vmatprep.subr.mxu0 0.0
      %1754 = vmatpush1.xpose.msra.mxu0 0.0
      %1755 = vmatprep.subr.mxu0 0.0
      %1756 = vmatpush1.xpose.msra.mxu0 0.0
      %1757 = vmatprep.subr.mxu0 0.0
      %1758 = vmatpush1.xpose.msra.mxu0 0.0
      %1759 = vmatprep.subr.mxu0 0.0
      %1760 = vmatpush1.xpose.msra.mxu0 0.0
      %1761 = vmatprep.subr.mxu0 0.0
      %1762 = vmatpush1.xpose.msra.mxu0 0.0
      %1763 = vmatprep.subr.mxu0 0.0
      %1764 = vmatpush1.xpose.msra.mxu0 %v1733
      %1765 = vmatprep.subr.mxu0 0.0
      %1766 = vmatpush1.xpose.msra.mxu0 %v1730
      %1767 = vmatprep.subr.mxu0 0.0
      %1768 = vmatpush2.xpose.msra.mxu0 0.0
      %1769 = vmatprep.subr.mxu0 0.0
      %1770 = vmatpush2.xpose.msra.mxu0 0.0
      %1771 = vmatprep.subr.mxu0 0.0
      %1772 = vmatpush2.xpose.msra.mxu0 0.0
      %1773 = vmatprep.subr.mxu0 0.0
      %1774 = vmatpush2.xpose.msra.mxu0 0.0
      %1775 = vmatprep.subr.mxu0 0.0
      %1776 = vmatpush2.xpose.msra.mxu0 0.0
      %1777 = vmatprep.subr.mxu0 0.0
      %1778 = vmatpush2.xpose.msra.mxu0 0.0
      %1779 = vmatprep.subr.mxu0 0.0
      %1780 = vmatpush2.xpose.msra.mxu0 0.0
      %1781 = vmatprep.subr.mxu0 0.0
      %1782 = vmatpush2.xpose.msra.mxu0 0.0
      %1783 = vmatprep.subr.mxu0 0.0
      %1784 = vmatpush2.xpose.msra.mxu0 0.0
      %1785 = vmatprep.subr.mxu0 0.0
      %1786 = vmatpush2.xpose.msra.mxu0 0.0
      %1787 = vmatprep.subr.mxu0 0.0
      %1788 = vmatpush2.xpose.msra.mxu0 0.0
      %1789 = vmatprep.subr.mxu0 0.0
      %1790 = vmatpush2.xpose.msra.mxu0 0.0
      %1791 = vmatprep.subr.mxu0 0.0
      %1792 = vmatpush2.xpose.msra.mxu0 0.0
      %1793 = vmatprep.subr.mxu0 0.0
      %1794 = vmatpush2.xpose.msra.mxu0 0.0
      %1795 = vmatprep.subr.mxu0 0.0
      %1796 = vmatpush2.xpose.msra.mxu0 0.0
      %1797 = vmatprep.subr.mxu0 0.0
      %1798 = vmatpush2.xpose.msra.mxu0 0.0
      %1799 = vmatprep.mubr.f32.mxu0 0.0
      %1800 = vmatmul.mubr.f32.gmra.mxu0 %v1730
      %v1801 = vpop.f32.mrf.mxu0
      %v1802 = vadd.f32 0.0, %v1801
      %v1803 = vpop.f32.mrf.mxu0
      %1804 = vmatprep.mubr.f32.mxu0 0.0
      %1805 = vmatmul.mubr.f32.gmra.mxu0 %v1733
      %v1806 = vpop.f32.mrf.mxu0
      %v1807 = vadd.f32 0.0, %v1806
      %v1808 = vpop.f32.mrf.mxu0
      %1809 = vdwg.mxu0
      %v1811 = vsel %vm189, %v165, 0
      %v1814 = vsel %vm189, %v166, 0
      %1816 = vmatprep.subr.mxu0 0.0
      %1817 = vmatpush1.xpose.msra.mxu0 0.0
      %1818 = vmatprep.subr.mxu0 0.0
      %1819 = vmatpush1.xpose.msra.mxu0 0.0
      %1820 = vmatprep.subr.mxu0 0.0
      %1821 = vmatpush1.xpose.msra.mxu0 0.0
      %1822 = vmatprep.subr.mxu0 0.0
      %1823 = vmatpush1.xpose.msra.mxu0 0.0
      %1824 = vmatprep.subr.mxu0 0.0
      %1825 = vmatpush1.xpose.msra.mxu0 0.0
      %1826 = vmatprep.subr.mxu0 0.0
      %1827 = vmatpush1.xpose.msra.mxu0 0.0
      %1828 = vmatprep.subr.mxu0 0.0
      %1829 = vmatpush1.xpose.msra.mxu0 0.0
      %1830 = vmatprep.subr.mxu0 0.0
      %1831 = vmatpush1.xpose.msra.mxu0 0.0
      %1832 = vmatprep.subr.mxu0 0.0
      %1833 = vmatpush1.xpose.msra.mxu0 0.0
      %1834 = vmatprep.subr.mxu0 0.0
      %1835 = vmatpush1.xpose.msra.mxu0 0.0
      %1836 = vmatprep.subr.mxu0 0.0
      %1837 = vmatpush1.xpose.msra.mxu0 0.0
      %1838 = vmatprep.subr.mxu0 0.0
      %1839 = vmatpush1.xpose.msra.mxu0 0.0
      %1840 = vmatprep.subr.mxu0 0.0
      %1841 = vmatpush1.xpose.msra.mxu0 0.0
      %1842 = vmatprep.subr.mxu0 0.0
      %1843 = vmatpush1.xpose.msra.mxu0 0.0
      %1844 = vmatprep.subr.mxu0 0.0
      %1845 = vmatpush1.xpose.msra.mxu0 %v1814
      %1846 = vmatprep.subr.mxu0 0.0
      %1847 = vmatpush1.xpose.msra.mxu0 %v1811
      %1848 = vmatprep.subr.mxu0 0.0
      %1849 = vmatpush2.xpose.msra.mxu0 0.0
      %1850 = vmatprep.subr.mxu0 0.0
      %1851 = vmatpush2.xpose.msra.mxu0 0.0
      %1852 = vmatprep.subr.mxu0 0.0
      %1853 = vmatpush2.xpose.msra.mxu0 0.0
      %1854 = vmatprep.subr.mxu0 0.0
      %1855 = vmatpush2.xpose.msra.mxu0 0.0
      %1856 = vmatprep.subr.mxu0 0.0
      %1857 = vmatpush2.xpose.msra.mxu0 0.0
      %1858 = vmatprep.subr.mxu0 0.0
      %1859 = vmatpush2.xpose.msra.mxu0 0.0
      %1860 = vmatprep.subr.mxu0 0.0
      %1861 = vmatpush2.xpose.msra.mxu0 0.0
      %1862 = vmatprep.subr.mxu0 0.0
      %1863 = vmatpush2.xpose.msra.mxu0 0.0
      %1864 = vmatprep.subr.mxu0 0.0
      %1865 = vmatpush2.xpose.msra.mxu0 0.0
      %1866 = vmatprep.subr.mxu0 0.0
      %1867 = vmatpush2.xpose.msra.mxu0 0.0
      %1868 = vmatprep.subr.mxu0 0.0
      %1869 = vmatpush2.xpose.msra.mxu0 0.0
      %1870 = vmatprep.subr.mxu0 0.0
      %1871 = vmatpush2.xpose.msra.mxu0 0.0
      %1872 = vmatprep.subr.mxu0 0.0
      %1873 = vmatpush2.xpose.msra.mxu0 0.0
      %1874 = vmatprep.subr.mxu0 0.0
      %1875 = vmatpush2.xpose.msra.mxu0 0.0
      %1876 = vmatprep.subr.mxu0 0.0
      %1877 = vmatpush2.xpose.msra.mxu0 0.0
      %1878 = vmatprep.subr.mxu0 0.0
      %1879 = vmatpush2.xpose.msra.mxu0 0.0
      %1880 = vmatprep.mubr.f32.mxu0 0.0
      %1881 = vmatmul.mubr.f32.gmra.mxu0 %v1811
      %v1882 = vpop.f32.mrf.mxu0
      %v1883 = vadd.f32 0.0, %v1882
      %v1884 = vpop.f32.mrf.mxu0
      %1885 = vmatprep.mubr.f32.mxu0 0.0
      %1886 = vmatmul.mubr.f32.gmra.mxu0 %v1814
      %v1887 = vpop.f32.mrf.mxu0
      %v1888 = vadd.f32 0.0, %v1887
      %v1889 = vpop.f32.mrf.mxu0
      %1890 = vdwg.mxu0
      %v1892 = vsel %vm189, %v167, 0
      %v1895 = vsel %vm189, %v168, 0
      %1897 = vmatprep.subr.mxu0 0.0
      %1898 = vmatpush1.xpose.msra.mxu0 0.0
      %1899 = vmatprep.subr.mxu0 0.0
      %1900 = vmatpush1.xpose.msra.mxu0 0.0
      %1901 = vmatprep.subr.mxu0 0.0
      %1902 = vmatpush1.xpose.msra.mxu0 0.0
      %1903 = vmatprep.subr.mxu0 0.0
      %1904 = vmatpush1.xpose.msra.mxu0 0.0
      %1905 = vmatprep.subr.mxu0 0.0
      %1906 = vmatpush1.xpose.msra.mxu0 0.0
      %1907 = vmatprep.subr.mxu0 0.0
      %1908 = vmatpush1.xpose.msra.mxu0 0.0
      %1909 = vmatprep.subr.mxu0 0.0
      %1910 = vmatpush1.xpose.msra.mxu0 0.0
      %1911 = vmatprep.subr.mxu0 0.0
      %1912 = vmatpush1.xpose.msra.mxu0 0.0
      %1913 = vmatprep.subr.mxu0 0.0
      %1914 = vmatpush1.xpose.msra.mxu0 0.0
      %1915 = vmatprep.subr.mxu0 0.0
      %1916 = vmatpush1.xpose.msra.mxu0 0.0
      %1917 = vmatprep.subr.mxu0 0.0
      %1918 = vmatpush1.xpose.msra.mxu0 0.0
      %1919 = vmatprep.subr.mxu0 0.0
      %1920 = vmatpush1.xpose.msra.mxu0 0.0
      %1921 = vmatprep.subr.mxu0 0.0
      %1922 = vmatpush1.xpose.msra.mxu0 0.0
      %1923 = vmatprep.subr.mxu0 0.0
      %1924 = vmatpush1.xpose.msra.mxu0 0.0
      %1925 = vmatprep.subr.mxu0 0.0
      %1926 = vmatpush1.xpose.msra.mxu0 %v1895
      %1927 = vmatprep.subr.mxu0 0.0
      %1928 = vmatpush1.xpose.msra.mxu0 %v1892
      %1929 = vmatprep.subr.mxu0 0.0
      %1930 = vmatpush2.xpose.msra.mxu0 0.0
      %1931 = vmatprep.subr.mxu0 0.0
      %1932 = vmatpush2.xpose.msra.mxu0 0.0
      %1933 = vmatprep.subr.mxu0 0.0
      %1934 = vmatpush2.xpose.msra.mxu0 0.0
      %1935 = vmatprep.subr.mxu0 0.0
      %1936 = vmatpush2.xpose.msra.mxu0 0.0
      %1937 = vmatprep.subr.mxu0 0.0
      %1938 = vmatpush2.xpose.msra.mxu0 0.0
      %1939 = vmatprep.subr.mxu0 0.0
      %1940 = vmatpush2.xpose.msra.mxu0 0.0
      %1941 = vmatprep.subr.mxu0 0.0
      %1942 = vmatpush2.xpose.msra.mxu0 0.0
      %1943 = vmatprep.subr.mxu0 0.0
      %1944 = vmatpush2.xpose.msra.mxu0 0.0
      %1945 = vmatprep.subr.mxu0 0.0
      %1946 = vmatpush2.xpose.msra.mxu0 0.0
      %1947 = vmatprep.subr.mxu0 0.0
      %1948 = vmatpush2.xpose.msra.mxu0 0.0
      %1949 = vmatprep.subr.mxu0 0.0
      %1950 = vmatpush2.xpose.msra.mxu0 0.0
      %1951 = vmatprep.subr.mxu0 0.0
      %1952 = vmatpush2.xpose.msra.mxu0 0.0
      %1953 = vmatprep.subr.mxu0 0.0
      %1954 = vmatpush2.xpose.msra.mxu0 0.0
      %1955 = vmatprep.subr.mxu0 0.0
      %1956 = vmatpush2.xpose.msra.mxu0 0.0
      %1957 = vmatprep.subr.mxu0 0.0
      %1958 = vmatpush2.xpose.msra.mxu0 0.0
      %1959 = vmatprep.subr.mxu0 0.0
      %1960 = vmatpush2.xpose.msra.mxu0 0.0
      %1961 = vmatprep.mubr.f32.mxu0 0.0
      %1962 = vmatmul.mubr.f32.gmra.mxu0 %v1892
      %v1963 = vpop.f32.mrf.mxu0
      %v1964 = vadd.f32 0.0, %v1963
      %v1965 = vpop.f32.mrf.mxu0
      %1966 = vmatprep.mubr.f32.mxu0 0.0
      %1967 = vmatmul.mubr.f32.gmra.mxu0 %v1895
      %v1968 = vpop.f32.mrf.mxu0
      %v1969 = vadd.f32 0.0, %v1968
      %v1970 = vpop.f32.mrf.mxu0
      %1971 = vdwg.mxu0
      %v1973 = vsel %vm189, %v169, 0
      %v1976 = vsel %vm189, %v170, 0
      %1978 = vmatprep.subr.mxu0 0.0
      %1979 = vmatpush1.xpose.msra.mxu0 0.0
      %1980 = vmatprep.subr.mxu0 0.0
      %1981 = vmatpush1.xpose.msra.mxu0 0.0
      %1982 = vmatprep.subr.mxu0 0.0
      %1983 = vmatpush1.xpose.msra.mxu0 0.0
      %1984 = vmatprep.subr.mxu0 0.0
      %1985 = vmatpush1.xpose.msra.mxu0 0.0
      %1986 = vmatprep.subr.mxu0 0.0
      %1987 = vmatpush1.xpose.msra.mxu0 0.0
      %1988 = vmatprep.subr.mxu0 0.0
      %1989 = vmatpush1.xpose.msra.mxu0 0.0
      %1990 = vmatprep.subr.mxu0 0.0
      %1991 = vmatpush1.xpose.msra.mxu0 0.0
      %1992 = vmatprep.subr.mxu0 0.0
      %1993 = vmatpush1.xpose.msra.mxu0 0.0
      %1994 = vmatprep.subr.mxu0 0.0
      %1995 = vmatpush1.xpose.msra.mxu0 0.0
      %1996 = vmatprep.subr.mxu0 0.0
      %1997 = vmatpush1.xpose.msra.mxu0 0.0
      %1998 = vmatprep.subr.mxu0 0.0
      %1999 = vmatpush1.xpose.msra.mxu0 0.0
      %2000 = vmatprep.subr.mxu0 0.0
      %2001 = vmatpush1.xpose.msra.mxu0 0.0
      %2002 = vmatprep.subr.mxu0 0.0
      %2003 = vmatpush1.xpose.msra.mxu0 0.0
      %2004 = vmatprep.subr.mxu0 0.0
      %2005 = vmatpush1.xpose.msra.mxu0 0.0
      %2006 = vmatprep.subr.mxu0 0.0
      %2007 = vmatpush1.xpose.msra.mxu0 %v1976
      %2008 = vmatprep.subr.mxu0 0.0
      %2009 = vmatpush1.xpose.msra.mxu0 %v1973
      %2010 = vmatprep.subr.mxu0 0.0
      %2011 = vmatpush2.xpose.msra.mxu0 0.0
      %2012 = vmatprep.subr.mxu0 0.0
      %2013 = vmatpush2.xpose.msra.mxu0 0.0
      %2014 = vmatprep.subr.mxu0 0.0
      %2015 = vmatpush2.xpose.msra.mxu0 0.0
      %2016 = vmatprep.subr.mxu0 0.0
      %2017 = vmatpush2.xpose.msra.mxu0 0.0
      %2018 = vmatprep.subr.mxu0 0.0
      %2019 = vmatpush2.xpose.msra.mxu0 0.0
      %2020 = vmatprep.subr.mxu0 0.0
      %2021 = vmatpush2.xpose.msra.mxu0 0.0
      %2022 = vmatprep.subr.mxu0 0.0
      %2023 = vmatpush2.xpose.msra.mxu0 0.0
      %2024 = vmatprep.subr.mxu0 0.0
      %2025 = vmatpush2.xpose.msra.mxu0 0.0
      %2026 = vmatprep.subr.mxu0 0.0
      %2027 = vmatpush2.xpose.msra.mxu0 0.0
      %2028 = vmatprep.subr.mxu0 0.0
      %2029 = vmatpush2.xpose.msra.mxu0 0.0
      %2030 = vmatprep.subr.mxu0 0.0
      %2031 = vmatpush2.xpose.msra.mxu0 0.0
      %2032 = vmatprep.subr.mxu0 0.0
      %2033 = vmatpush2.xpose.msra.mxu0 0.0
      %2034 = vmatprep.subr.mxu0 0.0
      %2035 = vmatpush2.xpose.msra.mxu0 0.0
      %2036 = vmatprep.subr.mxu0 0.0
      %2037 = vmatpush2.xpose.msra.mxu0 0.0
      %2038 = vmatprep.subr.mxu0 0.0
      %2039 = vmatpush2.xpose.msra.mxu0 0.0
      %2040 = vmatprep.subr.mxu0 0.0
      %2041 = vmatpush2.xpose.msra.mxu0 0.0
      %2042 = vmatprep.mubr.f32.mxu0 0.0
      %2043 = vmatmul.mubr.f32.gmra.mxu0 %v1973
      %v2044 = vpop.f32.mrf.mxu0
      %v2045 = vadd.f32 0.0, %v2044
      %v2046 = vpop.f32.mrf.mxu0
      %2047 = vmatprep.mubr.f32.mxu0 0.0
      %2048 = vmatmul.mubr.f32.gmra.mxu0 %v1976
      %v2049 = vpop.f32.mrf.mxu0
      %v2050 = vadd.f32 0.0, %v2049
      %v2051 = vpop.f32.mrf.mxu0
      %2052 = vdwg.mxu0
      %v2054 = vsel %vm189, %v171, 0
      %v2057 = vsel %vm189, %v172, 0
      %2059 = vmatprep.subr.mxu0 0.0
      %2060 = vmatpush1.xpose.msra.mxu0 0.0
      %2061 = vmatprep.subr.mxu0 0.0
      %2062 = vmatpush1.xpose.msra.mxu0 0.0
      %2063 = vmatprep.subr.mxu0 0.0
      %2064 = vmatpush1.xpose.msra.mxu0 0.0
      %2065 = vmatprep.subr.mxu0 0.0
      %2066 = vmatpush1.xpose.msra.mxu0 0.0
      %2067 = vmatprep.subr.mxu0 0.0
      %2068 = vmatpush1.xpose.msra.mxu0 0.0
      %2069 = vmatprep.subr.mxu0 0.0
      %2070 = vmatpush1.xpose.msra.mxu0 0.0
      %2071 = vmatprep.subr.mxu0 0.0
      %2072 = vmatpush1.xpose.msra.mxu0 0.0
      %2073 = vmatprep.subr.mxu0 0.0
      %2074 = vmatpush1.xpose.msra.mxu0 0.0
      %2075 = vmatprep.subr.mxu0 0.0
      %2076 = vmatpush1.xpose.msra.mxu0 0.0
      %2077 = vmatprep.subr.mxu0 0.0
      %2078 = vmatpush1.xpose.msra.mxu0 0.0
      %2079 = vmatprep.subr.mxu0 0.0
      %2080 = vmatpush1.xpose.msra.mxu0 0.0
      %2081 = vmatprep.subr.mxu0 0.0
      %2082 = vmatpush1.xpose.msra.mxu0 0.0
      %2083 = vmatprep.subr.mxu0 0.0
      %2084 = vmatpush1.xpose.msra.mxu0 0.0
      %2085 = vmatprep.subr.mxu0 0.0
      %2086 = vmatpush1.xpose.msra.mxu0 0.0
      %2087 = vmatprep.subr.mxu0 0.0
      %2088 = vmatpush1.xpose.msra.mxu0 %v2057
      %2089 = vmatprep.subr.mxu0 0.0
      %2090 = vmatpush1.xpose.msra.mxu0 %v2054
      %2091 = vmatprep.subr.mxu0 0.0
      %2092 = vmatpush2.xpose.msra.mxu0 0.0
      %2093 = vmatprep.subr.mxu0 0.0
      %2094 = vmatpush2.xpose.msra.mxu0 0.0
      %2095 = vmatprep.subr.mxu0 0.0
      %2096 = vmatpush2.xpose.msra.mxu0 0.0
      %2097 = vmatprep.subr.mxu0 0.0
      %2098 = vmatpush2.xpose.msra.mxu0 0.0
      %2099 = vmatprep.subr.mxu0 0.0
      %2100 = vmatpush2.xpose.msra.mxu0 0.0
      %2101 = vmatprep.subr.mxu0 0.0
      %2102 = vmatpush2.xpose.msra.mxu0 0.0
      %2103 = vmatprep.subr.mxu0 0.0
      %2104 = vmatpush2.xpose.msra.mxu0 0.0
      %2105 = vmatprep.subr.mxu0 0.0
      %2106 = vmatpush2.xpose.msra.mxu0 0.0
      %2107 = vmatprep.subr.mxu0 0.0
      %2108 = vmatpush2.xpose.msra.mxu0 0.0
      %2109 = vmatprep.subr.mxu0 0.0
      %2110 = vmatpush2.xpose.msra.mxu0 0.0
      %2111 = vmatprep.subr.mxu0 0.0
      %2112 = vmatpush2.xpose.msra.mxu0 0.0
      %2113 = vmatprep.subr.mxu0 0.0
      %2114 = vmatpush2.xpose.msra.mxu0 0.0
      %2115 = vmatprep.subr.mxu0 0.0
      %2116 = vmatpush2.xpose.msra.mxu0 0.0
      %2117 = vmatprep.subr.mxu0 0.0
      %2118 = vmatpush2.xpose.msra.mxu0 0.0
      %2119 = vmatprep.subr.mxu0 0.0
      %2120 = vmatpush2.xpose.msra.mxu0 0.0
      %2121 = vmatprep.subr.mxu0 0.0
      %2122 = vmatpush2.xpose.msra.mxu0 0.0
      %2123 = vmatprep.mubr.f32.mxu0 0.0
      %2124 = vmatmul.mubr.f32.gmra.mxu0 %v2054
      %v2125 = vpop.f32.mrf.mxu0
      %v2126 = vadd.f32 0.0, %v2125
      %v2127 = vpop.f32.mrf.mxu0
      %2128 = vmatprep.mubr.f32.mxu0 0.0
      %2129 = vmatmul.mubr.f32.gmra.mxu0 %v2057
      %v2130 = vpop.f32.mrf.mxu0
      %v2131 = vadd.f32 0.0, %v2130
      %v2132 = vpop.f32.mrf.mxu0
      %2133 = vdwg.mxu0
      %v2135 = vsel %vm189, %v173, 0
      %v2138 = vsel %vm189, %v174, 0
      %2140 = vmatprep.subr.mxu0 0.0
      %2141 = vmatpush1.xpose.msra.mxu0 0.0
      %2142 = vmatprep.subr.mxu0 0.0
      %2143 = vmatpush1.xpose.msra.mxu0 0.0
      %2144 = vmatprep.subr.mxu0 0.0
      %2145 = vmatpush1.xpose.msra.mxu0 0.0
      %2146 = vmatprep.subr.mxu0 0.0
      %2147 = vmatpush1.xpose.msra.mxu0 0.0
      %2148 = vmatprep.subr.mxu0 0.0
      %2149 = vmatpush1.xpose.msra.mxu0 0.0
      %2150 = vmatprep.subr.mxu0 0.0
      %2151 = vmatpush1.xpose.msra.mxu0 0.0
      %2152 = vmatprep.subr.mxu0 0.0
      %2153 = vmatpush1.xpose.msra.mxu0 0.0
      %2154 = vmatprep.subr.mxu0 0.0
      %2155 = vmatpush1.xpose.msra.mxu0 0.0
      %2156 = vmatprep.subr.mxu0 0.0
      %2157 = vmatpush1.xpose.msra.mxu0 0.0
      %2158 = vmatprep.subr.mxu0 0.0
      %2159 = vmatpush1.xpose.msra.mxu0 0.0
      %2160 = vmatprep.subr.mxu0 0.0
      %2161 = vmatpush1.xpose.msra.mxu0 0.0
      %2162 = vmatprep.subr.mxu0 0.0
      %2163 = vmatpush1.xpose.msra.mxu0 0.0
      %2164 = vmatprep.subr.mxu0 0.0
      %2165 = vmatpush1.xpose.msra.mxu0 0.0
      %2166 = vmatprep.subr.mxu0 0.0
      %2167 = vmatpush1.xpose.msra.mxu0 0.0
      %2168 = vmatprep.subr.mxu0 0.0
      %2169 = vmatpush1.xpose.msra.mxu0 %v2138
      %2170 = vmatprep.subr.mxu0 0.0
      %2171 = vmatpush1.xpose.msra.mxu0 %v2135
      %2172 = vmatprep.subr.mxu0 0.0
      %2173 = vmatpush2.xpose.msra.mxu0 0.0
      %2174 = vmatprep.subr.mxu0 0.0
      %2175 = vmatpush2.xpose.msra.mxu0 0.0
      %2176 = vmatprep.subr.mxu0 0.0
      %2177 = vmatpush2.xpose.msra.mxu0 0.0
      %2178 = vmatprep.subr.mxu0 0.0
      %2179 = vmatpush2.xpose.msra.mxu0 0.0
      %2180 = vmatprep.subr.mxu0 0.0
      %2181 = vmatpush2.xpose.msra.mxu0 0.0
      %2182 = vmatprep.subr.mxu0 0.0
      %2183 = vmatpush2.xpose.msra.mxu0 0.0
      %2184 = vmatprep.subr.mxu0 0.0
      %2185 = vmatpush2.xpose.msra.mxu0 0.0
      %2186 = vmatprep.subr.mxu0 0.0
      %2187 = vmatpush2.xpose.msra.mxu0 0.0
      %2188 = vmatprep.subr.mxu0 0.0
      %2189 = vmatpush2.xpose.msra.mxu0 0.0
      %2190 = vmatprep.subr.mxu0 0.0
      %2191 = vmatpush2.xpose.msra.mxu0 0.0
      %2192 = vmatprep.subr.mxu0 0.0
      %2193 = vmatpush2.xpose.msra.mxu0 0.0
      %2194 = vmatprep.subr.mxu0 0.0
      %2195 = vmatpush2.xpose.msra.mxu0 0.0
      %2196 = vmatprep.subr.mxu0 0.0
      %2197 = vmatpush2.xpose.msra.mxu0 0.0
      %2198 = vmatprep.subr.mxu0 0.0
      %2199 = vmatpush2.xpose.msra.mxu0 0.0
      %2200 = vmatprep.subr.mxu0 0.0
      %2201 = vmatpush2.xpose.msra.mxu0 0.0
      %2202 = vmatprep.subr.mxu0 0.0
      %2203 = vmatpush2.xpose.msra.mxu0 0.0
      %2204 = vmatprep.mubr.f32.mxu0 0.0
      %2205 = vmatmul.mubr.f32.gmra.mxu0 %v2135
      %v2206 = vpop.f32.mrf.mxu0
      %v2207 = vadd.f32 0.0, %v2206
      %v2208 = vpop.f32.mrf.mxu0
      %2209 = vmatprep.mubr.f32.mxu0 0.0
      %2210 = vmatmul.mubr.f32.gmra.mxu0 %v2138
      %v2211 = vpop.f32.mrf.mxu0
      %v2212 = vadd.f32 0.0, %v2211
      %v2213 = vpop.f32.mrf.mxu0
      %2214 = vdwg.mxu0
      %v2216 = vsel %vm189, %v175, 0
      %v2219 = vsel %vm189, %v176, 0
      %2221 = vmatprep.subr.mxu0 0.0
      %2222 = vmatpush1.xpose.msra.mxu0 0.0
      %2223 = vmatprep.subr.mxu0 0.0
      %2224 = vmatpush1.xpose.msra.mxu0 0.0
      %2225 = vmatprep.subr.mxu0 0.0
      %2226 = vmatpush1.xpose.msra.mxu0 0.0
      %2227 = vmatprep.subr.mxu0 0.0
      %2228 = vmatpush1.xpose.msra.mxu0 0.0
      %2229 = vmatprep.subr.mxu0 0.0
      %2230 = vmatpush1.xpose.msra.mxu0 0.0
      %2231 = vmatprep.subr.mxu0 0.0
      %2232 = vmatpush1.xpose.msra.mxu0 0.0
      %2233 = vmatprep.subr.mxu0 0.0
      %2234 = vmatpush1.xpose.msra.mxu0 0.0
      %2235 = vmatprep.subr.mxu0 0.0
      %2236 = vmatpush1.xpose.msra.mxu0 0.0
      %2237 = vmatprep.subr.mxu0 0.0
      %2238 = vmatpush1.xpose.msra.mxu0 0.0
      %2239 = vmatprep.subr.mxu0 0.0
      %2240 = vmatpush1.xpose.msra.mxu0 0.0
      %2241 = vmatprep.subr.mxu0 0.0
      %2242 = vmatpush1.xpose.msra.mxu0 0.0
      %2243 = vmatprep.subr.mxu0 0.0
      %2244 = vmatpush1.xpose.msra.mxu0 0.0
      %2245 = vmatprep.subr.mxu0 0.0
      %2246 = vmatpush1.xpose.msra.mxu0 0.0
      %2247 = vmatprep.subr.mxu0 0.0
      %2248 = vmatpush1.xpose.msra.mxu0 0.0
      %2249 = vmatprep.subr.mxu0 0.0
      %2250 = vmatpush1.xpose.msra.mxu0 %v2219
      %2251 = vmatprep.subr.mxu0 0.0
      %2252 = vmatpush1.xpose.msra.mxu0 %v2216
      %2253 = vmatprep.subr.mxu0 0.0
      %2254 = vmatpush2.xpose.msra.mxu0 0.0
      %2255 = vmatprep.subr.mxu0 0.0
      %2256 = vmatpush2.xpose.msra.mxu0 0.0
      %2257 = vmatprep.subr.mxu0 0.0
      %2258 = vmatpush2.xpose.msra.mxu0 0.0
      %2259 = vmatprep.subr.mxu0 0.0
      %2260 = vmatpush2.xpose.msra.mxu0 0.0
      %2261 = vmatprep.subr.mxu0 0.0
      %2262 = vmatpush2.xpose.msra.mxu0 0.0
      %2263 = vmatprep.subr.mxu0 0.0
      %2264 = vmatpush2.xpose.msra.mxu0 0.0
      %2265 = vmatprep.subr.mxu0 0.0
      %2266 = vmatpush2.xpose.msra.mxu0 0.0
      %2267 = vmatprep.subr.mxu0 0.0
      %2268 = vmatpush2.xpose.msra.mxu0 0.0
      %2269 = vmatprep.subr.mxu0 0.0
      %2270 = vmatpush2.xpose.msra.mxu0 0.0
      %2271 = vmatprep.subr.mxu0 0.0
      %2272 = vmatpush2.xpose.msra.mxu0 0.0
      %2273 = vmatprep.subr.mxu0 0.0
      %2274 = vmatpush2.xpose.msra.mxu0 0.0
      %2275 = vmatprep.subr.mxu0 0.0
      %2276 = vmatpush2.xpose.msra.mxu0 0.0
      %2277 = vmatprep.subr.mxu0 0.0
      %2278 = vmatpush2.xpose.msra.mxu0 0.0
      %2279 = vmatprep.subr.mxu0 0.0
      %2280 = vmatpush2.xpose.msra.mxu0 0.0
      %2281 = vmatprep.subr.mxu0 0.0
      %2282 = vmatpush2.xpose.msra.mxu0 0.0
      %2283 = vmatprep.subr.mxu0 0.0
      %2284 = vmatpush2.xpose.msra.mxu0 0.0
      %2285 = vmatprep.mubr.f32.mxu0 0.0
      %2286 = vmatmul.mubr.f32.gmra.mxu0 %v2216
      %v2287 = vpop.f32.mrf.mxu0
      %v2288 = vadd.f32 0.0, %v2287
      %v2289 = vpop.f32.mrf.mxu0
      %2290 = vmatprep.mubr.f32.mxu0 0.0
      %2291 = vmatmul.mubr.f32.gmra.mxu0 %v2219
      %v2292 = vpop.f32.mrf.mxu0
      %v2293 = vadd.f32 0.0, %v2292
      %v2294 = vpop.f32.mrf.mxu0
      %2295 = vdwg.mxu0
      %v2297 = vsel %vm189, %v177, 0
      %v2300 = vsel %vm189, %v178, 0
      %2302 = vmatprep.subr.mxu0 0.0
      %2303 = vmatpush1.xpose.msra.mxu0 0.0
      %2304 = vmatprep.subr.mxu0 0.0
      %2305 = vmatpush1.xpose.msra.mxu0 0.0
      %2306 = vmatprep.subr.mxu0 0.0
      %2307 = vmatpush1.xpose.msra.mxu0 0.0
      %2308 = vmatprep.subr.mxu0 0.0
      %2309 = vmatpush1.xpose.msra.mxu0 0.0
      %2310 = vmatprep.subr.mxu0 0.0
      %2311 = vmatpush1.xpose.msra.mxu0 0.0
      %2312 = vmatprep.subr.mxu0 0.0
      %2313 = vmatpush1.xpose.msra.mxu0 0.0
      %2314 = vmatprep.subr.mxu0 0.0
      %2315 = vmatpush1.xpose.msra.mxu0 0.0
      %2316 = vmatprep.subr.mxu0 0.0
      %2317 = vmatpush1.xpose.msra.mxu0 0.0
      %2318 = vmatprep.subr.mxu0 0.0
      %2319 = vmatpush1.xpose.msra.mxu0 0.0
      %2320 = vmatprep.subr.mxu0 0.0
      %2321 = vmatpush1.xpose.msra.mxu0 0.0
      %2322 = vmatprep.subr.mxu0 0.0
      %2323 = vmatpush1.xpose.msra.mxu0 0.0
      %2324 = vmatprep.subr.mxu0 0.0
      %2325 = vmatpush1.xpose.msra.mxu0 0.0
      %2326 = vmatprep.subr.mxu0 0.0
      %2327 = vmatpush1.xpose.msra.mxu0 0.0
      %2328 = vmatprep.subr.mxu0 0.0
      %2329 = vmatpush1.xpose.msra.mxu0 0.0
      %2330 = vmatprep.subr.mxu0 0.0
      %2331 = vmatpush1.xpose.msra.mxu0 %v2300
      %2332 = vmatprep.subr.mxu0 0.0
      %2333 = vmatpush1.xpose.msra.mxu0 %v2297
      %2334 = vmatprep.subr.mxu0 0.0
      %2335 = vmatpush2.xpose.msra.mxu0 0.0
      %2336 = vmatprep.subr.mxu0 0.0
      %2337 = vmatpush2.xpose.msra.mxu0 0.0
      %2338 = vmatprep.subr.mxu0 0.0
      %2339 = vmatpush2.xpose.msra.mxu0 0.0
      %2340 = vmatprep.subr.mxu0 0.0
      %2341 = vmatpush2.xpose.msra.mxu0 0.0
      %2342 = vmatprep.subr.mxu0 0.0
      %2343 = vmatpush2.xpose.msra.mxu0 0.0
      %2344 = vmatprep.subr.mxu0 0.0
      %2345 = vmatpush2.xpose.msra.mxu0 0.0
      %2346 = vmatprep.subr.mxu0 0.0
      %2347 = vmatpush2.xpose.msra.mxu0 0.0
      %2348 = vmatprep.subr.mxu0 0.0
      %2349 = vmatpush2.xpose.msra.mxu0 0.0
      %2350 = vmatprep.subr.mxu0 0.0
      %2351 = vmatpush2.xpose.msra.mxu0 0.0
      %2352 = vmatprep.subr.mxu0 0.0
      %2353 = vmatpush2.xpose.msra.mxu0 0.0
      %2354 = vmatprep.subr.mxu0 0.0
      %2355 = vmatpush2.xpose.msra.mxu0 0.0
      %2356 = vmatprep.subr.mxu0 0.0
      %2357 = vmatpush2.xpose.msra.mxu0 0.0
      %2358 = vmatprep.subr.mxu0 0.0
      %2359 = vmatpush2.xpose.msra.mxu0 0.0
      %2360 = vmatprep.subr.mxu0 0.0
      %2361 = vmatpush2.xpose.msra.mxu0 0.0
      %2362 = vmatprep.subr.mxu0 0.0
      %2363 = vmatpush2.xpose.msra.mxu0 0.0
      %2364 = vmatprep.subr.mxu0 0.0
      %2365 = vmatpush2.xpose.msra.mxu0 0.0
      %2366 = vmatprep.mubr.f32.mxu0 0.0
      %2367 = vmatmul.mubr.f32.gmra.mxu0 %v2297
      %v2368 = vpop.f32.mrf.mxu0
      %v2369 = vadd.f32 0.0, %v2368
      %v2370 = vpop.f32.mrf.mxu0
      %2371 = vmatprep.mubr.f32.mxu0 0.0
      %2372 = vmatmul.mubr.f32.gmra.mxu0 %v2300
      %v2373 = vpop.f32.mrf.mxu0
      %v2374 = vadd.f32 0.0, %v2373
      %v2375 = vpop.f32.mrf.mxu0
      %2376 = vdwg.mxu0
      %v2378 = vsel %vm189, %v179, 0
      %v2381 = vsel %vm189, %v180, 0
      %2383 = vmatprep.subr.mxu0 0.0
      %2384 = vmatpush1.xpose.msra.mxu0 0.0
      %2385 = vmatprep.subr.mxu0 0.0
      %2386 = vmatpush1.xpose.msra.mxu0 0.0
      %2387 = vmatprep.subr.mxu0 0.0
      %2388 = vmatpush1.xpose.msra.mxu0 0.0
      %2389 = vmatprep.subr.mxu0 0.0
      %2390 = vmatpush1.xpose.msra.mxu0 0.0
      %2391 = vmatprep.subr.mxu0 0.0
      %2392 = vmatpush1.xpose.msra.mxu0 0.0
      %2393 = vmatprep.subr.mxu0 0.0
      %2394 = vmatpush1.xpose.msra.mxu0 0.0
      %2395 = vmatprep.subr.mxu0 0.0
      %2396 = vmatpush1.xpose.msra.mxu0 0.0
      %2397 = vmatprep.subr.mxu0 0.0
      %2398 = vmatpush1.xpose.msra.mxu0 0.0
      %2399 = vmatprep.subr.mxu0 0.0
      %2400 = vmatpush1.xpose.msra.mxu0 0.0
      %2401 = vmatprep.subr.mxu0 0.0
      %2402 = vmatpush1.xpose.msra.mxu0 0.0
      %2403 = vmatprep.subr.mxu0 0.0
      %2404 = vmatpush1.xpose.msra.mxu0 0.0
      %2405 = vmatprep.subr.mxu0 0.0
      %2406 = vmatpush1.xpose.msra.mxu0 0.0
      %2407 = vmatprep.subr.mxu0 0.0
      %2408 = vmatpush1.xpose.msra.mxu0 0.0
      %2409 = vmatprep.subr.mxu0 0.0
      %2410 = vmatpush1.xpose.msra.mxu0 0.0
      %2411 = vmatprep.subr.mxu0 0.0
      %2412 = vmatpush1.xpose.msra.mxu0 %v2381
      %2413 = vmatprep.subr.mxu0 0.0
      %2414 = vmatpush1.xpose.msra.mxu0 %v2378
      %2415 = vmatprep.subr.mxu0 0.0
      %2416 = vmatpush2.xpose.msra.mxu0 0.0
      %2417 = vmatprep.subr.mxu0 0.0
      %2418 = vmatpush2.xpose.msra.mxu0 0.0
      %2419 = vmatprep.subr.mxu0 0.0
      %2420 = vmatpush2.xpose.msra.mxu0 0.0
      %2421 = vmatprep.subr.mxu0 0.0
      %2422 = vmatpush2.xpose.msra.mxu0 0.0
      %2423 = vmatprep.subr.mxu0 0.0
      %2424 = vmatpush2.xpose.msra.mxu0 0.0
      %2425 = vmatprep.subr.mxu0 0.0
      %2426 = vmatpush2.xpose.msra.mxu0 0.0
      %2427 = vmatprep.subr.mxu0 0.0
      %2428 = vmatpush2.xpose.msra.mxu0 0.0
      %2429 = vmatprep.subr.mxu0 0.0
      %2430 = vmatpush2.xpose.msra.mxu0 0.0
      %2431 = vmatprep.subr.mxu0 0.0
      %2432 = vmatpush2.xpose.msra.mxu0 0.0
      %2433 = vmatprep.subr.mxu0 0.0
      %2434 = vmatpush2.xpose.msra.mxu0 0.0
      %2435 = vmatprep.subr.mxu0 0.0
      %2436 = vmatpush2.xpose.msra.mxu0 0.0
      %2437 = vmatprep.subr.mxu0 0.0
      %2438 = vmatpush2.xpose.msra.mxu0 0.0
      %2439 = vmatprep.subr.mxu0 0.0
      %2440 = vmatpush2.xpose.msra.mxu0 0.0
      %2441 = vmatprep.subr.mxu0 0.0
      %2442 = vmatpush2.xpose.msra.mxu0 0.0
      %2443 = vmatprep.subr.mxu0 0.0
      %2444 = vmatpush2.xpose.msra.mxu0 0.0
      %2445 = vmatprep.subr.mxu0 0.0
      %2446 = vmatpush2.xpose.msra.mxu0 0.0
      %2447 = vmatprep.mubr.f32.mxu0 0.0
      %2448 = vmatmul.mubr.f32.gmra.mxu0 %v2378
      %v2449 = vpop.f32.mrf.mxu0
      %v2450 = vadd.f32 0.0, %v2449
      %v2451 = vpop.f32.mrf.mxu0
      %2452 = vmatprep.mubr.f32.mxu0 0.0
      %2453 = vmatmul.mubr.f32.gmra.mxu0 %v2381
      %v2454 = vpop.f32.mrf.mxu0
      %v2455 = vadd.f32 0.0, %v2454
      %v2456 = vpop.f32.mrf.mxu0
      %2457 = vdwg.mxu0
      %v2459 = vsel %vm189, %v181, 0
      %v2462 = vsel %vm189, %v182, 0
      %2464 = vmatprep.subr.mxu0 0.0
      %2465 = vmatpush1.xpose.msra.mxu0 0.0
      %2466 = vmatprep.subr.mxu0 0.0
      %2467 = vmatpush1.xpose.msra.mxu0 0.0
      %2468 = vmatprep.subr.mxu0 0.0
      %2469 = vmatpush1.xpose.msra.mxu0 0.0
      %2470 = vmatprep.subr.mxu0 0.0
      %2471 = vmatpush1.xpose.msra.mxu0 0.0
      %2472 = vmatprep.subr.mxu0 0.0
      %2473 = vmatpush1.xpose.msra.mxu0 0.0
      %2474 = vmatprep.subr.mxu0 0.0
      %2475 = vmatpush1.xpose.msra.mxu0 0.0
      %2476 = vmatprep.subr.mxu0 0.0
      %2477 = vmatpush1.xpose.msra.mxu0 0.0
      %2478 = vmatprep.subr.mxu0 0.0
      %2479 = vmatpush1.xpose.msra.mxu0 0.0
      %2480 = vmatprep.subr.mxu0 0.0
      %2481 = vmatpush1.xpose.msra.mxu0 0.0
      %2482 = vmatprep.subr.mxu0 0.0
      %2483 = vmatpush1.xpose.msra.mxu0 0.0
      %2484 = vmatprep.subr.mxu0 0.0
      %2485 = vmatpush1.xpose.msra.mxu0 0.0
      %2486 = vmatprep.subr.mxu0 0.0
      %2487 = vmatpush1.xpose.msra.mxu0 0.0
      %2488 = vmatprep.subr.mxu0 0.0
      %2489 = vmatpush1.xpose.msra.mxu0 0.0
      %2490 = vmatprep.subr.mxu0 0.0
      %2491 = vmatpush1.xpose.msra.mxu0 0.0
      %2492 = vmatprep.subr.mxu0 0.0
      %2493 = vmatpush1.xpose.msra.mxu0 %v2462
      %2494 = vmatprep.subr.mxu0 0.0
      %2495 = vmatpush1.xpose.msra.mxu0 %v2459
      %2496 = vmatprep.subr.mxu0 0.0
      %2497 = vmatpush2.xpose.msra.mxu0 0.0
      %2498 = vmatprep.subr.mxu0 0.0
      %2499 = vmatpush2.xpose.msra.mxu0 0.0
      %2500 = vmatprep.subr.mxu0 0.0
      %2501 = vmatpush2.xpose.msra.mxu0 0.0
      %2502 = vmatprep.subr.mxu0 0.0
      %2503 = vmatpush2.xpose.msra.mxu0 0.0
      %2504 = vmatprep.subr.mxu0 0.0
      %2505 = vmatpush2.xpose.msra.mxu0 0.0
      %2506 = vmatprep.subr.mxu0 0.0
      %2507 = vmatpush2.xpose.msra.mxu0 0.0
      %2508 = vmatprep.subr.mxu0 0.0
      %2509 = vmatpush2.xpose.msra.mxu0 0.0
      %2510 = vmatprep.subr.mxu0 0.0
      %2511 = vmatpush2.xpose.msra.mxu0 0.0
      %2512 = vmatprep.subr.mxu0 0.0
      %2513 = vmatpush2.xpose.msra.mxu0 0.0
      %2514 = vmatprep.subr.mxu0 0.0
      %2515 = vmatpush2.xpose.msra.mxu0 0.0
      %2516 = vmatprep.subr.mxu0 0.0
      %2517 = vmatpush2.xpose.msra.mxu0 0.0
      %2518 = vmatprep.subr.mxu0 0.0
      %2519 = vmatpush2.xpose.msra.mxu0 0.0
      %2520 = vmatprep.subr.mxu0 0.0
      %2521 = vmatpush2.xpose.msra.mxu0 0.0
      %2522 = vmatprep.subr.mxu0 0.0
      %2523 = vmatpush2.xpose.msra.mxu0 0.0
      %2524 = vmatprep.subr.mxu0 0.0
      %2525 = vmatpush2.xpose.msra.mxu0 0.0
      %2526 = vmatprep.subr.mxu0 0.0
      %2527 = vmatpush2.xpose.msra.mxu0 0.0
      %2528 = vmatprep.mubr.f32.mxu0 0.0
      %2529 = vmatmul.mubr.f32.gmra.mxu0 %v2459
      %v2530 = vpop.f32.mrf.mxu0
      %v2531 = vadd.f32 0.0, %v2530
      %v2532 = vpop.f32.mrf.mxu0
      %2533 = vmatprep.mubr.f32.mxu0 0.0
      %2534 = vmatmul.mubr.f32.gmra.mxu0 %v2462
      %v2535 = vpop.f32.mrf.mxu0
      %v2536 = vadd.f32 0.0, %v2535
      %v2537 = vpop.f32.mrf.mxu0
      %2538 = vdwg.mxu0
      %v2540 = vsel %vm189, %v183, 0
      %v2543 = vsel %vm189, %v184, 0
      %2545 = vmatprep.subr.mxu0 0.0
      %2546 = vmatpush1.xpose.msra.mxu0 0.0
      %2547 = vmatprep.subr.mxu0 0.0
      %2548 = vmatpush1.xpose.msra.mxu0 0.0
      %2549 = vmatprep.subr.mxu0 0.0
      %2550 = vmatpush1.xpose.msra.mxu0 0.0
      %2551 = vmatprep.subr.mxu0 0.0
      %2552 = vmatpush1.xpose.msra.mxu0 0.0
      %2553 = vmatprep.subr.mxu0 0.0
      %2554 = vmatpush1.xpose.msra.mxu0 0.0
      %2555 = vmatprep.subr.mxu0 0.0
      %2556 = vmatpush1.xpose.msra.mxu0 0.0
      %2557 = vmatprep.subr.mxu0 0.0
      %2558 = vmatpush1.xpose.msra.mxu0 0.0
      %2559 = vmatprep.subr.mxu0 0.0
      %2560 = vmatpush1.xpose.msra.mxu0 0.0
      %2561 = vmatprep.subr.mxu0 0.0
      %2562 = vmatpush1.xpose.msra.mxu0 0.0
      %2563 = vmatprep.subr.mxu0 0.0
      %2564 = vmatpush1.xpose.msra.mxu0 0.0
      %2565 = vmatprep.subr.mxu0 0.0
      %2566 = vmatpush1.xpose.msra.mxu0 0.0
      %2567 = vmatprep.subr.mxu0 0.0
      %2568 = vmatpush1.xpose.msra.mxu0 0.0
      %2569 = vmatprep.subr.mxu0 0.0
      %2570 = vmatpush1.xpose.msra.mxu0 0.0
      %2571 = vmatprep.subr.mxu0 0.0
      %2572 = vmatpush1.xpose.msra.mxu0 0.0
      %2573 = vmatprep.subr.mxu0 0.0
      %2574 = vmatpush1.xpose.msra.mxu0 %v2543
      %2575 = vmatprep.subr.mxu0 0.0
      %2576 = vmatpush1.xpose.msra.mxu0 %v2540
      %2577 = vmatprep.subr.mxu0 0.0
      %2578 = vmatpush2.xpose.msra.mxu0 0.0
      %2579 = vmatprep.subr.mxu0 0.0
      %2580 = vmatpush2.xpose.msra.mxu0 0.0
      %2581 = vmatprep.subr.mxu0 0.0
      %2582 = vmatpush2.xpose.msra.mxu0 0.0
      %2583 = vmatprep.subr.mxu0 0.0
      %2584 = vmatpush2.xpose.msra.mxu0 0.0
      %2585 = vmatprep.subr.mxu0 0.0
      %2586 = vmatpush2.xpose.msra.mxu0 0.0
      %2587 = vmatprep.subr.mxu0 0.0
      %2588 = vmatpush2.xpose.msra.mxu0 0.0
      %2589 = vmatprep.subr.mxu0 0.0
      %2590 = vmatpush2.xpose.msra.mxu0 0.0
      %2591 = vmatprep.subr.mxu0 0.0
      %2592 = vmatpush2.xpose.msra.mxu0 0.0
      %2593 = vmatprep.subr.mxu0 0.0
      %2594 = vmatpush2.xpose.msra.mxu0 0.0
      %2595 = vmatprep.subr.mxu0 0.0
      %2596 = vmatpush2.xpose.msra.mxu0 0.0
      %2597 = vmatprep.subr.mxu0 0.0
      %2598 = vmatpush2.xpose.msra.mxu0 0.0
      %2599 = vmatprep.subr.mxu0 0.0
      %2600 = vmatpush2.xpose.msra.mxu0 0.0
      %2601 = vmatprep.subr.mxu0 0.0
      %2602 = vmatpush2.xpose.msra.mxu0 0.0
      %2603 = vmatprep.subr.mxu0 0.0
      %2604 = vmatpush2.xpose.msra.mxu0 0.0
      %2605 = vmatprep.subr.mxu0 0.0
      %2606 = vmatpush2.xpose.msra.mxu0 0.0
      %2607 = vmatprep.subr.mxu0 0.0
      %2608 = vmatpush2.xpose.msra.mxu0 0.0
      %2609 = vmatprep.mubr.f32.mxu0 0.0
      %2610 = vmatmul.mubr.f32.gmra.mxu0 %v2540
      %v2611 = vpop.f32.mrf.mxu0
      %v2612 = vadd.f32 0.0, %v2611
      %v2613 = vpop.f32.mrf.mxu0
      %2614 = vmatprep.mubr.f32.mxu0 0.0
      %2615 = vmatmul.mubr.f32.gmra.mxu0 %v2543
      %v2616 = vpop.f32.mrf.mxu0
      %v2617 = vadd.f32 0.0, %v2616
      %v2618 = vpop.f32.mrf.mxu0
      %2619 = vdwg.mxu0
      %v2621 = vsel %vm189, %v185, 0
      %v2624 = vsel %vm189, %v186, 0
      %2626 = vmatprep.subr.mxu0 0.0
      %2627 = vmatpush1.xpose.msra.mxu0 0.0
      %2628 = vmatprep.subr.mxu0 0.0
      %2629 = vmatpush1.xpose.msra.mxu0 0.0
      %2630 = vmatprep.subr.mxu0 0.0
      %2631 = vmatpush1.xpose.msra.mxu0 0.0
      %2632 = vmatprep.subr.mxu0 0.0
      %2633 = vmatpush1.xpose.msra.mxu0 0.0
      %2634 = vmatprep.subr.mxu0 0.0
      %2635 = vmatpush1.xpose.msra.mxu0 0.0
      %2636 = vmatprep.subr.mxu0 0.0
      %2637 = vmatpush1.xpose.msra.mxu0 0.0
      %2638 = vmatprep.subr.mxu0 0.0
      %2639 = vmatpush1.xpose.msra.mxu0 0.0
      %2640 = vmatprep.subr.mxu0 0.0
      %2641 = vmatpush1.xpose.msra.mxu0 0.0
      %2642 = vmatprep.subr.mxu0 0.0
      %2643 = vmatpush1.xpose.msra.mxu0 0.0
      %2644 = vmatprep.subr.mxu0 0.0
      %2645 = vmatpush1.xpose.msra.mxu0 0.0
      %2646 = vmatprep.subr.mxu0 0.0
      %2647 = vmatpush1.xpose.msra.mxu0 0.0
      %2648 = vmatprep.subr.mxu0 0.0
      %2649 = vmatpush1.xpose.msra.mxu0 0.0
      %2650 = vmatprep.subr.mxu0 0.0
      %2651 = vmatpush1.xpose.msra.mxu0 0.0
      %2652 = vmatprep.subr.mxu0 0.0
      %2653 = vmatpush1.xpose.msra.mxu0 0.0
      %2654 = vmatprep.subr.mxu0 0.0
      %2655 = vmatpush1.xpose.msra.mxu0 %v2624
      %2656 = vmatprep.subr.mxu0 0.0
      %2657 = vmatpush1.xpose.msra.mxu0 %v2621
      %2658 = vmatprep.subr.mxu0 0.0
      %2659 = vmatpush2.xpose.msra.mxu0 0.0
      %2660 = vmatprep.subr.mxu0 0.0
      %2661 = vmatpush2.xpose.msra.mxu0 0.0
      %2662 = vmatprep.subr.mxu0 0.0
      %2663 = vmatpush2.xpose.msra.mxu0 0.0
      %2664 = vmatprep.subr.mxu0 0.0
      %2665 = vmatpush2.xpose.msra.mxu0 0.0
      %2666 = vmatprep.subr.mxu0 0.0
      %2667 = vmatpush2.xpose.msra.mxu0 0.0
      %2668 = vmatprep.subr.mxu0 0.0
      %2669 = vmatpush2.xpose.msra.mxu0 0.0
      %2670 = vmatprep.subr.mxu0 0.0
      %2671 = vmatpush2.xpose.msra.mxu0 0.0
      %2672 = vmatprep.subr.mxu0 0.0
      %2673 = vmatpush2.xpose.msra.mxu0 0.0
      %2674 = vmatprep.subr.mxu0 0.0
      %2675 = vmatpush2.xpose.msra.mxu0 0.0
      %2676 = vmatprep.subr.mxu0 0.0
      %2677 = vmatpush2.xpose.msra.mxu0 0.0
      %2678 = vmatprep.subr.mxu0 0.0
      %2679 = vmatpush2.xpose.msra.mxu0 0.0
      %2680 = vmatprep.subr.mxu0 0.0
      %2681 = vmatpush2.xpose.msra.mxu0 0.0
      %2682 = vmatprep.subr.mxu0 0.0
      %2683 = vmatpush2.xpose.msra.mxu0 0.0
      %2684 = vmatprep.subr.mxu0 0.0
      %2685 = vmatpush2.xpose.msra.mxu0 0.0
      %2686 = vmatprep.subr.mxu0 0.0
      %2687 = vmatpush2.xpose.msra.mxu0 0.0
      %2688 = vmatprep.subr.mxu0 0.0
      %2689 = vmatpush2.xpose.msra.mxu0 0.0
      %2690 = vmatprep.mubr.f32.mxu0 0.0
      %2691 = vmatmul.mubr.f32.gmra.mxu0 %v2621
      %v2692 = vpop.f32.mrf.mxu0
      %v2693 = vadd.f32 0.0, %v2692
      %v2694 = vpop.f32.mrf.mxu0
      %2695 = vmatprep.mubr.f32.mxu0 0.0
      %2696 = vmatmul.mubr.f32.gmra.mxu0 %v2624
      %v2697 = vpop.f32.mrf.mxu0
      %v2698 = vadd.f32 0.0, %v2697
      %v2699 = vpop.f32.mrf.mxu0
      %2700 = vdwg.mxu0
      %v2702 = vsel %vm189, %v187, 0
      %v2705 = vsel %vm189, %v188, 0
      %2707 = vmatprep.subr.mxu0 0.0
      %2708 = vmatpush1.xpose.msra.mxu0 0.0
      %2709 = vmatprep.subr.mxu0 0.0
      %2710 = vmatpush1.xpose.msra.mxu0 0.0
      %2711 = vmatprep.subr.mxu0 0.0
      %2712 = vmatpush1.xpose.msra.mxu0 0.0
      %2713 = vmatprep.subr.mxu0 0.0
      %2714 = vmatpush1.xpose.msra.mxu0 0.0
      %2715 = vmatprep.subr.mxu0 0.0
      %2716 = vmatpush1.xpose.msra.mxu0 0.0
      %2717 = vmatprep.subr.mxu0 0.0
      %2718 = vmatpush1.xpose.msra.mxu0 0.0
      %2719 = vmatprep.subr.mxu0 0.0
      %2720 = vmatpush1.xpose.msra.mxu0 0.0
      %2721 = vmatprep.subr.mxu0 0.0
      %2722 = vmatpush1.xpose.msra.mxu0 0.0
      %2723 = vmatprep.subr.mxu0 0.0
      %2724 = vmatpush1.xpose.msra.mxu0 0.0
      %2725 = vmatprep.subr.mxu0 0.0
      %2726 = vmatpush1.xpose.msra.mxu0 0.0
      %2727 = vmatprep.subr.mxu0 0.0
      %2728 = vmatpush1.xpose.msra.mxu0 0.0
      %2729 = vmatprep.subr.mxu0 0.0
      %2730 = vmatpush1.xpose.msra.mxu0 0.0
      %2731 = vmatprep.subr.mxu0 0.0
      %2732 = vmatpush1.xpose.msra.mxu0 0.0
      %2733 = vmatprep.subr.mxu0 0.0
      %2734 = vmatpush1.xpose.msra.mxu0 0.0
      %2735 = vmatprep.subr.mxu0 0.0
      %2736 = vmatpush1.xpose.msra.mxu0 %v2705
      %2737 = vmatprep.subr.mxu0 0.0
      %2738 = vmatpush1.xpose.msra.mxu0 %v2702
      %2739 = vmatprep.subr.mxu0 0.0
      %2740 = vmatpush2.xpose.msra.mxu0 0.0
      %2741 = vmatprep.subr.mxu0 0.0
      %2742 = vmatpush2.xpose.msra.mxu0 0.0
      %2743 = vmatprep.subr.mxu0 0.0
      %2744 = vmatpush2.xpose.msra.mxu0 0.0
      %2745 = vmatprep.subr.mxu0 0.0
      %2746 = vmatpush2.xpose.msra.mxu0 0.0
      %2747 = vmatprep.subr.mxu0 0.0
      %2748 = vmatpush2.xpose.msra.mxu0 0.0
      %2749 = vmatprep.subr.mxu0 0.0
      %2750 = vmatpush2.xpose.msra.mxu0 0.0
      %2751 = vmatprep.subr.mxu0 0.0
      %2752 = vmatpush2.xpose.msra.mxu0 0.0
      %2753 = vmatprep.subr.mxu0 0.0
      %2754 = vmatpush2.xpose.msra.mxu0 0.0
      %2755 = vmatprep.subr.mxu0 0.0
      %2756 = vmatpush2.xpose.msra.mxu0 0.0
      %2757 = vmatprep.subr.mxu0 0.0
      %2758 = vmatpush2.xpose.msra.mxu0 0.0
      %2759 = vmatprep.subr.mxu0 0.0
      %2760 = vmatpush2.xpose.msra.mxu0 0.0
      %2761 = vmatprep.subr.mxu0 0.0
      %2762 = vmatpush2.xpose.msra.mxu0 0.0
      %2763 = vmatprep.subr.mxu0 0.0
      %2764 = vmatpush2.xpose.msra.mxu0 0.0
      %2765 = vmatprep.subr.mxu0 0.0
      %2766 = vmatpush2.xpose.msra.mxu0 0.0
      %2767 = vmatprep.subr.mxu0 0.0
      %2768 = vmatpush2.xpose.msra.mxu0 0.0
      %2769 = vmatprep.subr.mxu0 0.0
      %2770 = vmatpush2.xpose.msra.mxu0 0.0
      %2771 = vmatprep.mubr.f32.mxu0 0.0
      %2772 = vmatmul.mubr.f32.gmra.mxu0 %v2702
      %v2773 = vpop.f32.mrf.mxu0
      %v2774 = vadd.f32 0.0, %v2773
      %v2775 = vpop.f32.mrf.mxu0
      %2776 = vmatprep.mubr.f32.mxu0 0.0
      %2777 = vmatmul.mubr.f32.gmra.mxu0 %v2705
      %v2778 = vpop.f32.mrf.mxu0
      %v2779 = vadd.f32 0.0, %v2778
      %v2780 = vpop.f32.mrf.mxu0
      %2781 = vdwg.mxu0
      %2782 = vst.msk [vmem:[%s123] sm:$0xff] %vm189, %v263
      %2783 = vst.msk [vmem:[%s123 + $0x8] sm:$0xff] %vm189, %v268
      %2784 = vst.msk [vmem:[%s123 + $0x10] sm:$0xff] %vm189, %v344
      %2785 = vst.msk [vmem:[%s123 + $0x18] sm:$0xff] %vm189, %v349
      %2786 = vst.msk [vmem:[%s123 + $0x20] sm:$0xff] %vm189, %v425
      %2787 = vst.msk [vmem:[%s123 + $0x28] sm:$0xff] %vm189, %v430
      %2788 = vst.msk [vmem:[%s123 + $0x30] sm:$0xff] %vm189, %v506
      %2789 = vst.msk [vmem:[%s123 + $0x38] sm:$0xff] %vm189, %v511
      %2790 = vst.msk [vmem:[%s123 + $0x40] sm:$0xff] %vm189, %v587
      %2791 = vst.msk [vmem:[%s123 + $0x48] sm:$0xff] %vm189, %v592
      %2792 = vst.msk [vmem:[%s123 + $0x50] sm:$0xff] %vm189, %v668
      %2793 = vst.msk [vmem:[%s123 + $0x58] sm:$0xff] %vm189, %v673
      %2794 = vst.msk [vmem:[%s123 + $0x60] sm:$0xff] %vm189, %v749
      %2795 = vst.msk [vmem:[%s123 + $0x68] sm:$0xff] %vm189, %v754
      %2796 = vst.msk [vmem:[%s123 + $0x70] sm:$0xff] %vm189, %v830
      %2797 = vst.msk [vmem:[%s123 + $0x78] sm:$0xff] %vm189, %v835
      %2798 = vst.msk [vmem:[%s123 + $0x80] sm:$0xff] %vm189, %v911
      %2799 = vst.msk [vmem:[%s123 + $0x88] sm:$0xff] %vm189, %v916
      %2800 = vst.msk [vmem:[%s123 + $0x90] sm:$0xff] %vm189, %v992
      %2801 = vst.msk [vmem:[%s123 + $0x98] sm:$0xff] %vm189, %v997
      %2802 = vst.msk [vmem:[%s123 + $0xa0] sm:$0xff] %vm189, %v1073
      %2803 = vst.msk [vmem:[%s123 + $0xa8] sm:$0xff] %vm189, %v1078
      %2804 = vst.msk [vmem:[%s123 + $0xb0] sm:$0xff] %vm189, %v1154
      %2805 = vst.msk [vmem:[%s123 + $0xb8] sm:$0xff] %vm189, %v1159
      %2806 = vst.msk [vmem:[%s123 + $0xc0] sm:$0xff] %vm189, %v1235
      %2807 = vst.msk [vmem:[%s123 + $0xc8] sm:$0xff] %vm189, %v1240
      %2808 = vst.msk [vmem:[%s123 + $0xd0] sm:$0xff] %vm189, %v1316
      %2809 = vst.msk [vmem:[%s123 + $0xd8] sm:$0xff] %vm189, %v1321
      %2810 = vst.msk [vmem:[%s123 + $0xe0] sm:$0xff] %vm189, %v1397
      %2811 = vst.msk [vmem:[%s123 + $0xe8] sm:$0xff] %vm189, %v1402
      %2812 = vst.msk [vmem:[%s123 + $0xf0] sm:$0xff] %vm189, %v1478
      %2813 = vst.msk [vmem:[%s123 + $0xf8] sm:$0xff] %vm189, %v1483
      %2814 = vst.msk [vmem:[%s123 + $0x100] sm:$0xff] %vm189, %v1559
      %2815 = vst.msk [vmem:[%s123 + $0x108] sm:$0xff] %vm189, %v1564
      %2816 = vst.msk [vmem:[%s123 + $0x110] sm:$0xff] %vm189, %v1640
      %2817 = vst.msk [vmem:[%s123 + $0x118] sm:$0xff] %vm189, %v1645
      %2818 = vst.msk [vmem:[%s123 + $0x120] sm:$0xff] %vm189, %v1721
      %2819 = vst.msk [vmem:[%s123 + $0x128] sm:$0xff] %vm189, %v1726
      %2820 = vst.msk [vmem:[%s123 + $0x130] sm:$0xff] %vm189, %v1802
      %2821 = vst.msk [vmem:[%s123 + $0x138] sm:$0xff] %vm189, %v1807
      %2822 = vst.msk [vmem:[%s123 + $0x140] sm:$0xff] %vm189, %v1883
      %2823 = vst.msk [vmem:[%s123 + $0x148] sm:$0xff] %vm189, %v1888
      %2824 = vst.msk [vmem:[%s123 + $0x150] sm:$0xff] %vm189, %v1964
      %2825 = vst.msk [vmem:[%s123 + $0x158] sm:$0xff] %vm189, %v1969
      %2826 = vst.msk [vmem:[%s123 + $0x160] sm:$0xff] %vm189, %v2045
      %2827 = vst.msk [vmem:[%s123 + $0x168] sm:$0xff] %vm189, %v2050
      %2828 = vst.msk [vmem:[%s123 + $0x170] sm:$0xff] %vm189, %v2126
      %2829 = vst.msk [vmem:[%s123 + $0x178] sm:$0xff] %vm189, %v2131
      %2830 = vst.msk [vmem:[%s123 + $0x180] sm:$0xff] %vm189, %v2207
      %2831 = vst.msk [vmem:[%s123 + $0x188] sm:$0xff] %vm189, %v2212
      %2832 = vst.msk [vmem:[%s123 + $0x190] sm:$0xff] %vm189, %v2288
      %2833 = vst.msk [vmem:[%s123 + $0x198] sm:$0xff] %vm189, %v2293
      %2834 = vst.msk [vmem:[%s123 + $0x1a0] sm:$0xff] %vm189, %v2369
      %2835 = vst.msk [vmem:[%s123 + $0x1a8] sm:$0xff] %vm189, %v2374
      %2836 = vst.msk [vmem:[%s123 + $0x1b0] sm:$0xff] %vm189, %v2450
      %2837 = vst.msk [vmem:[%s123 + $0x1b8] sm:$0xff] %vm189, %v2455
      %2838 = vst.msk [vmem:[%s123 + $0x1c0] sm:$0xff] %vm189, %v2531
      %2839 = vst.msk [vmem:[%s123 + $0x1c8] sm:$0xff] %vm189, %v2536
      %2840 = vst.msk [vmem:[%s123 + $0x1d0] sm:$0xff] %vm189, %v2612
      %2841 = vst.msk [vmem:[%s123 + $0x1d8] sm:$0xff] %vm189, %v2617
      %2842 = vst.msk [vmem:[%s123 + $0x1e0] sm:$0xff] %vm189, %v2693
      %2843 = vst.msk [vmem:[%s123 + $0x1e8] sm:$0xff] %vm189, %v2698
      %2844 = vst.msk [vmem:[%s123 + $0x1f0] sm:$0xff] %vm189, %v2774
      %2845 = vst.msk [vmem:[%s123 + $0x1f8] sm:$0xff] %vm189, %v2779
      %s2846 = smul.u32 32, %s12
      %p2847 = scmp.lt.s32.totalorder %s2846, 63
      %s2848 = scalar_select %p2847, %s2846, 63
      %s2849 = smul.addr %s2848, 2
      %s2850 = smul.addr %s2849, 8
      %s2851 = scalar_lea.vmem %s1, %s2850
      // Predicated region
      $region25: #{forward.31} parent=23 // pred_check
        %p2852 = pneg %p56
      $region26: #{forward.31} parent=23 // pred_check_branch
        %2854 = sbr.rel (%p2852) target = $region28
      $region27: #{forward.31} parent=23 // pred_region
        %s2855 = smul.u32 32, %s12
      $region28: #{forward.31} parent=23 // pred_fallthru
        _
    $region24: #{forward.31} parent=5 // pred_fallthru
      _
    %p2856 = scmp.le.s32.totalorder 2, %s7
    // Predicated region
    $region29: #{forward.31} parent=5 // pred_check
      %p2857 = pneg %p2856
    $region30: #{forward.31} parent=5 // pred_check_branch
      %2859 = sbr.rel (%p2857) target = $region32
    $region31: #{forward.31} parent=5 // pred_region
      %s2860 = ssub.s32 %s7, 2
      // Predicated region
      $region33: #{forward.31} parent=31 // pred_check
        %p2861 = pneg %p62
      $region34: #{forward.31} parent=31 // pred_check_branch
        %2863 = sbr.rel (%p2861) target = $region36
      $region35: #{forward.31} parent=31 // pred_region
        %s2864 = smul.u32 32, %s13
        %p2865 = scmp.lt.s32.totalorder %s2864, 63
        %s2866 = scalar_select %p2865, %s2864, 63
        %s2867 = smul.addr %s2866, 2
        %s2868 = smul.addr %s2867, 8
        %s2869 = scalar_lea.vmem %s1, %s2868
      $region36: #{forward.31} parent=31 // pred_fallthru
        _
    $region32: #{forward.31} parent=5 // pred_fallthru
      _
  $region6: #{forward.31} parent=0 // loop_footer
    %s11 = sadd.s32 1, %s7
  $region7: #{forward.31} parent=0 // loop_footer_branch
    %6 = sbr.rel target = $region3
  $region8: #{forward.31} parent=0 // loop_exit
    _

// kernel: forward.40
$region0: #{forward.40}
  #allocation0 [shape = 'u32[]', space=smem, size = 0x4, offset = 0x4, fixed_abs, tag = 'smem constant byte address 0x4 - core index']
  #allocation1 [shape = 'u32[144,128]{1,0:T(1,128)}', space=vmem, size = 0x12000, scoped, tag = 'internal scratch']
  #allocation2 [shape = 'f32[1,1]{1,0:T(1,128)S(1)}', space=vmem, size = 0x200, scoped, tag = 'scoped memory for forward.40']
  %s0 = inlined_call_operand.vmem [shape: f32[1,32], index: 0, kind: input, shape index: {}]
  %s1 = inlined_call_operand.vmem [shape: f32[32,512], index: 1, kind: input, shape index: {}]
  %s2 = inlined_call_operand.<no memory space> [shape: f32[1,1], index: 2, kind: input, shape index: {}]
  %s3 = inlined_call_operand.vmem [shape: f32[1,512], index: 3, kind: output, shape index: {}]
  %s4 = sld [smem:[#allocation0]]
  $region68: #{forward.40} parent=0
    _
  %s6 = ssub.s32 1, %s4
  %s7 = scalar_select 0, %s6, %s4
  %v8 = vstv %s2
  %9 = vst [vmem:[#allocation2] sm:$0x1] %v8
  $region1: #{forward.40} parent=0
    #allocation3 [shape = 'u8[65536]{0}', space=vmem, size = 0x10000, scoped, tag = 'input window, operand 1']
    loop: start=0, step=1, limit=4
    $region2: #{forward.40} parent=1 // loop_pre_header
      _
    $region3: #{forward.40} parent=1 // loop_header
      %s11 = sphi 0, %s15
      %p12 = scmp.ge.s32.totalorder %s11, 4
      %s19 = sphi 0, %s19
      %s21 = sphi 0, %s19
      %s22 = sphi 0, %s21
      %s36 = sphi 0, %s22
      %s42 = sphi 0, %s44
      %s45 = sphi 0, %s42
      %s46 = sphi 0, %s45
      %s62 = sphi 0, %s46
      %s66 = sphi 0, %s66
      %s68 = sphi 0, %s66
      %s69 = sphi 0, %s68
      %s83 = sphi 0, %s69
      %s89 = sphi 0, %s91
      %s92 = sphi 0, %s89
      %s93 = sphi 0, %s92
      %s109 = sphi 0, %s93
    $region4: #{forward.40} parent=1 // loop_header_branch
      %14 = sbr.rel (%p12) target = $region8
    $region5: #{forward.40} parent=1 // loop_body
      %s16 = ssub.s32 %s11, 1
      %s17 = ssub.s32 %s11, 2
      %s18 = sadd.s32 %s11, 1
      %s20 = sadd.s32 %s19, 1
      %p23 = scmp.eq.s32.totalorder %s11, 1
      %p24 = scmp.ne.s32.totalorder %s19, %s21
      %p25 = scmp.eq.s32.totalorder %s11, 0
      %p26 = por %p24, %p25
      %p27 = scmp.ne.s32.totalorder %s19, %s21
      %p28 = scmp.eq.s32.totalorder %s16, 1
      %p29 = por %p27, %p28
      %p30 = scmp.ne.s32.totalorder %s21, %s22
      %p31 = scmp.eq.s32.totalorder %s16, 0
      %p32 = por %p30, %p31
      %p33 = scmp.ne.s32.totalorder %s21, %s22
      %p34 = scmp.eq.s32.totalorder %s17, 1
      %p35 = por %p33, %p34
      %p37 = scmp.ne.s32.totalorder %s22, %s36
      %p38 = scmp.eq.s32.totalorder %s17, 0
      %p39 = por %p37, %p38
      %s40 = ssub.s32 %s11, %s18
      %p41 = scmp.eq.s32.totalorder %s40, 0
      %s43 = sadd.s32 %s42, 1
      %s44 = scalar_select %p41, %s42, %s43
      %p47 = pneg %p41
      %p48 = scmp.eq.s32.totalorder %s11, 1
      %p49 = por %p47, %p48
      %p50 = scmp.ne.s32.totalorder %s42, %s45
      %p51 = scmp.eq.s32.totalorder %s11, 0
      %p52 = por %p50, %p51
      %p53 = scmp.ne.s32.totalorder %s42, %s45
      %p54 = scmp.eq.s32.totalorder %s16, 1
      %p55 = por %p53, %p54
      %p56 = scmp.ne.s32.totalorder %s45, %s46
      %p57 = scmp.eq.s32.totalorder %s16, 0
      %p58 = por %p56, %p57
      %p59 = scmp.ne.s32.totalorder %s45, %s46
      %p60 = scmp.eq.s32.totalorder %s17, 1
      %p61 = por %p59, %p60
      %p63 = scmp.ne.s32.totalorder %s46, %s62
      %p64 = scmp.eq.s32.totalorder %s17, 0
      %p65 = por %p63, %p64
      %s67 = sadd.s32 %s66, 1
      %p70 = scmp.eq.s32.totalorder %s11, 1
      %p71 = scmp.ne.s32.totalorder %s66, %s68
      %p72 = scmp.eq.s32.totalorder %s11, 0
      %p73 = por %p71, %p72
      %p74 = scmp.ne.s32.totalorder %s66, %s68
      %p75 = scmp.eq.s32.totalorder %s16, 1
      %p76 = por %p74, %p75
      %p77 = scmp.ne.s32.totalorder %s68, %s69
      %p78 = scmp.eq.s32.totalorder %s16, 0
      %p79 = por %p77, %p78
      %p80 = scmp.ne.s32.totalorder %s68, %s69
      %p81 = scmp.eq.s32.totalorder %s17, 1
      %p82 = por %p80, %p81
      %p84 = scmp.ne.s32.totalorder %s69, %s83
      %p85 = scmp.eq.s32.totalorder %s17, 0
      %p86 = por %p84, %p85
      %s87 = ssub.s32 %s11, %s18
      %p88 = scmp.eq.s32.totalorder %s87, 0
      %s90 = sadd.s32 %s89, 1
      %s91 = scalar_select %p88, %s89, %s90
      %p94 = pneg %p88
      %p95 = scmp.eq.s32.totalorder %s11, 1
      %p96 = por %p94, %p95
      %p97 = scmp.ne.s32.totalorder %s89, %s92
      %p98 = scmp.eq.s32.totalorder %s11, 0
      %p99 = por %p97, %p98
      %p100 = scmp.ne.s32.totalorder %s89, %s92
      %p101 = scmp.eq.s32.totalorder %s16, 1
      %p102 = por %p100, %p101
      %p103 = scmp.ne.s32.totalorder %s92, %s93
      %p104 = scmp.eq.s32.totalorder %s16, 0
      %p105 = por %p103, %p104
      %p106 = scmp.ne.s32.totalorder %s92, %s93
      %p107 = scmp.eq.s32.totalorder %s17, 1
      %p108 = por %p106, %p107
      %p110 = scmp.ne.s32.totalorder %s93, %s109
      %p111 = scmp.eq.s32.totalorder %s17, 0
      %p112 = por %p110, %p111
      %p113 = scmp.le.s32.totalorder 1, %s11
      %p114 = scmp.lt.s32.totalorder %s11, 3
      %p115 = pnand %p113, %p114
      %p116 = pneg %p115
      // Predicated region
      $region9: #{forward.40} parent=5 // pred_check
        _
      $region10: #{forward.40} parent=5 // pred_check_branch
        %118 = sbr.rel (%p115) target = $region12
      $region11: #{forward.40} parent=5 // pred_region
        %s119 = ssub.s32 %s11, 1
        // Predicated region
        $region13: #{forward.40} parent=11 // pred_check
          %p120 = pneg %p32
        $region14: #{forward.40} parent=11 // pred_check_branch
          %122 = sbr.rel (%p120) target = $region16
        $region15: #{forward.40} parent=11 // pred_region
          _
        $region16: #{forward.40} parent=11 // pred_fallthru
          _
        // Predicated region
        $region17: #{forward.40} parent=11 // pred_check
          %p123 = pneg %p79
        $region18: #{forward.40} parent=11 // pred_check_branch
          %125 = sbr.rel (%p123) target = $region20
        $region19: #{forward.40} parent=11 // pred_region
          _
        $region20: #{forward.40} parent=11 // pred_fallthru
          _
      $region12: #{forward.40} parent=5 // pred_fallthru
        _
      %p126 = scmp.lt.s32.totalorder %s11, 2
      // Predicated region
      $region21: #{forward.40} parent=5 // pred_check
        %p127 = pneg %p126
      $region22: #{forward.40} parent=5 // pred_check_branch
        %129 = sbr.rel (%p127) target = $region24
      $region23: #{forward.40} parent=5 // pred_region
        // Predicated region
        $region25: #{forward.40} parent=23 // pred_check
          %p130 = pneg %p52
        $region26: #{forward.40} parent=23 // pred_check_branch
          %132 = sbr.rel (%p130) target = $region28
        $region27: #{forward.40} parent=23 // pred_region
          %s133 = sand.u32 %s42, 1
          %s134 = sand.u32 %s42, 1
          %s135 = smul.addr %s134, 64
          %s136 = scalar_lea.vmem [#allocation3], %s135
          %s137 = smul.u32 2, %s11
          %s138 = smul.addr %s137, 8
          %s139 = scalar_lea.vmem %s1, %s138
          // Predicated region
          $region29: #{forward.40} parent=27 // pred_check
            _
          $region30: #{forward.40} parent=27 // pred_check_branch
            %141 = sbr.rel (0) target = $region32
          $region31: #{forward.40} parent=27 // pred_region
            // Predicated region
            $region33: #{forward.40} parent=31 // pred_check
              _
            $region34: #{forward.40} parent=31 // pred_check_branch
              %143 = sbr.rel (0) target = $region36
            $region35: #{forward.40} parent=31 // pred_region
              loop: start=0, step=1, limit=1
              $region37: #{forward.40} parent=35 // loop_pre_header
                _
              $region38: #{forward.40} parent=35 // loop_header
                %s145 = sphi 0, %s149
                %p146 = scmp.ge.s32.totalorder %s145, 1
                %s150 = sphi %s139, %s139
                %s151 = sphi %s136, %s136
              $region39: #{forward.40} parent=35 // loop_header_branch
                %148 = sbr.rel (%p146) target = $region43
              $region40: #{forward.40} parent=35 // loop_body
                %v152 = vld [vmem:[%s150] sm:$0xff]
                %153 = vst [vmem:[%s151] sm:$0xff] %v152
                %v154 = vld [vmem:[%s150 + $0x8] sm:$0xff]
                %155 = vst [vmem:[%s151 + $0x8] sm:$0xff] %v154
                %v156 = vld [vmem:[%s150 + $0x20] sm:$0xff]
                %157 = vst [vmem:[%s151 + $0x10] sm:$0xff] %v156
                %v158 = vld [vmem:[%s150 + $0x28] sm:$0xff]
                %159 = vst [vmem:[%s151 + $0x18] sm:$0xff] %v158
                %v160 = vld [vmem:[%s150 + $0x40] sm:$0xff]
                %161 = vst [vmem:[%s151 + $0x20] sm:$0xff] %v160
                %v162 = vld [vmem:[%s150 + $0x48] sm:$0xff]
                %163 = vst [vmem:[%s151 + $0x28] sm:$0xff] %v162
                %v164 = vld [vmem:[%s150 + $0x60] sm:$0xff]
                %165 = vst [vmem:[%s151 + $0x30] sm:$0xff] %v164
                %v166 = vld [vmem:[%s150 + $0x68] sm:$0xff]
                %167 = vst [vmem:[%s151 + $0x38] sm:$0xff] %v166
              $region41: #{forward.40} parent=35 // loop_footer
                %s149 = sadd.s32 1, %s145
              $region42: #{forward.40} parent=35 // loop_footer_branch
                %144 = sbr.rel target = $region38
              $region43: #{forward.40} parent=35 // loop_exit
                _
            $region36: #{forward.40} parent=31 // pred_fallthru
              _
            // Predicated region
            $region44: #{forward.40} parent=31 // pred_check
              _
            $region45: #{forward.40} parent=31 // pred_check_branch
              %169 = sbr.rel target = $region47
            $region46: #{forward.40} parent=31 // pred_region
              _
            $region47: #{forward.40} parent=31 // pred_fallthru
              _
          $region32: #{forward.40} parent=27 // pred_fallthru
            _
          %170 = vnop
        $region28: #{forward.40} parent=23 // pred_fallthru
          _
      $region24: #{forward.40} parent=5 // pred_fallthru
        _
      %p171 = scmp.le.s32.totalorder 1, %s11
      %p172 = scmp.lt.s32.totalorder %s11, 3
      %p173 = pnand %p171, %p172
      %p174 = pneg %p173
      // Predicated region
      $region48: #{forward.40} parent=5 // pred_check
        _
      $region49: #{forward.40} parent=5 // pred_check_branch
        %176 = sbr.rel (%p173) target = $region51
      $region50: #{forward.40} parent=5 // pred_region
        %s177 = ssub.s32 %s11, 1
        %s178 = sand.u32 %s45, 1
        %s179 = sand.u32 %s45, 1
        %s180 = smul.addr %s179, 64
        %s181 = scalar_lea.vmem [#allocation3], %s180
        // Predicated region
        $region52: #{forward.40} parent=50 // pred_check
          %p182 = pneg %p58
        $region53: #{forward.40} parent=50 // pred_check_branch
          %184 = sbr.rel (%p182) target = $region55
        $region54: #{forward.40} parent=50 // pred_region
          _
        $region55: #{forward.40} parent=50 // pred_fallthru
          _
        %p185 = pneg %p32
        %p186 = pneg %p29
        %s187 = sand.u32 %s45, 1
        %s188 = sand.u32 %s45, 1
        %s189 = smul.addr %s188, 64
        %s190 = scalar_lea.vmem [#allocation3], %s189
        %p191 = pneg %p58
        %p192 = pneg %p55
        %p193 = pneg %p79
        %p194 = pneg %p76
        %p195 = pneg %p105
        %p196 = pneg %p102
        %s197 = smul.u32 2, %s16
        %p198 = scmp.lt.s32.totalorder %s197, 3
        %s199 = scalar_select %p198, %s197, 3
        %s200 = scalar_lea.vmem %s3, %s199
        %s201 = smul.u32 2, %s16
        %s202 = smul.u32 2, %s16
        %p203 = scmp.lt.s32.totalorder %s202, 3
        %s204 = scalar_select %p203, %s202, 3
        %s205 = scalar_lea.vmem %s3, %s204
        %s206 = smul.u32 2, %s16
        %v207 = vld [vmem:[%s0] sm:$0x1]
        %v208 = vld [vmem:[%s181] sm:$0xff]
        %v209 = vld [vmem:[%s181 + $0x8] sm:$0xff]
        %v210 = vld [vmem:[%s181 + $0x10] sm:$0xff]
        %v211 = vld [vmem:[%s181 + $0x18] sm:$0xff]
        %v212 = vld [vmem:[%s181 + $0x20] sm:$0xff]
        %v213 = vld [vmem:[%s181 + $0x28] sm:$0xff]
        %v214 = vld [vmem:[%s181 + $0x30] sm:$0xff]
        %v215 = vld [vmem:[%s181 + $0x38] sm:$0xff]
        %v216 = vld [vmem:[#allocation2] sm:$0x1]
        %218 = vset.pattern.permute.xlu0 0
        %219 = vperm.xlu0 %218, %v216
        %v220 = vpop.permute.xlu0 %219
        %v222 = vlaneseq
        %v223 = vshrl.u32 %v222, 7
        %v224 = vsub.s32 0, %v223
        %v225 = vrot.slane %v220, %v224
        %vm226 = vcmask 261120
        %v228 = vsel %vm226, %v207, 0
        %230 = vmatprep.subr.mxu0 0.0
        %231 = vmatpush1.msra.mxu0 0.0
        %232 = vmatprep.subr.mxu0 0.0
        %233 = vmatpush1.msra.mxu0 0.0
        %234 = vmatprep.subr.mxu0 0.0
        %235 = vmatpush1.msra.mxu0 0.0
        %236 = vmatprep.subr.mxu0 0.0
        %237 = vmatpush1.msra.mxu0 0.0
        %238 = vmatprep.subr.mxu0 0.0
        %239 = vmatpush1.msra.mxu0 0.0
        %240 = vmatprep.subr.mxu0 0.0
        %241 = vmatpush1.msra.mxu0 0.0
        %242 = vmatprep.subr.mxu0 0.0
        %243 = vmatpush1.msra.mxu0 0.0
        %244 = vmatprep.subr.mxu0 0.0
        %245 = vmatpush1.msra.mxu0 0.0
        %246 = vmatprep.subr.mxu0 0.0
        %247 = vmatpush1.msra.mxu0 0.0
        %248 = vmatprep.subr.mxu0 0.0
        %249 = vmatpush1.msra.mxu0 0.0
        %250 = vmatprep.subr.mxu0 0.0
        %251 = vmatpush1.msra.mxu0 0.0
        %252 = vmatprep.subr.mxu0 0.0
        %253 = vmatpush1.msra.mxu0 0.0
        %254 = vmatprep.subr.mxu0 %v215
        %255 = vmatpush1.msra.mxu0 %v214
        %256 = vmatprep.subr.mxu0 %v213
        %257 = vmatpush1.msra.mxu0 %v212
        %258 = vmatprep.subr.mxu0 %v211
        %259 = vmatpush1.msra.mxu0 %v210
        %260 = vmatprep.subr.mxu0 %v209
        %261 = vmatpush1.msra.mxu0 %v208
        %262 = vmatprep.subr.mxu0 0.0
        %263 = vmatpush2.msra.mxu0 0.0
        %264 = vmatprep.subr.mxu0 0.0
        %265 = vmatpush2.msra.mxu0 0.0
        %266 = vmatprep.subr.mxu0 0.0
        %267 = vmatpush2.msra.mxu0 0.0
        %268 = vmatprep.subr.mxu0 0.0
        %269 = vmatpush2.msra.mxu0 0.0
        %270 = vmatprep.subr.mxu0 0.0
        %271 = vmatpush2.msra.mxu0 0.0
        %272 = vmatprep.subr.mxu0 0.0
        %273 = vmatpush2.msra.mxu0 0.0
        %274 = vmatprep.subr.mxu0 0.0
        %275 = vmatpush2.msra.mxu0 0.0
        %276 = vmatprep.subr.mxu0 0.0
        %277 = vmatpush2.msra.mxu0 0.0
        %278 = vmatprep.subr.mxu0 0.0
        %279 = vmatpush2.msra.mxu0 0.0
        %280 = vmatprep.subr.mxu0 0.0
        %281 = vmatpush2.msra.mxu0 0.0
        %282 = vmatprep.subr.mxu0 0.0
        %283 = vmatpush2.msra.mxu0 0.0
        %284 = vmatprep.subr.mxu0 0.0
        %285 = vmatpush2.msra.mxu0 0.0
        %286 = vmatprep.subr.mxu0 0.0
        %287 = vmatpush2.msra.mxu0 0.0
        %288 = vmatprep.subr.mxu0 0.0
        %289 = vmatpush2.msra.mxu0 0.0
        %290 = vmatprep.subr.mxu0 0.0
        %291 = vmatpush2.msra.mxu0 0.0
        %292 = vmatprep.subr.mxu0 0.0
        %293 = vmatpush2.msra.mxu0 0.0
        %294 = vmatprep.mubr.f32.mxu0 0.0
        %295 = vmatmul.mubr.f32.gmra.mxu0 %v228
        %v296 = vpop.f32.mrf.mxu0
        %v297 = vadd.f32 %v225, %v296
        %v298 = vpop.f32.mrf.mxu0
        %v299 = vadd.f32 %v225, %v298
        %300 = vdwg.mxu0
        %v303 = vcombine.low %v297, %v299
        %v305 = vunpack.c.l.s4 1966171168
        %v306 = vunpack.c.0.s8 %v305
        %v307 = vlaneseq
        %v308 = vshrl.u32 %v307, 7
        %v309 = vsub.s32 %v306, %v308
        %v310 = vrot.slane %v303, %v309
        %v312 = vunpack.c.l.s4 1966171168
        %v313 = vunpack.c.0.s8 %v312
        %v314 = vlaneseq
        %v315 = vshrl.u32 %v314, 7
        %v316 = vsub.s32 %v313, %v315
        %v317 = vrot.slane %v310, %v316
        %v319 = vlaneseq
        %vm320 = vcmp.ge.s32.totalorder %v319, 0
        %vm321 = vcmp.lt.s32.totalorder %v319, 256
        %vm322 = vmand %vm320, %vm321
        %323 = vst.msk [vmem:[%s205] sm:$0x3] %vm322, %v317
        %s324 = smul.u32 2, %s16
        %p325 = scmp.lt.s32.totalorder %s324, 3
        %s326 = scalar_select %p325, %s324, 3
        %s327 = scalar_lea.vmem %s3, %s326
        // Predicated region
        $region56: #{forward.40} parent=50 // pred_check
          %p328 = pneg %p102
        $region57: #{forward.40} parent=50 // pred_check_branch
          %330 = sbr.rel (%p328) target = $region59
        $region58: #{forward.40} parent=50 // pred_region
          %s331 = smul.u32 2, %s16
        $region59: #{forward.40} parent=50 // pred_fallthru
          _
      $region51: #{forward.40} parent=5 // pred_fallthru
        _
      %p332 = scmp.le.s32.totalorder 2, %s11
      // Predicated region
      $region60: #{forward.40} parent=5 // pred_check
        %p333 = pneg %p332
      $region61: #{forward.40} parent=5 // pred_check_branch
        %335 = sbr.rel (%p333) target = $region63
      $region62: #{forward.40} parent=5 // pred_region
        %s336 = ssub.s32 %s11, 2
        // Predicated region
        $region64: #{forward.40} parent=62 // pred_check
          %p337 = pneg %p108
        $region65: #{forward.40} parent=62 // pred_check_branch
          %339 = sbr.rel (%p337) target = $region67
        $region66: #{forward.40} parent=62 // pred_region
          %s340 = smul.u32 2, %s17
          %p341 = scmp.lt.s32.totalorder %s340, 3
          %s342 = scalar_select %p341, %s340, 3
          %s343 = scalar_lea.vmem %s3, %s342
        $region67: #{forward.40} parent=62 // pred_fallthru
          _
      $region63: #{forward.40} parent=5 // pred_fallthru
        _
    $region6: #{forward.40} parent=1 // loop_footer
      %s15 = sadd.s32 1, %s11
    $region7: #{forward.40} parent=1 // loop_footer_branch
      %10 = sbr.rel target = $region3
    $region8: #{forward.40} parent=1 // loop_exit
      _

// kernel: forward.41
$region0: #{forward.41}
  #allocation0 [shape = 'u32[]', space=smem, size = 0x4, offset = 0x4, fixed_abs, tag = 'smem constant byte address 0x4 - core index']
  #allocation1 [shape = 'u32[144,128]{1,0:T(1,128)}', space=vmem, size = 0x12000, scoped, tag = 'internal scratch']
  %s0 = inlined_call_operand.vmem [shape: f32[2,16,16], index: 0, kind: input, shape index: {}]
  %s1 = inlined_call_operand.vmem [shape: f32[2,16,16], index: 1, kind: input, shape index: {}]
  %s2 = inlined_call_operand.hbm [shape: f32[2,16,16], index: 2, kind: output, shape index: {0}]
  %s3 = inlined_call_operand.hbm [shape: f32[2,16,16], index: 3, kind: output, shape index: {1}]
  %4 = xla_tuple %s2, %s3
  %s5 = sld [smem:[#allocation0]]
  $region56: #{forward.41} parent=0
    _
  %s7 = ssub.s32 1, %s5
  %s8 = scalar_select 0, %s7, %s5
  $region1: #{forward.41} parent=0
    #allocation2 [shape = 'u8[16384]{0}', space=vmem, size = 0x4000, scoped, tag = 'output window, operand 0']
    #allocation3 [shape = 's32[2]{0}', space=sflag, size = 0x8, scoped, tag = 'scoped memory for forward.41']
    #allocation4 [shape = 'u8[16384]{0}', space=vmem, size = 0x4000, scoped, tag = 'output window, operand 1']
    #allocation5 [shape = 's32[2]{0}', space=sflag, size = 0x8, scoped, tag = 'scoped memory for forward.41']
    %9 = vsyncpa [#allocation3], 0
    %s10 = scalar_lea.sflag [#allocation3], 1
    %11 = vsyncpa %s10, 0
    %12 = vsyncpa [#allocation5], 0
    %s13 = scalar_lea.sflag [#allocation5], 1
    %14 = vsyncpa %s13, 0
    loop: start=0, step=1, limit=4
    $region2: #{forward.41} parent=1 // loop_pre_header
      _
    $region3: #{forward.41} parent=1 // loop_header
      %s16 = sphi 0, %s20
      %p17 = scmp.ge.s32.totalorder %s16, 4
      %s26 = sphi 0, %s28
      %s29 = sphi 0, %s26
      %s30 = sphi 0, %s29
      %s46 = sphi 0, %s30
      %s52 = sphi 0, %s54
      %s55 = sphi 0, %s52
      %s56 = sphi 0, %s55
      %s72 = sphi 0, %s56
      %s78 = sphi 0, %s80
      %s81 = sphi 0, %s78
      %s82 = sphi 0, %s81
      %s98 = sphi 0, %s82
      %s104 = sphi 0, %s106
      %s107 = sphi 0, %s104
      %s108 = sphi 0, %s107
      %s124 = sphi 0, %s108
    $region4: #{forward.41} parent=1 // loop_header_branch
      %19 = sbr.rel (%p17) target = $region8
    $region5: #{forward.41} parent=1 // loop_body
      %s21 = ssub.s32 %s16, 1
      %s22 = ssub.s32 %s16, 2
      %s23 = sadd.s32 %s16, 1
      %s24 = ssub.s32 %s16, %s23
      %p25 = scmp.eq.s32.totalorder %s24, 0
      %s27 = sadd.s32 %s26, 1
      %s28 = scalar_select %p25, %s26, %s27
      %p31 = pneg %p25
      %p32 = scmp.eq.s32.totalorder %s16, 1
      %p33 = por %p31, %p32
      %p34 = scmp.ne.s32.totalorder %s26, %s29
      %p35 = scmp.eq.s32.totalorder %s16, 0
      %p36 = por %p34, %p35
      %p37 = scmp.ne.s32.totalorder %s26, %s29
      %p38 = scmp.eq.s32.totalorder %s21, 1
      %p39 = por %p37, %p38
      %p40 = scmp.ne.s32.totalorder %s29, %s30
      %p41 = scmp.eq.s32.totalorder %s21, 0
      %p42 = por %p40, %p41
      %p43 = scmp.ne.s32.totalorder %s29, %s30
      %p44 = scmp.eq.s32.totalorder %s22, 1
      %p45 = por %p43, %p44
      %p47 = scmp.ne.s32.totalorder %s30, %s46
      %p48 = scmp.eq.s32.totalorder %s22, 0
      %p49 = por %p47, %p48
      %s50 = ssub.s32 %s16, %s23
      %p51 = scmp.eq.s32.totalorder %s50, 0
      %s53 = sadd.s32 %s52, 1
      %s54 = scalar_select %p51, %s52, %s53
      %p57 = pneg %p51
      %p58 = scmp.eq.s32.totalorder %s16, 1
      %p59 = por %p57, %p58
      %p60 = scmp.ne.s32.totalorder %s52, %s55
      %p61 = scmp.eq.s32.totalorder %s16, 0
      %p62 = por %p60, %p61
      %p63 = scmp.ne.s32.totalorder %s52, %s55
      %p64 = scmp.eq.s32.totalorder %s21, 1
      %p65 = por %p63, %p64
      %p66 = scmp.ne.s32.totalorder %s55, %s56
      %p67 = scmp.eq.s32.totalorder %s21, 0
      %p68 = por %p66, %p67
      %p69 = scmp.ne.s32.totalorder %s55, %s56
      %p70 = scmp.eq.s32.totalorder %s22, 1
      %p71 = por %p69, %p70
      %p73 = scmp.ne.s32.totalorder %s56, %s72
      %p74 = scmp.eq.s32.totalorder %s22, 0
      %p75 = por %p73, %p74
      %s76 = ssub.s32 %s16, %s23
      %p77 = scmp.eq.s32.totalorder %s76, 0
      %s79 = sadd.s32 %s78, 1
      %s80 = scalar_select %p77, %s78, %s79
      %p83 = pneg %p77
      %p84 = scmp.eq.s32.totalorder %s16, 1
      %p85 = por %p83, %p84
      %p86 = scmp.ne.s32.totalorder %s78, %s81
      %p87 = scmp.eq.s32.totalorder %s16, 0
      %p88 = por %p86, %p87
      %p89 = scmp.ne.s32.totalorder %s78, %s81
      %p90 = scmp.eq.s32.totalorder %s21, 1
      %p91 = por %p89, %p90
      %p92 = scmp.ne.s32.totalorder %s81, %s82
      %p93 = scmp.eq.s32.totalorder %s21, 0
      %p94 = por %p92, %p93
      %p95 = scmp.ne.s32.totalorder %s81, %s82
      %p96 = scmp.eq.s32.totalorder %s22, 1
      %p97 = por %p95, %p96
      %p99 = scmp.ne.s32.totalorder %s82, %s98
      %p100 = scmp.eq.s32.totalorder %s22, 0
      %p101 = por %p99, %p100
      %s102 = ssub.s32 %s16, %s23
      %p103 = scmp.eq.s32.totalorder %s102, 0
      %s105 = sadd.s32 %s104, 1
      %s106 = scalar_select %p103, %s104, %s105
      %p109 = pneg %p103
      %p110 = scmp.eq.s32.totalorder %s16, 1
      %p111 = por %p109, %p110
      %p112 = scmp.ne.s32.totalorder %s104, %s107
      %p113 = scmp.eq.s32.totalorder %s16, 0
      %p114 = por %p112, %p113
      %p115 = scmp.ne.s32.totalorder %s104, %s107
      %p116 = scmp.eq.s32.totalorder %s21, 1
      %p117 = por %p115, %p116
      %p118 = scmp.ne.s32.totalorder %s107, %s108
      %p119 = scmp.eq.s32.totalorder %s21, 0
      %p120 = por %p118, %p119
      %p121 = scmp.ne.s32.totalorder %s107, %s108
      %p122 = scmp.eq.s32.totalorder %s22, 1
      %p123 = por %p121, %p122
      %p125 = scmp.ne.s32.totalorder %s108, %s124
      %p126 = scmp.eq.s32.totalorder %s22, 0
      %p127 = por %p125, %p126
      %p128 = scmp.le.s32.totalorder 1, %s16
      %p129 = scmp.lt.s32.totalorder %s16, 3
      %p130 = pnand %p128, %p129
      %p131 = pneg %p130
      // Predicated region
      $region9: #{forward.41} parent=5 // pred_check
        _
      $region10: #{forward.41} parent=5 // pred_check_branch
        %133 = sbr.rel (%p130) target = $region12
      $region11: #{forward.41} parent=5 // pred_region
        %s134 = ssub.s32 %s16, 1
      $region12: #{forward.41} parent=5 // pred_fallthru
        _
      %p135 = scmp.lt.s32.totalorder %s16, 2
      // Predicated region
      $region13: #{forward.41} parent=5 // pred_check
        %p136 = pneg %p135
      $region14: #{forward.41} parent=5 // pred_check_branch
        %138 = sbr.rel (%p136) target = $region16
      $region15: #{forward.41} parent=5 // pred_region
        // Predicated region
        $region17: #{forward.41} parent=15 // pred_check
          %p139 = pneg %p36
        $region18: #{forward.41} parent=15 // pred_check_branch
          %141 = sbr.rel (%p139) target = $region20
        $region19: #{forward.41} parent=15 // pred_region
          %p142 = scmp.lt.s32.totalorder %s16, 1
          %s143 = scalar_select %p142, %s16, 1
          %s144 = smul.addr %s143, 2
          %s145 = smul.addr %s144, 8
          %s146 = scalar_lea.vmem %s0, %s145
        $region20: #{forward.41} parent=15 // pred_fallthru
          _
        // Predicated region
        $region21: #{forward.41} parent=15 // pred_check
          %p147 = pneg %p62
        $region22: #{forward.41} parent=15 // pred_check_branch
          %149 = sbr.rel (%p147) target = $region24
        $region23: #{forward.41} parent=15 // pred_region
          %p150 = scmp.lt.s32.totalorder %s16, 1
          %s151 = scalar_select %p150, %s16, 1
          %s152 = smul.addr %s151, 2
          %s153 = smul.addr %s152, 8
          %s154 = scalar_lea.vmem %s1, %s153
        $region24: #{forward.41} parent=15 // pred_fallthru
          _
      $region16: #{forward.41} parent=5 // pred_fallthru
        _
      %p155 = scmp.le.s32.totalorder 1, %s16
      %p156 = scmp.lt.s32.totalorder %s16, 3
      %p157 = pnand %p155, %p156
      %p158 = pneg %p157
      // Predicated region
      $region25: #{forward.41} parent=5 // pred_check
        _
      $region26: #{forward.41} parent=5 // pred_check_branch
        %160 = sbr.rel (%p157) target = $region28
      $region27: #{forward.41} parent=5 // pred_region
        %s161 = ssub.s32 %s16, 1
        %p162 = scmp.lt.s32.totalorder %s21, 1
        %s163 = scalar_select %p162, %s21, 1
        %s164 = smul.addr %s163, 2
        %s165 = smul.addr %s164, 8
        %s166 = scalar_lea.vmem %s0, %s165
        %p167 = pneg %p42
        %p168 = pneg %p39
        %p169 = scmp.lt.s32.totalorder %s21, 1
        %s170 = scalar_select %p169, %s21, 1
        %s171 = smul.addr %s170, 2
        %s172 = smul.addr %s171, 8
        %s173 = scalar_lea.vmem %s1, %s172
        %p174 = pneg %p68
        %p175 = pneg %p65
        %p176 = pneg %p94
        %p177 = pneg %p91
        %s178 = sand.u32 %s81, 1
        %s179 = scalar_lea.sflag [#allocation3], %s178
        %s180 = sand.u32 %s81, 1
        %s181 = smul.addr %s180, 16
        %s182 = scalar_lea.vmem [#allocation2], %s181
        %p183 = pneg %p120
        %p184 = pneg %p117
        %s185 = sand.u32 %s107, 1
        %s186 = scalar_lea.sflag [#allocation5], %s185
        %s187 = sand.u32 %s107, 1
        %s188 = smul.addr %s187, 16
        %s189 = scalar_lea.vmem [#allocation4], %s188
        %p190 = scmp.lt.s32.totalorder %s21, 1
        %s191 = scalar_select %p190, %s21, 1
        %s192 = smul.addr %s191, 2
        %s193 = smul.addr %s192, 8
        %s194 = scalar_lea.vmem %s0, %s193
        %p195 = scmp.lt.s32.totalorder %s21, 1
        %s196 = scalar_select %p195, %s21, 1
        %s197 = smul.addr %s196, 2
        %s198 = smul.addr %s197, 8
        %s199 = scalar_lea.vmem %s1, %s198
        %v200 = vld [vmem:[%s194] sm:$0xff]
        %v201 = vld [vmem:[%s194 + $0x8] sm:$0xff]
        loop: start=0, step=1, limit=20
        $region29: #{forward.41} parent=27 // loop_pre_header
          _
        $region30: #{forward.41} parent=27 // loop_header
          %s203 = sphi 0, %s207
          %p204 = scmp.ge.s32.totalorder %s203, 20
          %v208 = vphi %v200, %v264
          %v209 = vphi %v201, %v265
        $region31: #{forward.41} parent=27 // loop_header_branch
          %206 = sbr.rel (%p204) target = $region35
        $region32: #{forward.41} parent=27 // loop_body
          %vm210 = vcmask 130048
          %v211 = vsel %vm210, %v208, -inf
          %v212 = vsel %vm210, %v209, -inf
          %v213 = vmax.f32 %v211, %v212
          %v214 = vrot.slane %v213, 4
          %v215 = vmax.f32 %v213, %v214
          %v216 = vrot.slane %v215, 2
          %v217 = vmax.f32 %v215, %v216
          %v218 = vrot.slane %v217, 1
          %v219 = vmax.f32 %v217, %v218
          %v220 = vsub.f32 %v208, %v219
          %v221 = vsub.f32 %v209, %v219
          %v222 = vmul.f32 %v220, 1.442695
          %v223 = vpow.pop %v222
          %v224 = vmul.f32 %v221, 1.442695
          %v225 = vpow.pop %v224
          %v226 = vsel %vm210, %v223, 0.0
          %v227 = vsel %vm210, %v225, 0.0
          %v228 = vadd.f32 %v226, %v227
          %v229 = vrot.slane %v228, 4
          %v230 = vadd.f32 %v228, %v229
          %v231 = vrot.slane %v230, 2
          %v232 = vadd.f32 %v230, %v231
          %v233 = vrot.slane %v232, 1
          %v234 = vadd.f32 %v232, %v233
          %v235 = vlog2.pop %v234
          %v236 = vmul.f32 %v235, 0.6931472
          %v237 = vadd.f32 %v236, %v219
          %v238 = vsub.f32 %v208, %v237
          %v239 = vsub.f32 %v209, %v237
          %v240 = vsel %vm210, %v238, -inf
          %241 = vmax.xlane.f32.xlu0 %v240
          %v242 = vpop.xlane.xlu0 %241
          %v243 = vsel %vm210, %v239, -inf
          %244 = vmax.xlane.f32.xlu0 %v243
          %v245 = vpop.xlane.xlu0 %244
          %v246 = vsub.f32 %v238, %v242
          %v247 = vsub.f32 %v239, %v245
          %v248 = vmul.f32 %v246, 1.442695
          %v249 = vpow.pop %v248
          %v250 = vmul.f32 %v247, 1.442695
          %v251 = vpow.pop %v250
          %v252 = vsel %vm210, %v249, 0.0
          %253 = vadd.xlane.f32.xlu0 %v252
          %v254 = vpop.xlane.xlu0 %253
          %v255 = vsel %vm210, %v251, 0.0
          %256 = vadd.xlane.f32.xlu0 %v255
          %v257 = vpop.xlane.xlu0 %256
          %v258 = vlog2.pop %v254
          %v259 = vmul.f32 %v258, 0.6931472
          %v260 = vlog2.pop %v257
          %v261 = vmul.f32 %v260, 0.6931472
          %v262 = vadd.f32 %v259, %v242
          %v263 = vadd.f32 %v261, %v245
          %v264 = vsub.f32 %v238, %v262
          %v265 = vsub.f32 %v239, %v263
        $region33: #{forward.41} parent=27 // loop_footer
          %s207 = sadd.s32 1, %s203
        $region34: #{forward.41} parent=27 // loop_footer_branch
          %202 = sbr.rel target = $region30
        $region35: #{forward.41} parent=27 // loop_exit
          _
        %v266 = vmul.f32 %v208, 1.442695
        %v267 = vpow.pop %v266
        %v268 = vmul.f32 %v209, 1.442695
        %v269 = vpow.pop %v268
        %vm270 = vcmask 130048
        %271 = vst.msk [vmem:[%s189] sm:$0xff] %vm270, %v267
        %272 = vst.msk [vmem:[%s189 + $0x8] sm:$0xff] %vm270, %v269
        %v273 = vld [vmem:[%s199] sm:$0xff]
        %v274 = vld [vmem:[%s199 + $0x8] sm:$0xff]
        %v276 = vsel %vm270, %v267, 0
        %v279 = vsel %vm270, %v269, 0
        %281 = vmatprep.subr.mxu0 0.0
        %282 = vmatpush1.msra.mxu0 0.0
        %283 = vmatprep.subr.mxu0 0.0
        %284 = vmatpush1.msra.mxu0 0.0
        %285 = vmatprep.subr.mxu0 0.0
        %286 = vmatpush1.msra.mxu0 0.0
        %287 = vmatprep.subr.mxu0 0.0
        %288 = vmatpush1.msra.mxu0 0.0
        %289 = vmatprep.subr.mxu0 0.0
        %290 = vmatpush1.msra.mxu0 0.0
        %291 = vmatprep.subr.mxu0 0.0
        %292 = vmatpush1.msra.mxu0 0.0
        %293 = vmatprep.subr.mxu0 0.0
        %294 = vmatpush1.msra.mxu0 0.0
        %295 = vmatprep.subr.mxu0 0.0
        %296 = vmatpush1.msra.mxu0 0.0
        %297 = vmatprep.subr.mxu0 0.0
        %298 = vmatpush1.msra.mxu0 0.0
        %299 = vmatprep.subr.mxu0 0.0
        %300 = vmatpush1.msra.mxu0 0.0
        %301 = vmatprep.subr.mxu0 0.0
        %302 = vmatpush1.msra.mxu0 0.0
        %303 = vmatprep.subr.mxu0 0.0
        %304 = vmatpush1.msra.mxu0 0.0
        %305 = vmatprep.subr.mxu0 0.0
        %306 = vmatpush1.msra.mxu0 0.0
        %307 = vmatprep.subr.mxu0 0.0
        %308 = vmatpush1.msra.mxu0 0.0
        %309 = vmatprep.subr.mxu0 0.0
        %310 = vmatpush1.msra.mxu0 %v274
        %311 = vmatprep.subr.mxu0 0.0
        %312 = vmatpush1.msra.mxu0 %v273
        %313 = vmatprep.subr.mxu0 0.0
        %314 = vmatpush2.msra.mxu0 0.0
        %315 = vmatprep.subr.mxu0 0.0
        %316 = vmatpush2.msra.mxu0 0.0
        %317 = vmatprep.subr.mxu0 0.0
        %318 = vmatpush2.msra.mxu0 0.0
        %319 = vmatprep.subr.mxu0 0.0
        %320 = vmatpush2.msra.mxu0 0.0
        %321 = vmatprep.subr.mxu0 0.0
        %322 = vmatpush2.msra.mxu0 0.0
        %323 = vmatprep.subr.mxu0 0.0
        %324 = vmatpush2.msra.mxu0 0.0
        %325 = vmatprep.subr.mxu0 0.0
        %326 = vmatpush2.msra.mxu0 0.0
        %327 = vmatprep.subr.mxu0 0.0
        %328 = vmatpush2.msra.mxu0 0.0
        %329 = vmatprep.subr.mxu0 0.0
        %330 = vmatpush2.msra.mxu0 0.0
        %331 = vmatprep.subr.mxu0 0.0
        %332 = vmatpush2.msra.mxu0 0.0
        %333 = vmatprep.subr.mxu0 0.0
        %334 = vmatpush2.msra.mxu0 0.0
        %335 = vmatprep.subr.mxu0 0.0
        %336 = vmatpush2.msra.mxu0 0.0
        %337 = vmatprep.subr.mxu0 0.0
        %338 = vmatpush2.msra.mxu0 0.0
        %339 = vmatprep.subr.mxu0 0.0
        %340 = vmatpush2.msra.mxu0 0.0
        %341 = vmatprep.subr.mxu0 0.0
        %342 = vmatpush2.msra.mxu0 0.0
        %343 = vmatprep.subr.mxu0 0.0
        %344 = vmatpush2.msra.mxu0 0.0
        %345 = vmatprep.mubr.f32.mxu0 0.0
        %346 = vmatmul.mubr.f32.gmra.mxu0 %v276
        %v347 = vpop.f32.mrf.mxu0
        %v348 = vadd.f32 0.0, %v347
        %v349 = vpop.f32.mrf.mxu0
        %350 = vmatprep.mubr.f32.mxu0 0.0
        %351 = vmatmul.mubr.f32.gmra.mxu0 %v279
        %v352 = vpop.f32.mrf.mxu0
        %v353 = vadd.f32 0.0, %v352
        %v354 = vpop.f32.mrf.mxu0
        %355 = vdwg.mxu0
        %v357 = vsel %vm270, %v348, 0
        %v360 = vsel %vm270, %v353, 0
        %362 = vmatprep.subr.mxu0 0.0
        %363 = vmatpush1.xpose.msra.mxu0 0.0
        %364 = vmatprep.subr.mxu0 0.0
        %365 = vmatpush1.xpose.msra.mxu0 0.0
        %366 = vmatprep.subr.mxu0 0.0
        %367 = vmatpush1.xpose.msra.mxu0 0.0
        %368 = vmatprep.subr.mxu0 0.0
        %369 = vmatpush1.xpose.msra.mxu0 0.0
        %370 = vmatprep.subr.mxu0 0.0
        %371 = vmatpush1.xpose.msra.mxu0 0.0
        %372 = vmatprep.subr.mxu0 0.0
        %373 = vmatpush1.xpose.msra.mxu0 0.0
        %374 = vmatprep.subr.mxu0 0.0
        %375 = vmatpush1.xpose.msra.mxu0 0.0
        %376 = vmatprep.subr.mxu0 0.0
        %377 = vmatpush1.xpose.msra.mxu0 0.0
        %378 = vmatprep.subr.mxu0 0.0
        %379 = vmatpush1.xpose.msra.mxu0 0.0
        %380 = vmatprep.subr.mxu0 0.0
        %381 = vmatpush1.xpose.msra.mxu0 0.0
        %382 = vmatprep.subr.mxu0 0.0
        %383 = vmatpush1.xpose.msra.mxu0 0.0
        %384 = vmatprep.subr.mxu0 0.0
        %385 = vmatpush1.xpose.msra.mxu0 0.0
        %386 = vmatprep.subr.mxu0 0.0
        %387 = vmatpush1.xpose.msra.mxu0 0.0
        %388 = vmatprep.subr.mxu0 0.0
        %389 = vmatpush1.xpose.msra.mxu0 0.0
        %390 = vmatprep.subr.mxu0 0.0
        %391 = vmatpush1.xpose.msra.mxu0 %v279
        %392 = vmatprep.subr.mxu0 0.0
        %393 = vmatpush1.xpose.msra.mxu0 %v276
        %394 = vmatprep.subr.mxu0 0.0
        %395 = vmatpush2.xpose.msra.mxu0 0.0
        %396 = vmatprep.subr.mxu0 0.0
        %397 = vmatpush2.xpose.msra.mxu0 0.0
        %398 = vmatprep.subr.mxu0 0.0
        %399 = vmatpush2.xpose.msra.mxu0 0.0
        %400 = vmatprep.subr.mxu0 0.0
        %401 = vmatpush2.xpose.msra.mxu0 0.0
        %402 = vmatprep.subr.mxu0 0.0
        %403 = vmatpush2.xpose.msra.mxu0 0.0
        %404 = vmatprep.subr.mxu0 0.0
        %405 = vmatpush2.xpose.msra.mxu0 0.0
        %406 = vmatprep.subr.mxu0 0.0
        %407 = vmatpush2.xpose.msra.mxu0 0.0
        %408 = vmatprep.subr.mxu0 0.0
        %409 = vmatpush2.xpose.msra.mxu0 0.0
        %410 = vmatprep.subr.mxu0 0.0
        %411 = vmatpush2.xpose.msra.mxu0 0.0
        %412 = vmatprep.subr.mxu0 0.0
        %413 = vmatpush2.xpose.msra.mxu0 0.0
        %414 = vmatprep.subr.mxu0 0.0
        %415 = vmatpush2.xpose.msra.mxu0 0.0
        %416 = vmatprep.subr.mxu0 0.0
        %417 = vmatpush2.xpose.msra.mxu0 0.0
        %418 = vmatprep.subr.mxu0 0.0
        %419 = vmatpush2.xpose.msra.mxu0 0.0
        %420 = vmatprep.subr.mxu0 0.0
        %421 = vmatpush2.xpose.msra.mxu0 0.0
        %422 = vmatprep.subr.mxu0 0.0
        %423 = vmatpush2.xpose.msra.mxu0 0.0
        %424 = vmatprep.subr.mxu0 0.0
        %425 = vmatpush2.xpose.msra.mxu0 0.0
        %426 = vmatprep.mubr.f32.mxu0 0.0
        %427 = vmatmul.mubr.f32.gmra.mxu0 %v357
        %v428 = vpop.f32.mrf.mxu0
        %v429 = vadd.f32 0.0, %v428
        %v430 = vpop.f32.mrf.mxu0
        %431 = vmatprep.mubr.f32.mxu0 0.0
        %432 = vmatmul.mubr.f32.gmra.mxu0 %v360
        %v433 = vpop.f32.mrf.mxu0
        %v434 = vadd.f32 0.0, %v433
        %v435 = vpop.f32.mrf.mxu0
        %436 = vdwg.mxu0
        %437 = vst.msk [vmem:[%s182] sm:$0xff] %vm270, %v429
        %438 = vst.msk [vmem:[%s182 + $0x8] sm:$0xff] %vm270, %v434
        %s439 = sand.u32 %s81, 1
        %s440 = scalar_lea.sflag [#allocation3], %s439
        %s441 = sand.u32 %s81, 1
        %s442 = smul.addr %s441, 16
        %s443 = scalar_lea.vmem [#allocation2], %s442
        %s444 = sand.u32 %s107, 1
        %s445 = scalar_lea.sflag [#allocation5], %s444
        %s446 = sand.u32 %s107, 1
        %s447 = smul.addr %s446, 16
        %s448 = scalar_lea.vmem [#allocation4], %s447
        // Predicated region
        $region36: #{forward.41} parent=27 // pred_check
          %p449 = pneg %p91
        $region37: #{forward.41} parent=27 // pred_check_branch
          %451 = sbr.rel (%p449) target = $region39
        $region38: #{forward.41} parent=27 // pred_region
          %s453 = ssub.s32 256, 256
          %454 = vsyncadd %s440, %s453
          %s455 = smul.addr %s21, 2
          %s456 = smul.addr %s455, 128
          %s457 = scalar_lea.hbm %s2, %s456
          %s458 = sshll.u32 %s443, 4
          %s459 = int_to_ptr.vmem [resolvable:$true] %s458
          %464 = dma.vmem_to_hbm [thread:$0]  %s459, 256, %s457, %s440, 128, 128, 8
        $region39: #{forward.41} parent=27 // pred_fallthru
          _
        // Predicated region
        $region40: #{forward.41} parent=27 // pred_check
          %p465 = pneg %p117
        $region41: #{forward.41} parent=27 // pred_check_branch
          %467 = sbr.rel (%p465) target = $region43
        $region42: #{forward.41} parent=27 // pred_region
          %s469 = ssub.s32 256, 256
          %470 = vsyncadd %s445, %s469
          %s471 = smul.addr %s21, 2
          %s472 = smul.addr %s471, 128
          %s473 = scalar_lea.hbm %s3, %s472
          %s474 = sshll.u32 %s448, 4
          %s475 = int_to_ptr.vmem [resolvable:$true] %s474
          %480 = dma.vmem_to_hbm [thread:$0]  %s475, 256, %s473, %s445, 128, 128, 8
        $region43: #{forward.41} parent=27 // pred_fallthru
          _
      $region28: #{forward.41} parent=5 // pred_fallthru
        _
      %p481 = scmp.le.s32.totalorder 2, %s16
      // Predicated region
      $region44: #{forward.41} parent=5 // pred_check
        %p482 = pneg %p481
      $region45: #{forward.41} parent=5 // pred_check_branch
        %484 = sbr.rel (%p482) target = $region47
      $region46: #{forward.41} parent=5 // pred_region
        %s485 = ssub.s32 %s16, 2
        // Predicated region
        $region48: #{forward.41} parent=46 // pred_check
          %p486 = pneg %p97
        $region49: #{forward.41} parent=46 // pred_check_branch
          %488 = sbr.rel (%p486) target = $region51
        $region50: #{forward.41} parent=46 // pred_region
          %s489 = sand.u32 %s82, 1
          %s490 = scalar_lea.sflag [#allocation3], %s489
          %s491 = sand.u32 %s82, 1
          %s492 = smul.addr %s491, 16
          %s493 = scalar_lea.vmem [#allocation2], %s492
          %494 = dma.done %s490, 256
        $region51: #{forward.41} parent=46 // pred_fallthru
          _
        // Predicated region
        $region52: #{forward.41} parent=46 // pred_check
          %p495 = pneg %p123
        $region53: #{forward.41} parent=46 // pred_check_branch
          %497 = sbr.rel (%p495) target = $region55
        $region54: #{forward.41} parent=46 // pred_region
          %s498 = sand.u32 %s108, 1
          %s499 = scalar_lea.sflag [#allocation5], %s498
          %s500 = sand.u32 %s108, 1
          %s501 = smul.addr %s500, 16
          %s502 = scalar_lea.vmem [#allocation4], %s501
          %503 = dma.done %s499, 256
        $region55: #{forward.41} parent=46 // pred_fallthru
          _
      $region47: #{forward.41} parent=5 // pred_fallthru
        _
    $region6: #{forward.41} parent=1 // loop_footer
      %s20 = sadd.s32 1, %s16
    $region7: #{forward.41} parent=1 // loop_footer_branch
      %15 = sbr.rel target = $region3
    $region8: #{forward.41} parent=1 // loop_exit
      _
    %504 = vsyncpa [#allocation3], 1
    %s505 = scalar_lea.sflag [#allocation3], 1
    %506 = vsyncpa %s505, 1
    %507 = vsyncpa [#allocation5], 1
    %s508 = scalar_lea.sflag [#allocation5], 1
    %509 = vsyncpa %s508, 1

</llo_original>
